<compile_context>
chip_gen: v7x
topology: tpu7x:2x2x1
jax: 0.10.0
libtpu: 0.0.40
codegen_flags: <defaults>
</compile_context>

<pallas_src>
import jax
import jax.numpy as jnp
import numpy as np
from jax.experimental import pallas as pl
from jax.experimental.pallas import tpu as pltpu

EPS = 1e-5  # PyTorch BatchNorm default eps


# ----------------------------- Pallas kernel ------------------------------- #

def _make_block_kernel(c0, growth, cb, num_layers, H, W, pad_rows):
    """Build the fused DenseBlock kernel (layer loop unrolled at trace time)."""
    HW = H * W

    def kernel(x_ref, *args):
        # args = (vecs_0, w1_0, w2_0, ..., vecs_{L-1}, w1_{L-1}, w2_{L-1},
        #         out_ref, srow_ref, col_ref)
        srow_ref = args[-2]          # (HW + 2*pad_rows, Cb) bf16 padded rows of t
        col_ref = args[-1]           # (HW, 9*Cb) bf16 im2col patches
        out_ref = args[-3]           # (1, HW, c_pad) f32 = concat feature buffer
        prm = args[:-3]

        # Concat buffer == output block.  One full-width (unmasked) clear gives
        # deterministic lane padding; only ~C_total/c_pad of it is rewritten.
        out_ref[...] = jnp.zeros_like(out_ref)
        out_ref[0, :, :c0] = x_ref[0]

        # Zero only the halo rows of the padded row buffer (interior is fully
        # rewritten every layer).  Must happen every grid step: with a
        # "parallel" grid the steps may land on different cores.
        zero_halo = jnp.zeros((pad_rows, cb), srow_ref.dtype)
        srow_ref[:pad_rows, :] = zero_halo
        srow_ref[pad_rows + HW:, :] = zero_halo

        # Column-edge masks for the 3x3 taps, hoisted once per grid step.
        px = jax.lax.broadcasted_iota(jnp.int32, (HW, 1), 0) % W
        ok_left = px >= 1            # dx = -1 stays inside the row
        ok_right = px <= W - 2       # dx = +1 stays inside the row

        for l in range(num_layers):
            cin = c0 + l * growth
            vec_ref = prm[3 * l]     # (3, max(Cin,Cb)) f32: [s1 | t1 | b2f]
            w1_ref = prm[3 * l + 1]  # (Cin, Cb) bf16, BN2 scale folded in
            w2_ref = prm[3 * l + 2]  # (9*Cb, G) bf16, taps flattened

            # BN1 (folded affine) + ReLU on cat(features); f32 elementwise.
            z = out_ref[0, :, :cin]                                  # (HW, Cin)
            y = jnp.maximum(z * vec_ref[0:1, :cin] + vec_ref[1:2, :cin], 0.0)

            # 1x1 conv == channel matmul on the MXU (bf16 operands, f32 acc).
            t = jnp.dot(y.astype(jnp.bfloat16), w1_ref[...],
                        preferred_element_type=jnp.float32)          # (HW, Cb)
            t = jnp.maximum(t + vec_ref[2:3, :cb], 0.0)              # BN2 + ReLU

            # Interior of the flat-pixel padded row buffer (halo stays zero).
            srow_ref[pad_rows:pad_rows + HW, :] = t.astype(srow_ref.dtype)

            # im2col: each 3x3 tap is a contiguous row window of srow_ref
            # (pixel p's (dy,dx) neighbour sits at flat row p + dy*W + dx);
            # row overflow lands in the zero halo, column wrap is masked.
            for k in range(9):
                dy, dx = k // 3 - 1, k % 3 - 1
                start = pad_rows + dy * W + dx
                patch = srow_ref[start:start + HW, :]                # (HW, Cb)
                if dx == -1:
                    patch = jnp.where(ok_left, patch, jnp.zeros_like(patch))
                elif dx == 1:
                    patch = jnp.where(ok_right, patch, jnp.zeros_like(patch))
                col_ref[:, k * cb:(k + 1) * cb] = patch

            # ONE (HW, 9*Cb) @ (9*Cb, G) matmul (K=288) replaces 9 K=32 pushes.
            conv = jnp.dot(col_ref[...], w2_ref[...],
                           preferred_element_type=jnp.float32)       # (HW, G)

            # Append this layer's growth_rate channels to the concat buffer.
            out_ref[0, :, cin:cin + growth] = conv

    return kernel


# ------------------------------- wrappers ---------------------------------- #

def fold_layer_params(p):
    """Pre-fold BN into an affine + the 1x1 weight, pack vectors into one array."""
    inv1 = jax.lax.rsqrt(p["v1"] + EPS)
    s1 = p["g1"] * inv1                                  # (1, Cin) BN1 scale
    t1 = p["b1"] - p["m1"] * s1                          # (1, Cin) BN1 shift
    inv2 = jax.lax.rsqrt(p["v2"] + EPS)
    s2 = p["g2"] * inv2                                  # (1, Cb)
    w1f = (p["w1"] * s2).astype(jnp.bfloat16)            # (Cin, Cb) BN2 scale folded
    b2f = p["b2"] - p["m2"] * s2                         # (1, Cb)  BN2 folded bias

    cin = p["w1"].shape[0]
    cb, g = p["w2"].shape[2], p["w2"].shape[3]
    cmax = max(cin, cb)
    vecs = jnp.zeros((3, cmax), jnp.float32)
    vecs = (vecs.at[0, :cin].set(s1[0])
                 .at[1, :cin].set(t1[0])
                 .at[2, :cb].set(b2f[0]))
    w2f = p["w2"].reshape(9 * cb, g).astype(jnp.bfloat16)  # taps flattened (9*Cb, G)
    return dict(vecs=vecs, w1f=w1f, w2f=w2f)


def dense_block_forward(x_nchw, folded_params):
    """DenseBlock.forward: torch NCHW in, torch NCHW out. One pallas_call total."""
    N, C0, H, W = x_nchw.shape
    HW = H * W
    L = len(folded_params)
    growth = folded_params[0]["w2f"].shape[-1]
    cb = folded_params[0]["w1f"].shape[1]
    c_total = C0 + L * growth
    c_pad = ((c_total + 127) // 128) * 128            # lane-dense output block
    pad_rows = -(-(W + 1) // 16) * 16                 # halo >= W+1, vreg-row aligned

    # NCHW -> NHWC -> (N, H*W, C): channels on the lane dim for the 1x1 matmul.
    x = jnp.transpose(x_nchw, (0, 2, 3, 1)).reshape(N, HW, C0)

    operands = [x]
    in_specs = [pl.BlockSpec((1, HW, C0), lambda i: (i, 0, 0))]
    for fp in folded_params:
        operands += [fp["vecs"], fp["w1f"], fp["w2f"]]
        in_specs += [pl.BlockSpec(fp["vecs"].shape, lambda i: (0, 0)),
                     pl.BlockSpec(fp["w1f"].shape, lambda i: (0, 0)),
                     pl.BlockSpec(fp["w2f"].shape, lambda i: (0, 0))]

    kernel = _make_block_kernel(C0, growth, cb, L, H, W, pad_rows)

    out = pl.pallas_call(
        kernel,
        out_shape=jax.ShapeDtypeStruct((N, HW, c_pad), jnp.float32),
        grid=(N,),                                     # batch axis -> 2nd TC on v7x
        in_specs=in_specs,
        out_specs=pl.BlockSpec((1, HW, c_pad), lambda i: (i, 0, 0)),
        scratch_shapes=[
            pltpu.VMEM((HW + 2 * pad_rows, cb), jnp.bfloat16),  # padded rows of t
            pltpu.VMEM((HW, 9 * cb), jnp.bfloat16),             # im2col patches
        ],
        # TODO(synk): at real DenseNet sizes (H=W>=56, Cin>=128) tile H with a
        # 1-row halo and set vmem_limit_bytes for v7x's 64 MiB VMEM.
        compiler_params=pltpu.CompilerParams(
            dimension_semantics=("parallel",)),
    )(*operands)

    out = out[:, :, :c_total].reshape(N, H, W, c_total)  # drop lane padding (free)
    return jnp.transpose(out, (0, 3, 1, 2))               # NHWC -> NCHW


# ------------------------- parameters (deterministic) ----------------------- #

def init_dense_layer_params(key, num_input_features, bottleneck_factor,
                            growth_rate):
    Cin = num_input_features
    Cb = bottleneck_factor * growth_rate
    G = growth_rate
    ks = jax.random.split(key, 10)
    w1 = jax.random.normal(ks[0], (Cin, Cb), jnp.float32) / np.sqrt(Cin)
    w2_hwio = (jax.random.normal(ks[1], (3, 3, Cb, G), jnp.float32)
               / np.sqrt(9 * Cb))
    # BatchNorm implemented in eval mode with fixed (synthetic) running stats.
    # TODO(synk): training-mode BN (batch statistics + running-stat update) not implemented.
    # TODO(synk): Dropout skipped (p=0 in this config -> identity).
    return dict(
        g1=jax.random.uniform(ks[2], (1, Cin), jnp.float32, 0.5, 1.5),
        b1=jax.random.normal(ks[3], (1, Cin), jnp.float32) * 0.1,
        m1=jax.random.normal(ks[4], (1, Cin), jnp.float32) * 0.1,
        v1=jax.random.uniform(ks[5], (1, Cin), jnp.float32, 0.5, 1.5),
        w1=w1,                                   # (Cin, Cb)  1x1 conv weight
        g2=jax.random.uniform(ks[6], (1, Cb), jnp.float32, 0.5, 1.5),
        b2=jax.random.normal(ks[7], (1, Cb), jnp.float32) * 0.1,
        m2=jax.random.normal(ks[8], (1, Cb), jnp.float32) * 0.1,
        v2=jax.random.uniform(ks[9], (1, Cb), jnp.float32, 0.5, 1.5),
        w2=w2_hwio,                              # (3, 3, Cb, G) HWIO
    )


# --------------------------- pure-JAX reference ----------------------------- #

def _dense_layer_ref(z, p):
    inv1 = jax.lax.rsqrt(p["v1"][0] + EPS)
    y = jnp.maximum((z - p["m1"][0]) * inv1 * p["g1"][0] + p["b1"][0], 0.0)
    t = jnp.einsum("nhwc,cd->nhwd", y, p["w1"])
    inv2 = jax.lax.rsqrt(p["v2"][0] + EPS)
    t = jnp.maximum((t - p["m2"][0]) * inv2 * p["g2"][0] + p["b2"][0], 0.0)
    return jax.lax.conv_general_dilated(
        t, p["w2"], window_strides=(1, 1), padding="SAME",
        dimension_numbers=("NHWC", "HWIO", "NHWC"))


def _dense_block_ref(x_nchw, layer_params):
    x = jnp.transpose(x_nchw, (0, 2, 3, 1))
    features = [x]
    for p in layer_params:
        z = jnp.concatenate(features, axis=-1)
        features.append(_dense_layer_ref(z, p))
    return jnp.transpose(jnp.concatenate(features, axis=-1), (0, 3, 1, 2))


# --------------------------------- main ------------------------------------ #

if __name__ == "__main__":
    # DenseBlock config: dimensionality=2, activation=ReLU, batchnorm=True,
    # bottleneck_factor=4, dropout=0.0, growth_rate=8, num_input_features=8,
    # num_layers=2.
    num_input_features = 8
    growth_rate = 8
    bottleneck_factor = 4
    num_layers = 2
    N, H, W = 2, 16, 16

    key = jax.random.PRNGKey(0)
    k_x, *k_layers = jax.random.split(key, num_layers + 1)

    layer_params = []
    for i in range(num_layers):
        layer_params.append(init_dense_layer_params(
            k_layers[i], num_input_features + i * growth_rate,
            bottleneck_factor, growth_rate))
    folded_params = [fold_layer_params(p) for p in layer_params]

    x = jax.random.normal(k_x, (N, num_input_features, H, W), jnp.float32)

    fwd = jax.jit(dense_block_forward)
    out = jax.block_until_ready(fwd(x, folded_params))
    ref = jax.block_until_ready(_dense_block_ref(x, layer_params))

    expected_channels = num_input_features + num_layers * growth_rate
    assert out.shape == (N, expected_channels, H, W), out.shape
    np.testing.assert_allclose(np.asarray(out), np.asarray(ref),
                               rtol=2e-2, atol=2e-2)
    print("KERNEL_OK")
</pallas_src>

<mosaic_0001>
module attributes {stable_mosaic.version = 11 : i64} {
  func.func @kernel(%arg0: i32, %arg1: memref<1x256x8xf32, #tpu.memory_space<vmem>>, %arg2: memref<3x32xf32, #tpu.memory_space<vmem>>, %arg3: memref<8x32xbf16, #tpu.memory_space<vmem>>, %arg4: memref<288x8xbf16, #tpu.memory_space<vmem>>, %arg5: memref<3x32xf32, #tpu.memory_space<vmem>>, %arg6: memref<16x32xbf16, #tpu.memory_space<vmem>>, %arg7: memref<288x8xbf16, #tpu.memory_space<vmem>>, %arg8: memref<1x256x128xf32, #tpu.memory_space<vmem>>, %arg9: memref<320x32xbf16, #tpu.memory_space<vmem>>, %arg10: memref<256x288xbf16, #tpu.memory_space<vmem>>) attributes {dimension_semantics = [#tpu.dimension_semantics<parallel>], iteration_bounds = array<i64: 2>, scalar_prefetch = 0 : i64, scratch_operands = 2 : i64, tpu.core_type = #tpu.core_type<tc>, window_params = [{transform_indices = @transform_0, window_bounds = array<i64: 1, 256, 8>}, {pipeline_mode = #tpu.pipeline_mode<synchronous>, transform_indices = @transform_1, window_bounds = array<i64: 3, 32>}, {pipeline_mode = #tpu.pipeline_mode<synchronous>, transform_indices = @transform_2, window_bounds = array<i64: 8, 32>}, {pipeline_mode = #tpu.pipeline_mode<synchronous>, transform_indices = @transform_3, window_bounds = array<i64: 288, 8>}, {pipeline_mode = #tpu.pipeline_mode<synchronous>, transform_indices = @transform_4, window_bounds = array<i64: 3, 32>}, {pipeline_mode = #tpu.pipeline_mode<synchronous>, transform_indices = @transform_5, window_bounds = array<i64: 16, 32>}, {pipeline_mode = #tpu.pipeline_mode<synchronous>, transform_indices = @transform_6, window_bounds = array<i64: 288, 8>}, {transform_indices = @transform_7, window_bounds = array<i64: 1, 256, 128>}]} {
    %cst = arith.constant 0.000000e+00 : f32
    %0 = vector.broadcast %cst : f32 to vector<1x256x128xf32>
    %c0 = arith.constant 0 : index
    %c0_0 = arith.constant 0 : index
    %c0_1 = arith.constant 0 : index
    %1 = vector.load %arg8[%c0, %c0_0, %c0_1] : memref<1x256x128xf32, #tpu.memory_space<vmem>>, vector<1x256x128xf32>
    tpu.vector_store %arg8[%c0, %c0_0, %c0_1], %0 {strides = array<i32>} : memref<1x256x128xf32, #tpu.memory_space<vmem>>, vector<1x256x128xf32>,
    %c0_2 = arith.constant 0 : index
    %c0_3 = arith.constant 0 : index
    %c0_4 = arith.constant 0 : index
    %2 = vector.load %arg1[%c0_2, %c0_3, %c0_4] : memref<1x256x8xf32, #tpu.memory_space<vmem>>, vector<1x256x8xf32>
    %3 = vector.shape_cast %2 : vector<1x256x8xf32> to vector<256x8xf32>
    %c0_5 = arith.constant 0 : index
    %c0_6 = arith.constant 0 : index
    %c0_7 = arith.constant 0 : index
    %4 = vector.load %arg8[%c0_5, %c0_6, %c0_7] : memref<1x256x128xf32, #tpu.memory_space<vmem>>, vector<1x256x8xf32>
    %5 = vector.shape_cast %4 : vector<1x256x8xf32> to vector<256x8xf32>
    %6 = vector.shape_cast %3 : vector<256x8xf32> to vector<1x256x8xf32>
    tpu.vector_store %arg8[%c0_5, %c0_6, %c0_7], %6 {strides = array<i32>} : memref<1x256x128xf32, #tpu.memory_space<vmem>>, vector<1x256x8xf32>,
    %cst_8 = arith.constant 0.000000e+00 : bf16
    %7 = vector.broadcast %cst_8 : bf16 to vector<32x32xbf16>
    %c0_9 = arith.constant 0 : index
    %c0_10 = arith.constant 0 : index
    %8 = vector.load %arg9[%c0_9, %c0_10] : memref<320x32xbf16, #tpu.memory_space<vmem>>, vector<32x32xbf16>
    tpu.vector_store %arg9[%c0_9, %c0_10], %7 {strides = array<i32>} : memref<320x32xbf16, #tpu.memory_space<vmem>>, vector<32x32xbf16>,
    %c288 = arith.constant 288 : index
    %c0_11 = arith.constant 0 : index
    %9 = vector.load %arg9[%c288, %c0_11] : memref<320x32xbf16, #tpu.memory_space<vmem>>, vector<32x32xbf16>
    tpu.vector_store %arg9[%c288, %c0_11], %7 {strides = array<i32>} : memref<320x32xbf16, #tpu.memory_space<vmem>>, vector<32x32xbf16>,
    %10 = tpu.iota {dimensions = array<i32: 0>} : vector<256x1xi32>
    %c16_i32 = arith.constant 16 : i32
    %c0_i32 = arith.constant 0 : i32
    %11 = arith.cmpi eq, %c16_i32, %c0_i32 : i32
    %c1_i32 = arith.constant 1 : i32
    %12 = arith.select %11, %c1_i32, %c16_i32 : i32
    %13 = vector.broadcast %12 : i32 to vector<256x1xi32>
    %14 = arith.remsi %10, %13 : vector<256x1xi32>
    %c0_i32_12 = arith.constant 0 : i32
    %15 = vector.broadcast %c0_i32_12 : i32 to vector<256x1xi32>
    %16 = arith.cmpi ne, %14, %15 : vector<256x1xi32>
    %c0_i32_13 = arith.constant 0 : i32
    %17 = vector.broadcast %c0_i32_13 : i32 to vector<256x1xi32>
    %18 = arith.cmpi slt, %14, %17 : vector<256x1xi32>
    %c0_i32_14 = arith.constant 0 : i32
    %19 = arith.cmpi slt, %12, %c0_i32_14 : i32
    %20 = vector.broadcast %19 : i1 to vector<256x1xi1>
    %21 = vector.broadcast %20 : vector<256x1xi1> to vector<256x1xi1>
    %22 = arith.xori %18, %21 : vector<256x1xi1>
    %23 = arith.andi %22, %16 : vector<256x1xi1>
    %24 = vector.broadcast %12 : i32 to vector<256x1xi32>
    %25 = arith.addi %14, %24 : vector<256x1xi32>
    %26 = arith.select %23, %25, %14 : vector<256x1xi1>, vector<256x1xi32>
    %c1_i32_15 = arith.constant 1 : i32
    %27 = vector.broadcast %c1_i32_15 : i32 to vector<256x1xi32>
    %28 = arith.cmpi sge, %26, %27 : vector<256x1xi32>
    %c14_i32 = arith.constant 14 : i32
    %29 = vector.broadcast %c14_i32 : i32 to vector<256x1xi32>
    %30 = arith.cmpi sle, %26, %29 : vector<256x1xi32>
    %c0_16 = arith.constant 0 : index
    %c0_17 = arith.constant 0 : index
    %c0_18 = arith.constant 0 : index
    %31 = vector.load %arg8[%c0_16, %c0_17, %c0_18] : memref<1x256x128xf32, #tpu.memory_space<vmem>>, vector<1x256x8xf32>
    %32 = vector.shape_cast %31 : vector<1x256x8xf32> to vector<256x8xf32>
    %c0_19 = arith.constant 0 : index
    %c0_20 = arith.constant 0 : index
    %33 = vector.load %arg2[%c0_19, %c0_20] : memref<3x32xf32, #tpu.memory_space<vmem>>, vector<1x8xf32>
    %34 = vector.broadcast %33 : vector<1x8xf32> to vector<256x8xf32>
    %35 = arith.mulf %32, %34 : vector<256x8xf32>
    %c1 = arith.constant 1 : index
    %c0_21 = arith.constant 0 : index
    %36 = vector.load %arg2[%c1, %c0_21] : memref<3x32xf32, #tpu.memory_space<vmem>>, vector<1x8xf32>
    %37 = vector.broadcast %36 : vector<1x8xf32> to vector<256x8xf32>
    %38 = arith.addf %35, %37 : vector<256x8xf32>
    %cst_22 = arith.constant 0.000000e+00 : f32
    %39 = vector.broadcast %cst_22 : f32 to vector<256x8xf32>
    %40 = arith.maximumf %38, %39 : vector<256x8xf32>
    %41 = arith.truncf %40 : vector<256x8xf32> to vector<256x8xbf16>
    %c0_23 = arith.constant 0 : index
    %c0_24 = arith.constant 0 : index
    %42 = vector.load %arg3[%c0_23, %c0_24] : memref<8x32xbf16, #tpu.memory_space<vmem>>, vector<8x32xbf16>
    %cst_25 = arith.constant dense<0.000000e+00> : vector<256x32xf32>
    %43 = tpu.matmul %41, %42, %cst_25 {dimension_numbers = #tpu.dot_dimension_numbers<[1], [0], [0], [1], [0, 0, 1, 1], [], []>} : vector<256x8xbf16>, vector<8x32xbf16>, vector<256x32xf32> -> vector<256x32xf32>
    %c2 = arith.constant 2 : index
    %c0_26 = arith.constant 0 : index
    %44 = vector.load %arg2[%c2, %c0_26] : memref<3x32xf32, #tpu.memory_space<vmem>>, vector<1x32xf32>
    %45 = vector.broadcast %44 : vector<1x32xf32> to vector<256x32xf32>
    %46 = arith.addf %43, %45 : vector<256x32xf32>
    %cst_27 = arith.constant 0.000000e+00 : f32
    %47 = vector.broadcast %cst_27 : f32 to vector<256x32xf32>
    %48 = arith.maximumf %46, %47 : vector<256x32xf32>
    %49 = arith.truncf %48 : vector<256x32xf32> to vector<256x32xbf16>
    %c32 = arith.constant 32 : index
    %c0_28 = arith.constant 0 : index
    %50 = vector.load %arg9[%c32, %c0_28] : memref<320x32xbf16, #tpu.memory_space<vmem>>, vector<256x32xbf16>
    tpu.vector_store %arg9[%c32, %c0_28], %49 {strides = array<i32>} : memref<320x32xbf16, #tpu.memory_space<vmem>>, vector<256x32xbf16>,
    %c15 = arith.constant 15 : index
    %c0_29 = arith.constant 0 : index
    %51 = vector.load %arg9[%c15, %c0_29] : memref<320x32xbf16, #tpu.memory_space<vmem>>, vector<256x32xbf16>
    %cst_30 = arith.constant 0.000000e+00 : bf16
    %52 = vector.broadcast %cst_30 : bf16 to vector<256x32xbf16>
    %53 = vector.shape_cast %28 : vector<256x1xi1> to vector<256x1xi1>
    %54 = vector.broadcast %53 : vector<256x1xi1> to vector<256x32xi1>
    %55 = arith.select %54, %51, %52 : vector<256x32xi1>, vector<256x32xbf16>
    %c0_31 = arith.constant 0 : index
    %c0_32 = arith.constant 0 : index
    %56 = vector.load %arg10[%c0_31, %c0_32] : memref<256x288xbf16, #tpu.memory_space<vmem>>, vector<256x32xbf16>
    tpu.vector_store %arg10[%c0_31, %c0_32], %55 {strides = array<i32>} : memref<256x288xbf16, #tpu.memory_space<vmem>>, vector<256x32xbf16>,
    %c16 = arith.constant 16 : index
    %c0_33 = arith.constant 0 : index
    %57 = vector.load %arg9[%c16, %c0_33] : memref<320x32xbf16, #tpu.memory_space<vmem>>, vector<256x32xbf16>
    %c0_34 = arith.constant 0 : index
    %c32_35 = arith.constant 32 : index
    %58 = vector.load %arg10[%c0_34, %c32_35] : memref<256x288xbf16, #tpu.memory_space<vmem>>, vector<256x32xbf16>
    tpu.vector_store %arg10[%c0_34, %c32_35], %57 {strides = array<i32>} : memref<256x288xbf16, #tpu.memory_space<vmem>>, vector<256x32xbf16>,
    %c17 = arith.constant 17 : index
    %c0_36 = arith.constant 0 : index
    %59 = vector.load %arg9[%c17, %c0_36] : memref<320x32xbf16, #tpu.memory_space<vmem>>, vector<256x32xbf16>
    %cst_37 = arith.constant 0.000000e+00 : bf16
    %60 = vector.broadcast %cst_37 : bf16 to vector<256x32xbf16>
    %61 = vector.shape_cast %30 : vector<256x1xi1> to vector<256x1xi1>
    %62 = vector.broadcast %61 : vector<256x1xi1> to vector<256x32xi1>
    %63 = arith.select %62, %59, %60 : vector<256x32xi1>, vector<256x32xbf16>
    %c0_38 = arith.constant 0 : index
    %c64 = arith.constant 64 : index
    %64 = vector.load %arg10[%c0_38, %c64] : memref<256x288xbf16, #tpu.memory_space<vmem>>, vector<256x32xbf16>
    tpu.vector_store %arg10[%c0_38, %c64], %63 {strides = array<i32>} : memref<256x288xbf16, #tpu.memory_space<vmem>>, vector<256x32xbf16>,
    %c31 = arith.constant 31 : index
    %c0_39 = arith.constant 0 : index
    %65 = vector.load %arg9[%c31, %c0_39] : memref<320x32xbf16, #tpu.memory_space<vmem>>, vector<256x32xbf16>
    %cst_40 = arith.constant 0.000000e+00 : bf16
    %66 = vector.broadcast %cst_40 : bf16 to vector<256x32xbf16>
    %67 = vector.shape_cast %28 : vector<256x1xi1> to vector<256x1xi1>
    %68 = vector.broadcast %67 : vector<256x1xi1> to vector<256x32xi1>
    %69 = arith.select %68, %65, %66 : vector<256x32xi1>, vector<256x32xbf16>
    %c0_41 = arith.constant 0 : index
    %c96 = arith.constant 96 : index
    %70 = vector.load %arg10[%c0_41, %c96] : memref<256x288xbf16, #tpu.memory_space<vmem>>, vector<256x32xbf16>
    tpu.vector_store %arg10[%c0_41, %c96], %69 {strides = array<i32>} : memref<256x288xbf16, #tpu.memory_space<vmem>>, vector<256x32xbf16>,
    %c32_42 = arith.constant 32 : index
    %c0_43 = arith.constant 0 : index
    %71 = vector.load %arg9[%c32_42, %c0_43] : memref<320x32xbf16, #tpu.memory_space<vmem>>, vector<256x32xbf16>
    %c0_44 = arith.constant 0 : index
    %c128 = arith.constant 128 : index
    %72 = vector.load %arg10[%c0_44, %c128] : memref<256x288xbf16, #tpu.memory_space<vmem>>, vector<256x32xbf16>
    tpu.vector_store %arg10[%c0_44, %c128], %71 {strides = array<i32>} : memref<256x288xbf16, #tpu.memory_space<vmem>>, vector<256x32xbf16>,
    %c33 = arith.constant 33 : index
    %c0_45 = arith.constant 0 : index
    %73 = vector.load %arg9[%c33, %c0_45] : memref<320x32xbf16, #tpu.memory_space<vmem>>, vector<256x32xbf16>
    %cst_46 = arith.constant 0.000000e+00 : bf16
    %74 = vector.broadcast %cst_46 : bf16 to vector<256x32xbf16>
    %75 = vector.shape_cast %30 : vector<256x1xi1> to vector<256x1xi1>
    %76 = vector.broadcast %75 : vector<256x1xi1> to vector<256x32xi1>
    %77 = arith.select %76, %73, %74 : vector<256x32xi1>, vector<256x32xbf16>
    %c0_47 = arith.constant 0 : index
    %c160 = arith.constant 160 : index
    %78 = vector.load %arg10[%c0_47, %c160] : memref<256x288xbf16, #tpu.memory_space<vmem>>, vector<256x32xbf16>
    tpu.vector_store %arg10[%c0_47, %c160], %77 {strides = array<i32>} : memref<256x288xbf16, #tpu.memory_space<vmem>>, vector<256x32xbf16>,
    %c47 = arith.constant 47 : index
    %c0_48 = arith.constant 0 : index
    %79 = vector.load %arg9[%c47, %c0_48] : memref<320x32xbf16, #tpu.memory_space<vmem>>, vector<256x32xbf16>
    %cst_49 = arith.constant 0.000000e+00 : bf16
    %80 = vector.broadcast %cst_49 : bf16 to vector<256x32xbf16>
    %81 = vector.shape_cast %28 : vector<256x1xi1> to vector<256x1xi1>
    %82 = vector.broadcast %81 : vector<256x1xi1> to vector<256x32xi1>
    %83 = arith.select %82, %79, %80 : vector<256x32xi1>, vector<256x32xbf16>
    %c0_50 = arith.constant 0 : index
    %c192 = arith.constant 192 : index
    %84 = vector.load %arg10[%c0_50, %c192] : memref<256x288xbf16, #tpu.memory_space<vmem>>, vector<256x32xbf16>
    tpu.vector_store %arg10[%c0_50, %c192], %83 {strides = array<i32>} : memref<256x288xbf16, #tpu.memory_space<vmem>>, vector<256x32xbf16>,
    %c48 = arith.constant 48 : index
    %c0_51 = arith.constant 0 : index
    %85 = vector.load %arg9[%c48, %c0_51] : memref<320x32xbf16, #tpu.memory_space<vmem>>, vector<256x32xbf16>
    %c0_52 = arith.constant 0 : index
    %c224 = arith.constant 224 : index
    %86 = vector.load %arg10[%c0_52, %c224] : memref<256x288xbf16, #tpu.memory_space<vmem>>, vector<256x32xbf16>
    tpu.vector_store %arg10[%c0_52, %c224], %85 {strides = array<i32>} : memref<256x288xbf16, #tpu.memory_space<vmem>>, vector<256x32xbf16>,
    %c49 = arith.constant 49 : index
    %c0_53 = arith.constant 0 : index
    %87 = vector.load %arg9[%c49, %c0_53] : memref<320x32xbf16, #tpu.memory_space<vmem>>, vector<256x32xbf16>
    %cst_54 = arith.constant 0.000000e+00 : bf16
    %88 = vector.broadcast %cst_54 : bf16 to vector<256x32xbf16>
    %89 = vector.shape_cast %30 : vector<256x1xi1> to vector<256x1xi1>
    %90 = vector.broadcast %89 : vector<256x1xi1> to vector<256x32xi1>
    %91 = arith.select %90, %87, %88 : vector<256x32xi1>, vector<256x32xbf16>
    %c0_55 = arith.constant 0 : index
    %c256 = arith.constant 256 : index
    %92 = vector.load %arg10[%c0_55, %c256] : memref<256x288xbf16, #tpu.memory_space<vmem>>, vector<256x32xbf16>
    tpu.vector_store %arg10[%c0_55, %c256], %91 {strides = array<i32>} : memref<256x288xbf16, #tpu.memory_space<vmem>>, vector<256x32xbf16>,
    %c0_56 = arith.constant 0 : index
    %c0_57 = arith.constant 0 : index
    %93 = vector.load %arg10[%c0_56, %c0_57] : memref<256x288xbf16, #tpu.memory_space<vmem>>, vector<256x288xbf16>
    %c0_58 = arith.constant 0 : index
    %c0_59 = arith.constant 0 : index
    %94 = vector.load %arg4[%c0_58, %c0_59] : memref<288x8xbf16, #tpu.memory_space<vmem>>, vector<288x8xbf16>
    %cst_60 = arith.constant dense<0.000000e+00> : vector<256x8xf32>
    %95 = tpu.matmul %93, %94, %cst_60 {dimension_numbers = #tpu.dot_dimension_numbers<[1], [0], [0], [1], [0, 0, 1, 1], [], []>} : vector<256x288xbf16>, vector<288x8xbf16>, vector<256x8xf32> -> vector<256x8xf32>
    %c0_61 = arith.constant 0 : index
    %c0_62 = arith.constant 0 : index
    %c8 = arith.constant 8 : index
    %96 = vector.load %arg8[%c0_61, %c0_62, %c8] : memref<1x256x128xf32, #tpu.memory_space<vmem>>, vector<1x256x8xf32>
    %97 = vector.shape_cast %96 : vector<1x256x8xf32> to vector<256x8xf32>
    %98 = vector.shape_cast %95 : vector<256x8xf32> to vector<1x256x8xf32>
    tpu.vector_store %arg8[%c0_61, %c0_62, %c8], %98 {strides = array<i32>} : memref<1x256x128xf32, #tpu.memory_space<vmem>>, vector<1x256x8xf32>,
    %c0_63 = arith.constant 0 : index
    %c0_64 = arith.constant 0 : index
    %c0_65 = arith.constant 0 : index
    %99 = vector.load %arg8[%c0_63, %c0_64, %c0_65] : memref<1x256x128xf32, #tpu.memory_space<vmem>>, vector<1x256x16xf32>
    %100 = vector.shape_cast %99 : vector<1x256x16xf32> to vector<256x16xf32>
    %c0_66 = arith.constant 0 : index
    %c0_67 = arith.constant 0 : index
    %101 = vector.load %arg5[%c0_66, %c0_67] : memref<3x32xf32, #tpu.memory_space<vmem>>, vector<1x16xf32>
    %102 = vector.broadcast %101 : vector<1x16xf32> to vector<256x16xf32>
    %103 = arith.mulf %100, %102 : vector<256x16xf32>
    %c1_68 = arith.constant 1 : index
    %c0_69 = arith.constant 0 : index
    %104 = vector.load %arg5[%c1_68, %c0_69] : memref<3x32xf32, #tpu.memory_space<vmem>>, vector<1x16xf32>
    %105 = vector.broadcast %104 : vector<1x16xf32> to vector<256x16xf32>
    %106 = arith.addf %103, %105 : vector<256x16xf32>
    %cst_70 = arith.constant 0.000000e+00 : f32
    %107 = vector.broadcast %cst_70 : f32 to vector<256x16xf32>
    %108 = arith.maximumf %106, %107 : vector<256x16xf32>
    %109 = arith.truncf %108 : vector<256x16xf32> to vector<256x16xbf16>
    %c0_71 = arith.constant 0 : index
    %c0_72 = arith.constant 0 : index
    %110 = vector.load %arg6[%c0_71, %c0_72] : memref<16x32xbf16, #tpu.memory_space<vmem>>, vector<16x32xbf16>
    %cst_73 = arith.constant dense<0.000000e+00> : vector<256x32xf32>
    %111 = tpu.matmul %109, %110, %cst_73 {dimension_numbers = #tpu.dot_dimension_numbers<[1], [0], [0], [1], [0, 0, 1, 1], [], []>} : vector<256x16xbf16>, vector<16x32xbf16>, vector<256x32xf32> -> vector<256x32xf32>
    %c2_74 = arith.constant 2 : index
    %c0_75 = arith.constant 0 : index
    %112 = vector.load %arg5[%c2_74, %c0_75] : memref<3x32xf32, #tpu.memory_space<vmem>>, vector<1x32xf32>
    %113 = vector.broadcast %112 : vector<1x32xf32> to vector<256x32xf32>
    %114 = arith.addf %111, %113 : vector<256x32xf32>
    %cst_76 = arith.constant 0.000000e+00 : f32
    %115 = vector.broadcast %cst_76 : f32 to vector<256x32xf32>
    %116 = arith.maximumf %114, %115 : vector<256x32xf32>
    %117 = arith.truncf %116 : vector<256x32xf32> to vector<256x32xbf16>
    %c32_77 = arith.constant 32 : index
    %c0_78 = arith.constant 0 : index
    %118 = vector.load %arg9[%c32_77, %c0_78] : memref<320x32xbf16, #tpu.memory_space<vmem>>, vector<256x32xbf16>
    tpu.vector_store %arg9[%c32_77, %c0_78], %117 {strides = array<i32>} : memref<320x32xbf16, #tpu.memory_space<vmem>>, vector<256x32xbf16>,
    %c15_79 = arith.constant 15 : index
    %c0_80 = arith.constant 0 : index
    %119 = vector.load %arg9[%c15_79, %c0_80] : memref<320x32xbf16, #tpu.memory_space<vmem>>, vector<256x32xbf16>
    %cst_81 = arith.constant 0.000000e+00 : bf16
    %120 = vector.broadcast %cst_81 : bf16 to vector<256x32xbf16>
    %121 = vector.shape_cast %28 : vector<256x1xi1> to vector<256x1xi1>
    %122 = vector.broadcast %121 : vector<256x1xi1> to vector<256x32xi1>
    %123 = arith.select %122, %119, %120 : vector<256x32xi1>, vector<256x32xbf16>
    %c0_82 = arith.constant 0 : index
    %c0_83 = arith.constant 0 : index
    %124 = vector.load %arg10[%c0_82, %c0_83] : memref<256x288xbf16, #tpu.memory_space<vmem>>, vector<256x32xbf16>
    tpu.vector_store %arg10[%c0_82, %c0_83], %123 {strides = array<i32>} : memref<256x288xbf16, #tpu.memory_space<vmem>>, vector<256x32xbf16>,
    %c16_84 = arith.constant 16 : index
    %c0_85 = arith.constant 0 : index
    %125 = vector.load %arg9[%c16_84, %c0_85] : memref<320x32xbf16, #tpu.memory_space<vmem>>, vector<256x32xbf16>
    %c0_86 = arith.constant 0 : index
    %c32_87 = arith.constant 32 : index
    %126 = vector.load %arg10[%c0_86, %c32_87] : memref<256x288xbf16, #tpu.memory_space<vmem>>, vector<256x32xbf16>
    tpu.vector_store %arg10[%c0_86, %c32_87], %125 {strides = array<i32>} : memref<256x288xbf16, #tpu.memory_space<vmem>>, vector<256x32xbf16>,
    %c17_88 = arith.constant 17 : index
    %c0_89 = arith.constant 0 : index
    %127 = vector.load %arg9[%c17_88, %c0_89] : memref<320x32xbf16, #tpu.memory_space<vmem>>, vector<256x32xbf16>
    %cst_90 = arith.constant 0.000000e+00 : bf16
    %128 = vector.broadcast %cst_90 : bf16 to vector<256x32xbf16>
    %129 = vector.shape_cast %30 : vector<256x1xi1> to vector<256x1xi1>
    %130 = vector.broadcast %129 : vector<256x1xi1> to vector<256x32xi1>
    %131 = arith.select %130, %127, %128 : vector<256x32xi1>, vector<256x32xbf16>
    %c0_91 = arith.constant 0 : index
    %c64_92 = arith.constant 64 : index
    %132 = vector.load %arg10[%c0_91, %c64_92] : memref<256x288xbf16, #tpu.memory_space<vmem>>, vector<256x32xbf16>
    tpu.vector_store %arg10[%c0_91, %c64_92], %131 {strides = array<i32>} : memref<256x288xbf16, #tpu.memory_space<vmem>>, vector<256x32xbf16>,
    %c31_93 = arith.constant 31 : index
    %c0_94 = arith.constant 0 : index
    %133 = vector.load %arg9[%c31_93, %c0_94] : memref<320x32xbf16, #tpu.memory_space<vmem>>, vector<256x32xbf16>
    %cst_95 = arith.constant 0.000000e+00 : bf16
    %134 = vector.broadcast %cst_95 : bf16 to vector<256x32xbf16>
    %135 = vector.shape_cast %28 : vector<256x1xi1> to vector<256x1xi1>
    %136 = vector.broadcast %135 : vector<256x1xi1> to vector<256x32xi1>
    %137 = arith.select %136, %133, %134 : vector<256x32xi1>, vector<256x32xbf16>
    %c0_96 = arith.constant 0 : index
    %c96_97 = arith.constant 96 : index
    %138 = vector.load %arg10[%c0_96, %c96_97] : memref<256x288xbf16, #tpu.memory_space<vmem>>, vector<256x32xbf16>
    tpu.vector_store %arg10[%c0_96, %c96_97], %137 {strides = array<i32>} : memref<256x288xbf16, #tpu.memory_space<vmem>>, vector<256x32xbf16>,
    %c32_98 = arith.constant 32 : index
    %c0_99 = arith.constant 0 : index
    %139 = vector.load %arg9[%c32_98, %c0_99] : memref<320x32xbf16, #tpu.memory_space<vmem>>, vector<256x32xbf16>
    %c0_100 = arith.constant 0 : index
    %c128_101 = arith.constant 128 : index
    %140 = vector.load %arg10[%c0_100, %c128_101] : memref<256x288xbf16, #tpu.memory_space<vmem>>, vector<256x32xbf16>
    tpu.vector_store %arg10[%c0_100, %c128_101], %139 {strides = array<i32>} : memref<256x288xbf16, #tpu.memory_space<vmem>>, vector<256x32xbf16>,
    %c33_102 = arith.constant 33 : index
    %c0_103 = arith.constant 0 : index
    %141 = vector.load %arg9[%c33_102, %c0_103] : memref<320x32xbf16, #tpu.memory_space<vmem>>, vector<256x32xbf16>
    %cst_104 = arith.constant 0.000000e+00 : bf16
    %142 = vector.broadcast %cst_104 : bf16 to vector<256x32xbf16>
    %143 = vector.shape_cast %30 : vector<256x1xi1> to vector<256x1xi1>
    %144 = vector.broadcast %143 : vector<256x1xi1> to vector<256x32xi1>
    %145 = arith.select %144, %141, %142 : vector<256x32xi1>, vector<256x32xbf16>
    %c0_105 = arith.constant 0 : index
    %c160_106 = arith.constant 160 : index
    %146 = vector.load %arg10[%c0_105, %c160_106] : memref<256x288xbf16, #tpu.memory_space<vmem>>, vector<256x32xbf16>
    tpu.vector_store %arg10[%c0_105, %c160_106], %145 {strides = array<i32>} : memref<256x288xbf16, #tpu.memory_space<vmem>>, vector<256x32xbf16>,
    %c47_107 = arith.constant 47 : index
    %c0_108 = arith.constant 0 : index
    %147 = vector.load %arg9[%c47_107, %c0_108] : memref<320x32xbf16, #tpu.memory_space<vmem>>, vector<256x32xbf16>
    %cst_109 = arith.constant 0.000000e+00 : bf16
    %148 = vector.broadcast %cst_109 : bf16 to vector<256x32xbf16>
    %149 = vector.shape_cast %28 : vector<256x1xi1> to vector<256x1xi1>
    %150 = vector.broadcast %149 : vector<256x1xi1> to vector<256x32xi1>
    %151 = arith.select %150, %147, %148 : vector<256x32xi1>, vector<256x32xbf16>
    %c0_110 = arith.constant 0 : index
    %c192_111 = arith.constant 192 : index
    %152 = vector.load %arg10[%c0_110, %c192_111] : memref<256x288xbf16, #tpu.memory_space<vmem>>, vector<256x32xbf16>
    tpu.vector_store %arg10[%c0_110, %c192_111], %151 {strides = array<i32>} : memref<256x288xbf16, #tpu.memory_space<vmem>>, vector<256x32xbf16>,
    %c48_112 = arith.constant 48 : index
    %c0_113 = arith.constant 0 : index
    %153 = vector.load %arg9[%c48_112, %c0_113] : memref<320x32xbf16, #tpu.memory_space<vmem>>, vector<256x32xbf16>
    %c0_114 = arith.constant 0 : index
    %c224_115 = arith.constant 224 : index
    %154 = vector.load %arg10[%c0_114, %c224_115] : memref<256x288xbf16, #tpu.memory_space<vmem>>, vector<256x32xbf16>
    tpu.vector_store %arg10[%c0_114, %c224_115], %153 {strides = array<i32>} : memref<256x288xbf16, #tpu.memory_space<vmem>>, vector<256x32xbf16>,
    %c49_116 = arith.constant 49 : index
    %c0_117 = arith.constant 0 : index
    %155 = vector.load %arg9[%c49_116, %c0_117] : memref<320x32xbf16, #tpu.memory_space<vmem>>, vector<256x32xbf16>
    %cst_118 = arith.constant 0.000000e+00 : bf16
    %156 = vector.broadcast %cst_118 : bf16 to vector<256x32xbf16>
    %157 = vector.shape_cast %30 : vector<256x1xi1> to vector<256x1xi1>
    %158 = vector.broadcast %157 : vector<256x1xi1> to vector<256x32xi1>
    %159 = arith.select %158, %155, %156 : vector<256x32xi1>, vector<256x32xbf16>
    %c0_119 = arith.constant 0 : index
    %c256_120 = arith.constant 256 : index
    %160 = vector.load %arg10[%c0_119, %c256_120] : memref<256x288xbf16, #tpu.memory_space<vmem>>, vector<256x32xbf16>
    tpu.vector_store %arg10[%c0_119, %c256_120], %159 {strides = array<i32>} : memref<256x288xbf16, #tpu.memory_space<vmem>>, vector<256x32xbf16>,
    %c0_121 = arith.constant 0 : index
    %c0_122 = arith.constant 0 : index
    %161 = vector.load %arg10[%c0_121, %c0_122] : memref<256x288xbf16, #tpu.memory_space<vmem>>, vector<256x288xbf16>
    %c0_123 = arith.constant 0 : index
    %c0_124 = arith.constant 0 : index
    %162 = vector.load %arg7[%c0_123, %c0_124] : memref<288x8xbf16, #tpu.memory_space<vmem>>, vector<288x8xbf16>
    %cst_125 = arith.constant dense<0.000000e+00> : vector<256x8xf32>
    %163 = tpu.matmul %161, %162, %cst_125 {dimension_numbers = #tpu.dot_dimension_numbers<[1], [0], [0], [1], [0, 0, 1, 1], [], []>} : vector<256x288xbf16>, vector<288x8xbf16>, vector<256x8xf32> -> vector<256x8xf32>
    %c0_126 = arith.constant 0 : index
    %c0_127 = arith.constant 0 : index
    %c16_128 = arith.constant 16 : index
    %164 = vector.load %arg8[%c0_126, %c0_127, %c16_128] : memref<1x256x128xf32, #tpu.memory_space<vmem>>, vector<1x256x8xf32>
    %165 = vector.shape_cast %164 : vector<1x256x8xf32> to vector<256x8xf32>
    %166 = vector.shape_cast %163 : vector<256x8xf32> to vector<1x256x8xf32>
    tpu.vector_store %arg8[%c0_126, %c0_127, %c16_128], %166 {strides = array<i32>} : memref<1x256x128xf32, #tpu.memory_space<vmem>>, vector<1x256x8xf32>,
    return
  }
  func.func @transform_0(%arg0: i32) -> (i32, i32, i32) {
    %c0_i32 = arith.constant 0 : i32
    %c0_i32_0 = arith.constant 0 : i32
    %c0_i32_1 = arith.constant 0 : i32
    return %arg0, %c0_i32, %c0_i32_0 : i32, i32, i32
  }
  func.func @transform_1(%arg0: i32) -> (i32, i32) {
    %c0_i32 = arith.constant 0 : i32
    %c0_i32_0 = arith.constant 0 : i32
    %c0_i32_1 = arith.constant 0 : i32
    return %c0_i32, %c0_i32_0 : i32, i32
  }
  func.func @transform_2(%arg0: i32) -> (i32, i32) {
    %c0_i32 = arith.constant 0 : i32
    %c0_i32_0 = arith.constant 0 : i32
    %c0_i32_1 = arith.constant 0 : i32
    return %c0_i32, %c0_i32_0 : i32, i32
  }
  func.func @transform_3(%arg0: i32) -> (i32, i32) {
    %c0_i32 = arith.constant 0 : i32
    %c0_i32_0 = arith.constant 0 : i32
    %c0_i32_1 = arith.constant 0 : i32
    return %c0_i32, %c0_i32_0 : i32, i32
  }
  func.func @transform_4(%arg0: i32) -> (i32, i32) {
    %c0_i32 = arith.constant 0 : i32
    %c0_i32_0 = arith.constant 0 : i32
    %c0_i32_1 = arith.constant 0 : i32
    return %c0_i32, %c0_i32_0 : i32, i32
  }
  func.func @transform_5(%arg0: i32) -> (i32, i32) {
    %c0_i32 = arith.constant 0 : i32
    %c0_i32_0 = arith.constant 0 : i32
    %c0_i32_1 = arith.constant 0 : i32
    return %c0_i32, %c0_i32_0 : i32, i32
  }
  func.func @transform_6(%arg0: i32) -> (i32, i32) {
    %c0_i32 = arith.constant 0 : i32
    %c0_i32_0 = arith.constant 0 : i32
    %c0_i32_1 = arith.constant 0 : i32
    return %c0_i32, %c0_i32_0 : i32, i32
  }
  func.func @transform_7(%arg0: i32) -> (i32, i32, i32) {
    %c0_i32 = arith.constant 0 : i32
    %c0_i32_0 = arith.constant 0 : i32
    %c0_i32_1 = arith.constant 0 : i32
    return %arg0, %c0_i32, %c0_i32_0 : i32, i32, i32
  }
}

</mosaic_0001>

<llo_original>
// kernel: dense_block_forward.1
$region0: #{dense_block_forward.1}
  #allocation0 [shape = 'u32[]', space=smem, size = 0x4, offset = 0x4, fixed_abs, tag = 'smem constant byte address 0x4 - core index']
  #allocation1 [shape = 'u32[144,128]{1,0:T(1,128)}', space=vmem, size = 0x12000, scoped, tag = 'internal scratch']
  #allocation2 [shape = 'bf16[320,32]{1,0:T(16,128)(2,1)}', space=vmem, size = 0x14000, scoped, tag = 'scratch operand']
  #allocation3 [shape = 'bf16[256,288]{1,0:T(16,128)(2,1)}', space=vmem, size = 0x30000, scoped, tag = 'scratch operand']
  %s0 = inlined_call_operand.vmem [shape: f32[2,256,8], index: 0, kind: input, shape index: {}]
  %s1 = inlined_call_operand.vmem [shape: f32[3,32], index: 1, kind: input, shape index: {}]
  %s2 = inlined_call_operand.vmem [shape: bf16[8,32], index: 2, kind: input, shape index: {}]
  %s3 = inlined_call_operand.vmem [shape: bf16[288,8], index: 3, kind: input, shape index: {}]
  %s4 = inlined_call_operand.vmem [shape: f32[3,32], index: 4, kind: input, shape index: {}]
  %s5 = inlined_call_operand.vmem [shape: bf16[16,32], index: 5, kind: input, shape index: {}]
  %s6 = inlined_call_operand.vmem [shape: bf16[288,8], index: 6, kind: input, shape index: {}]
  %s7 = inlined_call_operand.hbm [shape: f32[2,256,128], index: 7, kind: output, shape index: {}]
  %s8 = sld [smem:[#allocation0]]
  $region61: #{dense_block_forward.1} parent=0
    _
  %s10 = ssub.s32 1, %s8
  %s11 = scalar_select 0, %s10, %s8
  $region1: #{dense_block_forward.1} parent=0
    #allocation4 [shape = 'u8[262144]{0}', space=vmem, size = 0x40000, scoped, tag = 'output window, operand 0']
    #allocation5 [shape = 's32[2]{0}', space=sflag, size = 0x8, scoped, tag = 'scoped memory for dense_block_forward.1']
    %12 = vsyncpa [#allocation5], 0
    %s13 = scalar_lea.sflag [#allocation5], 1
    %14 = vsyncpa %s13, 0
    loop: start=0, step=1, limit=4
    $region2: #{dense_block_forward.1} parent=1 // loop_pre_header
      _
    $region3: #{dense_block_forward.1} parent=1 // loop_header
      %s16 = sphi 0, %s20
      %p17 = scmp.ge.s32.totalorder %s16, 4
      %s26 = sphi 0, %s28
      %s29 = sphi 0, %s26
      %s30 = sphi 0, %s29
      %s46 = sphi 0, %s30
      %s50 = sphi 0, %s50
      %s52 = sphi 0, %s50
      %s53 = sphi 0, %s52
      %s67 = sphi 0, %s53
      %s71 = sphi 0, %s71
      %s73 = sphi 0, %s71
      %s74 = sphi 0, %s73
      %s88 = sphi 0, %s74
      %s92 = sphi 0, %s92
      %s94 = sphi 0, %s92
      %s95 = sphi 0, %s94
      %s109 = sphi 0, %s95
      %s113 = sphi 0, %s113
      %s115 = sphi 0, %s113
      %s116 = sphi 0, %s115
      %s130 = sphi 0, %s116
      %s134 = sphi 0, %s134
      %s136 = sphi 0, %s134
      %s137 = sphi 0, %s136
      %s151 = sphi 0, %s137
      %s155 = sphi 0, %s155
      %s157 = sphi 0, %s155
      %s158 = sphi 0, %s157
      %s172 = sphi 0, %s158
      %s178 = sphi 0, %s180
      %s181 = sphi 0, %s178
      %s182 = sphi 0, %s181
      %s198 = sphi 0, %s182
    $region4: #{dense_block_forward.1} parent=1 // loop_header_branch
      %19 = sbr.rel (%p17) target = $region8
    $region5: #{dense_block_forward.1} parent=1 // loop_body
      %s21 = ssub.s32 %s16, 1
      %s22 = ssub.s32 %s16, 2
      %s23 = sadd.s32 %s16, 1
      %s24 = ssub.s32 %s16, %s23
      %p25 = scmp.eq.s32.totalorder %s24, 0
      %s27 = sadd.s32 %s26, 1
      %s28 = scalar_select %p25, %s26, %s27
      %p31 = pneg %p25
      %p32 = scmp.eq.s32.totalorder %s16, 1
      %p33 = por %p31, %p32
      %p34 = scmp.ne.s32.totalorder %s26, %s29
      %p35 = scmp.eq.s32.totalorder %s16, 0
      %p36 = por %p34, %p35
      %p37 = scmp.ne.s32.totalorder %s26, %s29
      %p38 = scmp.eq.s32.totalorder %s21, 1
      %p39 = por %p37, %p38
      %p40 = scmp.ne.s32.totalorder %s29, %s30
      %p41 = scmp.eq.s32.totalorder %s21, 0
      %p42 = por %p40, %p41
      %p43 = scmp.ne.s32.totalorder %s29, %s30
      %p44 = scmp.eq.s32.totalorder %s22, 1
      %p45 = por %p43, %p44
      %p47 = scmp.ne.s32.totalorder %s30, %s46
      %p48 = scmp.eq.s32.totalorder %s22, 0
      %p49 = por %p47, %p48
      %s51 = sadd.s32 %s50, 1
      %p54 = scmp.eq.s32.totalorder %s16, 1
      %p55 = scmp.ne.s32.totalorder %s50, %s52
      %p56 = scmp.eq.s32.totalorder %s16, 0
      %p57 = por %p55, %p56
      %p58 = scmp.ne.s32.totalorder %s50, %s52
      %p59 = scmp.eq.s32.totalorder %s21, 1
      %p60 = por %p58, %p59
      %p61 = scmp.ne.s32.totalorder %s52, %s53
      %p62 = scmp.eq.s32.totalorder %s21, 0
      %p63 = por %p61, %p62
      %p64 = scmp.ne.s32.totalorder %s52, %s53
      %p65 = scmp.eq.s32.totalorder %s22, 1
      %p66 = por %p64, %p65
      %p68 = scmp.ne.s32.totalorder %s53, %s67
      %p69 = scmp.eq.s32.totalorder %s22, 0
      %p70 = por %p68, %p69
      %s72 = sadd.s32 %s71, 1
      %p75 = scmp.eq.s32.totalorder %s16, 1
      %p76 = scmp.ne.s32.totalorder %s71, %s73
      %p77 = scmp.eq.s32.totalorder %s16, 0
      %p78 = por %p76, %p77
      %p79 = scmp.ne.s32.totalorder %s71, %s73
      %p80 = scmp.eq.s32.totalorder %s21, 1
      %p81 = por %p79, %p80
      %p82 = scmp.ne.s32.totalorder %s73, %s74
      %p83 = scmp.eq.s32.totalorder %s21, 0
      %p84 = por %p82, %p83
      %p85 = scmp.ne.s32.totalorder %s73, %s74
      %p86 = scmp.eq.s32.totalorder %s22, 1
      %p87 = por %p85, %p86
      %p89 = scmp.ne.s32.totalorder %s74, %s88
      %p90 = scmp.eq.s32.totalorder %s22, 0
      %p91 = por %p89, %p90
      %s93 = sadd.s32 %s92, 1
      %p96 = scmp.eq.s32.totalorder %s16, 1
      %p97 = scmp.ne.s32.totalorder %s92, %s94
      %p98 = scmp.eq.s32.totalorder %s16, 0
      %p99 = por %p97, %p98
      %p100 = scmp.ne.s32.totalorder %s92, %s94
      %p101 = scmp.eq.s32.totalorder %s21, 1
      %p102 = por %p100, %p101
      %p103 = scmp.ne.s32.totalorder %s94, %s95
      %p104 = scmp.eq.s32.totalorder %s21, 0
      %p105 = por %p103, %p104
      %p106 = scmp.ne.s32.totalorder %s94, %s95
      %p107 = scmp.eq.s32.totalorder %s22, 1
      %p108 = por %p106, %p107
      %p110 = scmp.ne.s32.totalorder %s95, %s109
      %p111 = scmp.eq.s32.totalorder %s22, 0
      %p112 = por %p110, %p111
      %s114 = sadd.s32 %s113, 1
      %p117 = scmp.eq.s32.totalorder %s16, 1
      %p118 = scmp.ne.s32.totalorder %s113, %s115
      %p119 = scmp.eq.s32.totalorder %s16, 0
      %p120 = por %p118, %p119
      %p121 = scmp.ne.s32.totalorder %s113, %s115
      %p122 = scmp.eq.s32.totalorder %s21, 1
      %p123 = por %p121, %p122
      %p124 = scmp.ne.s32.totalorder %s115, %s116
      %p125 = scmp.eq.s32.totalorder %s21, 0
      %p126 = por %p124, %p125
      %p127 = scmp.ne.s32.totalorder %s115, %s116
      %p128 = scmp.eq.s32.totalorder %s22, 1
      %p129 = por %p127, %p128
      %p131 = scmp.ne.s32.totalorder %s116, %s130
      %p132 = scmp.eq.s32.totalorder %s22, 0
      %p133 = por %p131, %p132
      %s135 = sadd.s32 %s134, 1
      %p138 = scmp.eq.s32.totalorder %s16, 1
      %p139 = scmp.ne.s32.totalorder %s134, %s136
      %p140 = scmp.eq.s32.totalorder %s16, 0
      %p141 = por %p139, %p140
      %p142 = scmp.ne.s32.totalorder %s134, %s136
      %p143 = scmp.eq.s32.totalorder %s21, 1
      %p144 = por %p142, %p143
      %p145 = scmp.ne.s32.totalorder %s136, %s137
      %p146 = scmp.eq.s32.totalorder %s21, 0
      %p147 = por %p145, %p146
      %p148 = scmp.ne.s32.totalorder %s136, %s137
      %p149 = scmp.eq.s32.totalorder %s22, 1
      %p150 = por %p148, %p149
      %p152 = scmp.ne.s32.totalorder %s137, %s151
      %p153 = scmp.eq.s32.totalorder %s22, 0
      %p154 = por %p152, %p153
      %s156 = sadd.s32 %s155, 1
      %p159 = scmp.eq.s32.totalorder %s16, 1
      %p160 = scmp.ne.s32.totalorder %s155, %s157
      %p161 = scmp.eq.s32.totalorder %s16, 0
      %p162 = por %p160, %p161
      %p163 = scmp.ne.s32.totalorder %s155, %s157
      %p164 = scmp.eq.s32.totalorder %s21, 1
      %p165 = por %p163, %p164
      %p166 = scmp.ne.s32.totalorder %s157, %s158
      %p167 = scmp.eq.s32.totalorder %s21, 0
      %p168 = por %p166, %p167
      %p169 = scmp.ne.s32.totalorder %s157, %s158
      %p170 = scmp.eq.s32.totalorder %s22, 1
      %p171 = por %p169, %p170
      %p173 = scmp.ne.s32.totalorder %s158, %s172
      %p174 = scmp.eq.s32.totalorder %s22, 0
      %p175 = por %p173, %p174
      %s176 = ssub.s32 %s16, %s23
      %p177 = scmp.eq.s32.totalorder %s176, 0
      %s179 = sadd.s32 %s178, 1
      %s180 = scalar_select %p177, %s178, %s179
      %p183 = pneg %p177
      %p184 = scmp.eq.s32.totalorder %s16, 1
      %p185 = por %p183, %p184
      %p186 = scmp.ne.s32.totalorder %s178, %s181
      %p187 = scmp.eq.s32.totalorder %s16, 0
      %p188 = por %p186, %p187
      %p189 = scmp.ne.s32.totalorder %s178, %s181
      %p190 = scmp.eq.s32.totalorder %s21, 1
      %p191 = por %p189, %p190
      %p192 = scmp.ne.s32.totalorder %s181, %s182
      %p193 = scmp.eq.s32.totalorder %s21, 0
      %p194 = por %p192, %p193
      %p195 = scmp.ne.s32.totalorder %s181, %s182
      %p196 = scmp.eq.s32.totalorder %s22, 1
      %p197 = por %p195, %p196
      %p199 = scmp.ne.s32.totalorder %s182, %s198
      %p200 = scmp.eq.s32.totalorder %s22, 0
      %p201 = por %p199, %p200
      %p202 = scmp.le.s32.totalorder 1, %s16
      %p203 = scmp.lt.s32.totalorder %s16, 3
      %p204 = pnand %p202, %p203
      %p205 = pneg %p204
      // Predicated region
      $region9: #{dense_block_forward.1} parent=5 // pred_check
        _
      $region10: #{dense_block_forward.1} parent=5 // pred_check_branch
        %207 = sbr.rel (%p204) target = $region12
      $region11: #{dense_block_forward.1} parent=5 // pred_region
        %s208 = ssub.s32 %s16, 1
        // Predicated region
        $region13: #{dense_block_forward.1} parent=11 // pred_check
          %p209 = pneg %p63
        $region14: #{dense_block_forward.1} parent=11 // pred_check_branch
          %211 = sbr.rel (%p209) target = $region16
        $region15: #{dense_block_forward.1} parent=11 // pred_region
          _
        $region16: #{dense_block_forward.1} parent=11 // pred_fallthru
          _
        // Predicated region
        $region17: #{dense_block_forward.1} parent=11 // pred_check
          %p212 = pneg %p84
        $region18: #{dense_block_forward.1} parent=11 // pred_check_branch
          %214 = sbr.rel (%p212) target = $region20
        $region19: #{dense_block_forward.1} parent=11 // pred_region
          _
        $region20: #{dense_block_forward.1} parent=11 // pred_fallthru
          _
        // Predicated region
        $region21: #{dense_block_forward.1} parent=11 // pred_check
          %p215 = pneg %p105
        $region22: #{dense_block_forward.1} parent=11 // pred_check_branch
          %217 = sbr.rel (%p215) target = $region24
        $region23: #{dense_block_forward.1} parent=11 // pred_region
          _
        $region24: #{dense_block_forward.1} parent=11 // pred_fallthru
          _
        // Predicated region
        $region25: #{dense_block_forward.1} parent=11 // pred_check
          %p218 = pneg %p126
        $region26: #{dense_block_forward.1} parent=11 // pred_check_branch
          %220 = sbr.rel (%p218) target = $region28
        $region27: #{dense_block_forward.1} parent=11 // pred_region
          _
        $region28: #{dense_block_forward.1} parent=11 // pred_fallthru
          _
        // Predicated region
        $region29: #{dense_block_forward.1} parent=11 // pred_check
          %p221 = pneg %p147
        $region30: #{dense_block_forward.1} parent=11 // pred_check_branch
          %223 = sbr.rel (%p221) target = $region32
        $region31: #{dense_block_forward.1} parent=11 // pred_region
          _
        $region32: #{dense_block_forward.1} parent=11 // pred_fallthru
          _
        // Predicated region
        $region33: #{dense_block_forward.1} parent=11 // pred_check
          %p224 = pneg %p168
        $region34: #{dense_block_forward.1} parent=11 // pred_check_branch
          %226 = sbr.rel (%p224) target = $region36
        $region35: #{dense_block_forward.1} parent=11 // pred_region
          _
        $region36: #{dense_block_forward.1} parent=11 // pred_fallthru
          _
      $region12: #{dense_block_forward.1} parent=5 // pred_fallthru
        _
      %p227 = scmp.lt.s32.totalorder %s16, 2
      // Predicated region
      $region37: #{dense_block_forward.1} parent=5 // pred_check
        %p228 = pneg %p227
      $region38: #{dense_block_forward.1} parent=5 // pred_check_branch
        %230 = sbr.rel (%p228) target = $region40
      $region39: #{dense_block_forward.1} parent=5 // pred_region
        // Predicated region
        $region41: #{dense_block_forward.1} parent=39 // pred_check
          %p231 = pneg %p36
        $region42: #{dense_block_forward.1} parent=39 // pred_check_branch
          %233 = sbr.rel (%p231) target = $region44
        $region43: #{dense_block_forward.1} parent=39 // pred_region
          %p234 = scmp.lt.s32.totalorder %s16, 1
          %s235 = scalar_select %p234, %s16, 1
          %s236 = smul.addr %s235, 32
          %s237 = smul.addr %s236, 8
          %s238 = scalar_lea.vmem %s0, %s237
        $region44: #{dense_block_forward.1} parent=39 // pred_fallthru
          _
      $region40: #{dense_block_forward.1} parent=5 // pred_fallthru
        _
      %p239 = scmp.le.s32.totalorder 1, %s16
      %p240 = scmp.lt.s32.totalorder %s16, 3
      %p241 = pnand %p239, %p240
      %p242 = pneg %p241
      // Predicated region
      $region45: #{dense_block_forward.1} parent=5 // pred_check
        _
      $region46: #{dense_block_forward.1} parent=5 // pred_check_branch
        %244 = sbr.rel (%p241) target = $region48
      $region47: #{dense_block_forward.1} parent=5 // pred_region
        %s245 = ssub.s32 %s16, 1
        %p246 = scmp.lt.s32.totalorder %s21, 1
        %s247 = scalar_select %p246, %s21, 1
        %s248 = smul.addr %s247, 32
        %s249 = smul.addr %s248, 8
        %s250 = scalar_lea.vmem %s0, %s249
        %p251 = pneg %p42
        %p252 = pneg %p39
        %p253 = pneg %p63
        %p254 = pneg %p60
        %p255 = pneg %p84
        %p256 = pneg %p81
        %p257 = pneg %p105
        %p258 = pneg %p102
        %p259 = pneg %p126
        %p260 = pneg %p123
        %p261 = pneg %p147
        %p262 = pneg %p144
        %p263 = pneg %p168
        %p264 = pneg %p165
        %p265 = pneg %p194
        %p266 = pneg %p191
        %s267 = sand.u32 %s181, 1
        %s268 = scalar_lea.sflag [#allocation5], %s267
        %s269 = sand.u32 %s181, 1
        %s270 = smul.addr %s269, 256
        %s271 = scalar_lea.vmem [#allocation4], %s270
        %p272 = scmp.lt.s32.totalorder %s21, 1
        %s273 = scalar_select %p272, %s21, 1
        %s274 = smul.addr %s273, 32
        %s275 = smul.addr %s274, 8
        %s276 = scalar_lea.vmem %s0, %s275
        %280 = vst [vmem:[%s271] sm:$0xff] 0.0
        %281 = vst [vmem:[%s271 + $0x8] sm:$0xff] 0.0
        %282 = vst [vmem:[%s271 + $0x10] sm:$0xff] 0.0
        %283 = vst [vmem:[%s271 + $0x18] sm:$0xff] 0.0
        %284 = vst [vmem:[%s271 + $0x20] sm:$0xff] 0.0
        %285 = vst [vmem:[%s271 + $0x28] sm:$0xff] 0.0
        %286 = vst [vmem:[%s271 + $0x30] sm:$0xff] 0.0
        %287 = vst [vmem:[%s271 + $0x38] sm:$0xff] 0.0
        %288 = vst [vmem:[%s271 + $0x40] sm:$0xff] 0.0
        %289 = vst [vmem:[%s271 + $0x48] sm:$0xff] 0.0
        %290 = vst [vmem:[%s271 + $0x50] sm:$0xff] 0.0
        %291 = vst [vmem:[%s271 + $0x58] sm:$0xff] 0.0
        %292 = vst [vmem:[%s271 + $0x60] sm:$0xff] 0.0
        %293 = vst [vmem:[%s271 + $0x68] sm:$0xff] 0.0
        %294 = vst [vmem:[%s271 + $0x70] sm:$0xff] 0.0
        %295 = vst [vmem:[%s271 + $0x78] sm:$0xff] 0.0
        %296 = vst [vmem:[%s271 + $0x80] sm:$0xff] 0.0
        %297 = vst [vmem:[%s271 + $0x88] sm:$0xff] 0.0
        %298 = vst [vmem:[%s271 + $0x90] sm:$0xff] 0.0
        %299 = vst [vmem:[%s271 + $0x98] sm:$0xff] 0.0
        %300 = vst [vmem:[%s271 + $0xa0] sm:$0xff] 0.0
        %301 = vst [vmem:[%s271 + $0xa8] sm:$0xff] 0.0
        %302 = vst [vmem:[%s271 + $0xb0] sm:$0xff] 0.0
        %303 = vst [vmem:[%s271 + $0xb8] sm:$0xff] 0.0
        %304 = vst [vmem:[%s271 + $0xc0] sm:$0xff] 0.0
        %305 = vst [vmem:[%s271 + $0xc8] sm:$0xff] 0.0
        %306 = vst [vmem:[%s271 + $0xd0] sm:$0xff] 0.0
        %307 = vst [vmem:[%s271 + $0xd8] sm:$0xff] 0.0
        %308 = vst [vmem:[%s271 + $0xe0] sm:$0xff] 0.0
        %309 = vst [vmem:[%s271 + $0xe8] sm:$0xff] 0.0
        %310 = vst [vmem:[%s271 + $0xf0] sm:$0xff] 0.0
        %311 = vst [vmem:[%s271 + $0xf8] sm:$0xff] 0.0
        %v312 = vld [vmem:[%s276] sm:$0xff]
        %v313 = vld [vmem:[%s276 + $0x8] sm:$0xff]
        %v314 = vld [vmem:[%s276 + $0x10] sm:$0xff]
        %v315 = vld [vmem:[%s276 + $0x18] sm:$0xff]
        %v316 = vld [vmem:[%s276 + $0x20] sm:$0xff]
        %v317 = vld [vmem:[%s276 + $0x28] sm:$0xff]
        %v318 = vld [vmem:[%s276 + $0x30] sm:$0xff]
        %v319 = vld [vmem:[%s276 + $0x38] sm:$0xff]
        %v320 = vld [vmem:[%s276 + $0x40] sm:$0xff]
        %v321 = vld [vmem:[%s276 + $0x48] sm:$0xff]
        %v322 = vld [vmem:[%s276 + $0x50] sm:$0xff]
        %v323 = vld [vmem:[%s276 + $0x58] sm:$0xff]
        %v324 = vld [vmem:[%s276 + $0x60] sm:$0xff]
        %v325 = vld [vmem:[%s276 + $0x68] sm:$0xff]
        %v326 = vld [vmem:[%s276 + $0x70] sm:$0xff]
        %v327 = vld [vmem:[%s276 + $0x78] sm:$0xff]
        %v328 = vld [vmem:[%s276 + $0x80] sm:$0xff]
        %v329 = vld [vmem:[%s276 + $0x88] sm:$0xff]
        %v330 = vld [vmem:[%s276 + $0x90] sm:$0xff]
        %v331 = vld [vmem:[%s276 + $0x98] sm:$0xff]
        %v332 = vld [vmem:[%s276 + $0xa0] sm:$0xff]
        %v333 = vld [vmem:[%s276 + $0xa8] sm:$0xff]
        %v334 = vld [vmem:[%s276 + $0xb0] sm:$0xff]
        %v335 = vld [vmem:[%s276 + $0xb8] sm:$0xff]
        %v336 = vld [vmem:[%s276 + $0xc0] sm:$0xff]
        %v337 = vld [vmem:[%s276 + $0xc8] sm:$0xff]
        %v338 = vld [vmem:[%s276 + $0xd0] sm:$0xff]
        %v339 = vld [vmem:[%s276 + $0xd8] sm:$0xff]
        %v340 = vld [vmem:[%s276 + $0xe0] sm:$0xff]
        %v341 = vld [vmem:[%s276 + $0xe8] sm:$0xff]
        %v342 = vld [vmem:[%s276 + $0xf0] sm:$0xff]
        %v343 = vld [vmem:[%s276 + $0xf8] sm:$0xff]
        %vm344 = vcmask 64512
        %345 = vst.msk [vmem:[%s271] sm:$0xff] %vm344, %v312
        %346 = vst.msk [vmem:[%s271 + $0x8] sm:$0xff] %vm344, %v313
        %347 = vst.msk [vmem:[%s271 + $0x10] sm:$0xff] %vm344, %v314
        %348 = vst.msk [vmem:[%s271 + $0x18] sm:$0xff] %vm344, %v315
        %349 = vst.msk [vmem:[%s271 + $0x20] sm:$0xff] %vm344, %v316
        %350 = vst.msk [vmem:[%s271 + $0x28] sm:$0xff] %vm344, %v317
        %351 = vst.msk [vmem:[%s271 + $0x30] sm:$0xff] %vm344, %v318
        %352 = vst.msk [vmem:[%s271 + $0x38] sm:$0xff] %vm344, %v319
        %353 = vst.msk [vmem:[%s271 + $0x40] sm:$0xff] %vm344, %v320
        %354 = vst.msk [vmem:[%s271 + $0x48] sm:$0xff] %vm344, %v321
        %355 = vst.msk [vmem:[%s271 + $0x50] sm:$0xff] %vm344, %v322
        %356 = vst.msk [vmem:[%s271 + $0x58] sm:$0xff] %vm344, %v323
        %357 = vst.msk [vmem:[%s271 + $0x60] sm:$0xff] %vm344, %v324
        %358 = vst.msk [vmem:[%s271 + $0x68] sm:$0xff] %vm344, %v325
        %359 = vst.msk [vmem:[%s271 + $0x70] sm:$0xff] %vm344, %v326
        %360 = vst.msk [vmem:[%s271 + $0x78] sm:$0xff] %vm344, %v327
        %361 = vst.msk [vmem:[%s271 + $0x80] sm:$0xff] %vm344, %v328
        %362 = vst.msk [vmem:[%s271 + $0x88] sm:$0xff] %vm344, %v329
        %363 = vst.msk [vmem:[%s271 + $0x90] sm:$0xff] %vm344, %v330
        %364 = vst.msk [vmem:[%s271 + $0x98] sm:$0xff] %vm344, %v331
        %365 = vst.msk [vmem:[%s271 + $0xa0] sm:$0xff] %vm344, %v332
        %366 = vst.msk [vmem:[%s271 + $0xa8] sm:$0xff] %vm344, %v333
        %367 = vst.msk [vmem:[%s271 + $0xb0] sm:$0xff] %vm344, %v334
        %368 = vst.msk [vmem:[%s271 + $0xb8] sm:$0xff] %vm344, %v335
        %369 = vst.msk [vmem:[%s271 + $0xc0] sm:$0xff] %vm344, %v336
        %370 = vst.msk [vmem:[%s271 + $0xc8] sm:$0xff] %vm344, %v337
        %371 = vst.msk [vmem:[%s271 + $0xd0] sm:$0xff] %vm344, %v338
        %372 = vst.msk [vmem:[%s271 + $0xd8] sm:$0xff] %vm344, %v339
        %373 = vst.msk [vmem:[%s271 + $0xe0] sm:$0xff] %vm344, %v340
        %374 = vst.msk [vmem:[%s271 + $0xe8] sm:$0xff] %vm344, %v341
        %375 = vst.msk [vmem:[%s271 + $0xf0] sm:$0xff] %vm344, %v342
        %376 = vst.msk [vmem:[%s271 + $0xf8] sm:$0xff] %vm344, %v343
        %vm377 = vcmask 261120
        %378 = vst.msk [vmem:[#allocation2] sm:$0xff] %vm377, 0
        %379 = vst.msk [vmem:[#allocation2 + $0x8] sm:$0xff] %vm377, 0
        %380 = vst.msk [vmem:[#allocation2 + $0x90] sm:$0xff] %vm377, 0
        %381 = vst.msk [vmem:[#allocation2 + $0x98] sm:$0xff] %vm377, 0
        %v382 = vlaneseq
        %v383 = vshrl.u32 %v382, 7
        %v384 = vadd.s32 %v383, 8
        %v385 = vadd.s32 %v383, 16
        %v386 = vadd.s32 %v383, 24
        %v387 = vadd.s32 %v383, 32
        %v388 = vadd.s32 %v383, 40
        %v389 = vadd.s32 %v383, 48
        %v390 = vadd.s32 %v383, 56
        %v391 = vadd.s32 %v383, 64
        %v392 = vadd.s32 %v383, 72
        %v393 = vadd.s32 %v383, 80
        %v394 = vadd.s32 %v383, 88
        %v395 = vadd.s32 %v383, 96
        %v396 = vadd.s32 %v383, 104
        %v397 = vadd.s32 %v383, 112
        %v398 = vadd.s32 %v383, 120
        %v399 = vadd.s32 %v383, 128
        %v400 = vadd.s32 %v383, 136
        %v401 = vadd.s32 %v383, 144
        %v402 = vadd.s32 %v383, 152
        %v403 = vadd.s32 %v383, 160
        %v404 = vadd.s32 %v383, 168
        %v405 = vadd.s32 %v383, 176
        %v406 = vadd.s32 %v383, 184
        %v407 = vadd.s32 %v383, 192
        %v408 = vadd.s32 %v383, 200
        %v409 = vadd.s32 %v383, 208
        %v410 = vadd.s32 %v383, 216
        %v411 = vadd.s32 %v383, 224
        %v412 = vadd.s32 %v383, 232
        %v413 = vadd.s32 %v383, 240
        %v414 = vadd.s32 %v383, 248
        %vm415 = vcmp.lt.s32.totalorder %v383, 0
        %v416 = vsub.s32 0, %v383
        %v417 = vsel %vm415, %v416, %v383
        %v418 = vshrl.u32 %v417, 4
        %v419 = vand.u32 %v417, 15
        %v420 = vsub.s32 0, %v419
        %v421 = vsel %vm415, %v420, %v419
        %vm422 = vcmp.lt.s32.totalorder %v384, 0
        %v423 = vsub.s32 0, %v384
        %v424 = vsel %vm422, %v423, %v384
        %v425 = vshrl.u32 %v424, 4
        %v426 = vand.u32 %v424, 15
        %v427 = vsub.s32 0, %v426
        %v428 = vsel %vm422, %v427, %v426
        %vm429 = vcmp.lt.s32.totalorder %v385, 0
        %v430 = vsub.s32 0, %v385
        %v431 = vsel %vm429, %v430, %v385
        %v432 = vshrl.u32 %v431, 4
        %v433 = vand.u32 %v431, 15
        %v434 = vsub.s32 0, %v433
        %v435 = vsel %vm429, %v434, %v433
        %vm436 = vcmp.lt.s32.totalorder %v386, 0
        %v437 = vsub.s32 0, %v386
        %v438 = vsel %vm436, %v437, %v386
        %v439 = vshrl.u32 %v438, 4
        %v440 = vand.u32 %v438, 15
        %v441 = vsub.s32 0, %v440
        %v442 = vsel %vm436, %v441, %v440
        %vm443 = vcmp.lt.s32.totalorder %v387, 0
        %v444 = vsub.s32 0, %v387
        %v445 = vsel %vm443, %v444, %v387
        %v446 = vshrl.u32 %v445, 4
        %v447 = vand.u32 %v445, 15
        %v448 = vsub.s32 0, %v447
        %v449 = vsel %vm443, %v448, %v447
        %vm450 = vcmp.lt.s32.totalorder %v388, 0
        %v451 = vsub.s32 0, %v388
        %v452 = vsel %vm450, %v451, %v388
        %v453 = vshrl.u32 %v452, 4
        %v454 = vand.u32 %v452, 15
        %v455 = vsub.s32 0, %v454
        %v456 = vsel %vm450, %v455, %v454
        %vm457 = vcmp.lt.s32.totalorder %v389, 0
        %v458 = vsub.s32 0, %v389
        %v459 = vsel %vm457, %v458, %v389
        %v460 = vshrl.u32 %v459, 4
        %v461 = vand.u32 %v459, 15
        %v462 = vsub.s32 0, %v461
        %v463 = vsel %vm457, %v462, %v461
        %vm464 = vcmp.lt.s32.totalorder %v390, 0
        %v465 = vsub.s32 0, %v390
        %v466 = vsel %vm464, %v465, %v390
        %v467 = vshrl.u32 %v466, 4
        %v468 = vand.u32 %v466, 15
        %v469 = vsub.s32 0, %v468
        %v470 = vsel %vm464, %v469, %v468
        %vm471 = vcmp.lt.s32.totalorder %v391, 0
        %v472 = vsub.s32 0, %v391
        %v473 = vsel %vm471, %v472, %v391
        %v474 = vshrl.u32 %v473, 4
        %v475 = vand.u32 %v473, 15
        %v476 = vsub.s32 0, %v475
        %v477 = vsel %vm471, %v476, %v475
        %vm478 = vcmp.lt.s32.totalorder %v392, 0
        %v479 = vsub.s32 0, %v392
        %v480 = vsel %vm478, %v479, %v392
        %v481 = vshrl.u32 %v480, 4
        %v482 = vand.u32 %v480, 15
        %v483 = vsub.s32 0, %v482
        %v484 = vsel %vm478, %v483, %v482
        %vm485 = vcmp.lt.s32.totalorder %v393, 0
        %v486 = vsub.s32 0, %v393
        %v487 = vsel %vm485, %v486, %v393
        %v488 = vshrl.u32 %v487, 4
        %v489 = vand.u32 %v487, 15
        %v490 = vsub.s32 0, %v489
        %v491 = vsel %vm485, %v490, %v489
        %vm492 = vcmp.lt.s32.totalorder %v394, 0
        %v493 = vsub.s32 0, %v394
        %v494 = vsel %vm492, %v493, %v394
        %v495 = vshrl.u32 %v494, 4
        %v496 = vand.u32 %v494, 15
        %v497 = vsub.s32 0, %v496
        %v498 = vsel %vm492, %v497, %v496
        %vm499 = vcmp.lt.s32.totalorder %v395, 0
        %v500 = vsub.s32 0, %v395
        %v501 = vsel %vm499, %v500, %v395
        %v502 = vshrl.u32 %v501, 4
        %v503 = vand.u32 %v501, 15
        %v504 = vsub.s32 0, %v503
        %v505 = vsel %vm499, %v504, %v503
        %vm506 = vcmp.lt.s32.totalorder %v396, 0
        %v507 = vsub.s32 0, %v396
        %v508 = vsel %vm506, %v507, %v396
        %v509 = vshrl.u32 %v508, 4
        %v510 = vand.u32 %v508, 15
        %v511 = vsub.s32 0, %v510
        %v512 = vsel %vm506, %v511, %v510
        %vm513 = vcmp.lt.s32.totalorder %v397, 0
        %v514 = vsub.s32 0, %v397
        %v515 = vsel %vm513, %v514, %v397
        %v516 = vshrl.u32 %v515, 4
        %v517 = vand.u32 %v515, 15
        %v518 = vsub.s32 0, %v517
        %v519 = vsel %vm513, %v518, %v517
        %vm520 = vcmp.lt.s32.totalorder %v398, 0
        %v521 = vsub.s32 0, %v398
        %v522 = vsel %vm520, %v521, %v398
        %v523 = vshrl.u32 %v522, 4
        %v524 = vand.u32 %v522, 15
        %v525 = vsub.s32 0, %v524
        %v526 = vsel %vm520, %v525, %v524
        %vm527 = vcmp.lt.s32.totalorder %v399, 0
        %v528 = vsub.s32 0, %v399
        %v529 = vsel %vm527, %v528, %v399
        %v530 = vshrl.u32 %v529, 4
        %v531 = vand.u32 %v529, 15
        %v532 = vsub.s32 0, %v531
        %v533 = vsel %vm527, %v532, %v531
        %vm534 = vcmp.lt.s32.totalorder %v400, 0
        %v535 = vsub.s32 0, %v400
        %v536 = vsel %vm534, %v535, %v400
        %v537 = vshrl.u32 %v536, 4
        %v538 = vand.u32 %v536, 15
        %v539 = vsub.s32 0, %v538
        %v540 = vsel %vm534, %v539, %v538
        %vm541 = vcmp.lt.s32.totalorder %v401, 0
        %v542 = vsub.s32 0, %v401
        %v543 = vsel %vm541, %v542, %v401
        %v544 = vshrl.u32 %v543, 4
        %v545 = vand.u32 %v543, 15
        %v546 = vsub.s32 0, %v545
        %v547 = vsel %vm541, %v546, %v545
        %vm548 = vcmp.lt.s32.totalorder %v402, 0
        %v549 = vsub.s32 0, %v402
        %v550 = vsel %vm548, %v549, %v402
        %v551 = vshrl.u32 %v550, 4
        %v552 = vand.u32 %v550, 15
        %v553 = vsub.s32 0, %v552
        %v554 = vsel %vm548, %v553, %v552
        %vm555 = vcmp.lt.s32.totalorder %v403, 0
        %v556 = vsub.s32 0, %v403
        %v557 = vsel %vm555, %v556, %v403
        %v558 = vshrl.u32 %v557, 4
        %v559 = vand.u32 %v557, 15
        %v560 = vsub.s32 0, %v559
        %v561 = vsel %vm555, %v560, %v559
        %vm562 = vcmp.lt.s32.totalorder %v404, 0
        %v563 = vsub.s32 0, %v404
        %v564 = vsel %vm562, %v563, %v404
        %v565 = vshrl.u32 %v564, 4
        %v566 = vand.u32 %v564, 15
        %v567 = vsub.s32 0, %v566
        %v568 = vsel %vm562, %v567, %v566
        %vm569 = vcmp.lt.s32.totalorder %v405, 0
        %v570 = vsub.s32 0, %v405
        %v571 = vsel %vm569, %v570, %v405
        %v572 = vshrl.u32 %v571, 4
        %v573 = vand.u32 %v571, 15
        %v574 = vsub.s32 0, %v573
        %v575 = vsel %vm569, %v574, %v573
        %vm576 = vcmp.lt.s32.totalorder %v406, 0
        %v577 = vsub.s32 0, %v406
        %v578 = vsel %vm576, %v577, %v406
        %v579 = vshrl.u32 %v578, 4
        %v580 = vand.u32 %v578, 15
        %v581 = vsub.s32 0, %v580
        %v582 = vsel %vm576, %v581, %v580
        %vm583 = vcmp.lt.s32.totalorder %v407, 0
        %v584 = vsub.s32 0, %v407
        %v585 = vsel %vm583, %v584, %v407
        %v586 = vshrl.u32 %v585, 4
        %v587 = vand.u32 %v585, 15
        %v588 = vsub.s32 0, %v587
        %v589 = vsel %vm583, %v588, %v587
        %vm590 = vcmp.lt.s32.totalorder %v408, 0
        %v591 = vsub.s32 0, %v408
        %v592 = vsel %vm590, %v591, %v408
        %v593 = vshrl.u32 %v592, 4
        %v594 = vand.u32 %v592, 15
        %v595 = vsub.s32 0, %v594
        %v596 = vsel %vm590, %v595, %v594
        %vm597 = vcmp.lt.s32.totalorder %v409, 0
        %v598 = vsub.s32 0, %v409
        %v599 = vsel %vm597, %v598, %v409
        %v600 = vshrl.u32 %v599, 4
        %v601 = vand.u32 %v599, 15
        %v602 = vsub.s32 0, %v601
        %v603 = vsel %vm597, %v602, %v601
        %vm604 = vcmp.lt.s32.totalorder %v410, 0
        %v605 = vsub.s32 0, %v410
        %v606 = vsel %vm604, %v605, %v410
        %v607 = vshrl.u32 %v606, 4
        %v608 = vand.u32 %v606, 15
        %v609 = vsub.s32 0, %v608
        %v610 = vsel %vm604, %v609, %v608
        %vm611 = vcmp.lt.s32.totalorder %v411, 0
        %v612 = vsub.s32 0, %v411
        %v613 = vsel %vm611, %v612, %v411
        %v614 = vshrl.u32 %v613, 4
        %v615 = vand.u32 %v613, 15
        %v616 = vsub.s32 0, %v615
        %v617 = vsel %vm611, %v616, %v615
        %vm618 = vcmp.lt.s32.totalorder %v412, 0
        %v619 = vsub.s32 0, %v412
        %v620 = vsel %vm618, %v619, %v412
        %v621 = vshrl.u32 %v620, 4
        %v622 = vand.u32 %v620, 15
        %v623 = vsub.s32 0, %v622
        %v624 = vsel %vm618, %v623, %v622
        %vm625 = vcmp.lt.s32.totalorder %v413, 0
        %v626 = vsub.s32 0, %v413
        %v627 = vsel %vm625, %v626, %v413
        %v628 = vshrl.u32 %v627, 4
        %v629 = vand.u32 %v627, 15
        %v630 = vsub.s32 0, %v629
        %v631 = vsel %vm625, %v630, %v629
        %vm632 = vcmp.lt.s32.totalorder %v414, 0
        %v633 = vsub.s32 0, %v414
        %v634 = vsel %vm632, %v633, %v414
        %v635 = vshrl.u32 %v634, 4
        %v636 = vand.u32 %v634, 15
        %v637 = vsub.s32 0, %v636
        %v638 = vsel %vm632, %v637, %v636
        %vm639 = vcmp.ne.s32.totalorder %v421, 0
        %vm640 = vcmp.ne.s32.totalorder %v428, 0
        %vm641 = vcmp.ne.s32.totalorder %v435, 0
        %vm642 = vcmp.ne.s32.totalorder %v442, 0
        %vm643 = vcmp.ne.s32.totalorder %v449, 0
        %vm644 = vcmp.ne.s32.totalorder %v456, 0
        %vm645 = vcmp.ne.s32.totalorder %v463, 0
        %vm646 = vcmp.ne.s32.totalorder %v470, 0
        %vm647 = vcmp.ne.s32.totalorder %v477, 0
        %vm648 = vcmp.ne.s32.totalorder %v484, 0
        %vm649 = vcmp.ne.s32.totalorder %v491, 0
        %vm650 = vcmp.ne.s32.totalorder %v498, 0
        %vm651 = vcmp.ne.s32.totalorder %v505, 0
        %vm652 = vcmp.ne.s32.totalorder %v512, 0
        %vm653 = vcmp.ne.s32.totalorder %v519, 0
        %vm654 = vcmp.ne.s32.totalorder %v526, 0
        %vm655 = vcmp.ne.s32.totalorder %v533, 0
        %vm656 = vcmp.ne.s32.totalorder %v540, 0
        %vm657 = vcmp.ne.s32.totalorder %v547, 0
        %vm658 = vcmp.ne.s32.totalorder %v554, 0
        %vm659 = vcmp.ne.s32.totalorder %v561, 0
        %vm660 = vcmp.ne.s32.totalorder %v568, 0
        %vm661 = vcmp.ne.s32.totalorder %v575, 0
        %vm662 = vcmp.ne.s32.totalorder %v582, 0
        %vm663 = vcmp.ne.s32.totalorder %v589, 0
        %vm664 = vcmp.ne.s32.totalorder %v596, 0
        %vm665 = vcmp.ne.s32.totalorder %v603, 0
        %vm666 = vcmp.ne.s32.totalorder %v610, 0
        %vm667 = vcmp.ne.s32.totalorder %v617, 0
        %vm668 = vcmp.ne.s32.totalorder %v624, 0
        %vm669 = vcmp.ne.s32.totalorder %v631, 0
        %vm670 = vcmp.ne.s32.totalorder %v638, 0
        %vm671 = vcmp.lt.s32.totalorder %v421, 0
        %vm672 = vcmp.lt.s32.totalorder %v428, 0
        %vm673 = vcmp.lt.s32.totalorder %v435, 0
        %vm674 = vcmp.lt.s32.totalorder %v442, 0
        %vm675 = vcmp.lt.s32.totalorder %v449, 0
        %vm676 = vcmp.lt.s32.totalorder %v456, 0
        %vm677 = vcmp.lt.s32.totalorder %v463, 0
        %vm678 = vcmp.lt.s32.totalorder %v470, 0
        %vm679 = vcmp.lt.s32.totalorder %v477, 0
        %vm680 = vcmp.lt.s32.totalorder %v484, 0
        %vm681 = vcmp.lt.s32.totalorder %v491, 0
        %vm682 = vcmp.lt.s32.totalorder %v498, 0
        %vm683 = vcmp.lt.s32.totalorder %v505, 0
        %vm684 = vcmp.lt.s32.totalorder %v512, 0
        %vm685 = vcmp.lt.s32.totalorder %v519, 0
        %vm686 = vcmp.lt.s32.totalorder %v526, 0
        %vm687 = vcmp.lt.s32.totalorder %v533, 0
        %vm688 = vcmp.lt.s32.totalorder %v540, 0
        %vm689 = vcmp.lt.s32.totalorder %v547, 0
        %vm690 = vcmp.lt.s32.totalorder %v554, 0
        %vm691 = vcmp.lt.s32.totalorder %v561, 0
        %vm692 = vcmp.lt.s32.totalorder %v568, 0
        %vm693 = vcmp.lt.s32.totalorder %v575, 0
        %vm694 = vcmp.lt.s32.totalorder %v582, 0
        %vm695 = vcmp.lt.s32.totalorder %v589, 0
        %vm696 = vcmp.lt.s32.totalorder %v596, 0
        %vm697 = vcmp.lt.s32.totalorder %v603, 0
        %vm698 = vcmp.lt.s32.totalorder %v610, 0
        %vm699 = vcmp.lt.s32.totalorder %v617, 0
        %vm700 = vcmp.lt.s32.totalorder %v624, 0
        %vm701 = vcmp.lt.s32.totalorder %v631, 0
        %vm702 = vcmp.lt.s32.totalorder %v638, 0
        %vm703 = vmand %vm671, %vm639
        %vm704 = vmand %vm672, %vm640
        %vm705 = vmand %vm673, %vm641
        %vm706 = vmand %vm674, %vm642
        %vm707 = vmand %vm675, %vm643
        %vm708 = vmand %vm676, %vm644
        %vm709 = vmand %vm677, %vm645
        %vm710 = vmand %vm678, %vm646
        %vm711 = vmand %vm679, %vm647
        %vm712 = vmand %vm680, %vm648
        %vm713 = vmand %vm681, %vm649
        %vm714 = vmand %vm682, %vm650
        %vm715 = vmand %vm683, %vm651
        %vm716 = vmand %vm684, %vm652
        %vm717 = vmand %vm685, %vm653
        %vm718 = vmand %vm686, %vm654
        %vm719 = vmand %vm687, %vm655
        %vm720 = vmand %vm688, %vm656
        %vm721 = vmand %vm689, %vm657
        %vm722 = vmand %vm690, %vm658
        %vm723 = vmand %vm691, %vm659
        %vm724 = vmand %vm692, %vm660
        %vm725 = vmand %vm693, %vm661
        %vm726 = vmand %vm694, %vm662
        %vm727 = vmand %vm695, %vm663
        %vm728 = vmand %vm696, %vm664
        %vm729 = vmand %vm697, %vm665
        %vm730 = vmand %vm698, %vm666
        %vm731 = vmand %vm699, %vm667
        %vm732 = vmand %vm700, %vm668
        %vm733 = vmand %vm701, %vm669
        %vm734 = vmand %vm702, %vm670
        %v735 = vadd.s32 %v421, 16
        %v736 = vadd.s32 %v428, 16
        %v737 = vadd.s32 %v435, 16
        %v738 = vadd.s32 %v442, 16
        %v739 = vadd.s32 %v449, 16
        %v740 = vadd.s32 %v456, 16
        %v741 = vadd.s32 %v463, 16
        %v742 = vadd.s32 %v470, 16
        %v743 = vadd.s32 %v477, 16
        %v744 = vadd.s32 %v484, 16
        %v745 = vadd.s32 %v491, 16
        %v746 = vadd.s32 %v498, 16
        %v747 = vadd.s32 %v505, 16
        %v748 = vadd.s32 %v512, 16
        %v749 = vadd.s32 %v519, 16
        %v750 = vadd.s32 %v526, 16
        %v751 = vadd.s32 %v533, 16
        %v752 = vadd.s32 %v540, 16
        %v753 = vadd.s32 %v547, 16
        %v754 = vadd.s32 %v554, 16
        %v755 = vadd.s32 %v561, 16
        %v756 = vadd.s32 %v568, 16
        %v757 = vadd.s32 %v575, 16
        %v758 = vadd.s32 %v582, 16
        %v759 = vadd.s32 %v589, 16
        %v760 = vadd.s32 %v596, 16
        %v761 = vadd.s32 %v603, 16
        %v762 = vadd.s32 %v610, 16
        %v763 = vadd.s32 %v617, 16
        %v764 = vadd.s32 %v624, 16
        %v765 = vadd.s32 %v631, 16
        %v766 = vadd.s32 %v638, 16
        %v767 = vsel %vm703, %v735, %v421
        %v768 = vsel %vm704, %v736, %v428
        %v769 = vsel %vm705, %v737, %v435
        %v770 = vsel %vm706, %v738, %v442
        %v771 = vsel %vm707, %v739, %v449
        %v772 = vsel %vm708, %v740, %v456
        %v773 = vsel %vm709, %v741, %v463
        %v774 = vsel %vm710, %v742, %v470
        %v775 = vsel %vm711, %v743, %v477
        %v776 = vsel %vm712, %v744, %v484
        %v777 = vsel %vm713, %v745, %v491
        %v778 = vsel %vm714, %v746, %v498
        %v779 = vsel %vm715, %v747, %v505
        %v780 = vsel %vm716, %v748, %v512
        %v781 = vsel %vm717, %v749, %v519
        %v782 = vsel %vm718, %v750, %v526
        %v783 = vsel %vm719, %v751, %v533
        %v784 = vsel %vm720, %v752, %v540
        %v785 = vsel %vm721, %v753, %v547
        %v786 = vsel %vm722, %v754, %v554
        %v787 = vsel %vm723, %v755, %v561
        %v788 = vsel %vm724, %v756, %v568
        %v789 = vsel %vm725, %v757, %v575
        %v790 = vsel %vm726, %v758, %v582
        %v791 = vsel %vm727, %v759, %v589
        %v792 = vsel %vm728, %v760, %v596
        %v793 = vsel %vm729, %v761, %v603
        %v794 = vsel %vm730, %v762, %v610
        %v795 = vsel %vm731, %v763, %v617
        %v796 = vsel %vm732, %v764, %v624
        %v797 = vsel %vm733, %v765, %v631
        %v798 = vsel %vm734, %v766, %v638
        %vm799 = vcmp.ge.s32.totalorder %v767, 1
        %vm800 = vcmp.ge.s32.totalorder %v768, 1
        %vm801 = vcmp.ge.s32.totalorder %v769, 1
        %vm802 = vcmp.ge.s32.totalorder %v770, 1
        %vm803 = vcmp.ge.s32.totalorder %v771, 1
        %vm804 = vcmp.ge.s32.totalorder %v772, 1
        %vm805 = vcmp.ge.s32.totalorder %v773, 1
        %vm806 = vcmp.ge.s32.totalorder %v774, 1
        %vm807 = vcmp.ge.s32.totalorder %v775, 1
        %vm808 = vcmp.ge.s32.totalorder %v776, 1
        %vm809 = vcmp.ge.s32.totalorder %v777, 1
        %vm810 = vcmp.ge.s32.totalorder %v778, 1
        %vm811 = vcmp.ge.s32.totalorder %v779, 1
        %vm812 = vcmp.ge.s32.totalorder %v780, 1
        %vm813 = vcmp.ge.s32.totalorder %v781, 1
        %vm814 = vcmp.ge.s32.totalorder %v782, 1
        %vm815 = vcmp.ge.s32.totalorder %v783, 1
        %vm816 = vcmp.ge.s32.totalorder %v784, 1
        %vm817 = vcmp.ge.s32.totalorder %v785, 1
        %vm818 = vcmp.ge.s32.totalorder %v786, 1
        %vm819 = vcmp.ge.s32.totalorder %v787, 1
        %vm820 = vcmp.ge.s32.totalorder %v788, 1
        %vm821 = vcmp.ge.s32.totalorder %v789, 1
        %vm822 = vcmp.ge.s32.totalorder %v790, 1
        %vm823 = vcmp.ge.s32.totalorder %v791, 1
        %vm824 = vcmp.ge.s32.totalorder %v792, 1
        %vm825 = vcmp.ge.s32.totalorder %v793, 1
        %vm826 = vcmp.ge.s32.totalorder %v794, 1
        %vm827 = vcmp.ge.s32.totalorder %v795, 1
        %vm828 = vcmp.ge.s32.totalorder %v796, 1
        %vm829 = vcmp.ge.s32.totalorder %v797, 1
        %vm830 = vcmp.ge.s32.totalorder %v798, 1
        %vm831 = vcmp.le.s32.totalorder %v767, 14
        %vm832 = vcmp.le.s32.totalorder %v768, 14
        %vm833 = vcmp.le.s32.totalorder %v769, 14
        %vm834 = vcmp.le.s32.totalorder %v770, 14
        %vm835 = vcmp.le.s32.totalorder %v771, 14
        %vm836 = vcmp.le.s32.totalorder %v772, 14
        %vm837 = vcmp.le.s32.totalorder %v773, 14
        %vm838 = vcmp.le.s32.totalorder %v774, 14
        %vm839 = vcmp.le.s32.totalorder %v775, 14
        %vm840 = vcmp.le.s32.totalorder %v776, 14
        %vm841 = vcmp.le.s32.totalorder %v777, 14
        %vm842 = vcmp.le.s32.totalorder %v778, 14
        %vm843 = vcmp.le.s32.totalorder %v779, 14
        %vm844 = vcmp.le.s32.totalorder %v780, 14
        %vm845 = vcmp.le.s32.totalorder %v781, 14
        %vm846 = vcmp.le.s32.totalorder %v782, 14
        %vm847 = vcmp.le.s32.totalorder %v783, 14
        %vm848 = vcmp.le.s32.totalorder %v784, 14
        %vm849 = vcmp.le.s32.totalorder %v785, 14
        %vm850 = vcmp.le.s32.totalorder %v786, 14
        %vm851 = vcmp.le.s32.totalorder %v787, 14
        %vm852 = vcmp.le.s32.totalorder %v788, 14
        %vm853 = vcmp.le.s32.totalorder %v789, 14
        %vm854 = vcmp.le.s32.totalorder %v790, 14
        %vm855 = vcmp.le.s32.totalorder %v791, 14
        %vm856 = vcmp.le.s32.totalorder %v792, 14
        %vm857 = vcmp.le.s32.totalorder %v793, 14
        %vm858 = vcmp.le.s32.totalorder %v794, 14
        %vm859 = vcmp.le.s32.totalorder %v795, 14
        %vm860 = vcmp.le.s32.totalorder %v796, 14
        %vm861 = vcmp.le.s32.totalorder %v797, 14
        %vm862 = vcmp.le.s32.totalorder %v798, 14
        %v863 = vld [vmem:[%s271] sm:$0xff]
        %v864 = vld [vmem:[%s271 + $0x8] sm:$0xff]
        %v865 = vld [vmem:[%s271 + $0x10] sm:$0xff]
        %v866 = vld [vmem:[%s271 + $0x18] sm:$0xff]
        %v867 = vld [vmem:[%s271 + $0x20] sm:$0xff]
        %v868 = vld [vmem:[%s271 + $0x28] sm:$0xff]
        %v869 = vld [vmem:[%s271 + $0x30] sm:$0xff]
        %v870 = vld [vmem:[%s271 + $0x38] sm:$0xff]
        %v871 = vld [vmem:[%s271 + $0x40] sm:$0xff]
        %v872 = vld [vmem:[%s271 + $0x48] sm:$0xff]
        %v873 = vld [vmem:[%s271 + $0x50] sm:$0xff]
        %v874 = vld [vmem:[%s271 + $0x58] sm:$0xff]
        %v875 = vld [vmem:[%s271 + $0x60] sm:$0xff]
        %v876 = vld [vmem:[%s271 + $0x68] sm:$0xff]
        %v877 = vld [vmem:[%s271 + $0x70] sm:$0xff]
        %v878 = vld [vmem:[%s271 + $0x78] sm:$0xff]
        %v879 = vld [vmem:[%s271 + $0x80] sm:$0xff]
        %v880 = vld [vmem:[%s271 + $0x88] sm:$0xff]
        %v881 = vld [vmem:[%s271 + $0x90] sm:$0xff]
        %v882 = vld [vmem:[%s271 + $0x98] sm:$0xff]
        %v883 = vld [vmem:[%s271 + $0xa0] sm:$0xff]
        %v884 = vld [vmem:[%s271 + $0xa8] sm:$0xff]
        %v885 = vld [vmem:[%s271 + $0xb0] sm:$0xff]
        %v886 = vld [vmem:[%s271 + $0xb8] sm:$0xff]
        %v887 = vld [vmem:[%s271 + $0xc0] sm:$0xff]
        %v888 = vld [vmem:[%s271 + $0xc8] sm:$0xff]
        %v889 = vld [vmem:[%s271 + $0xd0] sm:$0xff]
        %v890 = vld [vmem:[%s271 + $0xd8] sm:$0xff]
        %v891 = vld [vmem:[%s271 + $0xe0] sm:$0xff]
        %v892 = vld [vmem:[%s271 + $0xe8] sm:$0xff]
        %v893 = vld [vmem:[%s271 + $0xf0] sm:$0xff]
        %v894 = vld [vmem:[%s271 + $0xf8] sm:$0xff]
        %v895 = vld [vmem:[%s1] sm:$0x1]
        %v896 = vlaneseq
        %v897 = vshrl.u32 %v896, 7
        %v898 = vsub.s32 0, %v897
        %v899 = vrot.slane %v895, %v898
        %v900 = vmul.f32 %v863, %v899
        %v901 = vmul.f32 %v864, %v899
        %v902 = vmul.f32 %v865, %v899
        %v903 = vmul.f32 %v866, %v899
        %v904 = vmul.f32 %v867, %v899
        %v905 = vmul.f32 %v868, %v899
        %v906 = vmul.f32 %v869, %v899
        %v907 = vmul.f32 %v870, %v899
        %v908 = vmul.f32 %v871, %v899
        %v909 = vmul.f32 %v872, %v899
        %v910 = vmul.f32 %v873, %v899
        %v911 = vmul.f32 %v874, %v899
        %v912 = vmul.f32 %v875, %v899
        %v913 = vmul.f32 %v876, %v899
        %v914 = vmul.f32 %v877, %v899
        %v915 = vmul.f32 %v878, %v899
        %v916 = vmul.f32 %v879, %v899
        %v917 = vmul.f32 %v880, %v899
        %v918 = vmul.f32 %v881, %v899
        %v919 = vmul.f32 %v882, %v899
        %v920 = vmul.f32 %v883, %v899
        %v921 = vmul.f32 %v884, %v899
        %v922 = vmul.f32 %v885, %v899
        %v923 = vmul.f32 %v886, %v899
        %v924 = vmul.f32 %v887, %v899
        %v925 = vmul.f32 %v888, %v899
        %v926 = vmul.f32 %v889, %v899
        %v927 = vmul.f32 %v890, %v899
        %v928 = vmul.f32 %v891, %v899
        %v929 = vmul.f32 %v892, %v899
        %v930 = vmul.f32 %v893, %v899
        %v931 = vmul.f32 %v894, %v899
        %v932 = vld [vmem:[%s1 + $0x1] sm:$0x1]
        %v933 = vlaneseq
        %v934 = vshrl.u32 %v933, 7
        %v935 = vsub.s32 0, %v934
        %v936 = vrot.slane %v932, %v935
        %v937 = vadd.f32 %v900, %v936
        %v938 = vadd.f32 %v901, %v936
        %v939 = vadd.f32 %v902, %v936
        %v940 = vadd.f32 %v903, %v936
        %v941 = vadd.f32 %v904, %v936
        %v942 = vadd.f32 %v905, %v936
        %v943 = vadd.f32 %v906, %v936
        %v944 = vadd.f32 %v907, %v936
        %v945 = vadd.f32 %v908, %v936
        %v946 = vadd.f32 %v909, %v936
        %v947 = vadd.f32 %v910, %v936
        %v948 = vadd.f32 %v911, %v936
        %v949 = vadd.f32 %v912, %v936
        %v950 = vadd.f32 %v913, %v936
        %v951 = vadd.f32 %v914, %v936
        %v952 = vadd.f32 %v915, %v936
        %v953 = vadd.f32 %v916, %v936
        %v954 = vadd.f32 %v917, %v936
        %v955 = vadd.f32 %v918, %v936
        %v956 = vadd.f32 %v919, %v936
        %v957 = vadd.f32 %v920, %v936
        %v958 = vadd.f32 %v921, %v936
        %v959 = vadd.f32 %v922, %v936
        %v960 = vadd.f32 %v923, %v936
        %v961 = vadd.f32 %v924, %v936
        %v962 = vadd.f32 %v925, %v936
        %v963 = vadd.f32 %v926, %v936
        %v964 = vadd.f32 %v927, %v936
        %v965 = vadd.f32 %v928, %v936
        %v966 = vadd.f32 %v929, %v936
        %v967 = vadd.f32 %v930, %v936
        %v968 = vadd.f32 %v931, %v936
        %v969 = vmax.f32 %v937, 0.0
        %v970 = vmax.f32 %v938, 0.0
        %v971 = vmax.f32 %v939, 0.0
        %v972 = vmax.f32 %v940, 0.0
        %v973 = vmax.f32 %v941, 0.0
        %v974 = vmax.f32 %v942, 0.0
        %v975 = vmax.f32 %v943, 0.0
        %v976 = vmax.f32 %v944, 0.0
        %v977 = vmax.f32 %v945, 0.0
        %v978 = vmax.f32 %v946, 0.0
        %v979 = vmax.f32 %v947, 0.0
        %v980 = vmax.f32 %v948, 0.0
        %v981 = vmax.f32 %v949, 0.0
        %v982 = vmax.f32 %v950, 0.0
        %v983 = vmax.f32 %v951, 0.0
        %v984 = vmax.f32 %v952, 0.0
        %v985 = vmax.f32 %v953, 0.0
        %v986 = vmax.f32 %v954, 0.0
        %v987 = vmax.f32 %v955, 0.0
        %v988 = vmax.f32 %v956, 0.0
        %v989 = vmax.f32 %v957, 0.0
        %v990 = vmax.f32 %v958, 0.0
        %v991 = vmax.f32 %v959, 0.0
        %v992 = vmax.f32 %v960, 0.0
        %v993 = vmax.f32 %v961, 0.0
        %v994 = vmax.f32 %v962, 0.0
        %v995 = vmax.f32 %v963, 0.0
        %v996 = vmax.f32 %v964, 0.0
        %v997 = vmax.f32 %v965, 0.0
        %v998 = vmax.f32 %v966, 0.0
        %v999 = vmax.f32 %v967, 0.0
        %v1000 = vmax.f32 %v968, 0.0
        %v1001 = vpack.c.bf16 %v970, %v969
        %v1002 = vpack.c.bf16 %v972, %v971
        %v1003 = vpack.c.bf16 %v974, %v973
        %v1004 = vpack.c.bf16 %v976, %v975
        %v1005 = vpack.c.bf16 %v978, %v977
        %v1006 = vpack.c.bf16 %v980, %v979
        %v1007 = vpack.c.bf16 %v982, %v981
        %v1008 = vpack.c.bf16 %v984, %v983
        %v1009 = vpack.c.bf16 %v986, %v985
        %v1010 = vpack.c.bf16 %v988, %v987
        %v1011 = vpack.c.bf16 %v990, %v989
        %v1012 = vpack.c.bf16 %v992, %v991
        %v1013 = vpack.c.bf16 %v994, %v993
        %v1014 = vpack.c.bf16 %v996, %v995
        %v1015 = vpack.c.bf16 %v998, %v997
        %v1016 = vpack.c.bf16 %v1000, %v999
        %v1017 = vld [vmem:[%s2] sm:$0xf]
        %v1018 = vld [vmem:[%s1 + $0x2] sm:$0x1]
        %v1019 = vlaneseq
        %v1020 = vshrl.u32 %v1019, 7
        %v1021 = vsub.s32 0, %v1020
        %v1022 = vrot.slane %v1018, %v1021
        %v1024 = vsel %vm344, %v1001, 0
        %v1027 = vsel %vm344, %v1002, 0
        %v1030 = vsel %vm344, %v1003, 0
        %v1033 = vsel %vm344, %v1004, 0
        %v1036 = vsel %vm344, %v1005, 0
        %v1039 = vsel %vm344, %v1006, 0
        %v1042 = vsel %vm344, %v1007, 0
        %v1045 = vsel %vm344, %v1008, 0
        %v1048 = vsel %vm344, %v1009, 0
        %v1051 = vsel %vm344, %v1010, 0
        %v1054 = vsel %vm344, %v1011, 0
        %v1057 = vsel %vm344, %v1012, 0
        %v1060 = vsel %vm344, %v1013, 0
        %v1063 = vsel %vm344, %v1014, 0
        %v1066 = vsel %vm344, %v1015, 0
        %v1069 = vsel %vm344, %v1016, 0
        %vm1071 = vcmask 1043456
        %v1073 = vsel %vm1071, %v1017, 0
        %1075 = vmatprep.subr.bf16.mxu0 0
        %1076 = vmatpush1.bf16.msra.mxu0 %v1073
        %1077 = vmatprep.subr.bf16.mxu0 0
        %1078 = vmatpush1.bf16.msra.mxu0 0
        %1079 = vmatprep.subr.bf16.mxu0 0
        %1080 = vmatpush1.bf16.msra.mxu0 0
        %1081 = vmatprep.subr.bf16.mxu0 0
        %1082 = vmatpush1.bf16.msra.mxu0 0
        %1083 = vmatprep.subr.bf16.mxu0 0
        %1084 = vmatpush1.bf16.msra.mxu0 0
        %1085 = vmatprep.subr.bf16.mxu0 0
        %1086 = vmatpush1.bf16.msra.mxu0 0
        %1087 = vmatprep.subr.bf16.mxu0 0
        %1088 = vmatpush1.bf16.msra.mxu0 0
        %1089 = vmatprep.subr.bf16.mxu0 0
        %1090 = vmatpush1.bf16.msra.mxu0 0
        %1091 = vmatprep.subr.bf16.mxu0 0
        %1092 = vmatpush1.bf16.msra.mxu0 0
        %1093 = vmatprep.subr.bf16.mxu0 0
        %1094 = vmatpush1.bf16.msra.mxu0 0
        %1095 = vmatprep.subr.bf16.mxu0 0
        %1096 = vmatpush1.bf16.msra.mxu0 0
        %1097 = vmatprep.subr.bf16.mxu0 0
        %1098 = vmatpush1.bf16.msra.mxu0 0
        %1099 = vmatprep.subr.bf16.mxu0 0
        %1100 = vmatpush1.bf16.msra.mxu0 0
        %1101 = vmatprep.subr.bf16.mxu0 0
        %1102 = vmatpush1.bf16.msra.mxu0 0
        %1103 = vmatprep.subr.bf16.mxu0 0
        %1104 = vmatpush1.bf16.msra.mxu0 0
        %1105 = vmatprep.subr.bf16.mxu0 0
        %1106 = vmatpush1.bf16.msra.mxu0 0
        %1107 = vmatprep.mubr.bf16.mxu0 0
        %1108 = vmatmul.mubr.bf16.gmra.mrb[0].mxu0 %v1024
        %v1109 = vpop.f32.mrb[0].mxu0
        %v1110 = vadd.f32 %v1022, %v1109
        %v1111 = vpop.f32.mrb[0].mxu0
        %v1112 = vpop.f32.mrb[0].mxu0
        %v1113 = vadd.f32 %v1022, %v1112
        %v1114 = vpop.f32.mrb[0].mxu0
        %1115 = vmatprep.mubr.bf16.mxu0 0
        %1116 = vmatmul.mubr.bf16.gmra.mrb[0].mxu0 %v1027
        %v1117 = vpop.f32.mrb[0].mxu0
        %v1118 = vadd.f32 %v1022, %v1117
        %v1119 = vpop.f32.mrb[0].mxu0
        %v1120 = vpop.f32.mrb[0].mxu0
        %v1121 = vadd.f32 %v1022, %v1120
        %v1122 = vpop.f32.mrb[0].mxu0
        %1123 = vmatprep.mubr.bf16.mxu0 0
        %1124 = vmatmul.mubr.bf16.gmra.mrb[0].mxu0 %v1030
        %v1125 = vpop.f32.mrb[0].mxu0
        %v1126 = vadd.f32 %v1022, %v1125
        %v1127 = vpop.f32.mrb[0].mxu0
        %v1128 = vpop.f32.mrb[0].mxu0
        %v1129 = vadd.f32 %v1022, %v1128
        %v1130 = vpop.f32.mrb[0].mxu0
        %1131 = vmatprep.mubr.bf16.mxu0 0
        %1132 = vmatmul.mubr.bf16.gmra.mrb[0].mxu0 %v1033
        %v1133 = vpop.f32.mrb[0].mxu0
        %v1134 = vadd.f32 %v1022, %v1133
        %v1135 = vpop.f32.mrb[0].mxu0
        %v1136 = vpop.f32.mrb[0].mxu0
        %v1137 = vadd.f32 %v1022, %v1136
        %v1138 = vpop.f32.mrb[0].mxu0
        %1139 = vmatprep.mubr.bf16.mxu0 0
        %1140 = vmatmul.mubr.bf16.gmra.mrb[0].mxu0 %v1036
        %v1141 = vpop.f32.mrb[0].mxu0
        %v1142 = vadd.f32 %v1022, %v1141
        %v1143 = vpop.f32.mrb[0].mxu0
        %v1144 = vpop.f32.mrb[0].mxu0
        %v1145 = vadd.f32 %v1022, %v1144
        %v1146 = vpop.f32.mrb[0].mxu0
        %1147 = vmatprep.mubr.bf16.mxu0 0
        %1148 = vmatmul.mubr.bf16.gmra.mrb[0].mxu0 %v1039
        %v1149 = vpop.f32.mrb[0].mxu0
        %v1150 = vadd.f32 %v1022, %v1149
        %v1151 = vpop.f32.mrb[0].mxu0
        %v1152 = vpop.f32.mrb[0].mxu0
        %v1153 = vadd.f32 %v1022, %v1152
        %v1154 = vpop.f32.mrb[0].mxu0
        %1155 = vmatprep.mubr.bf16.mxu0 0
        %1156 = vmatmul.mubr.bf16.gmra.mrb[0].mxu0 %v1042
        %v1157 = vpop.f32.mrb[0].mxu0
        %v1158 = vadd.f32 %v1022, %v1157
        %v1159 = vpop.f32.mrb[0].mxu0
        %v1160 = vpop.f32.mrb[0].mxu0
        %v1161 = vadd.f32 %v1022, %v1160
        %v1162 = vpop.f32.mrb[0].mxu0
        %1163 = vmatprep.mubr.bf16.mxu0 0
        %1164 = vmatmul.mubr.bf16.gmra.mrb[0].mxu0 %v1045
        %v1165 = vpop.f32.mrb[0].mxu0
        %v1166 = vadd.f32 %v1022, %v1165
        %v1167 = vpop.f32.mrb[0].mxu0
        %v1168 = vpop.f32.mrb[0].mxu0
        %v1169 = vadd.f32 %v1022, %v1168
        %v1170 = vpop.f32.mrb[0].mxu0
        %1171 = vmatprep.mubr.bf16.mxu0 0
        %1172 = vmatmul.mubr.bf16.gmra.mrb[0].mxu0 %v1048
        %v1173 = vpop.f32.mrb[0].mxu0
        %v1174 = vadd.f32 %v1022, %v1173
        %v1175 = vpop.f32.mrb[0].mxu0
        %v1176 = vpop.f32.mrb[0].mxu0
        %v1177 = vadd.f32 %v1022, %v1176
        %v1178 = vpop.f32.mrb[0].mxu0
        %1179 = vmatprep.mubr.bf16.mxu0 0
        %1180 = vmatmul.mubr.bf16.gmra.mrb[0].mxu0 %v1051
        %v1181 = vpop.f32.mrb[0].mxu0
        %v1182 = vadd.f32 %v1022, %v1181
        %v1183 = vpop.f32.mrb[0].mxu0
        %v1184 = vpop.f32.mrb[0].mxu0
        %v1185 = vadd.f32 %v1022, %v1184
        %v1186 = vpop.f32.mrb[0].mxu0
        %1187 = vmatprep.mubr.bf16.mxu0 0
        %1188 = vmatmul.mubr.bf16.gmra.mrb[0].mxu0 %v1054
        %v1189 = vpop.f32.mrb[0].mxu0
        %v1190 = vadd.f32 %v1022, %v1189
        %v1191 = vpop.f32.mrb[0].mxu0
        %v1192 = vpop.f32.mrb[0].mxu0
        %v1193 = vadd.f32 %v1022, %v1192
        %v1194 = vpop.f32.mrb[0].mxu0
        %1195 = vmatprep.mubr.bf16.mxu0 0
        %1196 = vmatmul.mubr.bf16.gmra.mrb[0].mxu0 %v1057
        %v1197 = vpop.f32.mrb[0].mxu0
        %v1198 = vadd.f32 %v1022, %v1197
        %v1199 = vpop.f32.mrb[0].mxu0
        %v1200 = vpop.f32.mrb[0].mxu0
        %v1201 = vadd.f32 %v1022, %v1200
        %v1202 = vpop.f32.mrb[0].mxu0
        %1203 = vmatprep.mubr.bf16.mxu0 0
        %1204 = vmatmul.mubr.bf16.gmra.mrb[0].mxu0 %v1060
        %v1205 = vpop.f32.mrb[0].mxu0
        %v1206 = vadd.f32 %v1022, %v1205
        %v1207 = vpop.f32.mrb[0].mxu0
        %v1208 = vpop.f32.mrb[0].mxu0
        %v1209 = vadd.f32 %v1022, %v1208
        %v1210 = vpop.f32.mrb[0].mxu0
        %1211 = vmatprep.mubr.bf16.mxu0 0
        %1212 = vmatmul.mubr.bf16.gmra.mrb[0].mxu0 %v1063
        %v1213 = vpop.f32.mrb[0].mxu0
        %v1214 = vadd.f32 %v1022, %v1213
        %v1215 = vpop.f32.mrb[0].mxu0
        %v1216 = vpop.f32.mrb[0].mxu0
        %v1217 = vadd.f32 %v1022, %v1216
        %v1218 = vpop.f32.mrb[0].mxu0
        %1219 = vmatprep.mubr.bf16.mxu0 0
        %1220 = vmatmul.mubr.bf16.gmra.mrb[0].mxu0 %v1066
        %v1221 = vpop.f32.mrb[0].mxu0
        %v1222 = vadd.f32 %v1022, %v1221
        %v1223 = vpop.f32.mrb[0].mxu0
        %v1224 = vpop.f32.mrb[0].mxu0
        %v1225 = vadd.f32 %v1022, %v1224
        %v1226 = vpop.f32.mrb[0].mxu0
        %1227 = vmatprep.mubr.bf16.mxu0 0
        %1228 = vmatmul.mubr.bf16.gmra.mrb[0].mxu0 %v1069
        %v1229 = vpop.f32.mrb[0].mxu0
        %v1230 = vadd.f32 %v1022, %v1229
        %v1231 = vpop.f32.mrb[0].mxu0
        %v1232 = vpop.f32.mrb[0].mxu0
        %v1233 = vadd.f32 %v1022, %v1232
        %v1234 = vpop.f32.mrb[0].mxu0
        %1235 = vdwg.mxu0
        %v1236 = vmax.f32 %v1110, 0.0
        %v1237 = vmax.f32 %v1113, 0.0
        %v1238 = vmax.f32 %v1118, 0.0
        %v1239 = vmax.f32 %v1121, 0.0
        %v1240 = vmax.f32 %v1126, 0.0
        %v1241 = vmax.f32 %v1129, 0.0
        %v1242 = vmax.f32 %v1134, 0.0
        %v1243 = vmax.f32 %v1137, 0.0
        %v1244 = vmax.f32 %v1142, 0.0
        %v1245 = vmax.f32 %v1145, 0.0
        %v1246 = vmax.f32 %v1150, 0.0
        %v1247 = vmax.f32 %v1153, 0.0
        %v1248 = vmax.f32 %v1158, 0.0
        %v1249 = vmax.f32 %v1161, 0.0
        %v1250 = vmax.f32 %v1166, 0.0
        %v1251 = vmax.f32 %v1169, 0.0
        %v1252 = vmax.f32 %v1174, 0.0
        %v1253 = vmax.f32 %v1177, 0.0
        %v1254 = vmax.f32 %v1182, 0.0
        %v1255 = vmax.f32 %v1185, 0.0
        %v1256 = vmax.f32 %v1190, 0.0
        %v1257 = vmax.f32 %v1193, 0.0
        %v1258 = vmax.f32 %v1198, 0.0
        %v1259 = vmax.f32 %v1201, 0.0
        %v1260 = vmax.f32 %v1206, 0.0
        %v1261 = vmax.f32 %v1209, 0.0
        %v1262 = vmax.f32 %v1214, 0.0
        %v1263 = vmax.f32 %v1217, 0.0
        %v1264 = vmax.f32 %v1222, 0.0
        %v1265 = vmax.f32 %v1225, 0.0
        %v1266 = vmax.f32 %v1230, 0.0
        %v1267 = vmax.f32 %v1233, 0.0
        %v1268 = vpack.c.bf16 %v1237, %v1236
        %v1269 = vpack.c.bf16 %v1239, %v1238
        %v1270 = vpack.c.bf16 %v1241, %v1240
        %v1271 = vpack.c.bf16 %v1243, %v1242
        %v1272 = vpack.c.bf16 %v1245, %v1244
        %v1273 = vpack.c.bf16 %v1247, %v1246
        %v1274 = vpack.c.bf16 %v1249, %v1248
        %v1275 = vpack.c.bf16 %v1251, %v1250
        %v1276 = vpack.c.bf16 %v1253, %v1252
        %v1277 = vpack.c.bf16 %v1255, %v1254
        %v1278 = vpack.c.bf16 %v1257, %v1256
        %v1279 = vpack.c.bf16 %v1259, %v1258
        %v1280 = vpack.c.bf16 %v1261, %v1260
        %v1281 = vpack.c.bf16 %v1263, %v1262
        %v1282 = vpack.c.bf16 %v1265, %v1264
        %v1283 = vpack.c.bf16 %v1267, %v1266
        %1284 = vst.msk [vmem:[#allocation2 + $0x10] sm:$0xff] %vm377, %v1268
        %1285 = vst.msk [vmem:[#allocation2 + $0x18] sm:$0xff] %vm377, %v1269
        %1286 = vst.msk [vmem:[#allocation2 + $0x20] sm:$0xff] %vm377, %v1270
        %1287 = vst.msk [vmem:[#allocation2 + $0x28] sm:$0xff] %vm377, %v1271
        %1288 = vst.msk [vmem:[#allocation2 + $0x30] sm:$0xff] %vm377, %v1272
        %1289 = vst.msk [vmem:[#allocation2 + $0x38] sm:$0xff] %vm377, %v1273
        %1290 = vst.msk [vmem:[#allocation2 + $0x40] sm:$0xff] %vm377, %v1274
        %1291 = vst.msk [vmem:[#allocation2 + $0x48] sm:$0xff] %vm377, %v1275
        %1292 = vst.msk [vmem:[#allocation2 + $0x50] sm:$0xff] %vm377, %v1276
        %1293 = vst.msk [vmem:[#allocation2 + $0x58] sm:$0xff] %vm377, %v1277
        %1294 = vst.msk [vmem:[#allocation2 + $0x60] sm:$0xff] %vm377, %v1278
        %1295 = vst.msk [vmem:[#allocation2 + $0x68] sm:$0xff] %vm377, %v1279
        %1296 = vst.msk [vmem:[#allocation2 + $0x70] sm:$0xff] %vm377, %v1280
        %1297 = vst.msk [vmem:[#allocation2 + $0x78] sm:$0xff] %vm377, %v1281
        %1298 = vst.msk [vmem:[#allocation2 + $0x80] sm:$0xff] %vm377, %v1282
        %1299 = vst.msk [vmem:[#allocation2 + $0x88] sm:$0xff] %vm377, %v1283
        %v1300 = vld [vmem:[#allocation2] sm:$0x80]
        %v1301 = vld [vmem:[#allocation2 + $0x8] sm:$0xff]
        %v1302 = vld [vmem:[#allocation2 + $0x10] sm:$0xff]
        %v1303 = vld [vmem:[#allocation2 + $0x18] sm:$0xff]
        %v1304 = vld [vmem:[#allocation2 + $0x20] sm:$0xff]
        %v1305 = vld [vmem:[#allocation2 + $0x28] sm:$0xff]
        %v1306 = vld [vmem:[#allocation2 + $0x30] sm:$0xff]
        %v1307 = vld [vmem:[#allocation2 + $0x38] sm:$0xff]
        %v1308 = vld [vmem:[#allocation2 + $0x40] sm:$0xff]
        %v1309 = vld [vmem:[#allocation2 + $0x48] sm:$0xff]
        %v1310 = vld [vmem:[#allocation2 + $0x50] sm:$0xff]
        %v1311 = vld [vmem:[#allocation2 + $0x58] sm:$0xff]
        %v1312 = vld [vmem:[#allocation2 + $0x60] sm:$0xff]
        %v1313 = vld [vmem:[#allocation2 + $0x68] sm:$0xff]
        %v1314 = vld [vmem:[#allocation2 + $0x70] sm:$0xff]
        %v1315 = vld [vmem:[#allocation2 + $0x78] sm:$0xff]
        %v1316 = vld [vmem:[#allocation2 + $0x80] sm:$0xff]
        %v1317 = vsel %vm799, 1, 0
        %v1318 = vsel %vm800, 1, 0
        %v1319 = vsel %vm801, 1, 0
        %v1320 = vsel %vm802, 1, 0
        %v1321 = vsel %vm803, 1, 0
        %v1322 = vsel %vm804, 1, 0
        %v1323 = vsel %vm805, 1, 0
        %v1324 = vsel %vm806, 1, 0
        %v1325 = vsel %vm807, 1, 0
        %v1326 = vsel %vm808, 1, 0
        %v1327 = vsel %vm809, 1, 0
        %v1328 = vsel %vm810, 1, 0
        %v1329 = vsel %vm811, 1, 0
        %v1330 = vsel %vm812, 1, 0
        %v1331 = vsel %vm813, 1, 0
        %v1332 = vsel %vm814, 1, 0
        %v1333 = vsel %vm815, 1, 0
        %v1334 = vsel %vm816, 1, 0
        %v1335 = vsel %vm817, 1, 0
        %v1336 = vsel %vm818, 1, 0
        %v1337 = vsel %vm819, 1, 0
        %v1338 = vsel %vm820, 1, 0
        %v1339 = vsel %vm821, 1, 0
        %v1340 = vsel %vm822, 1, 0
        %v1341 = vsel %vm823, 1, 0
        %v1342 = vsel %vm824, 1, 0
        %v1343 = vsel %vm825, 1, 0
        %v1344 = vsel %vm826, 1, 0
        %v1345 = vsel %vm827, 1, 0
        %v1346 = vsel %vm828, 1, 0
        %v1347 = vsel %vm829, 1, 0
        %v1348 = vsel %vm830, 1, 0
        %vm1349 = vcmp.eq.s32.totalorder %v1317, 1
        %vm1350 = vcmp.eq.s32.totalorder %v1318, 1
        %vm1351 = vcmp.eq.s32.totalorder %v1319, 1
        %vm1352 = vcmp.eq.s32.totalorder %v1320, 1
        %vm1353 = vcmp.eq.s32.totalorder %v1321, 1
        %vm1354 = vcmp.eq.s32.totalorder %v1322, 1
        %vm1355 = vcmp.eq.s32.totalorder %v1323, 1
        %vm1356 = vcmp.eq.s32.totalorder %v1324, 1
        %vm1357 = vcmp.eq.s32.totalorder %v1325, 1
        %vm1358 = vcmp.eq.s32.totalorder %v1326, 1
        %vm1359 = vcmp.eq.s32.totalorder %v1327, 1
        %vm1360 = vcmp.eq.s32.totalorder %v1328, 1
        %vm1361 = vcmp.eq.s32.totalorder %v1329, 1
        %vm1362 = vcmp.eq.s32.totalorder %v1330, 1
        %vm1363 = vcmp.eq.s32.totalorder %v1331, 1
        %vm1364 = vcmp.eq.s32.totalorder %v1332, 1
        %vm1365 = vcmp.eq.s32.totalorder %v1333, 1
        %vm1366 = vcmp.eq.s32.totalorder %v1334, 1
        %vm1367 = vcmp.eq.s32.totalorder %v1335, 1
        %vm1368 = vcmp.eq.s32.totalorder %v1336, 1
        %vm1369 = vcmp.eq.s32.totalorder %v1337, 1
        %vm1370 = vcmp.eq.s32.totalorder %v1338, 1
        %vm1371 = vcmp.eq.s32.totalorder %v1339, 1
        %vm1372 = vcmp.eq.s32.totalorder %v1340, 1
        %vm1373 = vcmp.eq.s32.totalorder %v1341, 1
        %vm1374 = vcmp.eq.s32.totalorder %v1342, 1
        %vm1375 = vcmp.eq.s32.totalorder %v1343, 1
        %vm1376 = vcmp.eq.s32.totalorder %v1344, 1
        %vm1377 = vcmp.eq.s32.totalorder %v1345, 1
        %vm1378 = vcmp.eq.s32.totalorder %v1346, 1
        %vm1379 = vcmp.eq.s32.totalorder %v1347, 1
        %vm1380 = vcmp.eq.s32.totalorder %v1348, 1
        %vm1381 = vmpackc.low %vm1349, %vm1349
        %vm1382 = vmpackc.low %vm1350, %vm1350
        %vm1383 = vmpackc.low %vm1351, %vm1351
        %vm1384 = vmpackc.low %vm1352, %vm1352
        %vm1385 = vmpackc.low %vm1353, %vm1353
        %vm1386 = vmpackc.low %vm1354, %vm1354
        %vm1387 = vmpackc.low %vm1355, %vm1355
        %vm1388 = vmpackc.low %vm1356, %vm1356
        %vm1389 = vmpackc.low %vm1357, %vm1357
        %vm1390 = vmpackc.low %vm1358, %vm1358
        %vm1391 = vmpackc.low %vm1359, %vm1359
        %vm1392 = vmpackc.low %vm1360, %vm1360
        %vm1393 = vmpackc.low %vm1361, %vm1361
        %vm1394 = vmpackc.low %vm1362, %vm1362
        %vm1395 = vmpackc.low %vm1363, %vm1363
        %vm1396 = vmpackc.low %vm1364, %vm1364
        %vm1397 = vmpackc.low %vm1365, %vm1365
        %vm1398 = vmpackc.low %vm1366, %vm1366
        %vm1399 = vmpackc.low %vm1367, %vm1367
        %vm1400 = vmpackc.low %vm1368, %vm1368
        %vm1401 = vmpackc.low %vm1369, %vm1369
        %vm1402 = vmpackc.low %vm1370, %vm1370
        %vm1403 = vmpackc.low %vm1371, %vm1371
        %vm1404 = vmpackc.low %vm1372, %vm1372
        %vm1405 = vmpackc.low %vm1373, %vm1373
        %vm1406 = vmpackc.low %vm1374, %vm1374
        %vm1407 = vmpackc.low %vm1375, %vm1375
        %vm1408 = vmpackc.low %vm1376, %vm1376
        %vm1409 = vmpackc.low %vm1377, %vm1377
        %vm1410 = vmpackc.low %vm1378, %vm1378
        %vm1411 = vmpackc.low %vm1379, %vm1379
        %vm1412 = vmpackc.low %vm1380, %vm1380
        %v1413 = vsel %vm1381, 65537, 0
        %v1414 = vsel %vm1382, 65537, 0
        %v1415 = vsel %vm1383, 65537, 0
        %v1416 = vsel %vm1384, 65537, 0
        %v1417 = vsel %vm1385, 65537, 0
        %v1418 = vsel %vm1386, 65537, 0
        %v1419 = vsel %vm1387, 65537, 0
        %v1420 = vsel %vm1388, 65537, 0
        %v1421 = vsel %vm1389, 65537, 0
        %v1422 = vsel %vm1390, 65537, 0
        %v1423 = vsel %vm1391, 65537, 0
        %v1424 = vsel %vm1392, 65537, 0
        %v1425 = vsel %vm1393, 65537, 0
        %v1426 = vsel %vm1394, 65537, 0
        %v1427 = vsel %vm1395, 65537, 0
        %v1428 = vsel %vm1396, 65537, 0
        %v1429 = vsel %vm1397, 65537, 0
        %v1430 = vsel %vm1398, 65537, 0
        %v1431 = vsel %vm1399, 65537, 0
        %v1432 = vsel %vm1400, 65537, 0
        %v1433 = vsel %vm1401, 65537, 0
        %v1434 = vsel %vm1402, 65537, 0
        %v1435 = vsel %vm1403, 65537, 0
        %v1436 = vsel %vm1404, 65537, 0
        %v1437 = vsel %vm1405, 65537, 0
        %v1438 = vsel %vm1406, 65537, 0
        %v1439 = vsel %vm1407, 65537, 0
        %v1440 = vsel %vm1408, 65537, 0
        %v1441 = vsel %vm1409, 65537, 0
        %v1442 = vsel %vm1410, 65537, 0
        %v1443 = vsel %vm1411, 65537, 0
        %v1444 = vsel %vm1412, 65537, 0
        %v1445 = vunpack.c.l.b16 %v1413
        %v1446 = vunpack.c.l.b16 %v1414
        %v1447 = vunpack.c.l.b16 %v1415
        %v1448 = vunpack.c.l.b16 %v1416
        %v1449 = vunpack.c.l.b16 %v1417
        %v1450 = vunpack.c.l.b16 %v1418
        %v1451 = vunpack.c.l.b16 %v1419
        %v1452 = vunpack.c.l.b16 %v1420
        %v1453 = vunpack.c.l.b16 %v1421
        %v1454 = vunpack.c.l.b16 %v1422
        %v1455 = vunpack.c.l.b16 %v1423
        %v1456 = vunpack.c.l.b16 %v1424
        %v1457 = vunpack.c.l.b16 %v1425
        %v1458 = vunpack.c.l.b16 %v1426
        %v1459 = vunpack.c.l.b16 %v1427
        %v1460 = vunpack.c.l.b16 %v1428
        %v1461 = vunpack.c.l.b16 %v1429
        %v1462 = vunpack.c.l.b16 %v1430
        %v1463 = vunpack.c.l.b16 %v1431
        %v1464 = vunpack.c.l.b16 %v1432
        %v1465 = vunpack.c.l.b16 %v1433
        %v1466 = vunpack.c.l.b16 %v1434
        %v1467 = vunpack.c.l.b16 %v1435
        %v1468 = vunpack.c.l.b16 %v1436
        %v1469 = vunpack.c.l.b16 %v1437
        %v1470 = vunpack.c.l.b16 %v1438
        %v1471 = vunpack.c.l.b16 %v1439
        %v1472 = vunpack.c.l.b16 %v1440
        %v1473 = vunpack.c.l.b16 %v1441
        %v1474 = vunpack.c.l.b16 %v1442
        %v1475 = vunpack.c.l.b16 %v1443
        %v1476 = vunpack.c.l.b16 %v1444
        %v1477 = vpack.c.b16 %v1446, %v1445
        %v1478 = vpack.c.b16 %v1448, %v1447
        %v1479 = vpack.c.b16 %v1450, %v1449
        %v1480 = vpack.c.b16 %v1452, %v1451
        %v1481 = vpack.c.b16 %v1454, %v1453
        %v1482 = vpack.c.b16 %v1456, %v1455
        %v1483 = vpack.c.b16 %v1458, %v1457
        %v1484 = vpack.c.b16 %v1460, %v1459
        %v1485 = vpack.c.b16 %v1462, %v1461
        %v1486 = vpack.c.b16 %v1464, %v1463
        %v1487 = vpack.c.b16 %v1466, %v1465
        %v1488 = vpack.c.b16 %v1468, %v1467
        %v1489 = vpack.c.b16 %v1470, %v1469
        %v1490 = vpack.c.b16 %v1472, %v1471
        %v1491 = vpack.c.b16 %v1474, %v1473
        %v1492 = vpack.c.b16 %v1476, %v1475
        %vm1493 = vsmask.f32 7424
        %v1495 = vshll.u32 %v1477, 16
        %v1497 = vrot.slane %v1495, 1
        %v1498 = vshrl.u32 %v1477, 16
        %v1500 = vor.u32 %v1498, %v1497
        %v1502 = vshll.u32 %v1478, 16
        %v1504 = vrot.slane %v1502, 1
        %v1505 = vsel %vm1493, %v1500, %v1504
        %v1506 = vshrl.u32 %v1478, 16
        %v1508 = vor.u32 %v1506, %v1504
        %v1510 = vshll.u32 %v1479, 16
        %v1512 = vrot.slane %v1510, 1
        %v1513 = vsel %vm1493, %v1508, %v1512
        %v1514 = vshrl.u32 %v1479, 16
        %v1516 = vor.u32 %v1514, %v1512
        %v1518 = vshll.u32 %v1480, 16
        %v1520 = vrot.slane %v1518, 1
        %v1521 = vsel %vm1493, %v1516, %v1520
        %v1522 = vshrl.u32 %v1480, 16
        %v1524 = vor.u32 %v1522, %v1520
        %v1526 = vshll.u32 %v1481, 16
        %v1528 = vrot.slane %v1526, 1
        %v1529 = vsel %vm1493, %v1524, %v1528
        %v1530 = vshrl.u32 %v1481, 16
        %v1532 = vor.u32 %v1530, %v1528
        %v1534 = vshll.u32 %v1482, 16
        %v1536 = vrot.slane %v1534, 1
        %v1537 = vsel %vm1493, %v1532, %v1536
        %v1538 = vshrl.u32 %v1482, 16
        %v1540 = vor.u32 %v1538, %v1536
        %v1542 = vshll.u32 %v1483, 16
        %v1544 = vrot.slane %v1542, 1
        %v1545 = vsel %vm1493, %v1540, %v1544
        %v1546 = vshrl.u32 %v1483, 16
        %v1548 = vor.u32 %v1546, %v1544
        %v1550 = vshll.u32 %v1484, 16
        %v1552 = vrot.slane %v1550, 1
        %v1553 = vsel %vm1493, %v1548, %v1552
        %v1554 = vshrl.u32 %v1484, 16
        %v1556 = vor.u32 %v1554, %v1552
        %v1558 = vshll.u32 %v1485, 16
        %v1560 = vrot.slane %v1558, 1
        %v1561 = vsel %vm1493, %v1556, %v1560
        %v1562 = vshrl.u32 %v1485, 16
        %v1564 = vor.u32 %v1562, %v1560
        %v1566 = vshll.u32 %v1486, 16
        %v1568 = vrot.slane %v1566, 1
        %v1569 = vsel %vm1493, %v1564, %v1568
        %v1570 = vshrl.u32 %v1486, 16
        %v1572 = vor.u32 %v1570, %v1568
        %v1574 = vshll.u32 %v1487, 16
        %v1576 = vrot.slane %v1574, 1
        %v1577 = vsel %vm1493, %v1572, %v1576
        %v1578 = vshrl.u32 %v1487, 16
        %v1580 = vor.u32 %v1578, %v1576
        %v1582 = vshll.u32 %v1488, 16
        %v1584 = vrot.slane %v1582, 1
        %v1585 = vsel %vm1493, %v1580, %v1584
        %v1586 = vshrl.u32 %v1488, 16
        %v1588 = vor.u32 %v1586, %v1584
        %v1590 = vshll.u32 %v1489, 16
        %v1592 = vrot.slane %v1590, 1
        %v1593 = vsel %vm1493, %v1588, %v1592
        %v1594 = vshrl.u32 %v1489, 16
        %v1596 = vor.u32 %v1594, %v1592
        %v1598 = vshll.u32 %v1490, 16
        %v1600 = vrot.slane %v1598, 1
        %v1601 = vsel %vm1493, %v1596, %v1600
        %v1602 = vshrl.u32 %v1490, 16
        %v1604 = vor.u32 %v1602, %v1600
        %v1606 = vshll.u32 %v1491, 16
        %v1608 = vrot.slane %v1606, 1
        %v1609 = vsel %vm1493, %v1604, %v1608
        %v1610 = vshrl.u32 %v1491, 16
        %v1612 = vor.u32 %v1610, %v1608
        %v1614 = vshll.u32 %v1492, 16
        %v1616 = vrot.slane %v1614, 1
        %v1617 = vsel %vm1493, %v1612, %v1616
        %v1618 = vshrl.u32 %v1492, 16
        %v1620 = vor.u32 %v1618, %v1616
        %vm1621 = vcmp.ne.s16.totalorder %v1497, 0
        %vm1622 = vcmp.ne.s16.totalorder %v1505, 0
        %vm1623 = vcmp.ne.s16.totalorder %v1513, 0
        %vm1624 = vcmp.ne.s16.totalorder %v1521, 0
        %vm1625 = vcmp.ne.s16.totalorder %v1529, 0
        %vm1626 = vcmp.ne.s16.totalorder %v1537, 0
        %vm1627 = vcmp.ne.s16.totalorder %v1545, 0
        %vm1628 = vcmp.ne.s16.totalorder %v1553, 0
        %vm1629 = vcmp.ne.s16.totalorder %v1561, 0
        %vm1630 = vcmp.ne.s16.totalorder %v1569, 0
        %vm1631 = vcmp.ne.s16.totalorder %v1577, 0
        %vm1632 = vcmp.ne.s16.totalorder %v1585, 0
        %vm1633 = vcmp.ne.s16.totalorder %v1593, 0
        %vm1634 = vcmp.ne.s16.totalorder %v1601, 0
        %vm1635 = vcmp.ne.s16.totalorder %v1609, 0
        %vm1636 = vcmp.ne.s16.totalorder %v1617, 0
        %vm1637 = vcmp.ne.s16.totalorder %v1620, 0
        %v1638 = vsel %vm1621, %v1300, 0
        %v1639 = vsel %vm1622, %v1301, 0
        %v1640 = vsel %vm1623, %v1302, 0
        %v1641 = vsel %vm1624, %v1303, 0
        %v1642 = vsel %vm1625, %v1304, 0
        %v1643 = vsel %vm1626, %v1305, 0
        %v1644 = vsel %vm1627, %v1306, 0
        %v1645 = vsel %vm1628, %v1307, 0
        %v1646 = vsel %vm1629, %v1308, 0
        %v1647 = vsel %vm1630, %v1309, 0
        %v1648 = vsel %vm1631, %v1310, 0
        %v1649 = vsel %vm1632, %v1311, 0
        %v1650 = vsel %vm1633, %v1312, 0
        %v1651 = vsel %vm1634, %v1313, 0
        %v1652 = vsel %vm1635, %v1314, 0
        %v1653 = vsel %vm1636, %v1315, 0
        %v1654 = vsel %vm1637, %v1316, 0
        %vm1655 = vsmask.f32 256
        %v1657 = vshrl.u32 %v1638, 16
        %v1659 = vrot.slane %v1657, 7
        %v1661 = vshrl.u32 %v1639, 16
        %v1663 = vrot.slane %v1661, 7
        %v1664 = vshll.u32 %v1639, 16
        %v1666 = vor.u32 %v1663, %v1664
        %v1667 = vsel %vm1655, %v1659, %v1666
        %v1669 = vshrl.u32 %v1640, 16
        %v1671 = vrot.slane %v1669, 7
        %v1672 = vshll.u32 %v1640, 16
        %v1674 = vor.u32 %v1671, %v1672
        %v1675 = vsel %vm1655, %v1663, %v1674
        %v1677 = vshrl.u32 %v1641, 16
        %v1679 = vrot.slane %v1677, 7
        %v1680 = vshll.u32 %v1641, 16
        %v1682 = vor.u32 %v1679, %v1680
        %v1683 = vsel %vm1655, %v1671, %v1682
        %v1685 = vshrl.u32 %v1642, 16
        %v1687 = vrot.slane %v1685, 7
        %v1688 = vshll.u32 %v1642, 16
        %v1690 = vor.u32 %v1687, %v1688
        %v1691 = vsel %vm1655, %v1679, %v1690
        %v1693 = vshrl.u32 %v1643, 16
        %v1695 = vrot.slane %v1693, 7
        %v1696 = vshll.u32 %v1643, 16
        %v1698 = vor.u32 %v1695, %v1696
        %v1699 = vsel %vm1655, %v1687, %v1698
        %v1701 = vshrl.u32 %v1644, 16
        %v1703 = vrot.slane %v1701, 7
        %v1704 = vshll.u32 %v1644, 16
        %v1706 = vor.u32 %v1703, %v1704
        %v1707 = vsel %vm1655, %v1695, %v1706
        %v1709 = vshrl.u32 %v1645, 16
        %v1711 = vrot.slane %v1709, 7
        %v1712 = vshll.u32 %v1645, 16
        %v1714 = vor.u32 %v1711, %v1712
        %v1715 = vsel %vm1655, %v1703, %v1714
        %v1717 = vshrl.u32 %v1646, 16
        %v1719 = vrot.slane %v1717, 7
        %v1720 = vshll.u32 %v1646, 16
        %v1722 = vor.u32 %v1719, %v1720
        %v1723 = vsel %vm1655, %v1711, %v1722
        %v1725 = vshrl.u32 %v1647, 16
        %v1727 = vrot.slane %v1725, 7
        %v1728 = vshll.u32 %v1647, 16
        %v1730 = vor.u32 %v1727, %v1728
        %v1731 = vsel %vm1655, %v1719, %v1730
        %v1733 = vshrl.u32 %v1648, 16
        %v1735 = vrot.slane %v1733, 7
        %v1736 = vshll.u32 %v1648, 16
        %v1738 = vor.u32 %v1735, %v1736
        %v1739 = vsel %vm1655, %v1727, %v1738
        %v1741 = vshrl.u32 %v1649, 16
        %v1743 = vrot.slane %v1741, 7
        %v1744 = vshll.u32 %v1649, 16
        %v1746 = vor.u32 %v1743, %v1744
        %v1747 = vsel %vm1655, %v1735, %v1746
        %v1749 = vshrl.u32 %v1650, 16
        %v1751 = vrot.slane %v1749, 7
        %v1752 = vshll.u32 %v1650, 16
        %v1754 = vor.u32 %v1751, %v1752
        %v1755 = vsel %vm1655, %v1743, %v1754
        %v1757 = vshrl.u32 %v1651, 16
        %v1759 = vrot.slane %v1757, 7
        %v1760 = vshll.u32 %v1651, 16
        %v1762 = vor.u32 %v1759, %v1760
        %v1763 = vsel %vm1655, %v1751, %v1762
        %v1765 = vshrl.u32 %v1652, 16
        %v1767 = vrot.slane %v1765, 7
        %v1768 = vshll.u32 %v1652, 16
        %v1770 = vor.u32 %v1767, %v1768
        %v1771 = vsel %vm1655, %v1759, %v1770
        %v1773 = vshrl.u32 %v1653, 16
        %v1775 = vrot.slane %v1773, 7
        %v1776 = vshll.u32 %v1653, 16
        %v1778 = vor.u32 %v1775, %v1776
        %v1779 = vsel %vm1655, %v1767, %v1778
        %v1781 = vshrl.u32 %v1654, 16
        %v1783 = vrot.slane %v1781, 7
        %v1784 = vshll.u32 %v1654, 16
        %v1786 = vor.u32 %v1783, %v1784
        %v1787 = vsel %vm1655, %v1775, %v1786
        %1804 = vst.msk [vmem:[#allocation3] sm:$0xff] %vm377, %v1667
        %1805 = vst.msk [vmem:[#allocation3 + $0x18] sm:$0xff] %vm377, %v1675
        %1806 = vst.msk [vmem:[#allocation3 + $0x30] sm:$0xff] %vm377, %v1683
        %1807 = vst.msk [vmem:[#allocation3 + $0x48] sm:$0xff] %vm377, %v1691
        %1808 = vst.msk [vmem:[#allocation3 + $0x60] sm:$0xff] %vm377, %v1699
        %1809 = vst.msk [vmem:[#allocation3 + $0x78] sm:$0xff] %vm377, %v1707
        %1810 = vst.msk [vmem:[#allocation3 + $0x90] sm:$0xff] %vm377, %v1715
        %1811 = vst.msk [vmem:[#allocation3 + $0xa8] sm:$0xff] %vm377, %v1723
        %1812 = vst.msk [vmem:[#allocation3 + $0xc0] sm:$0xff] %vm377, %v1731
        %1813 = vst.msk [vmem:[#allocation3 + $0xd8] sm:$0xff] %vm377, %v1739
        %1814 = vst.msk [vmem:[#allocation3 + $0xf0] sm:$0xff] %vm377, %v1747
        %1815 = vst.msk [vmem:[#allocation3 + $0x108] sm:$0xff] %vm377, %v1755
        %1816 = vst.msk [vmem:[#allocation3 + $0x120] sm:$0xff] %vm377, %v1763
        %1817 = vst.msk [vmem:[#allocation3 + $0x138] sm:$0xff] %vm377, %v1771
        %1818 = vst.msk [vmem:[#allocation3 + $0x150] sm:$0xff] %vm377, %v1779
        %1819 = vst.msk [vmem:[#allocation3 + $0x168] sm:$0xff] %vm377, %v1787
        %v1820 = vld [vmem:[#allocation2 + $0x8] sm:$0xff]
        %v1821 = vld [vmem:[#allocation2 + $0x10] sm:$0xff]
        %v1822 = vld [vmem:[#allocation2 + $0x18] sm:$0xff]
        %v1823 = vld [vmem:[#allocation2 + $0x20] sm:$0xff]
        %v1824 = vld [vmem:[#allocation2 + $0x28] sm:$0xff]
        %v1825 = vld [vmem:[#allocation2 + $0x30] sm:$0xff]
        %v1826 = vld [vmem:[#allocation2 + $0x38] sm:$0xff]
        %v1827 = vld [vmem:[#allocation2 + $0x40] sm:$0xff]
        %v1828 = vld [vmem:[#allocation2 + $0x48] sm:$0xff]
        %v1829 = vld [vmem:[#allocation2 + $0x50] sm:$0xff]
        %v1830 = vld [vmem:[#allocation2 + $0x58] sm:$0xff]
        %v1831 = vld [vmem:[#allocation2 + $0x60] sm:$0xff]
        %v1832 = vld [vmem:[#allocation2 + $0x68] sm:$0xff]
        %v1833 = vld [vmem:[#allocation2 + $0x70] sm:$0xff]
        %v1834 = vld [vmem:[#allocation2 + $0x78] sm:$0xff]
        %v1835 = vld [vmem:[#allocation2 + $0x80] sm:$0xff]
        %1852 = vrot.lane.b32.xlu0 %v1820, 32
        %v1853 = vpop.permute.xlu0 %1852
        %1854 = vrot.lane.b32.xlu0 %v1821, 32
        %v1855 = vpop.permute.xlu0 %1854
        %1856 = vrot.lane.b32.xlu0 %v1822, 32
        %v1857 = vpop.permute.xlu0 %1856
        %1858 = vrot.lane.b32.xlu0 %v1823, 32
        %v1859 = vpop.permute.xlu0 %1858
        %1860 = vrot.lane.b32.xlu0 %v1824, 32
        %v1861 = vpop.permute.xlu0 %1860
        %1862 = vrot.lane.b32.xlu0 %v1825, 32
        %v1863 = vpop.permute.xlu0 %1862
        %1864 = vrot.lane.b32.xlu0 %v1826, 32
        %v1865 = vpop.permute.xlu0 %1864
        %1866 = vrot.lane.b32.xlu0 %v1827, 32
        %v1867 = vpop.permute.xlu0 %1866
        %1868 = vrot.lane.b32.xlu0 %v1828, 32
        %v1869 = vpop.permute.xlu0 %1868
        %1870 = vrot.lane.b32.xlu0 %v1829, 32
        %v1871 = vpop.permute.xlu0 %1870
        %1872 = vrot.lane.b32.xlu0 %v1830, 32
        %v1873 = vpop.permute.xlu0 %1872
        %1874 = vrot.lane.b32.xlu0 %v1831, 32
        %v1875 = vpop.permute.xlu0 %1874
        %1876 = vrot.lane.b32.xlu0 %v1832, 32
        %v1877 = vpop.permute.xlu0 %1876
        %1878 = vrot.lane.b32.xlu0 %v1833, 32
        %v1879 = vpop.permute.xlu0 %1878
        %1880 = vrot.lane.b32.xlu0 %v1834, 32
        %v1881 = vpop.permute.xlu0 %1880
        %1882 = vrot.lane.b32.xlu0 %v1835, 32
        %v1883 = vpop.permute.xlu0 %1882
        %vm1900 = vcmask 523520
        %1901 = vst.msk [vmem:[#allocation3] sm:$0xff] %vm1900, %v1853
        %1902 = vst.msk [vmem:[#allocation3 + $0x18] sm:$0xff] %vm1900, %v1855
        %1903 = vst.msk [vmem:[#allocation3 + $0x30] sm:$0xff] %vm1900, %v1857
        %1904 = vst.msk [vmem:[#allocation3 + $0x48] sm:$0xff] %vm1900, %v1859
        %1905 = vst.msk [vmem:[#allocation3 + $0x60] sm:$0xff] %vm1900, %v1861
        %1906 = vst.msk [vmem:[#allocation3 + $0x78] sm:$0xff] %vm1900, %v1863
        %1907 = vst.msk [vmem:[#allocation3 + $0x90] sm:$0xff] %vm1900, %v1865
        %1908 = vst.msk [vmem:[#allocation3 + $0xa8] sm:$0xff] %vm1900, %v1867
        %1909 = vst.msk [vmem:[#allocation3 + $0xc0] sm:$0xff] %vm1900, %v1869
        %1910 = vst.msk [vmem:[#allocation3 + $0xd8] sm:$0xff] %vm1900, %v1871
        %1911 = vst.msk [vmem:[#allocation3 + $0xf0] sm:$0xff] %vm1900, %v1873
        %1912 = vst.msk [vmem:[#allocation3 + $0x108] sm:$0xff] %vm1900, %v1875
        %1913 = vst.msk [vmem:[#allocation3 + $0x120] sm:$0xff] %vm1900, %v1877
        %1914 = vst.msk [vmem:[#allocation3 + $0x138] sm:$0xff] %vm1900, %v1879
        %1915 = vst.msk [vmem:[#allocation3 + $0x150] sm:$0xff] %vm1900, %v1881
        %1916 = vst.msk [vmem:[#allocation3 + $0x168] sm:$0xff] %vm1900, %v1883
        %v1917 = vld [vmem:[#allocation2 + $0x8] sm:$0xff]
        %v1918 = vld [vmem:[#allocation2 + $0x10] sm:$0xff]
        %v1919 = vld [vmem:[#allocation2 + $0x18] sm:$0xff]
        %v1920 = vld [vmem:[#allocation2 + $0x20] sm:$0xff]
        %v1921 = vld [vmem:[#allocation2 + $0x28] sm:$0xff]
        %v1922 = vld [vmem:[#allocation2 + $0x30] sm:$0xff]
        %v1923 = vld [vmem:[#allocation2 + $0x38] sm:$0xff]
        %v1924 = vld [vmem:[#allocation2 + $0x40] sm:$0xff]
        %v1925 = vld [vmem:[#allocation2 + $0x48] sm:$0xff]
        %v1926 = vld [vmem:[#allocation2 + $0x50] sm:$0xff]
        %v1927 = vld [vmem:[#allocation2 + $0x58] sm:$0xff]
        %v1928 = vld [vmem:[#allocation2 + $0x60] sm:$0xff]
        %v1929 = vld [vmem:[#allocation2 + $0x68] sm:$0xff]
        %v1930 = vld [vmem:[#allocation2 + $0x70] sm:$0xff]
        %v1931 = vld [vmem:[#allocation2 + $0x78] sm:$0xff]
        %v1932 = vld [vmem:[#allocation2 + $0x80] sm:$0xff]
        %v1933 = vld [vmem:[#allocation2 + $0x88] sm:$0x1]
        %v1934 = vsel %vm831, 1, 0
        %v1935 = vsel %vm832, 1, 0
        %v1936 = vsel %vm833, 1, 0
        %v1937 = vsel %vm834, 1, 0
        %v1938 = vsel %vm835, 1, 0
        %v1939 = vsel %vm836, 1, 0
        %v1940 = vsel %vm837, 1, 0
        %v1941 = vsel %vm838, 1, 0
        %v1942 = vsel %vm839, 1, 0
        %v1943 = vsel %vm840, 1, 0
        %v1944 = vsel %vm841, 1, 0
        %v1945 = vsel %vm842, 1, 0
        %v1946 = vsel %vm843, 1, 0
        %v1947 = vsel %vm844, 1, 0
        %v1948 = vsel %vm845, 1, 0
        %v1949 = vsel %vm846, 1, 0
        %v1950 = vsel %vm847, 1, 0
        %v1951 = vsel %vm848, 1, 0
        %v1952 = vsel %vm849, 1, 0
        %v1953 = vsel %vm850, 1, 0
        %v1954 = vsel %vm851, 1, 0
        %v1955 = vsel %vm852, 1, 0
        %v1956 = vsel %vm853, 1, 0
        %v1957 = vsel %vm854, 1, 0
        %v1958 = vsel %vm855, 1, 0
        %v1959 = vsel %vm856, 1, 0
        %v1960 = vsel %vm857, 1, 0
        %v1961 = vsel %vm858, 1, 0
        %v1962 = vsel %vm859, 1, 0
        %v1963 = vsel %vm860, 1, 0
        %v1964 = vsel %vm861, 1, 0
        %v1965 = vsel %vm862, 1, 0
        %vm1966 = vcmp.eq.s32.totalorder %v1934, 1
        %vm1967 = vcmp.eq.s32.totalorder %v1935, 1
        %vm1968 = vcmp.eq.s32.totalorder %v1936, 1
        %vm1969 = vcmp.eq.s32.totalorder %v1937, 1
        %vm1970 = vcmp.eq.s32.totalorder %v1938, 1
        %vm1971 = vcmp.eq.s32.totalorder %v1939, 1
        %vm1972 = vcmp.eq.s32.totalorder %v1940, 1
        %vm1973 = vcmp.eq.s32.totalorder %v1941, 1
        %vm1974 = vcmp.eq.s32.totalorder %v1942, 1
        %vm1975 = vcmp.eq.s32.totalorder %v1943, 1
        %vm1976 = vcmp.eq.s32.totalorder %v1944, 1
        %vm1977 = vcmp.eq.s32.totalorder %v1945, 1
        %vm1978 = vcmp.eq.s32.totalorder %v1946, 1
        %vm1979 = vcmp.eq.s32.totalorder %v1947, 1
        %vm1980 = vcmp.eq.s32.totalorder %v1948, 1
        %vm1981 = vcmp.eq.s32.totalorder %v1949, 1
        %vm1982 = vcmp.eq.s32.totalorder %v1950, 1
        %vm1983 = vcmp.eq.s32.totalorder %v1951, 1
        %vm1984 = vcmp.eq.s32.totalorder %v1952, 1
        %vm1985 = vcmp.eq.s32.totalorder %v1953, 1
        %vm1986 = vcmp.eq.s32.totalorder %v1954, 1
        %vm1987 = vcmp.eq.s32.totalorder %v1955, 1
        %vm1988 = vcmp.eq.s32.totalorder %v1956, 1
        %vm1989 = vcmp.eq.s32.totalorder %v1957, 1
        %vm1990 = vcmp.eq.s32.totalorder %v1958, 1
        %vm1991 = vcmp.eq.s32.totalorder %v1959, 1
        %vm1992 = vcmp.eq.s32.totalorder %v1960, 1
        %vm1993 = vcmp.eq.s32.totalorder %v1961, 1
        %vm1994 = vcmp.eq.s32.totalorder %v1962, 1
        %vm1995 = vcmp.eq.s32.totalorder %v1963, 1
        %vm1996 = vcmp.eq.s32.totalorder %v1964, 1
        %vm1997 = vcmp.eq.s32.totalorder %v1965, 1
        %vm1998 = vmpackc.low %vm1966, %vm1966
        %vm1999 = vmpackc.low %vm1967, %vm1967
        %vm2000 = vmpackc.low %vm1968, %vm1968
        %vm2001 = vmpackc.low %vm1969, %vm1969
        %vm2002 = vmpackc.low %vm1970, %vm1970
        %vm2003 = vmpackc.low %vm1971, %vm1971
        %vm2004 = vmpackc.low %vm1972, %vm1972
        %vm2005 = vmpackc.low %vm1973, %vm1973
        %vm2006 = vmpackc.low %vm1974, %vm1974
        %vm2007 = vmpackc.low %vm1975, %vm1975
        %vm2008 = vmpackc.low %vm1976, %vm1976
        %vm2009 = vmpackc.low %vm1977, %vm1977
        %vm2010 = vmpackc.low %vm1978, %vm1978
        %vm2011 = vmpackc.low %vm1979, %vm1979
        %vm2012 = vmpackc.low %vm1980, %vm1980
        %vm2013 = vmpackc.low %vm1981, %vm1981
        %vm2014 = vmpackc.low %vm1982, %vm1982
        %vm2015 = vmpackc.low %vm1983, %vm1983
        %vm2016 = vmpackc.low %vm1984, %vm1984
        %vm2017 = vmpackc.low %vm1985, %vm1985
        %vm2018 = vmpackc.low %vm1986, %vm1986
        %vm2019 = vmpackc.low %vm1987, %vm1987
        %vm2020 = vmpackc.low %vm1988, %vm1988
        %vm2021 = vmpackc.low %vm1989, %vm1989
        %vm2022 = vmpackc.low %vm1990, %vm1990
        %vm2023 = vmpackc.low %vm1991, %vm1991
        %vm2024 = vmpackc.low %vm1992, %vm1992
        %vm2025 = vmpackc.low %vm1993, %vm1993
        %vm2026 = vmpackc.low %vm1994, %vm1994
        %vm2027 = vmpackc.low %vm1995, %vm1995
        %vm2028 = vmpackc.low %vm1996, %vm1996
        %vm2029 = vmpackc.low %vm1997, %vm1997
        %v2030 = vsel %vm1998, 65537, 0
        %v2031 = vsel %vm1999, 65537, 0
        %v2032 = vsel %vm2000, 65537, 0
        %v2033 = vsel %vm2001, 65537, 0
        %v2034 = vsel %vm2002, 65537, 0
        %v2035 = vsel %vm2003, 65537, 0
        %v2036 = vsel %vm2004, 65537, 0
        %v2037 = vsel %vm2005, 65537, 0
        %v2038 = vsel %vm2006, 65537, 0
        %v2039 = vsel %vm2007, 65537, 0
        %v2040 = vsel %vm2008, 65537, 0
        %v2041 = vsel %vm2009, 65537, 0
        %v2042 = vsel %vm2010, 65537, 0
        %v2043 = vsel %vm2011, 65537, 0
        %v2044 = vsel %vm2012, 65537, 0
        %v2045 = vsel %vm2013, 65537, 0
        %v2046 = vsel %vm2014, 65537, 0
        %v2047 = vsel %vm2015, 65537, 0
        %v2048 = vsel %vm2016, 65537, 0
        %v2049 = vsel %vm2017, 65537, 0
        %v2050 = vsel %vm2018, 65537, 0
        %v2051 = vsel %vm2019, 65537, 0
        %v2052 = vsel %vm2020, 65537, 0
        %v2053 = vsel %vm2021, 65537, 0
        %v2054 = vsel %vm2022, 65537, 0
        %v2055 = vsel %vm2023, 65537, 0
        %v2056 = vsel %vm2024, 65537, 0
        %v2057 = vsel %vm2025, 65537, 0
        %v2058 = vsel %vm2026, 65537, 0
        %v2059 = vsel %vm2027, 65537, 0
        %v2060 = vsel %vm2028, 65537, 0
        %v2061 = vsel %vm2029, 65537, 0
        %v2062 = vunpack.c.l.b16 %v2030
        %v2063 = vunpack.c.l.b16 %v2031
        %v2064 = vunpack.c.l.b16 %v2032
        %v2065 = vunpack.c.l.b16 %v2033
        %v2066 = vunpack.c.l.b16 %v2034
        %v2067 = vunpack.c.l.b16 %v2035
        %v2068 = vunpack.c.l.b16 %v2036
        %v2069 = vunpack.c.l.b16 %v2037
        %v2070 = vunpack.c.l.b16 %v2038
        %v2071 = vunpack.c.l.b16 %v2039
        %v2072 = vunpack.c.l.b16 %v2040
        %v2073 = vunpack.c.l.b16 %v2041
        %v2074 = vunpack.c.l.b16 %v2042
        %v2075 = vunpack.c.l.b16 %v2043
        %v2076 = vunpack.c.l.b16 %v2044
        %v2077 = vunpack.c.l.b16 %v2045
        %v2078 = vunpack.c.l.b16 %v2046
        %v2079 = vunpack.c.l.b16 %v2047
        %v2080 = vunpack.c.l.b16 %v2048
        %v2081 = vunpack.c.l.b16 %v2049
        %v2082 = vunpack.c.l.b16 %v2050
        %v2083 = vunpack.c.l.b16 %v2051
        %v2084 = vunpack.c.l.b16 %v2052
        %v2085 = vunpack.c.l.b16 %v2053
        %v2086 = vunpack.c.l.b16 %v2054
        %v2087 = vunpack.c.l.b16 %v2055
        %v2088 = vunpack.c.l.b16 %v2056
        %v2089 = vunpack.c.l.b16 %v2057
        %v2090 = vunpack.c.l.b16 %v2058
        %v2091 = vunpack.c.l.b16 %v2059
        %v2092 = vunpack.c.l.b16 %v2060
        %v2093 = vunpack.c.l.b16 %v2061
        %v2094 = vpack.c.b16 %v2063, %v2062
        %v2095 = vpack.c.b16 %v2065, %v2064
        %v2096 = vpack.c.b16 %v2067, %v2066
        %v2097 = vpack.c.b16 %v2069, %v2068
        %v2098 = vpack.c.b16 %v2071, %v2070
        %v2099 = vpack.c.b16 %v2073, %v2072
        %v2100 = vpack.c.b16 %v2075, %v2074
        %v2101 = vpack.c.b16 %v2077, %v2076
        %v2102 = vpack.c.b16 %v2079, %v2078
        %v2103 = vpack.c.b16 %v2081, %v2080
        %v2104 = vpack.c.b16 %v2083, %v2082
        %v2105 = vpack.c.b16 %v2085, %v2084
        %v2106 = vpack.c.b16 %v2087, %v2086
        %v2107 = vpack.c.b16 %v2089, %v2088
        %v2108 = vpack.c.b16 %v2091, %v2090
        %v2109 = vpack.c.b16 %v2093, %v2092
        %v2111 = vshrl.u32 %v2094, 16
        %v2113 = vrot.slane %v2111, 7
        %v2114 = vshll.u32 %v2094, 16
        %v2116 = vor.u32 %v2113, %v2114
        %v2118 = vshrl.u32 %v2095, 16
        %v2120 = vrot.slane %v2118, 7
        %v2121 = vshll.u32 %v2095, 16
        %v2123 = vor.u32 %v2120, %v2121
        %v2124 = vsel %vm1655, %v2113, %v2123
        %v2126 = vshrl.u32 %v2096, 16
        %v2128 = vrot.slane %v2126, 7
        %v2129 = vshll.u32 %v2096, 16
        %v2131 = vor.u32 %v2128, %v2129
        %v2132 = vsel %vm1655, %v2120, %v2131
        %v2134 = vshrl.u32 %v2097, 16
        %v2136 = vrot.slane %v2134, 7
        %v2137 = vshll.u32 %v2097, 16
        %v2139 = vor.u32 %v2136, %v2137
        %v2140 = vsel %vm1655, %v2128, %v2139
        %v2142 = vshrl.u32 %v2098, 16
        %v2144 = vrot.slane %v2142, 7
        %v2145 = vshll.u32 %v2098, 16
        %v2147 = vor.u32 %v2144, %v2145
        %v2148 = vsel %vm1655, %v2136, %v2147
        %v2150 = vshrl.u32 %v2099, 16
        %v2152 = vrot.slane %v2150, 7
        %v2153 = vshll.u32 %v2099, 16
        %v2155 = vor.u32 %v2152, %v2153
        %v2156 = vsel %vm1655, %v2144, %v2155
        %v2158 = vshrl.u32 %v2100, 16
        %v2160 = vrot.slane %v2158, 7
        %v2161 = vshll.u32 %v2100, 16
        %v2163 = vor.u32 %v2160, %v2161
        %v2164 = vsel %vm1655, %v2152, %v2163
        %v2166 = vshrl.u32 %v2101, 16
        %v2168 = vrot.slane %v2166, 7
        %v2169 = vshll.u32 %v2101, 16
        %v2171 = vor.u32 %v2168, %v2169
        %v2172 = vsel %vm1655, %v2160, %v2171
        %v2174 = vshrl.u32 %v2102, 16
        %v2176 = vrot.slane %v2174, 7
        %v2177 = vshll.u32 %v2102, 16
        %v2179 = vor.u32 %v2176, %v2177
        %v2180 = vsel %vm1655, %v2168, %v2179
        %v2182 = vshrl.u32 %v2103, 16
        %v2184 = vrot.slane %v2182, 7
        %v2185 = vshll.u32 %v2103, 16
        %v2187 = vor.u32 %v2184, %v2185
        %v2188 = vsel %vm1655, %v2176, %v2187
        %v2190 = vshrl.u32 %v2104, 16
        %v2192 = vrot.slane %v2190, 7
        %v2193 = vshll.u32 %v2104, 16
        %v2195 = vor.u32 %v2192, %v2193
        %v2196 = vsel %vm1655, %v2184, %v2195
        %v2198 = vshrl.u32 %v2105, 16
        %v2200 = vrot.slane %v2198, 7
        %v2201 = vshll.u32 %v2105, 16
        %v2203 = vor.u32 %v2200, %v2201
        %v2204 = vsel %vm1655, %v2192, %v2203
        %v2206 = vshrl.u32 %v2106, 16
        %v2208 = vrot.slane %v2206, 7
        %v2209 = vshll.u32 %v2106, 16
        %v2211 = vor.u32 %v2208, %v2209
        %v2212 = vsel %vm1655, %v2200, %v2211
        %v2214 = vshrl.u32 %v2107, 16
        %v2216 = vrot.slane %v2214, 7
        %v2217 = vshll.u32 %v2107, 16
        %v2219 = vor.u32 %v2216, %v2217
        %v2220 = vsel %vm1655, %v2208, %v2219
        %v2222 = vshrl.u32 %v2108, 16
        %v2224 = vrot.slane %v2222, 7
        %v2225 = vshll.u32 %v2108, 16
        %v2227 = vor.u32 %v2224, %v2225
        %v2228 = vsel %vm1655, %v2216, %v2227
        %v2230 = vshrl.u32 %v2109, 16
        %v2232 = vrot.slane %v2230, 7
        %v2233 = vshll.u32 %v2109, 16
        %v2235 = vor.u32 %v2232, %v2233
        %v2236 = vsel %vm1655, %v2224, %v2235
        %vm2237 = vcmp.ne.s16.totalorder %v2116, 0
        %vm2238 = vcmp.ne.s16.totalorder %v2124, 0
        %vm2239 = vcmp.ne.s16.totalorder %v2132, 0
        %vm2240 = vcmp.ne.s16.totalorder %v2140, 0
        %vm2241 = vcmp.ne.s16.totalorder %v2148, 0
        %vm2242 = vcmp.ne.s16.totalorder %v2156, 0
        %vm2243 = vcmp.ne.s16.totalorder %v2164, 0
        %vm2244 = vcmp.ne.s16.totalorder %v2172, 0
        %vm2245 = vcmp.ne.s16.totalorder %v2180, 0
        %vm2246 = vcmp.ne.s16.totalorder %v2188, 0
        %vm2247 = vcmp.ne.s16.totalorder %v2196, 0
        %vm2248 = vcmp.ne.s16.totalorder %v2204, 0
        %vm2249 = vcmp.ne.s16.totalorder %v2212, 0
        %vm2250 = vcmp.ne.s16.totalorder %v2220, 0
        %vm2251 = vcmp.ne.s16.totalorder %v2228, 0
        %vm2252 = vcmp.ne.s16.totalorder %v2236, 0
        %vm2253 = vcmp.ne.s16.totalorder %v2232, 0
        %v2254 = vsel %vm2237, %v1917, 0
        %v2255 = vsel %vm2238, %v1918, 0
        %v2256 = vsel %vm2239, %v1919, 0
        %v2257 = vsel %vm2240, %v1920, 0
        %v2258 = vsel %vm2241, %v1921, 0
        %v2259 = vsel %vm2242, %v1922, 0
        %v2260 = vsel %vm2243, %v1923, 0
        %v2261 = vsel %vm2244, %v1924, 0
        %v2262 = vsel %vm2245, %v1925, 0
        %v2263 = vsel %vm2246, %v1926, 0
        %v2264 = vsel %vm2247, %v1927, 0
        %v2265 = vsel %vm2248, %v1928, 0
        %v2266 = vsel %vm2249, %v1929, 0
        %v2267 = vsel %vm2250, %v1930, 0
        %v2268 = vsel %vm2251, %v1931, 0
        %v2269 = vsel %vm2252, %v1932, 0
        %v2270 = vsel %vm2253, %v1933, 0
        %v2272 = vshrl.u32 %v2254, 16
        %v2274 = vshll.u32 %v2254, 16
        %v2276 = vrot.slane %v2274, 1
        %v2277 = vor.u32 %v2272, %v2276
        %v2279 = vshll.u32 %v2255, 16
        %v2281 = vrot.slane %v2279, 1
        %v2282 = vsel %vm1493, %v2277, %v2281
        %v2283 = vshrl.u32 %v2255, 16
        %v2285 = vor.u32 %v2283, %v2281
        %v2287 = vshll.u32 %v2256, 16
        %v2289 = vrot.slane %v2287, 1
        %v2290 = vsel %vm1493, %v2285, %v2289
        %v2291 = vshrl.u32 %v2256, 16
        %v2293 = vor.u32 %v2291, %v2289
        %v2295 = vshll.u32 %v2257, 16
        %v2297 = vrot.slane %v2295, 1
        %v2298 = vsel %vm1493, %v2293, %v2297
        %v2299 = vshrl.u32 %v2257, 16
        %v2301 = vor.u32 %v2299, %v2297
        %v2303 = vshll.u32 %v2258, 16
        %v2305 = vrot.slane %v2303, 1
        %v2306 = vsel %vm1493, %v2301, %v2305
        %v2307 = vshrl.u32 %v2258, 16
        %v2309 = vor.u32 %v2307, %v2305
        %v2311 = vshll.u32 %v2259, 16
        %v2313 = vrot.slane %v2311, 1
        %v2314 = vsel %vm1493, %v2309, %v2313
        %v2315 = vshrl.u32 %v2259, 16
        %v2317 = vor.u32 %v2315, %v2313
        %v2319 = vshll.u32 %v2260, 16
        %v2321 = vrot.slane %v2319, 1
        %v2322 = vsel %vm1493, %v2317, %v2321
        %v2323 = vshrl.u32 %v2260, 16
        %v2325 = vor.u32 %v2323, %v2321
        %v2327 = vshll.u32 %v2261, 16
        %v2329 = vrot.slane %v2327, 1
        %v2330 = vsel %vm1493, %v2325, %v2329
        %v2331 = vshrl.u32 %v2261, 16
        %v2333 = vor.u32 %v2331, %v2329
        %v2335 = vshll.u32 %v2262, 16
        %v2337 = vrot.slane %v2335, 1
        %v2338 = vsel %vm1493, %v2333, %v2337
        %v2339 = vshrl.u32 %v2262, 16
        %v2341 = vor.u32 %v2339, %v2337
        %v2343 = vshll.u32 %v2263, 16
        %v2345 = vrot.slane %v2343, 1
        %v2346 = vsel %vm1493, %v2341, %v2345
        %v2347 = vshrl.u32 %v2263, 16
        %v2349 = vor.u32 %v2347, %v2345
        %v2351 = vshll.u32 %v2264, 16
        %v2353 = vrot.slane %v2351, 1
        %v2354 = vsel %vm1493, %v2349, %v2353
        %v2355 = vshrl.u32 %v2264, 16
        %v2357 = vor.u32 %v2355, %v2353
        %v2359 = vshll.u32 %v2265, 16
        %v2361 = vrot.slane %v2359, 1
        %v2362 = vsel %vm1493, %v2357, %v2361
        %v2363 = vshrl.u32 %v2265, 16
        %v2365 = vor.u32 %v2363, %v2361
        %v2367 = vshll.u32 %v2266, 16
        %v2369 = vrot.slane %v2367, 1
        %v2370 = vsel %vm1493, %v2365, %v2369
        %v2371 = vshrl.u32 %v2266, 16
        %v2373 = vor.u32 %v2371, %v2369
        %v2375 = vshll.u32 %v2267, 16
        %v2377 = vrot.slane %v2375, 1
        %v2378 = vsel %vm1493, %v2373, %v2377
        %v2379 = vshrl.u32 %v2267, 16
        %v2381 = vor.u32 %v2379, %v2377
        %v2383 = vshll.u32 %v2268, 16
        %v2385 = vrot.slane %v2383, 1
        %v2386 = vsel %vm1493, %v2381, %v2385
        %v2387 = vshrl.u32 %v2268, 16
        %v2389 = vor.u32 %v2387, %v2385
        %v2391 = vshll.u32 %v2269, 16
        %v2393 = vrot.slane %v2391, 1
        %v2394 = vsel %vm1493, %v2389, %v2393
        %v2395 = vshrl.u32 %v2269, 16
        %v2397 = vor.u32 %v2395, %v2393
        %v2399 = vshll.u32 %v2270, 16
        %v2401 = vrot.slane %v2399, 1
        %v2402 = vsel %vm1493, %v2397, %v2401
        %2403 = vrot.lane.b32.xlu0 %v2282, 64
        %v2404 = vpop.permute.xlu0 %2403
        %2405 = vrot.lane.b32.xlu0 %v2290, 64
        %v2406 = vpop.permute.xlu0 %2405
        %2407 = vrot.lane.b32.xlu0 %v2298, 64
        %v2408 = vpop.permute.xlu0 %2407
        %2409 = vrot.lane.b32.xlu0 %v2306, 64
        %v2410 = vpop.permute.xlu0 %2409
        %2411 = vrot.lane.b32.xlu0 %v2314, 64
        %v2412 = vpop.permute.xlu0 %2411
        %2413 = vrot.lane.b32.xlu0 %v2322, 64
        %v2414 = vpop.permute.xlu0 %2413
        %2415 = vrot.lane.b32.xlu0 %v2330, 64
        %v2416 = vpop.permute.xlu0 %2415
        %2417 = vrot.lane.b32.xlu0 %v2338, 64
        %v2418 = vpop.permute.xlu0 %2417
        %2419 = vrot.lane.b32.xlu0 %v2346, 64
        %v2420 = vpop.permute.xlu0 %2419
        %2421 = vrot.lane.b32.xlu0 %v2354, 64
        %v2422 = vpop.permute.xlu0 %2421
        %2423 = vrot.lane.b32.xlu0 %v2362, 64
        %v2424 = vpop.permute.xlu0 %2423
        %2425 = vrot.lane.b32.xlu0 %v2370, 64
        %v2426 = vpop.permute.xlu0 %2425
        %2427 = vrot.lane.b32.xlu0 %v2378, 64
        %v2428 = vpop.permute.xlu0 %2427
        %2429 = vrot.lane.b32.xlu0 %v2386, 64
        %v2430 = vpop.permute.xlu0 %2429
        %2431 = vrot.lane.b32.xlu0 %v2394, 64
        %v2432 = vpop.permute.xlu0 %2431
        %2433 = vrot.lane.b32.xlu0 %v2402, 64
        %v2434 = vpop.permute.xlu0 %2433
        %vm2451 = vcmask 785920
        %2452 = vst.msk [vmem:[#allocation3] sm:$0xff] %vm2451, %v2404
        %2453 = vst.msk [vmem:[#allocation3 + $0x18] sm:$0xff] %vm2451, %v2406
        %2454 = vst.msk [vmem:[#allocation3 + $0x30] sm:$0xff] %vm2451, %v2408
        %2455 = vst.msk [vmem:[#allocation3 + $0x48] sm:$0xff] %vm2451, %v2410
        %2456 = vst.msk [vmem:[#allocation3 + $0x60] sm:$0xff] %vm2451, %v2412
        %2457 = vst.msk [vmem:[#allocation3 + $0x78] sm:$0xff] %vm2451, %v2414
        %2458 = vst.msk [vmem:[#allocation3 + $0x90] sm:$0xff] %vm2451, %v2416
        %2459 = vst.msk [vmem:[#allocation3 + $0xa8] sm:$0xff] %vm2451, %v2418
        %2460 = vst.msk [vmem:[#allocation3 + $0xc0] sm:$0xff] %vm2451, %v2420
        %2461 = vst.msk [vmem:[#allocation3 + $0xd8] sm:$0xff] %vm2451, %v2422
        %2462 = vst.msk [vmem:[#allocation3 + $0xf0] sm:$0xff] %vm2451, %v2424
        %2463 = vst.msk [vmem:[#allocation3 + $0x108] sm:$0xff] %vm2451, %v2426
        %2464 = vst.msk [vmem:[#allocation3 + $0x120] sm:$0xff] %vm2451, %v2428
        %2465 = vst.msk [vmem:[#allocation3 + $0x138] sm:$0xff] %vm2451, %v2430
        %2466 = vst.msk [vmem:[#allocation3 + $0x150] sm:$0xff] %vm2451, %v2432
        %2467 = vst.msk [vmem:[#allocation3 + $0x168] sm:$0xff] %vm2451, %v2434
        %v2468 = vld [vmem:[#allocation2 + $0x8] sm:$0x80]
        %v2469 = vld [vmem:[#allocation2 + $0x10] sm:$0xff]
        %v2470 = vld [vmem:[#allocation2 + $0x18] sm:$0xff]
        %v2471 = vld [vmem:[#allocation2 + $0x20] sm:$0xff]
        %v2472 = vld [vmem:[#allocation2 + $0x28] sm:$0xff]
        %v2473 = vld [vmem:[#allocation2 + $0x30] sm:$0xff]
        %v2474 = vld [vmem:[#allocation2 + $0x38] sm:$0xff]
        %v2475 = vld [vmem:[#allocation2 + $0x40] sm:$0xff]
        %v2476 = vld [vmem:[#allocation2 + $0x48] sm:$0xff]
        %v2477 = vld [vmem:[#allocation2 + $0x50] sm:$0xff]
        %v2478 = vld [vmem:[#allocation2 + $0x58] sm:$0xff]
        %v2479 = vld [vmem:[#allocation2 + $0x60] sm:$0xff]
        %v2480 = vld [vmem:[#allocation2 + $0x68] sm:$0xff]
        %v2481 = vld [vmem:[#allocation2 + $0x70] sm:$0xff]
        %v2482 = vld [vmem:[#allocation2 + $0x78] sm:$0xff]
        %v2483 = vld [vmem:[#allocation2 + $0x80] sm:$0xff]
        %v2484 = vld [vmem:[#allocation2 + $0x88] sm:$0xff]
        %v2485 = vsel %vm1621, %v2468, 0
        %v2486 = vsel %vm1622, %v2469, 0
        %v2487 = vsel %vm1623, %v2470, 0
        %v2488 = vsel %vm1624, %v2471, 0
        %v2489 = vsel %vm1625, %v2472, 0
        %v2490 = vsel %vm1626, %v2473, 0
        %v2491 = vsel %vm1627, %v2474, 0
        %v2492 = vsel %vm1628, %v2475, 0
        %v2493 = vsel %vm1629, %v2476, 0
        %v2494 = vsel %vm1630, %v2477, 0
        %v2495 = vsel %vm1631, %v2478, 0
        %v2496 = vsel %vm1632, %v2479, 0
        %v2497 = vsel %vm1633, %v2480, 0
        %v2498 = vsel %vm1634, %v2481, 0
        %v2499 = vsel %vm1635, %v2482, 0
        %v2500 = vsel %vm1636, %v2483, 0
        %v2501 = vsel %vm1637, %v2484, 0
        %v2503 = vshrl.u32 %v2485, 16
        %v2505 = vrot.slane %v2503, 7
        %v2507 = vshrl.u32 %v2486, 16
        %v2509 = vrot.slane %v2507, 7
        %v2510 = vshll.u32 %v2486, 16
        %v2512 = vor.u32 %v2509, %v2510
        %v2513 = vsel %vm1655, %v2505, %v2512
        %v2515 = vshrl.u32 %v2487, 16
        %v2517 = vrot.slane %v2515, 7
        %v2518 = vshll.u32 %v2487, 16
        %v2520 = vor.u32 %v2517, %v2518
        %v2521 = vsel %vm1655, %v2509, %v2520
        %v2523 = vshrl.u32 %v2488, 16
        %v2525 = vrot.slane %v2523, 7
        %v2526 = vshll.u32 %v2488, 16
        %v2528 = vor.u32 %v2525, %v2526
        %v2529 = vsel %vm1655, %v2517, %v2528
        %v2531 = vshrl.u32 %v2489, 16
        %v2533 = vrot.slane %v2531, 7
        %v2534 = vshll.u32 %v2489, 16
        %v2536 = vor.u32 %v2533, %v2534
        %v2537 = vsel %vm1655, %v2525, %v2536
        %v2539 = vshrl.u32 %v2490, 16
        %v2541 = vrot.slane %v2539, 7
        %v2542 = vshll.u32 %v2490, 16
        %v2544 = vor.u32 %v2541, %v2542
        %v2545 = vsel %vm1655, %v2533, %v2544
        %v2547 = vshrl.u32 %v2491, 16
        %v2549 = vrot.slane %v2547, 7
        %v2550 = vshll.u32 %v2491, 16
        %v2552 = vor.u32 %v2549, %v2550
        %v2553 = vsel %vm1655, %v2541, %v2552
        %v2555 = vshrl.u32 %v2492, 16
        %v2557 = vrot.slane %v2555, 7
        %v2558 = vshll.u32 %v2492, 16
        %v2560 = vor.u32 %v2557, %v2558
        %v2561 = vsel %vm1655, %v2549, %v2560
        %v2563 = vshrl.u32 %v2493, 16
        %v2565 = vrot.slane %v2563, 7
        %v2566 = vshll.u32 %v2493, 16
        %v2568 = vor.u32 %v2565, %v2566
        %v2569 = vsel %vm1655, %v2557, %v2568
        %v2571 = vshrl.u32 %v2494, 16
        %v2573 = vrot.slane %v2571, 7
        %v2574 = vshll.u32 %v2494, 16
        %v2576 = vor.u32 %v2573, %v2574
        %v2577 = vsel %vm1655, %v2565, %v2576
        %v2579 = vshrl.u32 %v2495, 16
        %v2581 = vrot.slane %v2579, 7
        %v2582 = vshll.u32 %v2495, 16
        %v2584 = vor.u32 %v2581, %v2582
        %v2585 = vsel %vm1655, %v2573, %v2584
        %v2587 = vshrl.u32 %v2496, 16
        %v2589 = vrot.slane %v2587, 7
        %v2590 = vshll.u32 %v2496, 16
        %v2592 = vor.u32 %v2589, %v2590
        %v2593 = vsel %vm1655, %v2581, %v2592
        %v2595 = vshrl.u32 %v2497, 16
        %v2597 = vrot.slane %v2595, 7
        %v2598 = vshll.u32 %v2497, 16
        %v2600 = vor.u32 %v2597, %v2598
        %v2601 = vsel %vm1655, %v2589, %v2600
        %v2603 = vshrl.u32 %v2498, 16
        %v2605 = vrot.slane %v2603, 7
        %v2606 = vshll.u32 %v2498, 16
        %v2608 = vor.u32 %v2605, %v2606
        %v2609 = vsel %vm1655, %v2597, %v2608
        %v2611 = vshrl.u32 %v2499, 16
        %v2613 = vrot.slane %v2611, 7
        %v2614 = vshll.u32 %v2499, 16
        %v2616 = vor.u32 %v2613, %v2614
        %v2617 = vsel %vm1655, %v2605, %v2616
        %v2619 = vshrl.u32 %v2500, 16
        %v2621 = vrot.slane %v2619, 7
        %v2622 = vshll.u32 %v2500, 16
        %v2624 = vor.u32 %v2621, %v2622
        %v2625 = vsel %vm1655, %v2613, %v2624
        %v2627 = vshrl.u32 %v2501, 16
        %v2629 = vrot.slane %v2627, 7
        %v2630 = vshll.u32 %v2501, 16
        %v2632 = vor.u32 %v2629, %v2630
        %v2633 = vsel %vm1655, %v2621, %v2632
        %2634 = vrot.lane.b32.xlu0 %v2513, 96
        %v2635 = vpop.permute.xlu0 %2634
        %2636 = vrot.lane.b32.xlu0 %v2521, 96
        %v2637 = vpop.permute.xlu0 %2636
        %2638 = vrot.lane.b32.xlu0 %v2529, 96
        %v2639 = vpop.permute.xlu0 %2638
        %2640 = vrot.lane.b32.xlu0 %v2537, 96
        %v2641 = vpop.permute.xlu0 %2640
        %2642 = vrot.lane.b32.xlu0 %v2545, 96
        %v2643 = vpop.permute.xlu0 %2642
        %2644 = vrot.lane.b32.xlu0 %v2553, 96
        %v2645 = vpop.permute.xlu0 %2644
        %2646 = vrot.lane.b32.xlu0 %v2561, 96
        %v2647 = vpop.permute.xlu0 %2646
        %2648 = vrot.lane.b32.xlu0 %v2569, 96
        %v2649 = vpop.permute.xlu0 %2648
        %2650 = vrot.lane.b32.xlu0 %v2577, 96
        %v2651 = vpop.permute.xlu0 %2650
        %2652 = vrot.lane.b32.xlu0 %v2585, 96
        %v2653 = vpop.permute.xlu0 %2652
        %2654 = vrot.lane.b32.xlu0 %v2593, 96
        %v2655 = vpop.permute.xlu0 %2654
        %2656 = vrot.lane.b32.xlu0 %v2601, 96
        %v2657 = vpop.permute.xlu0 %2656
        %2658 = vrot.lane.b32.xlu0 %v2609, 96
        %v2659 = vpop.permute.xlu0 %2658
        %2660 = vrot.lane.b32.xlu0 %v2617, 96
        %v2661 = vpop.permute.xlu0 %2660
        %2662 = vrot.lane.b32.xlu0 %v2625, 96
        %v2663 = vpop.permute.xlu0 %2662
        %2664 = vrot.lane.b32.xlu0 %v2633, 96
        %v2665 = vpop.permute.xlu0 %2664
        %vm2682 = vcmask 1048320
        %2683 = vst.msk [vmem:[#allocation3] sm:$0xff] %vm2682, %v2635
        %2684 = vst.msk [vmem:[#allocation3 + $0x18] sm:$0xff] %vm2682, %v2637
        %2685 = vst.msk [vmem:[#allocation3 + $0x30] sm:$0xff] %vm2682, %v2639
        %2686 = vst.msk [vmem:[#allocation3 + $0x48] sm:$0xff] %vm2682, %v2641
        %2687 = vst.msk [vmem:[#allocation3 + $0x60] sm:$0xff] %vm2682, %v2643
        %2688 = vst.msk [vmem:[#allocation3 + $0x78] sm:$0xff] %vm2682, %v2645
        %2689 = vst.msk [vmem:[#allocation3 + $0x90] sm:$0xff] %vm2682, %v2647
        %2690 = vst.msk [vmem:[#allocation3 + $0xa8] sm:$0xff] %vm2682, %v2649
        %2691 = vst.msk [vmem:[#allocation3 + $0xc0] sm:$0xff] %vm2682, %v2651
        %2692 = vst.msk [vmem:[#allocation3 + $0xd8] sm:$0xff] %vm2682, %v2653
        %2693 = vst.msk [vmem:[#allocation3 + $0xf0] sm:$0xff] %vm2682, %v2655
        %2694 = vst.msk [vmem:[#allocation3 + $0x108] sm:$0xff] %vm2682, %v2657
        %2695 = vst.msk [vmem:[#allocation3 + $0x120] sm:$0xff] %vm2682, %v2659
        %2696 = vst.msk [vmem:[#allocation3 + $0x138] sm:$0xff] %vm2682, %v2661
        %2697 = vst.msk [vmem:[#allocation3 + $0x150] sm:$0xff] %vm2682, %v2663
        %2698 = vst.msk [vmem:[#allocation3 + $0x168] sm:$0xff] %vm2682, %v2665
        %v2699 = vld [vmem:[#allocation2 + $0x10] sm:$0xff]
        %v2700 = vld [vmem:[#allocation2 + $0x18] sm:$0xff]
        %v2701 = vld [vmem:[#allocation2 + $0x20] sm:$0xff]
        %v2702 = vld [vmem:[#allocation2 + $0x28] sm:$0xff]
        %v2703 = vld [vmem:[#allocation2 + $0x30] sm:$0xff]
        %v2704 = vld [vmem:[#allocation2 + $0x38] sm:$0xff]
        %v2705 = vld [vmem:[#allocation2 + $0x40] sm:$0xff]
        %v2706 = vld [vmem:[#allocation2 + $0x48] sm:$0xff]
        %v2707 = vld [vmem:[#allocation2 + $0x50] sm:$0xff]
        %v2708 = vld [vmem:[#allocation2 + $0x58] sm:$0xff]
        %v2709 = vld [vmem:[#allocation2 + $0x60] sm:$0xff]
        %v2710 = vld [vmem:[#allocation2 + $0x68] sm:$0xff]
        %v2711 = vld [vmem:[#allocation2 + $0x70] sm:$0xff]
        %v2712 = vld [vmem:[#allocation2 + $0x78] sm:$0xff]
        %v2713 = vld [vmem:[#allocation2 + $0x80] sm:$0xff]
        %v2714 = vld [vmem:[#allocation2 + $0x88] sm:$0xff]
        %2715 = vst.msk [vmem:[#allocation3 + $0x8] sm:$0xff] %vm377, %v2699
        %2716 = vst.msk [vmem:[#allocation3 + $0x20] sm:$0xff] %vm377, %v2700
        %2717 = vst.msk [vmem:[#allocation3 + $0x38] sm:$0xff] %vm377, %v2701
        %2718 = vst.msk [vmem:[#allocation3 + $0x50] sm:$0xff] %vm377, %v2702
        %2719 = vst.msk [vmem:[#allocation3 + $0x68] sm:$0xff] %vm377, %v2703
        %2720 = vst.msk [vmem:[#allocation3 + $0x80] sm:$0xff] %vm377, %v2704
        %2721 = vst.msk [vmem:[#allocation3 + $0x98] sm:$0xff] %vm377, %v2705
        %2722 = vst.msk [vmem:[#allocation3 + $0xb0] sm:$0xff] %vm377, %v2706
        %2723 = vst.msk [vmem:[#allocation3 + $0xc8] sm:$0xff] %vm377, %v2707
        %2724 = vst.msk [vmem:[#allocation3 + $0xe0] sm:$0xff] %vm377, %v2708
        %2725 = vst.msk [vmem:[#allocation3 + $0xf8] sm:$0xff] %vm377, %v2709
        %2726 = vst.msk [vmem:[#allocation3 + $0x110] sm:$0xff] %vm377, %v2710
        %2727 = vst.msk [vmem:[#allocation3 + $0x128] sm:$0xff] %vm377, %v2711
        %2728 = vst.msk [vmem:[#allocation3 + $0x140] sm:$0xff] %vm377, %v2712
        %2729 = vst.msk [vmem:[#allocation3 + $0x158] sm:$0xff] %vm377, %v2713
        %2730 = vst.msk [vmem:[#allocation3 + $0x170] sm:$0xff] %vm377, %v2714
        %v2731 = vld [vmem:[#allocation2 + $0x10] sm:$0xff]
        %v2732 = vld [vmem:[#allocation2 + $0x18] sm:$0xff]
        %v2733 = vld [vmem:[#allocation2 + $0x20] sm:$0xff]
        %v2734 = vld [vmem:[#allocation2 + $0x28] sm:$0xff]
        %v2735 = vld [vmem:[#allocation2 + $0x30] sm:$0xff]
        %v2736 = vld [vmem:[#allocation2 + $0x38] sm:$0xff]
        %v2737 = vld [vmem:[#allocation2 + $0x40] sm:$0xff]
        %v2738 = vld [vmem:[#allocation2 + $0x48] sm:$0xff]
        %v2739 = vld [vmem:[#allocation2 + $0x50] sm:$0xff]
        %v2740 = vld [vmem:[#allocation2 + $0x58] sm:$0xff]
        %v2741 = vld [vmem:[#allocation2 + $0x60] sm:$0xff]
        %v2742 = vld [vmem:[#allocation2 + $0x68] sm:$0xff]
        %v2743 = vld [vmem:[#allocation2 + $0x70] sm:$0xff]
        %v2744 = vld [vmem:[#allocation2 + $0x78] sm:$0xff]
        %v2745 = vld [vmem:[#allocation2 + $0x80] sm:$0xff]
        %v2746 = vld [vmem:[#allocation2 + $0x88] sm:$0xff]
        %v2747 = vld [vmem:[#allocation2 + $0x90] sm:$0x1]
        %v2748 = vsel %vm2237, %v2731, 0
        %v2749 = vsel %vm2238, %v2732, 0
        %v2750 = vsel %vm2239, %v2733, 0
        %v2751 = vsel %vm2240, %v2734, 0
        %v2752 = vsel %vm2241, %v2735, 0
        %v2753 = vsel %vm2242, %v2736, 0
        %v2754 = vsel %vm2243, %v2737, 0
        %v2755 = vsel %vm2244, %v2738, 0
        %v2756 = vsel %vm2245, %v2739, 0
        %v2757 = vsel %vm2246, %v2740, 0
        %v2758 = vsel %vm2247, %v2741, 0
        %v2759 = vsel %vm2248, %v2742, 0
        %v2760 = vsel %vm2249, %v2743, 0
        %v2761 = vsel %vm2250, %v2744, 0
        %v2762 = vsel %vm2251, %v2745, 0
        %v2763 = vsel %vm2252, %v2746, 0
        %v2764 = vsel %vm2253, %v2747, 0
        %v2766 = vshrl.u32 %v2748, 16
        %v2768 = vshll.u32 %v2748, 16
        %v2770 = vrot.slane %v2768, 1
        %v2771 = vor.u32 %v2766, %v2770
        %v2773 = vshll.u32 %v2749, 16
        %v2775 = vrot.slane %v2773, 1
        %v2776 = vsel %vm1493, %v2771, %v2775
        %v2777 = vshrl.u32 %v2749, 16
        %v2779 = vor.u32 %v2777, %v2775
        %v2781 = vshll.u32 %v2750, 16
        %v2783 = vrot.slane %v2781, 1
        %v2784 = vsel %vm1493, %v2779, %v2783
        %v2785 = vshrl.u32 %v2750, 16
        %v2787 = vor.u32 %v2785, %v2783
        %v2789 = vshll.u32 %v2751, 16
        %v2791 = vrot.slane %v2789, 1
        %v2792 = vsel %vm1493, %v2787, %v2791
        %v2793 = vshrl.u32 %v2751, 16
        %v2795 = vor.u32 %v2793, %v2791
        %v2797 = vshll.u32 %v2752, 16
        %v2799 = vrot.slane %v2797, 1
        %v2800 = vsel %vm1493, %v2795, %v2799
        %v2801 = vshrl.u32 %v2752, 16
        %v2803 = vor.u32 %v2801, %v2799
        %v2805 = vshll.u32 %v2753, 16
        %v2807 = vrot.slane %v2805, 1
        %v2808 = vsel %vm1493, %v2803, %v2807
        %v2809 = vshrl.u32 %v2753, 16
        %v2811 = vor.u32 %v2809, %v2807
        %v2813 = vshll.u32 %v2754, 16
        %v2815 = vrot.slane %v2813, 1
        %v2816 = vsel %vm1493, %v2811, %v2815
        %v2817 = vshrl.u32 %v2754, 16
        %v2819 = vor.u32 %v2817, %v2815
        %v2821 = vshll.u32 %v2755, 16
        %v2823 = vrot.slane %v2821, 1
        %v2824 = vsel %vm1493, %v2819, %v2823
        %v2825 = vshrl.u32 %v2755, 16
        %v2827 = vor.u32 %v2825, %v2823
        %v2829 = vshll.u32 %v2756, 16
        %v2831 = vrot.slane %v2829, 1
        %v2832 = vsel %vm1493, %v2827, %v2831
        %v2833 = vshrl.u32 %v2756, 16
        %v2835 = vor.u32 %v2833, %v2831
        %v2837 = vshll.u32 %v2757, 16
        %v2839 = vrot.slane %v2837, 1
        %v2840 = vsel %vm1493, %v2835, %v2839
        %v2841 = vshrl.u32 %v2757, 16
        %v2843 = vor.u32 %v2841, %v2839
        %v2845 = vshll.u32 %v2758, 16
        %v2847 = vrot.slane %v2845, 1
        %v2848 = vsel %vm1493, %v2843, %v2847
        %v2849 = vshrl.u32 %v2758, 16
        %v2851 = vor.u32 %v2849, %v2847
        %v2853 = vshll.u32 %v2759, 16
        %v2855 = vrot.slane %v2853, 1
        %v2856 = vsel %vm1493, %v2851, %v2855
        %v2857 = vshrl.u32 %v2759, 16
        %v2859 = vor.u32 %v2857, %v2855
        %v2861 = vshll.u32 %v2760, 16
        %v2863 = vrot.slane %v2861, 1
        %v2864 = vsel %vm1493, %v2859, %v2863
        %v2865 = vshrl.u32 %v2760, 16
        %v2867 = vor.u32 %v2865, %v2863
        %v2869 = vshll.u32 %v2761, 16
        %v2871 = vrot.slane %v2869, 1
        %v2872 = vsel %vm1493, %v2867, %v2871
        %v2873 = vshrl.u32 %v2761, 16
        %v2875 = vor.u32 %v2873, %v2871
        %v2877 = vshll.u32 %v2762, 16
        %v2879 = vrot.slane %v2877, 1
        %v2880 = vsel %vm1493, %v2875, %v2879
        %v2881 = vshrl.u32 %v2762, 16
        %v2883 = vor.u32 %v2881, %v2879
        %v2885 = vshll.u32 %v2763, 16
        %v2887 = vrot.slane %v2885, 1
        %v2888 = vsel %vm1493, %v2883, %v2887
        %v2889 = vshrl.u32 %v2763, 16
        %v2891 = vor.u32 %v2889, %v2887
        %v2893 = vshll.u32 %v2764, 16
        %v2895 = vrot.slane %v2893, 1
        %v2896 = vsel %vm1493, %v2891, %v2895
        %2897 = vrot.lane.b32.xlu0 %v2776, 32
        %v2898 = vpop.permute.xlu0 %2897
        %2899 = vrot.lane.b32.xlu0 %v2784, 32
        %v2900 = vpop.permute.xlu0 %2899
        %2901 = vrot.lane.b32.xlu0 %v2792, 32
        %v2902 = vpop.permute.xlu0 %2901
        %2903 = vrot.lane.b32.xlu0 %v2800, 32
        %v2904 = vpop.permute.xlu0 %2903
        %2905 = vrot.lane.b32.xlu0 %v2808, 32
        %v2906 = vpop.permute.xlu0 %2905
        %2907 = vrot.lane.b32.xlu0 %v2816, 32
        %v2908 = vpop.permute.xlu0 %2907
        %2909 = vrot.lane.b32.xlu0 %v2824, 32
        %v2910 = vpop.permute.xlu0 %2909
        %2911 = vrot.lane.b32.xlu0 %v2832, 32
        %v2912 = vpop.permute.xlu0 %2911
        %2913 = vrot.lane.b32.xlu0 %v2840, 32
        %v2914 = vpop.permute.xlu0 %2913
        %2915 = vrot.lane.b32.xlu0 %v2848, 32
        %v2916 = vpop.permute.xlu0 %2915
        %2917 = vrot.lane.b32.xlu0 %v2856, 32
        %v2918 = vpop.permute.xlu0 %2917
        %2919 = vrot.lane.b32.xlu0 %v2864, 32
        %v2920 = vpop.permute.xlu0 %2919
        %2921 = vrot.lane.b32.xlu0 %v2872, 32
        %v2922 = vpop.permute.xlu0 %2921
        %2923 = vrot.lane.b32.xlu0 %v2880, 32
        %v2924 = vpop.permute.xlu0 %2923
        %2925 = vrot.lane.b32.xlu0 %v2888, 32
        %v2926 = vpop.permute.xlu0 %2925
        %2927 = vrot.lane.b32.xlu0 %v2896, 32
        %v2928 = vpop.permute.xlu0 %2927
        %2945 = vst.msk [vmem:[#allocation3 + $0x8] sm:$0xff] %vm1900, %v2898
        %2946 = vst.msk [vmem:[#allocation3 + $0x20] sm:$0xff] %vm1900, %v2900
        %2947 = vst.msk [vmem:[#allocation3 + $0x38] sm:$0xff] %vm1900, %v2902
        %2948 = vst.msk [vmem:[#allocation3 + $0x50] sm:$0xff] %vm1900, %v2904
        %2949 = vst.msk [vmem:[#allocation3 + $0x68] sm:$0xff] %vm1900, %v2906
        %2950 = vst.msk [vmem:[#allocation3 + $0x80] sm:$0xff] %vm1900, %v2908
        %2951 = vst.msk [vmem:[#allocation3 + $0x98] sm:$0xff] %vm1900, %v2910
        %2952 = vst.msk [vmem:[#allocation3 + $0xb0] sm:$0xff] %vm1900, %v2912
        %2953 = vst.msk [vmem:[#allocation3 + $0xc8] sm:$0xff] %vm1900, %v2914
        %2954 = vst.msk [vmem:[#allocation3 + $0xe0] sm:$0xff] %vm1900, %v2916
        %2955 = vst.msk [vmem:[#allocation3 + $0xf8] sm:$0xff] %vm1900, %v2918
        %2956 = vst.msk [vmem:[#allocation3 + $0x110] sm:$0xff] %vm1900, %v2920
        %2957 = vst.msk [vmem:[#allocation3 + $0x128] sm:$0xff] %vm1900, %v2922
        %2958 = vst.msk [vmem:[#allocation3 + $0x140] sm:$0xff] %vm1900, %v2924
        %2959 = vst.msk [vmem:[#allocation3 + $0x158] sm:$0xff] %vm1900, %v2926
        %2960 = vst.msk [vmem:[#allocation3 + $0x170] sm:$0xff] %vm1900, %v2928
        %v2961 = vld [vmem:[#allocation2 + $0x10] sm:$0x80]
        %v2962 = vld [vmem:[#allocation2 + $0x18] sm:$0xff]
        %v2963 = vld [vmem:[#allocation2 + $0x20] sm:$0xff]
        %v2964 = vld [vmem:[#allocation2 + $0x28] sm:$0xff]
        %v2965 = vld [vmem:[#allocation2 + $0x30] sm:$0xff]
        %v2966 = vld [vmem:[#allocation2 + $0x38] sm:$0xff]
        %v2967 = vld [vmem:[#allocation2 + $0x40] sm:$0xff]
        %v2968 = vld [vmem:[#allocation2 + $0x48] sm:$0xff]
        %v2969 = vld [vmem:[#allocation2 + $0x50] sm:$0xff]
        %v2970 = vld [vmem:[#allocation2 + $0x58] sm:$0xff]
        %v2971 = vld [vmem:[#allocation2 + $0x60] sm:$0xff]
        %v2972 = vld [vmem:[#allocation2 + $0x68] sm:$0xff]
        %v2973 = vld [vmem:[#allocation2 + $0x70] sm:$0xff]
        %v2974 = vld [vmem:[#allocation2 + $0x78] sm:$0xff]
        %v2975 = vld [vmem:[#allocation2 + $0x80] sm:$0xff]
        %v2976 = vld [vmem:[#allocation2 + $0x88] sm:$0xff]
        %v2977 = vld [vmem:[#allocation2 + $0x90] sm:$0xff]
        %v2978 = vsel %vm1621, %v2961, 0
        %v2979 = vsel %vm1622, %v2962, 0
        %v2980 = vsel %vm1623, %v2963, 0
        %v2981 = vsel %vm1624, %v2964, 0
        %v2982 = vsel %vm1625, %v2965, 0
        %v2983 = vsel %vm1626, %v2966, 0
        %v2984 = vsel %vm1627, %v2967, 0
        %v2985 = vsel %vm1628, %v2968, 0
        %v2986 = vsel %vm1629, %v2969, 0
        %v2987 = vsel %vm1630, %v2970, 0
        %v2988 = vsel %vm1631, %v2971, 0
        %v2989 = vsel %vm1632, %v2972, 0
        %v2990 = vsel %vm1633, %v2973, 0
        %v2991 = vsel %vm1634, %v2974, 0
        %v2992 = vsel %vm1635, %v2975, 0
        %v2993 = vsel %vm1636, %v2976, 0
        %v2994 = vsel %vm1637, %v2977, 0
        %v2996 = vshrl.u32 %v2978, 16
        %v2998 = vrot.slane %v2996, 7
        %v3000 = vshrl.u32 %v2979, 16
        %v3002 = vrot.slane %v3000, 7
        %v3003 = vshll.u32 %v2979, 16
        %v3005 = vor.u32 %v3002, %v3003
        %v3006 = vsel %vm1655, %v2998, %v3005
        %v3008 = vshrl.u32 %v2980, 16
        %v3010 = vrot.slane %v3008, 7
        %v3011 = vshll.u32 %v2980, 16
        %v3013 = vor.u32 %v3010, %v3011
        %v3014 = vsel %vm1655, %v3002, %v3013
        %v3016 = vshrl.u32 %v2981, 16
        %v3018 = vrot.slane %v3016, 7
        %v3019 = vshll.u32 %v2981, 16
        %v3021 = vor.u32 %v3018, %v3019
        %v3022 = vsel %vm1655, %v3010, %v3021
        %v3024 = vshrl.u32 %v2982, 16
        %v3026 = vrot.slane %v3024, 7
        %v3027 = vshll.u32 %v2982, 16
        %v3029 = vor.u32 %v3026, %v3027
        %v3030 = vsel %vm1655, %v3018, %v3029
        %v3032 = vshrl.u32 %v2983, 16
        %v3034 = vrot.slane %v3032, 7
        %v3035 = vshll.u32 %v2983, 16
        %v3037 = vor.u32 %v3034, %v3035
        %v3038 = vsel %vm1655, %v3026, %v3037
        %v3040 = vshrl.u32 %v2984, 16
        %v3042 = vrot.slane %v3040, 7
        %v3043 = vshll.u32 %v2984, 16
        %v3045 = vor.u32 %v3042, %v3043
        %v3046 = vsel %vm1655, %v3034, %v3045
        %v3048 = vshrl.u32 %v2985, 16
        %v3050 = vrot.slane %v3048, 7
        %v3051 = vshll.u32 %v2985, 16
        %v3053 = vor.u32 %v3050, %v3051
        %v3054 = vsel %vm1655, %v3042, %v3053
        %v3056 = vshrl.u32 %v2986, 16
        %v3058 = vrot.slane %v3056, 7
        %v3059 = vshll.u32 %v2986, 16
        %v3061 = vor.u32 %v3058, %v3059
        %v3062 = vsel %vm1655, %v3050, %v3061
        %v3064 = vshrl.u32 %v2987, 16
        %v3066 = vrot.slane %v3064, 7
        %v3067 = vshll.u32 %v2987, 16
        %v3069 = vor.u32 %v3066, %v3067
        %v3070 = vsel %vm1655, %v3058, %v3069
        %v3072 = vshrl.u32 %v2988, 16
        %v3074 = vrot.slane %v3072, 7
        %v3075 = vshll.u32 %v2988, 16
        %v3077 = vor.u32 %v3074, %v3075
        %v3078 = vsel %vm1655, %v3066, %v3077
        %v3080 = vshrl.u32 %v2989, 16
        %v3082 = vrot.slane %v3080, 7
        %v3083 = vshll.u32 %v2989, 16
        %v3085 = vor.u32 %v3082, %v3083
        %v3086 = vsel %vm1655, %v3074, %v3085
        %v3088 = vshrl.u32 %v2990, 16
        %v3090 = vrot.slane %v3088, 7
        %v3091 = vshll.u32 %v2990, 16
        %v3093 = vor.u32 %v3090, %v3091
        %v3094 = vsel %vm1655, %v3082, %v3093
        %v3096 = vshrl.u32 %v2991, 16
        %v3098 = vrot.slane %v3096, 7
        %v3099 = vshll.u32 %v2991, 16
        %v3101 = vor.u32 %v3098, %v3099
        %v3102 = vsel %vm1655, %v3090, %v3101
        %v3104 = vshrl.u32 %v2992, 16
        %v3106 = vrot.slane %v3104, 7
        %v3107 = vshll.u32 %v2992, 16
        %v3109 = vor.u32 %v3106, %v3107
        %v3110 = vsel %vm1655, %v3098, %v3109
        %v3112 = vshrl.u32 %v2993, 16
        %v3114 = vrot.slane %v3112, 7
        %v3115 = vshll.u32 %v2993, 16
        %v3117 = vor.u32 %v3114, %v3115
        %v3118 = vsel %vm1655, %v3106, %v3117
        %v3120 = vshrl.u32 %v2994, 16
        %v3122 = vrot.slane %v3120, 7
        %v3123 = vshll.u32 %v2994, 16
        %v3125 = vor.u32 %v3122, %v3123
        %v3126 = vsel %vm1655, %v3114, %v3125
        %3127 = vrot.lane.b32.xlu0 %v3006, 64
        %v3128 = vpop.permute.xlu0 %3127
        %3129 = vrot.lane.b32.xlu0 %v3014, 64
        %v3130 = vpop.permute.xlu0 %3129
        %3131 = vrot.lane.b32.xlu0 %v3022, 64
        %v3132 = vpop.permute.xlu0 %3131
        %3133 = vrot.lane.b32.xlu0 %v3030, 64
        %v3134 = vpop.permute.xlu0 %3133
        %3135 = vrot.lane.b32.xlu0 %v3038, 64
        %v3136 = vpop.permute.xlu0 %3135
        %3137 = vrot.lane.b32.xlu0 %v3046, 64
        %v3138 = vpop.permute.xlu0 %3137
        %3139 = vrot.lane.b32.xlu0 %v3054, 64
        %v3140 = vpop.permute.xlu0 %3139
        %3141 = vrot.lane.b32.xlu0 %v3062, 64
        %v3142 = vpop.permute.xlu0 %3141
        %3143 = vrot.lane.b32.xlu0 %v3070, 64
        %v3144 = vpop.permute.xlu0 %3143
        %3145 = vrot.lane.b32.xlu0 %v3078, 64
        %v3146 = vpop.permute.xlu0 %3145
        %3147 = vrot.lane.b32.xlu0 %v3086, 64
        %v3148 = vpop.permute.xlu0 %3147
        %3149 = vrot.lane.b32.xlu0 %v3094, 64
        %v3150 = vpop.permute.xlu0 %3149
        %3151 = vrot.lane.b32.xlu0 %v3102, 64
        %v3152 = vpop.permute.xlu0 %3151
        %3153 = vrot.lane.b32.xlu0 %v3110, 64
        %v3154 = vpop.permute.xlu0 %3153
        %3155 = vrot.lane.b32.xlu0 %v3118, 64
        %v3156 = vpop.permute.xlu0 %3155
        %3157 = vrot.lane.b32.xlu0 %v3126, 64
        %v3158 = vpop.permute.xlu0 %3157
        %3175 = vst.msk [vmem:[#allocation3 + $0x8] sm:$0xff] %vm2451, %v3128
        %3176 = vst.msk [vmem:[#allocation3 + $0x20] sm:$0xff] %vm2451, %v3130
        %3177 = vst.msk [vmem:[#allocation3 + $0x38] sm:$0xff] %vm2451, %v3132
        %3178 = vst.msk [vmem:[#allocation3 + $0x50] sm:$0xff] %vm2451, %v3134
        %3179 = vst.msk [vmem:[#allocation3 + $0x68] sm:$0xff] %vm2451, %v3136
        %3180 = vst.msk [vmem:[#allocation3 + $0x80] sm:$0xff] %vm2451, %v3138
        %3181 = vst.msk [vmem:[#allocation3 + $0x98] sm:$0xff] %vm2451, %v3140
        %3182 = vst.msk [vmem:[#allocation3 + $0xb0] sm:$0xff] %vm2451, %v3142
        %3183 = vst.msk [vmem:[#allocation3 + $0xc8] sm:$0xff] %vm2451, %v3144
        %3184 = vst.msk [vmem:[#allocation3 + $0xe0] sm:$0xff] %vm2451, %v3146
        %3185 = vst.msk [vmem:[#allocation3 + $0xf8] sm:$0xff] %vm2451, %v3148
        %3186 = vst.msk [vmem:[#allocation3 + $0x110] sm:$0xff] %vm2451, %v3150
        %3187 = vst.msk [vmem:[#allocation3 + $0x128] sm:$0xff] %vm2451, %v3152
        %3188 = vst.msk [vmem:[#allocation3 + $0x140] sm:$0xff] %vm2451, %v3154
        %3189 = vst.msk [vmem:[#allocation3 + $0x158] sm:$0xff] %vm2451, %v3156
        %3190 = vst.msk [vmem:[#allocation3 + $0x170] sm:$0xff] %vm2451, %v3158
        %v3191 = vld [vmem:[#allocation2 + $0x18] sm:$0xff]
        %v3192 = vld [vmem:[#allocation2 + $0x20] sm:$0xff]
        %v3193 = vld [vmem:[#allocation2 + $0x28] sm:$0xff]
        %v3194 = vld [vmem:[#allocation2 + $0x30] sm:$0xff]
        %v3195 = vld [vmem:[#allocation2 + $0x38] sm:$0xff]
        %v3196 = vld [vmem:[#allocation2 + $0x40] sm:$0xff]
        %v3197 = vld [vmem:[#allocation2 + $0x48] sm:$0xff]
        %v3198 = vld [vmem:[#allocation2 + $0x50] sm:$0xff]
        %v3199 = vld [vmem:[#allocation2 + $0x58] sm:$0xff]
        %v3200 = vld [vmem:[#allocation2 + $0x60] sm:$0xff]
        %v3201 = vld [vmem:[#allocation2 + $0x68] sm:$0xff]
        %v3202 = vld [vmem:[#allocation2 + $0x70] sm:$0xff]
        %v3203 = vld [vmem:[#allocation2 + $0x78] sm:$0xff]
        %v3204 = vld [vmem:[#allocation2 + $0x80] sm:$0xff]
        %v3205 = vld [vmem:[#allocation2 + $0x88] sm:$0xff]
        %v3206 = vld [vmem:[#allocation2 + $0x90] sm:$0xff]
        %3223 = vrot.lane.b32.xlu0 %v3191, 96
        %v3224 = vpop.permute.xlu0 %3223
        %3225 = vrot.lane.b32.xlu0 %v3192, 96
        %v3226 = vpop.permute.xlu0 %3225
        %3227 = vrot.lane.b32.xlu0 %v3193, 96
        %v3228 = vpop.permute.xlu0 %3227
        %3229 = vrot.lane.b32.xlu0 %v3194, 96
        %v3230 = vpop.permute.xlu0 %3229
        %3231 = vrot.lane.b32.xlu0 %v3195, 96
        %v3232 = vpop.permute.xlu0 %3231
        %3233 = vrot.lane.b32.xlu0 %v3196, 96
        %v3234 = vpop.permute.xlu0 %3233
        %3235 = vrot.lane.b32.xlu0 %v3197, 96
        %v3236 = vpop.permute.xlu0 %3235
        %3237 = vrot.lane.b32.xlu0 %v3198, 96
        %v3238 = vpop.permute.xlu0 %3237
        %3239 = vrot.lane.b32.xlu0 %v3199, 96
        %v3240 = vpop.permute.xlu0 %3239
        %3241 = vrot.lane.b32.xlu0 %v3200, 96
        %v3242 = vpop.permute.xlu0 %3241
        %3243 = vrot.lane.b32.xlu0 %v3201, 96
        %v3244 = vpop.permute.xlu0 %3243
        %3245 = vrot.lane.b32.xlu0 %v3202, 96
        %v3246 = vpop.permute.xlu0 %3245
        %3247 = vrot.lane.b32.xlu0 %v3203, 96
        %v3248 = vpop.permute.xlu0 %3247
        %3249 = vrot.lane.b32.xlu0 %v3204, 96
        %v3250 = vpop.permute.xlu0 %3249
        %3251 = vrot.lane.b32.xlu0 %v3205, 96
        %v3252 = vpop.permute.xlu0 %3251
        %3253 = vrot.lane.b32.xlu0 %v3206, 96
        %v3254 = vpop.permute.xlu0 %3253
        %3271 = vst.msk [vmem:[#allocation3 + $0x8] sm:$0xff] %vm2682, %v3224
        %3272 = vst.msk [vmem:[#allocation3 + $0x20] sm:$0xff] %vm2682, %v3226
        %3273 = vst.msk [vmem:[#allocation3 + $0x38] sm:$0xff] %vm2682, %v3228
        %3274 = vst.msk [vmem:[#allocation3 + $0x50] sm:$0xff] %vm2682, %v3230
        %3275 = vst.msk [vmem:[#allocation3 + $0x68] sm:$0xff] %vm2682, %v3232
        %3276 = vst.msk [vmem:[#allocation3 + $0x80] sm:$0xff] %vm2682, %v3234
        %3277 = vst.msk [vmem:[#allocation3 + $0x98] sm:$0xff] %vm2682, %v3236
        %3278 = vst.msk [vmem:[#allocation3 + $0xb0] sm:$0xff] %vm2682, %v3238
        %3279 = vst.msk [vmem:[#allocation3 + $0xc8] sm:$0xff] %vm2682, %v3240
        %3280 = vst.msk [vmem:[#allocation3 + $0xe0] sm:$0xff] %vm2682, %v3242
        %3281 = vst.msk [vmem:[#allocation3 + $0xf8] sm:$0xff] %vm2682, %v3244
        %3282 = vst.msk [vmem:[#allocation3 + $0x110] sm:$0xff] %vm2682, %v3246
        %3283 = vst.msk [vmem:[#allocation3 + $0x128] sm:$0xff] %vm2682, %v3248
        %3284 = vst.msk [vmem:[#allocation3 + $0x140] sm:$0xff] %vm2682, %v3250
        %3285 = vst.msk [vmem:[#allocation3 + $0x158] sm:$0xff] %vm2682, %v3252
        %3286 = vst.msk [vmem:[#allocation3 + $0x170] sm:$0xff] %vm2682, %v3254
        %v3287 = vld [vmem:[#allocation2 + $0x18] sm:$0xff]
        %v3288 = vld [vmem:[#allocation2 + $0x20] sm:$0xff]
        %v3289 = vld [vmem:[#allocation2 + $0x28] sm:$0xff]
        %v3290 = vld [vmem:[#allocation2 + $0x30] sm:$0xff]
        %v3291 = vld [vmem:[#allocation2 + $0x38] sm:$0xff]
        %v3292 = vld [vmem:[#allocation2 + $0x40] sm:$0xff]
        %v3293 = vld [vmem:[#allocation2 + $0x48] sm:$0xff]
        %v3294 = vld [vmem:[#allocation2 + $0x50] sm:$0xff]
        %v3295 = vld [vmem:[#allocation2 + $0x58] sm:$0xff]
        %v3296 = vld [vmem:[#allocation2 + $0x60] sm:$0xff]
        %v3297 = vld [vmem:[#allocation2 + $0x68] sm:$0xff]
        %v3298 = vld [vmem:[#allocation2 + $0x70] sm:$0xff]
        %v3299 = vld [vmem:[#allocation2 + $0x78] sm:$0xff]
        %v3300 = vld [vmem:[#allocation2 + $0x80] sm:$0xff]
        %v3301 = vld [vmem:[#allocation2 + $0x88] sm:$0xff]
        %v3302 = vld [vmem:[#allocation2 + $0x90] sm:$0xff]
        %v3303 = vld [vmem:[#allocation2 + $0x98] sm:$0x1]
        %v3304 = vsel %vm2237, %v3287, 0
        %v3305 = vsel %vm2238, %v3288, 0
        %v3306 = vsel %vm2239, %v3289, 0
        %v3307 = vsel %vm2240, %v3290, 0
        %v3308 = vsel %vm2241, %v3291, 0
        %v3309 = vsel %vm2242, %v3292, 0
        %v3310 = vsel %vm2243, %v3293, 0
        %v3311 = vsel %vm2244, %v3294, 0
        %v3312 = vsel %vm2245, %v3295, 0
        %v3313 = vsel %vm2246, %v3296, 0
        %v3314 = vsel %vm2247, %v3297, 0
        %v3315 = vsel %vm2248, %v3298, 0
        %v3316 = vsel %vm2249, %v3299, 0
        %v3317 = vsel %vm2250, %v3300, 0
        %v3318 = vsel %vm2251, %v3301, 0
        %v3319 = vsel %vm2252, %v3302, 0
        %v3320 = vsel %vm2253, %v3303, 0
        %v3322 = vshrl.u32 %v3304, 16
        %v3324 = vshll.u32 %v3304, 16
        %v3326 = vrot.slane %v3324, 1
        %v3327 = vor.u32 %v3322, %v3326
        %v3329 = vshll.u32 %v3305, 16
        %v3331 = vrot.slane %v3329, 1
        %v3332 = vsel %vm1493, %v3327, %v3331
        %v3333 = vshrl.u32 %v3305, 16
        %v3335 = vor.u32 %v3333, %v3331
        %v3337 = vshll.u32 %v3306, 16
        %v3339 = vrot.slane %v3337, 1
        %v3340 = vsel %vm1493, %v3335, %v3339
        %v3341 = vshrl.u32 %v3306, 16
        %v3343 = vor.u32 %v3341, %v3339
        %v3345 = vshll.u32 %v3307, 16
        %v3347 = vrot.slane %v3345, 1
        %v3348 = vsel %vm1493, %v3343, %v3347
        %v3349 = vshrl.u32 %v3307, 16
        %v3351 = vor.u32 %v3349, %v3347
        %v3353 = vshll.u32 %v3308, 16
        %v3355 = vrot.slane %v3353, 1
        %v3356 = vsel %vm1493, %v3351, %v3355
        %v3357 = vshrl.u32 %v3308, 16
        %v3359 = vor.u32 %v3357, %v3355
        %v3361 = vshll.u32 %v3309, 16
        %v3363 = vrot.slane %v3361, 1
        %v3364 = vsel %vm1493, %v3359, %v3363
        %v3365 = vshrl.u32 %v3309, 16
        %v3367 = vor.u32 %v3365, %v3363
        %v3369 = vshll.u32 %v3310, 16
        %v3371 = vrot.slane %v3369, 1
        %v3372 = vsel %vm1493, %v3367, %v3371
        %v3373 = vshrl.u32 %v3310, 16
        %v3375 = vor.u32 %v3373, %v3371
        %v3377 = vshll.u32 %v3311, 16
        %v3379 = vrot.slane %v3377, 1
        %v3380 = vsel %vm1493, %v3375, %v3379
        %v3381 = vshrl.u32 %v3311, 16
        %v3383 = vor.u32 %v3381, %v3379
        %v3385 = vshll.u32 %v3312, 16
        %v3387 = vrot.slane %v3385, 1
        %v3388 = vsel %vm1493, %v3383, %v3387
        %v3389 = vshrl.u32 %v3312, 16
        %v3391 = vor.u32 %v3389, %v3387
        %v3393 = vshll.u32 %v3313, 16
        %v3395 = vrot.slane %v3393, 1
        %v3396 = vsel %vm1493, %v3391, %v3395
        %v3397 = vshrl.u32 %v3313, 16
        %v3399 = vor.u32 %v3397, %v3395
        %v3401 = vshll.u32 %v3314, 16
        %v3403 = vrot.slane %v3401, 1
        %v3404 = vsel %vm1493, %v3399, %v3403
        %v3405 = vshrl.u32 %v3314, 16
        %v3407 = vor.u32 %v3405, %v3403
        %v3409 = vshll.u32 %v3315, 16
        %v3411 = vrot.slane %v3409, 1
        %v3412 = vsel %vm1493, %v3407, %v3411
        %v3413 = vshrl.u32 %v3315, 16
        %v3415 = vor.u32 %v3413, %v3411
        %v3417 = vshll.u32 %v3316, 16
        %v3419 = vrot.slane %v3417, 1
        %v3420 = vsel %vm1493, %v3415, %v3419
        %v3421 = vshrl.u32 %v3316, 16
        %v3423 = vor.u32 %v3421, %v3419
        %v3425 = vshll.u32 %v3317, 16
        %v3427 = vrot.slane %v3425, 1
        %v3428 = vsel %vm1493, %v3423, %v3427
        %v3429 = vshrl.u32 %v3317, 16
        %v3431 = vor.u32 %v3429, %v3427
        %v3433 = vshll.u32 %v3318, 16
        %v3435 = vrot.slane %v3433, 1
        %v3436 = vsel %vm1493, %v3431, %v3435
        %v3437 = vshrl.u32 %v3318, 16
        %v3439 = vor.u32 %v3437, %v3435
        %v3441 = vshll.u32 %v3319, 16
        %v3443 = vrot.slane %v3441, 1
        %v3444 = vsel %vm1493, %v3439, %v3443
        %v3445 = vshrl.u32 %v3319, 16
        %v3447 = vor.u32 %v3445, %v3443
        %v3449 = vshll.u32 %v3320, 16
        %v3451 = vrot.slane %v3449, 1
        %v3452 = vsel %vm1493, %v3447, %v3451
        %3469 = vst.msk [vmem:[#allocation3 + $0x10] sm:$0xff] %vm377, %v3332
        %3470 = vst.msk [vmem:[#allocation3 + $0x28] sm:$0xff] %vm377, %v3340
        %3471 = vst.msk [vmem:[#allocation3 + $0x40] sm:$0xff] %vm377, %v3348
        %3472 = vst.msk [vmem:[#allocation3 + $0x58] sm:$0xff] %vm377, %v3356
        %3473 = vst.msk [vmem:[#allocation3 + $0x70] sm:$0xff] %vm377, %v3364
        %3474 = vst.msk [vmem:[#allocation3 + $0x88] sm:$0xff] %vm377, %v3372
        %3475 = vst.msk [vmem:[#allocation3 + $0xa0] sm:$0xff] %vm377, %v3380
        %3476 = vst.msk [vmem:[#allocation3 + $0xb8] sm:$0xff] %vm377, %v3388
        %3477 = vst.msk [vmem:[#allocation3 + $0xd0] sm:$0xff] %vm377, %v3396
        %3478 = vst.msk [vmem:[#allocation3 + $0xe8] sm:$0xff] %vm377, %v3404
        %3479 = vst.msk [vmem:[#allocation3 + $0x100] sm:$0xff] %vm377, %v3412
        %3480 = vst.msk [vmem:[#allocation3 + $0x118] sm:$0xff] %vm377, %v3420
        %3481 = vst.msk [vmem:[#allocation3 + $0x130] sm:$0xff] %vm377, %v3428
        %3482 = vst.msk [vmem:[#allocation3 + $0x148] sm:$0xff] %vm377, %v3436
        %3483 = vst.msk [vmem:[#allocation3 + $0x160] sm:$0xff] %vm377, %v3444
        %3484 = vst.msk [vmem:[#allocation3 + $0x178] sm:$0xff] %vm377, %v3452
        %v3485 = vld [vmem:[#allocation3] sm:$0xff]
        %v3486 = vld [vmem:[#allocation3 + $0x8] sm:$0xff]
        %v3487 = vld [vmem:[#allocation3 + $0x10] sm:$0xff]
        %v3488 = vld [vmem:[#allocation3 + $0x18] sm:$0xff]
        %v3489 = vld [vmem:[#allocation3 + $0x20] sm:$0xff]
        %v3490 = vld [vmem:[#allocation3 + $0x28] sm:$0xff]
        %v3491 = vld [vmem:[#allocation3 + $0x30] sm:$0xff]
        %v3492 = vld [vmem:[#allocation3 + $0x38] sm:$0xff]
        %v3493 = vld [vmem:[#allocation3 + $0x40] sm:$0xff]
        %v3494 = vld [vmem:[#allocation3 + $0x48] sm:$0xff]
        %v3495 = vld [vmem:[#allocation3 + $0x50] sm:$0xff]
        %v3496 = vld [vmem:[#allocation3 + $0x58] sm:$0xff]
        %v3497 = vld [vmem:[#allocation3 + $0x60] sm:$0xff]
        %v3498 = vld [vmem:[#allocation3 + $0x68] sm:$0xff]
        %v3499 = vld [vmem:[#allocation3 + $0x70] sm:$0xff]
        %v3500 = vld [vmem:[#allocation3 + $0x78] sm:$0xff]
        %v3501 = vld [vmem:[#allocation3 + $0x80] sm:$0xff]
        %v3502 = vld [vmem:[#allocation3 + $0x88] sm:$0xff]
        %v3503 = vld [vmem:[#allocation3 + $0x90] sm:$0xff]
        %v3504 = vld [vmem:[#allocation3 + $0x98] sm:$0xff]
        %v3505 = vld [vmem:[#allocation3 + $0xa0] sm:$0xff]
        %v3506 = vld [vmem:[#allocation3 + $0xa8] sm:$0xff]
        %v3507 = vld [vmem:[#allocation3 + $0xb0] sm:$0xff]
        %v3508 = vld [vmem:[#allocation3 + $0xb8] sm:$0xff]
        %v3509 = vld [vmem:[#allocation3 + $0xc0] sm:$0xff]
        %v3510 = vld [vmem:[#allocation3 + $0xc8] sm:$0xff]
        %v3511 = vld [vmem:[#allocation3 + $0xd0] sm:$0xff]
        %v3512 = vld [vmem:[#allocation3 + $0xd8] sm:$0xff]
        %v3513 = vld [vmem:[#allocation3 + $0xe0] sm:$0xff]
        %v3514 = vld [vmem:[#allocation3 + $0xe8] sm:$0xff]
        %v3515 = vld [vmem:[#allocation3 + $0xf0] sm:$0xff]
        %v3516 = vld [vmem:[#allocation3 + $0xf8] sm:$0xff]
        %v3517 = vld [vmem:[#allocation3 + $0x100] sm:$0xff]
        %v3518 = vld [vmem:[#allocation3 + $0x108] sm:$0xff]
        %v3519 = vld [vmem:[#allocation3 + $0x110] sm:$0xff]
        %v3520 = vld [vmem:[#allocation3 + $0x118] sm:$0xff]
        %v3521 = vld [vmem:[#allocation3 + $0x120] sm:$0xff]
        %v3522 = vld [vmem:[#allocation3 + $0x128] sm:$0xff]
        %v3523 = vld [vmem:[#allocation3 + $0x130] sm:$0xff]
        %v3524 = vld [vmem:[#allocation3 + $0x138] sm:$0xff]
        %v3525 = vld [vmem:[#allocation3 + $0x140] sm:$0xff]
        %v3526 = vld [vmem:[#allocation3 + $0x148] sm:$0xff]
        %v3527 = vld [vmem:[#allocation3 + $0x150] sm:$0xff]
        %v3528 = vld [vmem:[#allocation3 + $0x158] sm:$0xff]
        %v3529 = vld [vmem:[#allocation3 + $0x160] sm:$0xff]
        %v3530 = vld [vmem:[#allocation3 + $0x168] sm:$0xff]
        %v3531 = vld [vmem:[#allocation3 + $0x170] sm:$0xff]
        %v3532 = vld [vmem:[#allocation3 + $0x178] sm:$0xff]
        %v3533 = vld [vmem:[%s3] sm:$0xf]
        %v3534 = vld [vmem:[%s3 + $0x4] sm:$0xf]
        %v3535 = vld [vmem:[%s3 + $0x8] sm:$0xf]
        %v3536 = vld [vmem:[%s3 + $0xc] sm:$0xf]
        %v3537 = vld [vmem:[%s3 + $0x10] sm:$0xf]
        %v3538 = vld [vmem:[%s3 + $0x14] sm:$0xf]
        %v3539 = vld [vmem:[%s3 + $0x18] sm:$0xf]
        %v3540 = vld [vmem:[%s3 + $0x1c] sm:$0xf]
        %v3541 = vld [vmem:[%s3 + $0x20] sm:$0xf]
        %v3542 = vld [vmem:[%s3 + $0x24] sm:$0xf]
        %v3543 = vld [vmem:[%s3 + $0x28] sm:$0xf]
        %v3544 = vld [vmem:[%s3 + $0x2c] sm:$0xf]
        %v3545 = vld [vmem:[%s3 + $0x30] sm:$0xf]
        %v3546 = vld [vmem:[%s3 + $0x34] sm:$0xf]
        %v3547 = vld [vmem:[%s3 + $0x38] sm:$0xf]
        %v3548 = vld [vmem:[%s3 + $0x3c] sm:$0xf]
        %v3549 = vld [vmem:[%s3 + $0x40] sm:$0xf]
        %v3550 = vld [vmem:[%s3 + $0x44] sm:$0xf]
        %v3551 = vld [vmem:[%s3 + $0x48] sm:$0xf]
        %v3552 = vld [vmem:[%s3 + $0x4c] sm:$0xf]
        %v3553 = vld [vmem:[%s3 + $0x50] sm:$0xf]
        %v3554 = vld [vmem:[%s3 + $0x54] sm:$0xf]
        %v3555 = vld [vmem:[%s3 + $0x58] sm:$0xf]
        %v3556 = vld [vmem:[%s3 + $0x5c] sm:$0xf]
        %v3557 = vld [vmem:[%s3 + $0x60] sm:$0xf]
        %v3558 = vld [vmem:[%s3 + $0x64] sm:$0xf]
        %v3559 = vld [vmem:[%s3 + $0x68] sm:$0xf]
        %v3560 = vld [vmem:[%s3 + $0x6c] sm:$0xf]
        %v3561 = vld [vmem:[%s3 + $0x70] sm:$0xf]
        %v3562 = vld [vmem:[%s3 + $0x74] sm:$0xf]
        %v3563 = vld [vmem:[%s3 + $0x78] sm:$0xf]
        %v3564 = vld [vmem:[%s3 + $0x7c] sm:$0xf]
        %v3565 = vld [vmem:[%s3 + $0x80] sm:$0xf]
        %v3566 = vld [vmem:[%s3 + $0x84] sm:$0xf]
        %v3567 = vld [vmem:[%s3 + $0x88] sm:$0xf]
        %v3568 = vld [vmem:[%s3 + $0x8c] sm:$0xf]
        %v3605 = vunpack.c.l.b16 %v3533
        %v3606 = vunpack.c.l.b16 %v3534
        %v3607 = vunpack.c.l.b16 %v3535
        %v3608 = vunpack.c.l.b16 %v3536
        %v3609 = vunpack.c.l.b16 %v3537
        %v3610 = vunpack.c.l.b16 %v3538
        %v3611 = vunpack.c.l.b16 %v3539
        %v3612 = vunpack.c.l.b16 %v3540
        %v3613 = vunpack.c.l.b16 %v3541
        %v3614 = vunpack.c.l.b16 %v3542
        %v3615 = vunpack.c.l.b16 %v3543
        %v3616 = vunpack.c.l.b16 %v3544
        %v3617 = vunpack.c.l.b16 %v3545
        %v3618 = vunpack.c.l.b16 %v3546
        %v3619 = vunpack.c.l.b16 %v3547
        %v3620 = vunpack.c.l.b16 %v3548
        %v3621 = vunpack.c.l.b16 %v3549
        %v3622 = vunpack.c.l.b16 %v3550
        %v3623 = vunpack.c.l.b16 %v3551
        %v3624 = vunpack.c.l.b16 %v3552
        %v3625 = vunpack.c.l.b16 %v3553
        %v3626 = vunpack.c.l.b16 %v3554
        %v3627 = vunpack.c.l.b16 %v3555
        %v3628 = vunpack.c.l.b16 %v3556
        %v3629 = vunpack.c.l.b16 %v3557
        %v3630 = vunpack.c.l.b16 %v3558
        %v3631 = vunpack.c.l.b16 %v3559
        %v3632 = vunpack.c.l.b16 %v3560
        %v3633 = vunpack.c.l.b16 %v3561
        %v3634 = vunpack.c.l.b16 %v3562
        %v3635 = vunpack.c.l.b16 %v3563
        %v3636 = vunpack.c.l.b16 %v3564
        %v3637 = vunpack.c.l.b16 %v3565
        %v3638 = vunpack.c.l.b16 %v3566
        %v3639 = vunpack.c.l.b16 %v3567
        %v3640 = vunpack.c.l.b16 %v3568
        %v3641 = vpack.c.b16 %v3606, %v3605
        %v3642 = vpack.c.b16 %v3608, %v3607
        %v3643 = vpack.c.b16 %v3610, %v3609
        %v3644 = vpack.c.b16 %v3612, %v3611
        %v3645 = vpack.c.b16 %v3614, %v3613
        %v3646 = vpack.c.b16 %v3616, %v3615
        %v3647 = vpack.c.b16 %v3618, %v3617
        %v3648 = vpack.c.b16 %v3620, %v3619
        %v3649 = vpack.c.b16 %v3622, %v3621
        %v3650 = vpack.c.b16 %v3624, %v3623
        %v3651 = vpack.c.b16 %v3626, %v3625
        %v3652 = vpack.c.b16 %v3628, %v3627
        %v3653 = vpack.c.b16 %v3630, %v3629
        %v3654 = vpack.c.b16 %v3632, %v3631
        %v3655 = vpack.c.b16 %v3634, %v3633
        %v3656 = vpack.c.b16 %v3636, %v3635
        %v3657 = vpack.c.b16 %v3638, %v3637
        %v3658 = vpack.c.b16 %v3640, %v3639
        %v3678 = vsel %vm377, %v3487, 0
        %v3681 = vsel %vm377, %v3490, 0
        %v3684 = vsel %vm377, %v3493, 0
        %v3687 = vsel %vm377, %v3496, 0
        %v3690 = vsel %vm377, %v3499, 0
        %v3693 = vsel %vm377, %v3502, 0
        %v3696 = vsel %vm377, %v3505, 0
        %v3699 = vsel %vm377, %v3508, 0
        %v3702 = vsel %vm377, %v3511, 0
        %v3705 = vsel %vm377, %v3514, 0
        %v3708 = vsel %vm377, %v3517, 0
        %v3711 = vsel %vm377, %v3520, 0
        %v3714 = vsel %vm377, %v3523, 0
        %v3717 = vsel %vm377, %v3526, 0
        %v3720 = vsel %vm377, %v3529, 0
        %v3723 = vsel %vm377, %v3532, 0
        %3725 = vmatprep.subr.bf16.mxu0 0
        %3726 = vmatpush1.bf16.msra.mxu0 %v3641
        %3727 = vmatprep.subr.bf16.mxu0 0
        %3728 = vmatpush1.bf16.msra.mxu0 %v3642
        %3729 = vmatprep.subr.bf16.mxu0 0
        %3730 = vmatpush1.bf16.msra.mxu0 %v3643
        %3731 = vmatprep.subr.bf16.mxu0 0
        %3732 = vmatpush1.bf16.msra.mxu0 %v3644
        %3733 = vmatprep.subr.bf16.mxu0 0
        %3734 = vmatpush1.bf16.msra.mxu0 %v3645
        %3735 = vmatprep.subr.bf16.mxu0 0
        %3736 = vmatpush1.bf16.msra.mxu0 %v3646
        %3737 = vmatprep.subr.bf16.mxu0 0
        %3738 = vmatpush1.bf16.msra.mxu0 %v3647
        %3739 = vmatprep.subr.bf16.mxu0 0
        %3740 = vmatpush1.bf16.msra.mxu0 %v3648
        %3741 = vmatprep.subr.bf16.mxu0 0
        %3742 = vmatpush1.bf16.msra.mxu0 %v3649
        %3743 = vmatprep.subr.bf16.mxu0 0
        %3744 = vmatpush1.bf16.msra.mxu0 %v3650
        %3745 = vmatprep.subr.bf16.mxu0 0
        %3746 = vmatpush1.bf16.msra.mxu0 %v3651
        %3747 = vmatprep.subr.bf16.mxu0 0
        %3748 = vmatpush1.bf16.msra.mxu0 %v3652
        %3749 = vmatprep.subr.bf16.mxu0 0
        %3750 = vmatpush1.bf16.msra.mxu0 %v3653
        %3751 = vmatprep.subr.bf16.mxu0 0
        %3752 = vmatpush1.bf16.msra.mxu0 %v3654
        %3753 = vmatprep.subr.bf16.mxu0 0
        %3754 = vmatpush1.bf16.msra.mxu0 %v3655
        %3755 = vmatprep.subr.bf16.mxu0 0
        %3756 = vmatpush1.bf16.msra.mxu0 %v3656
        %3757 = vmatprep.mubr.bf16.mxu0 %v3486
        %3758 = vmatmul.mubr.bf16.gmra.mrb[0].mxu0 %v3485
        %v3759 = vpop.f32.mrb[0].mxu0
        %v3760 = vadd.f32 0.0, %v3759
        %v3761 = vpop.f32.mrb[0].mxu0
        %v3762 = vpop.f32.mrb[0].mxu0
        %v3763 = vadd.f32 0.0, %v3762
        %v3764 = vpop.f32.mrb[0].mxu0
        %3765 = vmatprep.mubr.bf16.mxu0 %v3489
        %3766 = vmatmul.mubr.bf16.gmra.mrb[0].mxu0 %v3488
        %v3767 = vpop.f32.mrb[0].mxu0
        %v3768 = vadd.f32 0.0, %v3767
        %v3769 = vpop.f32.mrb[0].mxu0
        %v3770 = vpop.f32.mrb[0].mxu0
        %v3771 = vadd.f32 0.0, %v3770
        %v3772 = vpop.f32.mrb[0].mxu0
        %3773 = vmatprep.mubr.bf16.mxu0 %v3492
        %3774 = vmatmul.mubr.bf16.gmra.mrb[0].mxu0 %v3491
        %v3775 = vpop.f32.mrb[0].mxu0
        %v3776 = vadd.f32 0.0, %v3775
        %v3777 = vpop.f32.mrb[0].mxu0
        %v3778 = vpop.f32.mrb[0].mxu0
        %v3779 = vadd.f32 0.0, %v3778
        %v3780 = vpop.f32.mrb[0].mxu0
        %3781 = vmatprep.mubr.bf16.mxu0 %v3495
        %3782 = vmatmul.mubr.bf16.gmra.mrb[0].mxu0 %v3494
        %v3783 = vpop.f32.mrb[0].mxu0
        %v3784 = vadd.f32 0.0, %v3783
        %v3785 = vpop.f32.mrb[0].mxu0
        %v3786 = vpop.f32.mrb[0].mxu0
        %v3787 = vadd.f32 0.0, %v3786
        %v3788 = vpop.f32.mrb[0].mxu0
        %3789 = vmatprep.mubr.bf16.mxu0 %v3498
        %3790 = vmatmul.mubr.bf16.gmra.mrb[0].mxu0 %v3497
        %v3791 = vpop.f32.mrb[0].mxu0
        %v3792 = vadd.f32 0.0, %v3791
        %v3793 = vpop.f32.mrb[0].mxu0
        %v3794 = vpop.f32.mrb[0].mxu0
        %v3795 = vadd.f32 0.0, %v3794
        %v3796 = vpop.f32.mrb[0].mxu0
        %3797 = vmatprep.mubr.bf16.mxu0 %v3501
        %3798 = vmatmul.mubr.bf16.gmra.mrb[0].mxu0 %v3500
        %v3799 = vpop.f32.mrb[0].mxu0
        %v3800 = vadd.f32 0.0, %v3799
        %v3801 = vpop.f32.mrb[0].mxu0
        %v3802 = vpop.f32.mrb[0].mxu0
        %v3803 = vadd.f32 0.0, %v3802
        %v3804 = vpop.f32.mrb[0].mxu0
        %3805 = vmatprep.mubr.bf16.mxu0 %v3504
        %3806 = vmatmul.mubr.bf16.gmra.mrb[0].mxu0 %v3503
        %v3807 = vpop.f32.mrb[0].mxu0
        %v3808 = vadd.f32 0.0, %v3807
        %v3809 = vpop.f32.mrb[0].mxu0
        %v3810 = vpop.f32.mrb[0].mxu0
        %v3811 = vadd.f32 0.0, %v3810
        %v3812 = vpop.f32.mrb[0].mxu0
        %3813 = vmatprep.mubr.bf16.mxu0 %v3507
        %3814 = vmatmul.mubr.bf16.gmra.mrb[0].mxu0 %v3506
        %v3815 = vpop.f32.mrb[0].mxu0
        %v3816 = vadd.f32 0.0, %v3815
        %v3817 = vpop.f32.mrb[0].mxu0
        %v3818 = vpop.f32.mrb[0].mxu0
        %v3819 = vadd.f32 0.0, %v3818
        %v3820 = vpop.f32.mrb[0].mxu0
        %3821 = vmatprep.mubr.bf16.mxu0 %v3510
        %3822 = vmatmul.mubr.bf16.gmra.mrb[0].mxu0 %v3509
        %v3823 = vpop.f32.mrb[0].mxu0
        %v3824 = vadd.f32 0.0, %v3823
        %v3825 = vpop.f32.mrb[0].mxu0
        %v3826 = vpop.f32.mrb[0].mxu0
        %v3827 = vadd.f32 0.0, %v3826
        %v3828 = vpop.f32.mrb[0].mxu0
        %3829 = vmatprep.mubr.bf16.mxu0 %v3513
        %3830 = vmatmul.mubr.bf16.gmra.mrb[0].mxu0 %v3512
        %v3831 = vpop.f32.mrb[0].mxu0
        %v3832 = vadd.f32 0.0, %v3831
        %v3833 = vpop.f32.mrb[0].mxu0
        %v3834 = vpop.f32.mrb[0].mxu0
        %v3835 = vadd.f32 0.0, %v3834
        %v3836 = vpop.f32.mrb[0].mxu0
        %3837 = vmatprep.mubr.bf16.mxu0 %v3516
        %3838 = vmatmul.mubr.bf16.gmra.mrb[0].mxu0 %v3515
        %v3839 = vpop.f32.mrb[0].mxu0
        %v3840 = vadd.f32 0.0, %v3839
        %v3841 = vpop.f32.mrb[0].mxu0
        %v3842 = vpop.f32.mrb[0].mxu0
        %v3843 = vadd.f32 0.0, %v3842
        %v3844 = vpop.f32.mrb[0].mxu0
        %3845 = vmatprep.mubr.bf16.mxu0 %v3519
        %3846 = vmatmul.mubr.bf16.gmra.mrb[0].mxu0 %v3518
        %v3847 = vpop.f32.mrb[0].mxu0
        %v3848 = vadd.f32 0.0, %v3847
        %v3849 = vpop.f32.mrb[0].mxu0
        %v3850 = vpop.f32.mrb[0].mxu0
        %v3851 = vadd.f32 0.0, %v3850
        %v3852 = vpop.f32.mrb[0].mxu0
        %3853 = vmatprep.mubr.bf16.mxu0 %v3522
        %3854 = vmatmul.mubr.bf16.gmra.mrb[0].mxu0 %v3521
        %v3855 = vpop.f32.mrb[0].mxu0
        %v3856 = vadd.f32 0.0, %v3855
        %v3857 = vpop.f32.mrb[0].mxu0
        %v3858 = vpop.f32.mrb[0].mxu0
        %v3859 = vadd.f32 0.0, %v3858
        %v3860 = vpop.f32.mrb[0].mxu0
        %3861 = vmatprep.mubr.bf16.mxu0 %v3525
        %3862 = vmatmul.mubr.bf16.gmra.mrb[0].mxu0 %v3524
        %v3863 = vpop.f32.mrb[0].mxu0
        %v3864 = vadd.f32 0.0, %v3863
        %v3865 = vpop.f32.mrb[0].mxu0
        %v3866 = vpop.f32.mrb[0].mxu0
        %v3867 = vadd.f32 0.0, %v3866
        %v3868 = vpop.f32.mrb[0].mxu0
        %3869 = vmatprep.mubr.bf16.mxu0 %v3528
        %3870 = vmatmul.mubr.bf16.gmra.mrb[0].mxu0 %v3527
        %v3871 = vpop.f32.mrb[0].mxu0
        %v3872 = vadd.f32 0.0, %v3871
        %v3873 = vpop.f32.mrb[0].mxu0
        %v3874 = vpop.f32.mrb[0].mxu0
        %v3875 = vadd.f32 0.0, %v3874
        %v3876 = vpop.f32.mrb[0].mxu0
        %3877 = vmatprep.mubr.bf16.mxu0 %v3531
        %3878 = vmatmul.mubr.bf16.gmra.mrb[0].mxu0 %v3530
        %v3879 = vpop.f32.mrb[0].mxu0
        %v3880 = vadd.f32 0.0, %v3879
        %v3881 = vpop.f32.mrb[0].mxu0
        %v3882 = vpop.f32.mrb[0].mxu0
        %v3883 = vadd.f32 0.0, %v3882
        %v3884 = vpop.f32.mrb[0].mxu0
        %3885 = vdwg.mxu0
        %3886 = vmatprep.subr.bf16.mxu0 0
        %3887 = vmatpush1.bf16.msra.mxu0 %v3657
        %3888 = vmatprep.subr.bf16.mxu0 0
        %3889 = vmatpush1.bf16.msra.mxu0 %v3658
        %3890 = vmatprep.subr.bf16.mxu0 0
        %3891 = vmatpush1.bf16.msra.mxu0 0
        %3892 = vmatprep.subr.bf16.mxu0 0
        %3893 = vmatpush1.bf16.msra.mxu0 0
        %3894 = vmatprep.subr.bf16.mxu0 0
        %3895 = vmatpush1.bf16.msra.mxu0 0
        %3896 = vmatprep.subr.bf16.mxu0 0
        %3897 = vmatpush1.bf16.msra.mxu0 0
        %3898 = vmatprep.subr.bf16.mxu0 0
        %3899 = vmatpush1.bf16.msra.mxu0 0
        %3900 = vmatprep.subr.bf16.mxu0 0
        %3901 = vmatpush1.bf16.msra.mxu0 0
        %3902 = vmatprep.subr.bf16.mxu0 0
        %3903 = vmatpush1.bf16.msra.mxu0 0
        %3904 = vmatprep.subr.bf16.mxu0 0
        %3905 = vmatpush1.bf16.msra.mxu0 0
        %3906 = vmatprep.subr.bf16.mxu0 0
        %3907 = vmatpush1.bf16.msra.mxu0 0
        %3908 = vmatprep.subr.bf16.mxu0 0
        %3909 = vmatpush1.bf16.msra.mxu0 0
        %3910 = vmatprep.subr.bf16.mxu0 0
        %3911 = vmatpush1.bf16.msra.mxu0 0
        %3912 = vmatprep.subr.bf16.mxu0 0
        %3913 = vmatpush1.bf16.msra.mxu0 0
        %3914 = vmatprep.subr.bf16.mxu0 0
        %3915 = vmatpush1.bf16.msra.mxu0 0
        %3916 = vmatprep.subr.bf16.mxu0 0
        %3917 = vmatpush1.bf16.msra.mxu0 0
        %3918 = vmatprep.mubr.bf16.mxu0 0
        %3919 = vmatmul.mubr.bf16.gmra.mrb[0].mxu0 %v3678
        %v3920 = vpop.f32.mrb[0].mxu0
        %v3921 = vadd.f32 %v3760, %v3920
        %v3922 = vpop.f32.mrb[0].mxu0
        %v3923 = vpop.f32.mrb[0].mxu0
        %v3924 = vadd.f32 %v3763, %v3923
        %v3925 = vpop.f32.mrb[0].mxu0
        %3926 = vmatprep.mubr.bf16.mxu0 0
        %3927 = vmatmul.mubr.bf16.gmra.mrb[0].mxu0 %v3681
        %v3928 = vpop.f32.mrb[0].mxu0
        %v3929 = vadd.f32 %v3768, %v3928
        %v3930 = vpop.f32.mrb[0].mxu0
        %v3931 = vpop.f32.mrb[0].mxu0
        %v3932 = vadd.f32 %v3771, %v3931
        %v3933 = vpop.f32.mrb[0].mxu0
        %3934 = vmatprep.mubr.bf16.mxu0 0
        %3935 = vmatmul.mubr.bf16.gmra.mrb[0].mxu0 %v3684
        %v3936 = vpop.f32.mrb[0].mxu0
        %v3937 = vadd.f32 %v3776, %v3936
        %v3938 = vpop.f32.mrb[0].mxu0
        %v3939 = vpop.f32.mrb[0].mxu0
        %v3940 = vadd.f32 %v3779, %v3939
        %v3941 = vpop.f32.mrb[0].mxu0
        %3942 = vmatprep.mubr.bf16.mxu0 0
        %3943 = vmatmul.mubr.bf16.gmra.mrb[0].mxu0 %v3687
        %v3944 = vpop.f32.mrb[0].mxu0
        %v3945 = vadd.f32 %v3784, %v3944
        %v3946 = vpop.f32.mrb[0].mxu0
        %v3947 = vpop.f32.mrb[0].mxu0
        %v3948 = vadd.f32 %v3787, %v3947
        %v3949 = vpop.f32.mrb[0].mxu0
        %3950 = vmatprep.mubr.bf16.mxu0 0
        %3951 = vmatmul.mubr.bf16.gmra.mrb[0].mxu0 %v3690
        %v3952 = vpop.f32.mrb[0].mxu0
        %v3953 = vadd.f32 %v3792, %v3952
        %v3954 = vpop.f32.mrb[0].mxu0
        %v3955 = vpop.f32.mrb[0].mxu0
        %v3956 = vadd.f32 %v3795, %v3955
        %v3957 = vpop.f32.mrb[0].mxu0
        %3958 = vmatprep.mubr.bf16.mxu0 0
        %3959 = vmatmul.mubr.bf16.gmra.mrb[0].mxu0 %v3693
        %v3960 = vpop.f32.mrb[0].mxu0
        %v3961 = vadd.f32 %v3800, %v3960
        %v3962 = vpop.f32.mrb[0].mxu0
        %v3963 = vpop.f32.mrb[0].mxu0
        %v3964 = vadd.f32 %v3803, %v3963
        %v3965 = vpop.f32.mrb[0].mxu0
        %3966 = vmatprep.mubr.bf16.mxu0 0
        %3967 = vmatmul.mubr.bf16.gmra.mrb[0].mxu0 %v3696
        %v3968 = vpop.f32.mrb[0].mxu0
        %v3969 = vadd.f32 %v3808, %v3968
        %v3970 = vpop.f32.mrb[0].mxu0
        %v3971 = vpop.f32.mrb[0].mxu0
        %v3972 = vadd.f32 %v3811, %v3971
        %v3973 = vpop.f32.mrb[0].mxu0
        %3974 = vmatprep.mubr.bf16.mxu0 0
        %3975 = vmatmul.mubr.bf16.gmra.mrb[0].mxu0 %v3699
        %v3976 = vpop.f32.mrb[0].mxu0
        %v3977 = vadd.f32 %v3816, %v3976
        %v3978 = vpop.f32.mrb[0].mxu0
        %v3979 = vpop.f32.mrb[0].mxu0
        %v3980 = vadd.f32 %v3819, %v3979
        %v3981 = vpop.f32.mrb[0].mxu0
        %3982 = vmatprep.mubr.bf16.mxu0 0
        %3983 = vmatmul.mubr.bf16.gmra.mrb[0].mxu0 %v3702
        %v3984 = vpop.f32.mrb[0].mxu0
        %v3985 = vadd.f32 %v3824, %v3984
        %v3986 = vpop.f32.mrb[0].mxu0
        %v3987 = vpop.f32.mrb[0].mxu0
        %v3988 = vadd.f32 %v3827, %v3987
        %v3989 = vpop.f32.mrb[0].mxu0
        %3990 = vmatprep.mubr.bf16.mxu0 0
        %3991 = vmatmul.mubr.bf16.gmra.mrb[0].mxu0 %v3705
        %v3992 = vpop.f32.mrb[0].mxu0
        %v3993 = vadd.f32 %v3832, %v3992
        %v3994 = vpop.f32.mrb[0].mxu0
        %v3995 = vpop.f32.mrb[0].mxu0
        %v3996 = vadd.f32 %v3835, %v3995
        %v3997 = vpop.f32.mrb[0].mxu0
        %3998 = vmatprep.mubr.bf16.mxu0 0
        %3999 = vmatmul.mubr.bf16.gmra.mrb[0].mxu0 %v3708
        %v4000 = vpop.f32.mrb[0].mxu0
        %v4001 = vadd.f32 %v3840, %v4000
        %v4002 = vpop.f32.mrb[0].mxu0
        %v4003 = vpop.f32.mrb[0].mxu0
        %v4004 = vadd.f32 %v3843, %v4003
        %v4005 = vpop.f32.mrb[0].mxu0
        %4006 = vmatprep.mubr.bf16.mxu0 0
        %4007 = vmatmul.mubr.bf16.gmra.mrb[0].mxu0 %v3711
        %v4008 = vpop.f32.mrb[0].mxu0
        %v4009 = vadd.f32 %v3848, %v4008
        %v4010 = vpop.f32.mrb[0].mxu0
        %v4011 = vpop.f32.mrb[0].mxu0
        %v4012 = vadd.f32 %v3851, %v4011
        %v4013 = vpop.f32.mrb[0].mxu0
        %4014 = vmatprep.mubr.bf16.mxu0 0
        %4015 = vmatmul.mubr.bf16.gmra.mrb[0].mxu0 %v3714
        %v4016 = vpop.f32.mrb[0].mxu0
        %v4017 = vadd.f32 %v3856, %v4016
        %v4018 = vpop.f32.mrb[0].mxu0
        %v4019 = vpop.f32.mrb[0].mxu0
        %v4020 = vadd.f32 %v3859, %v4019
        %v4021 = vpop.f32.mrb[0].mxu0
        %4022 = vmatprep.mubr.bf16.mxu0 0
        %4023 = vmatmul.mubr.bf16.gmra.mrb[0].mxu0 %v3717
        %v4024 = vpop.f32.mrb[0].mxu0
        %v4025 = vadd.f32 %v3864, %v4024
        %v4026 = vpop.f32.mrb[0].mxu0
        %v4027 = vpop.f32.mrb[0].mxu0
        %v4028 = vadd.f32 %v3867, %v4027
        %v4029 = vpop.f32.mrb[0].mxu0
        %4030 = vmatprep.mubr.bf16.mxu0 0
        %4031 = vmatmul.mubr.bf16.gmra.mrb[0].mxu0 %v3720
        %v4032 = vpop.f32.mrb[0].mxu0
        %v4033 = vadd.f32 %v3872, %v4032
        %v4034 = vpop.f32.mrb[0].mxu0
        %v4035 = vpop.f32.mrb[0].mxu0
        %v4036 = vadd.f32 %v3875, %v4035
        %v4037 = vpop.f32.mrb[0].mxu0
        %4038 = vmatprep.mubr.bf16.mxu0 0
        %4039 = vmatmul.mubr.bf16.gmra.mrb[0].mxu0 %v3723
        %v4040 = vpop.f32.mrb[0].mxu0
        %v4041 = vadd.f32 %v3880, %v4040
        %v4042 = vpop.f32.mrb[0].mxu0
        %v4043 = vpop.f32.mrb[0].mxu0
        %v4044 = vadd.f32 %v3883, %v4043
        %v4045 = vpop.f32.mrb[0].mxu0
        %4046 = vdwg.mxu0
        %4079 = vrot.lane.b32.xlu0 %v3921, 8
        %v4080 = vpop.permute.xlu0 %4079
        %4081 = vrot.lane.b32.xlu0 %v3924, 8
        %v4082 = vpop.permute.xlu0 %4081
        %4083 = vrot.lane.b32.xlu0 %v3929, 8
        %v4084 = vpop.permute.xlu0 %4083
        %4085 = vrot.lane.b32.xlu0 %v3932, 8
        %v4086 = vpop.permute.xlu0 %4085
        %4087 = vrot.lane.b32.xlu0 %v3937, 8
        %v4088 = vpop.permute.xlu0 %4087
        %4089 = vrot.lane.b32.xlu0 %v3940, 8
        %v4090 = vpop.permute.xlu0 %4089
        %4091 = vrot.lane.b32.xlu0 %v3945, 8
        %v4092 = vpop.permute.xlu0 %4091
        %4093 = vrot.lane.b32.xlu0 %v3948, 8
        %v4094 = vpop.permute.xlu0 %4093
        %4095 = vrot.lane.b32.xlu0 %v3953, 8
        %v4096 = vpop.permute.xlu0 %4095
        %4097 = vrot.lane.b32.xlu0 %v3956, 8
        %v4098 = vpop.permute.xlu0 %4097
        %4099 = vrot.lane.b32.xlu0 %v3961, 8
        %v4100 = vpop.permute.xlu0 %4099
        %4101 = vrot.lane.b32.xlu0 %v3964, 8
        %v4102 = vpop.permute.xlu0 %4101
        %4103 = vrot.lane.b32.xlu0 %v3969, 8
        %v4104 = vpop.permute.xlu0 %4103
        %4105 = vrot.lane.b32.xlu0 %v3972, 8
        %v4106 = vpop.permute.xlu0 %4105
        %4107 = vrot.lane.b32.xlu0 %v3977, 8
        %v4108 = vpop.permute.xlu0 %4107
        %4109 = vrot.lane.b32.xlu0 %v3980, 8
        %v4110 = vpop.permute.xlu0 %4109
        %4111 = vrot.lane.b32.xlu0 %v3985, 8
        %v4112 = vpop.permute.xlu0 %4111
        %4113 = vrot.lane.b32.xlu0 %v3988, 8
        %v4114 = vpop.permute.xlu0 %4113
        %4115 = vrot.lane.b32.xlu0 %v3993, 8
        %v4116 = vpop.permute.xlu0 %4115
        %4117 = vrot.lane.b32.xlu0 %v3996, 8
        %v4118 = vpop.permute.xlu0 %4117
        %4119 = vrot.lane.b32.xlu0 %v4001, 8
        %v4120 = vpop.permute.xlu0 %4119
        %4121 = vrot.lane.b32.xlu0 %v4004, 8
        %v4122 = vpop.permute.xlu0 %4121
        %4123 = vrot.lane.b32.xlu0 %v4009, 8
        %v4124 = vpop.permute.xlu0 %4123
        %4125 = vrot.lane.b32.xlu0 %v4012, 8
        %v4126 = vpop.permute.xlu0 %4125
        %4127 = vrot.lane.b32.xlu0 %v4017, 8
        %v4128 = vpop.permute.xlu0 %4127
        %4129 = vrot.lane.b32.xlu0 %v4020, 8
        %v4130 = vpop.permute.xlu0 %4129
        %4131 = vrot.lane.b32.xlu0 %v4025, 8
        %v4132 = vpop.permute.xlu0 %4131
        %4133 = vrot.lane.b32.xlu0 %v4028, 8
        %v4134 = vpop.permute.xlu0 %4133
        %4135 = vrot.lane.b32.xlu0 %v4033, 8
        %v4136 = vpop.permute.xlu0 %4135
        %4137 = vrot.lane.b32.xlu0 %v4036, 8
        %v4138 = vpop.permute.xlu0 %4137
        %4139 = vrot.lane.b32.xlu0 %v4041, 8
        %v4140 = vpop.permute.xlu0 %4139
        %4141 = vrot.lane.b32.xlu0 %v4044, 8
        %v4142 = vpop.permute.xlu0 %4141
        %vm4175 = vcmask 130112
        %4176 = vst.msk [vmem:[%s271] sm:$0xff] %vm4175, %v4080
        %4177 = vst.msk [vmem:[%s271 + $0x8] sm:$0xff] %vm4175, %v4082
        %4178 = vst.msk [vmem:[%s271 + $0x10] sm:$0xff] %vm4175, %v4084
        %4179 = vst.msk [vmem:[%s271 + $0x18] sm:$0xff] %vm4175, %v4086
        %4180 = vst.msk [vmem:[%s271 + $0x20] sm:$0xff] %vm4175, %v4088
        %4181 = vst.msk [vmem:[%s271 + $0x28] sm:$0xff] %vm4175, %v4090
        %4182 = vst.msk [vmem:[%s271 + $0x30] sm:$0xff] %vm4175, %v4092
        %4183 = vst.msk [vmem:[%s271 + $0x38] sm:$0xff] %vm4175, %v4094
        %4184 = vst.msk [vmem:[%s271 + $0x40] sm:$0xff] %vm4175, %v4096
        %4185 = vst.msk [vmem:[%s271 + $0x48] sm:$0xff] %vm4175, %v4098
        %4186 = vst.msk [vmem:[%s271 + $0x50] sm:$0xff] %vm4175, %v4100
        %4187 = vst.msk [vmem:[%s271 + $0x58] sm:$0xff] %vm4175, %v4102
        %4188 = vst.msk [vmem:[%s271 + $0x60] sm:$0xff] %vm4175, %v4104
        %4189 = vst.msk [vmem:[%s271 + $0x68] sm:$0xff] %vm4175, %v4106
        %4190 = vst.msk [vmem:[%s271 + $0x70] sm:$0xff] %vm4175, %v4108
        %4191 = vst.msk [vmem:[%s271 + $0x78] sm:$0xff] %vm4175, %v4110
        %4192 = vst.msk [vmem:[%s271 + $0x80] sm:$0xff] %vm4175, %v4112
        %4193 = vst.msk [vmem:[%s271 + $0x88] sm:$0xff] %vm4175, %v4114
        %4194 = vst.msk [vmem:[%s271 + $0x90] sm:$0xff] %vm4175, %v4116
        %4195 = vst.msk [vmem:[%s271 + $0x98] sm:$0xff] %vm4175, %v4118
        %4196 = vst.msk [vmem:[%s271 + $0xa0] sm:$0xff] %vm4175, %v4120
        %4197 = vst.msk [vmem:[%s271 + $0xa8] sm:$0xff] %vm4175, %v4122
        %4198 = vst.msk [vmem:[%s271 + $0xb0] sm:$0xff] %vm4175, %v4124
        %4199 = vst.msk [vmem:[%s271 + $0xb8] sm:$0xff] %vm4175, %v4126
        %4200 = vst.msk [vmem:[%s271 + $0xc0] sm:$0xff] %vm4175, %v4128
        %4201 = vst.msk [vmem:[%s271 + $0xc8] sm:$0xff] %vm4175, %v4130
        %4202 = vst.msk [vmem:[%s271 + $0xd0] sm:$0xff] %vm4175, %v4132
        %4203 = vst.msk [vmem:[%s271 + $0xd8] sm:$0xff] %vm4175, %v4134
        %4204 = vst.msk [vmem:[%s271 + $0xe0] sm:$0xff] %vm4175, %v4136
        %4205 = vst.msk [vmem:[%s271 + $0xe8] sm:$0xff] %vm4175, %v4138
        %4206 = vst.msk [vmem:[%s271 + $0xf0] sm:$0xff] %vm4175, %v4140
        %4207 = vst.msk [vmem:[%s271 + $0xf8] sm:$0xff] %vm4175, %v4142
        %v4208 = vld [vmem:[%s271] sm:$0xff]
        %v4209 = vld [vmem:[%s271 + $0x8] sm:$0xff]
        %v4210 = vld [vmem:[%s271 + $0x10] sm:$0xff]
        %v4211 = vld [vmem:[%s271 + $0x18] sm:$0xff]
        %v4212 = vld [vmem:[%s271 + $0x20] sm:$0xff]
        %v4213 = vld [vmem:[%s271 + $0x28] sm:$0xff]
        %v4214 = vld [vmem:[%s271 + $0x30] sm:$0xff]
        %v4215 = vld [vmem:[%s271 + $0x38] sm:$0xff]
        %v4216 = vld [vmem:[%s271 + $0x40] sm:$0xff]
        %v4217 = vld [vmem:[%s271 + $0x48] sm:$0xff]
        %v4218 = vld [vmem:[%s271 + $0x50] sm:$0xff]
        %v4219 = vld [vmem:[%s271 + $0x58] sm:$0xff]
        %v4220 = vld [vmem:[%s271 + $0x60] sm:$0xff]
        %v4221 = vld [vmem:[%s271 + $0x68] sm:$0xff]
        %v4222 = vld [vmem:[%s271 + $0x70] sm:$0xff]
        %v4223 = vld [vmem:[%s271 + $0x78] sm:$0xff]
        %v4224 = vld [vmem:[%s271 + $0x80] sm:$0xff]
        %v4225 = vld [vmem:[%s271 + $0x88] sm:$0xff]
        %v4226 = vld [vmem:[%s271 + $0x90] sm:$0xff]
        %v4227 = vld [vmem:[%s271 + $0x98] sm:$0xff]
        %v4228 = vld [vmem:[%s271 + $0xa0] sm:$0xff]
        %v4229 = vld [vmem:[%s271 + $0xa8] sm:$0xff]
        %v4230 = vld [vmem:[%s271 + $0xb0] sm:$0xff]
        %v4231 = vld [vmem:[%s271 + $0xb8] sm:$0xff]
        %v4232 = vld [vmem:[%s271 + $0xc0] sm:$0xff]
        %v4233 = vld [vmem:[%s271 + $0xc8] sm:$0xff]
        %v4234 = vld [vmem:[%s271 + $0xd0] sm:$0xff]
        %v4235 = vld [vmem:[%s271 + $0xd8] sm:$0xff]
        %v4236 = vld [vmem:[%s271 + $0xe0] sm:$0xff]
        %v4237 = vld [vmem:[%s271 + $0xe8] sm:$0xff]
        %v4238 = vld [vmem:[%s271 + $0xf0] sm:$0xff]
        %v4239 = vld [vmem:[%s271 + $0xf8] sm:$0xff]
        %v4240 = vld [vmem:[%s4] sm:$0x1]
        %v4241 = vlaneseq
        %v4242 = vshrl.u32 %v4241, 7
        %v4243 = vsub.s32 0, %v4242
        %v4244 = vrot.slane %v4240, %v4243
        %v4245 = vmul.f32 %v4208, %v4244
        %v4246 = vmul.f32 %v4209, %v4244
        %v4247 = vmul.f32 %v4210, %v4244
        %v4248 = vmul.f32 %v4211, %v4244
        %v4249 = vmul.f32 %v4212, %v4244
        %v4250 = vmul.f32 %v4213, %v4244
        %v4251 = vmul.f32 %v4214, %v4244
        %v4252 = vmul.f32 %v4215, %v4244
        %v4253 = vmul.f32 %v4216, %v4244
        %v4254 = vmul.f32 %v4217, %v4244
        %v4255 = vmul.f32 %v4218, %v4244
        %v4256 = vmul.f32 %v4219, %v4244
        %v4257 = vmul.f32 %v4220, %v4244
        %v4258 = vmul.f32 %v4221, %v4244
        %v4259 = vmul.f32 %v4222, %v4244
        %v4260 = vmul.f32 %v4223, %v4244
        %v4261 = vmul.f32 %v4224, %v4244
        %v4262 = vmul.f32 %v4225, %v4244
        %v4263 = vmul.f32 %v4226, %v4244
        %v4264 = vmul.f32 %v4227, %v4244
        %v4265 = vmul.f32 %v4228, %v4244
        %v4266 = vmul.f32 %v4229, %v4244
        %v4267 = vmul.f32 %v4230, %v4244
        %v4268 = vmul.f32 %v4231, %v4244
        %v4269 = vmul.f32 %v4232, %v4244
        %v4270 = vmul.f32 %v4233, %v4244
        %v4271 = vmul.f32 %v4234, %v4244
        %v4272 = vmul.f32 %v4235, %v4244
        %v4273 = vmul.f32 %v4236, %v4244
        %v4274 = vmul.f32 %v4237, %v4244
        %v4275 = vmul.f32 %v4238, %v4244
        %v4276 = vmul.f32 %v4239, %v4244
        %v4277 = vld [vmem:[%s4 + $0x1] sm:$0x1]
        %v4278 = vlaneseq
        %v4279 = vshrl.u32 %v4278, 7
        %v4280 = vsub.s32 0, %v4279
        %v4281 = vrot.slane %v4277, %v4280
        %v4282 = vadd.f32 %v4245, %v4281
        %v4283 = vadd.f32 %v4246, %v4281
        %v4284 = vadd.f32 %v4247, %v4281
        %v4285 = vadd.f32 %v4248, %v4281
        %v4286 = vadd.f32 %v4249, %v4281
        %v4287 = vadd.f32 %v4250, %v4281
        %v4288 = vadd.f32 %v4251, %v4281
        %v4289 = vadd.f32 %v4252, %v4281
        %v4290 = vadd.f32 %v4253, %v4281
        %v4291 = vadd.f32 %v4254, %v4281
        %v4292 = vadd.f32 %v4255, %v4281
        %v4293 = vadd.f32 %v4256, %v4281
        %v4294 = vadd.f32 %v4257, %v4281
        %v4295 = vadd.f32 %v4258, %v4281
        %v4296 = vadd.f32 %v4259, %v4281
        %v4297 = vadd.f32 %v4260, %v4281
        %v4298 = vadd.f32 %v4261, %v4281
        %v4299 = vadd.f32 %v4262, %v4281
        %v4300 = vadd.f32 %v4263, %v4281
        %v4301 = vadd.f32 %v4264, %v4281
        %v4302 = vadd.f32 %v4265, %v4281
        %v4303 = vadd.f32 %v4266, %v4281
        %v4304 = vadd.f32 %v4267, %v4281
        %v4305 = vadd.f32 %v4268, %v4281
        %v4306 = vadd.f32 %v4269, %v4281
        %v4307 = vadd.f32 %v4270, %v4281
        %v4308 = vadd.f32 %v4271, %v4281
        %v4309 = vadd.f32 %v4272, %v4281
        %v4310 = vadd.f32 %v4273, %v4281
        %v4311 = vadd.f32 %v4274, %v4281
        %v4312 = vadd.f32 %v4275, %v4281
        %v4313 = vadd.f32 %v4276, %v4281
        %v4314 = vmax.f32 %v4282, 0.0
        %v4315 = vmax.f32 %v4283, 0.0
        %v4316 = vmax.f32 %v4284, 0.0
        %v4317 = vmax.f32 %v4285, 0.0
        %v4318 = vmax.f32 %v4286, 0.0
        %v4319 = vmax.f32 %v4287, 0.0
        %v4320 = vmax.f32 %v4288, 0.0
        %v4321 = vmax.f32 %v4289, 0.0
        %v4322 = vmax.f32 %v4290, 0.0
        %v4323 = vmax.f32 %v4291, 0.0
        %v4324 = vmax.f32 %v4292, 0.0
        %v4325 = vmax.f32 %v4293, 0.0
        %v4326 = vmax.f32 %v4294, 0.0
        %v4327 = vmax.f32 %v4295, 0.0
        %v4328 = vmax.f32 %v4296, 0.0
        %v4329 = vmax.f32 %v4297, 0.0
        %v4330 = vmax.f32 %v4298, 0.0
        %v4331 = vmax.f32 %v4299, 0.0
        %v4332 = vmax.f32 %v4300, 0.0
        %v4333 = vmax.f32 %v4301, 0.0
        %v4334 = vmax.f32 %v4302, 0.0
        %v4335 = vmax.f32 %v4303, 0.0
        %v4336 = vmax.f32 %v4304, 0.0
        %v4337 = vmax.f32 %v4305, 0.0
        %v4338 = vmax.f32 %v4306, 0.0
        %v4339 = vmax.f32 %v4307, 0.0
        %v4340 = vmax.f32 %v4308, 0.0
        %v4341 = vmax.f32 %v4309, 0.0
        %v4342 = vmax.f32 %v4310, 0.0
        %v4343 = vmax.f32 %v4311, 0.0
        %v4344 = vmax.f32 %v4312, 0.0
        %v4345 = vmax.f32 %v4313, 0.0
        %v4346 = vpack.c.bf16 %v4315, %v4314
        %v4347 = vpack.c.bf16 %v4317, %v4316
        %v4348 = vpack.c.bf16 %v4319, %v4318
        %v4349 = vpack.c.bf16 %v4321, %v4320
        %v4350 = vpack.c.bf16 %v4323, %v4322
        %v4351 = vpack.c.bf16 %v4325, %v4324
        %v4352 = vpack.c.bf16 %v4327, %v4326
        %v4353 = vpack.c.bf16 %v4329, %v4328
        %v4354 = vpack.c.bf16 %v4331, %v4330
        %v4355 = vpack.c.bf16 %v4333, %v4332
        %v4356 = vpack.c.bf16 %v4335, %v4334
        %v4357 = vpack.c.bf16 %v4337, %v4336
        %v4358 = vpack.c.bf16 %v4339, %v4338
        %v4359 = vpack.c.bf16 %v4341, %v4340
        %v4360 = vpack.c.bf16 %v4343, %v4342
        %v4361 = vpack.c.bf16 %v4345, %v4344
        %v4362 = vld [vmem:[%s5] sm:$0xf]
        %v4363 = vld [vmem:[%s5 + $0x4] sm:$0xf]
        %v4364 = vld [vmem:[%s4 + $0x2] sm:$0x1]
        %v4365 = vlaneseq
        %v4366 = vshrl.u32 %v4365, 7
        %v4367 = vsub.s32 0, %v4366
        %v4368 = vrot.slane %v4364, %v4367
        %v4371 = vunpack.c.l.b16 %v4362
        %v4372 = vunpack.c.l.b16 %v4363
        %v4373 = vpack.c.b16 %v4372, %v4371
        %vm4375 = vcmask 130048
        %v4377 = vsel %vm4375, %v4346, 0
        %v4380 = vsel %vm4375, %v4347, 0
        %v4383 = vsel %vm4375, %v4348, 0
        %v4386 = vsel %vm4375, %v4349, 0
        %v4389 = vsel %vm4375, %v4350, 0
        %v4392 = vsel %vm4375, %v4351, 0
        %v4395 = vsel %vm4375, %v4352, 0
        %v4398 = vsel %vm4375, %v4353, 0
        %v4401 = vsel %vm4375, %v4354, 0
        %v4404 = vsel %vm4375, %v4355, 0
        %v4407 = vsel %vm4375, %v4356, 0
        %v4410 = vsel %vm4375, %v4357, 0
        %v4413 = vsel %vm4375, %v4358, 0
        %v4416 = vsel %vm4375, %v4359, 0
        %v4419 = vsel %vm4375, %v4360, 0
        %v4422 = vsel %vm4375, %v4361, 0
        %4424 = vmatprep.subr.bf16.mxu0 0
        %4425 = vmatpush1.bf16.msra.mxu0 %v4373
        %4426 = vmatprep.subr.bf16.mxu0 0
        %4427 = vmatpush1.bf16.msra.mxu0 0
        %4428 = vmatprep.subr.bf16.mxu0 0
        %4429 = vmatpush1.bf16.msra.mxu0 0
        %4430 = vmatprep.subr.bf16.mxu0 0
        %4431 = vmatpush1.bf16.msra.mxu0 0
        %4432 = vmatprep.subr.bf16.mxu0 0
        %4433 = vmatpush1.bf16.msra.mxu0 0
        %4434 = vmatprep.subr.bf16.mxu0 0
        %4435 = vmatpush1.bf16.msra.mxu0 0
        %4436 = vmatprep.subr.bf16.mxu0 0
        %4437 = vmatpush1.bf16.msra.mxu0 0
        %4438 = vmatprep.subr.bf16.mxu0 0
        %4439 = vmatpush1.bf16.msra.mxu0 0
        %4440 = vmatprep.subr.bf16.mxu0 0
        %4441 = vmatpush1.bf16.msra.mxu0 0
        %4442 = vmatprep.subr.bf16.mxu0 0
        %4443 = vmatpush1.bf16.msra.mxu0 0
        %4444 = vmatprep.subr.bf16.mxu0 0
        %4445 = vmatpush1.bf16.msra.mxu0 0
        %4446 = vmatprep.subr.bf16.mxu0 0
        %4447 = vmatpush1.bf16.msra.mxu0 0
        %4448 = vmatprep.subr.bf16.mxu0 0
        %4449 = vmatpush1.bf16.msra.mxu0 0
        %4450 = vmatprep.subr.bf16.mxu0 0
        %4451 = vmatpush1.bf16.msra.mxu0 0
        %4452 = vmatprep.subr.bf16.mxu0 0
        %4453 = vmatpush1.bf16.msra.mxu0 0
        %4454 = vmatprep.subr.bf16.mxu0 0
        %4455 = vmatpush1.bf16.msra.mxu0 0
        %4456 = vmatprep.mubr.bf16.mxu0 0
        %4457 = vmatmul.mubr.bf16.gmra.mrb[0].mxu0 %v4377
        %v4458 = vpop.f32.mrb[0].mxu0
        %v4459 = vadd.f32 %v4368, %v4458
        %v4460 = vpop.f32.mrb[0].mxu0
        %v4461 = vpop.f32.mrb[0].mxu0
        %v4462 = vadd.f32 %v4368, %v4461
        %v4463 = vpop.f32.mrb[0].mxu0
        %4464 = vmatprep.mubr.bf16.mxu0 0
        %4465 = vmatmul.mubr.bf16.gmra.mrb[0].mxu0 %v4380
        %v4466 = vpop.f32.mrb[0].mxu0
        %v4467 = vadd.f32 %v4368, %v4466
        %v4468 = vpop.f32.mrb[0].mxu0
        %v4469 = vpop.f32.mrb[0].mxu0
        %v4470 = vadd.f32 %v4368, %v4469
        %v4471 = vpop.f32.mrb[0].mxu0
        %4472 = vmatprep.mubr.bf16.mxu0 0
        %4473 = vmatmul.mubr.bf16.gmra.mrb[0].mxu0 %v4383
        %v4474 = vpop.f32.mrb[0].mxu0
        %v4475 = vadd.f32 %v4368, %v4474
        %v4476 = vpop.f32.mrb[0].mxu0
        %v4477 = vpop.f32.mrb[0].mxu0
        %v4478 = vadd.f32 %v4368, %v4477
        %v4479 = vpop.f32.mrb[0].mxu0
        %4480 = vmatprep.mubr.bf16.mxu0 0
        %4481 = vmatmul.mubr.bf16.gmra.mrb[0].mxu0 %v4386
        %v4482 = vpop.f32.mrb[0].mxu0
        %v4483 = vadd.f32 %v4368, %v4482
        %v4484 = vpop.f32.mrb[0].mxu0
        %v4485 = vpop.f32.mrb[0].mxu0
        %v4486 = vadd.f32 %v4368, %v4485
        %v4487 = vpop.f32.mrb[0].mxu0
        %4488 = vmatprep.mubr.bf16.mxu0 0
        %4489 = vmatmul.mubr.bf16.gmra.mrb[0].mxu0 %v4389
        %v4490 = vpop.f32.mrb[0].mxu0
        %v4491 = vadd.f32 %v4368, %v4490
        %v4492 = vpop.f32.mrb[0].mxu0
        %v4493 = vpop.f32.mrb[0].mxu0
        %v4494 = vadd.f32 %v4368, %v4493
        %v4495 = vpop.f32.mrb[0].mxu0
        %4496 = vmatprep.mubr.bf16.mxu0 0
        %4497 = vmatmul.mubr.bf16.gmra.mrb[0].mxu0 %v4392
        %v4498 = vpop.f32.mrb[0].mxu0
        %v4499 = vadd.f32 %v4368, %v4498
        %v4500 = vpop.f32.mrb[0].mxu0
        %v4501 = vpop.f32.mrb[0].mxu0
        %v4502 = vadd.f32 %v4368, %v4501
        %v4503 = vpop.f32.mrb[0].mxu0
        %4504 = vmatprep.mubr.bf16.mxu0 0
        %4505 = vmatmul.mubr.bf16.gmra.mrb[0].mxu0 %v4395
        %v4506 = vpop.f32.mrb[0].mxu0
        %v4507 = vadd.f32 %v4368, %v4506
        %v4508 = vpop.f32.mrb[0].mxu0
        %v4509 = vpop.f32.mrb[0].mxu0
        %v4510 = vadd.f32 %v4368, %v4509
        %v4511 = vpop.f32.mrb[0].mxu0
        %4512 = vmatprep.mubr.bf16.mxu0 0
        %4513 = vmatmul.mubr.bf16.gmra.mrb[0].mxu0 %v4398
        %v4514 = vpop.f32.mrb[0].mxu0
        %v4515 = vadd.f32 %v4368, %v4514
        %v4516 = vpop.f32.mrb[0].mxu0
        %v4517 = vpop.f32.mrb[0].mxu0
        %v4518 = vadd.f32 %v4368, %v4517
        %v4519 = vpop.f32.mrb[0].mxu0
        %4520 = vmatprep.mubr.bf16.mxu0 0
        %4521 = vmatmul.mubr.bf16.gmra.mrb[0].mxu0 %v4401
        %v4522 = vpop.f32.mrb[0].mxu0
        %v4523 = vadd.f32 %v4368, %v4522
        %v4524 = vpop.f32.mrb[0].mxu0
        %v4525 = vpop.f32.mrb[0].mxu0
        %v4526 = vadd.f32 %v4368, %v4525
        %v4527 = vpop.f32.mrb[0].mxu0
        %4528 = vmatprep.mubr.bf16.mxu0 0
        %4529 = vmatmul.mubr.bf16.gmra.mrb[0].mxu0 %v4404
        %v4530 = vpop.f32.mrb[0].mxu0
        %v4531 = vadd.f32 %v4368, %v4530
        %v4532 = vpop.f32.mrb[0].mxu0
        %v4533 = vpop.f32.mrb[0].mxu0
        %v4534 = vadd.f32 %v4368, %v4533
        %v4535 = vpop.f32.mrb[0].mxu0
        %4536 = vmatprep.mubr.bf16.mxu0 0
        %4537 = vmatmul.mubr.bf16.gmra.mrb[0].mxu0 %v4407
        %v4538 = vpop.f32.mrb[0].mxu0
        %v4539 = vadd.f32 %v4368, %v4538
        %v4540 = vpop.f32.mrb[0].mxu0
        %v4541 = vpop.f32.mrb[0].mxu0
        %v4542 = vadd.f32 %v4368, %v4541
        %v4543 = vpop.f32.mrb[0].mxu0
        %4544 = vmatprep.mubr.bf16.mxu0 0
        %4545 = vmatmul.mubr.bf16.gmra.mrb[0].mxu0 %v4410
        %v4546 = vpop.f32.mrb[0].mxu0
        %v4547 = vadd.f32 %v4368, %v4546
        %v4548 = vpop.f32.mrb[0].mxu0
        %v4549 = vpop.f32.mrb[0].mxu0
        %v4550 = vadd.f32 %v4368, %v4549
        %v4551 = vpop.f32.mrb[0].mxu0
        %4552 = vmatprep.mubr.bf16.mxu0 0
        %4553 = vmatmul.mubr.bf16.gmra.mrb[0].mxu0 %v4413
        %v4554 = vpop.f32.mrb[0].mxu0
        %v4555 = vadd.f32 %v4368, %v4554
        %v4556 = vpop.f32.mrb[0].mxu0
        %v4557 = vpop.f32.mrb[0].mxu0
        %v4558 = vadd.f32 %v4368, %v4557
        %v4559 = vpop.f32.mrb[0].mxu0
        %4560 = vmatprep.mubr.bf16.mxu0 0
        %4561 = vmatmul.mubr.bf16.gmra.mrb[0].mxu0 %v4416
        %v4562 = vpop.f32.mrb[0].mxu0
        %v4563 = vadd.f32 %v4368, %v4562
        %v4564 = vpop.f32.mrb[0].mxu0
        %v4565 = vpop.f32.mrb[0].mxu0
        %v4566 = vadd.f32 %v4368, %v4565
        %v4567 = vpop.f32.mrb[0].mxu0
        %4568 = vmatprep.mubr.bf16.mxu0 0
        %4569 = vmatmul.mubr.bf16.gmra.mrb[0].mxu0 %v4419
        %v4570 = vpop.f32.mrb[0].mxu0
        %v4571 = vadd.f32 %v4368, %v4570
        %v4572 = vpop.f32.mrb[0].mxu0
        %v4573 = vpop.f32.mrb[0].mxu0
        %v4574 = vadd.f32 %v4368, %v4573
        %v4575 = vpop.f32.mrb[0].mxu0
        %4576 = vmatprep.mubr.bf16.mxu0 0
        %4577 = vmatmul.mubr.bf16.gmra.mrb[0].mxu0 %v4422
        %v4578 = vpop.f32.mrb[0].mxu0
        %v4579 = vadd.f32 %v4368, %v4578
        %v4580 = vpop.f32.mrb[0].mxu0
        %v4581 = vpop.f32.mrb[0].mxu0
        %v4582 = vadd.f32 %v4368, %v4581
        %v4583 = vpop.f32.mrb[0].mxu0
        %4584 = vdwg.mxu0
        %v4585 = vmax.f32 %v4459, 0.0
        %v4586 = vmax.f32 %v4462, 0.0
        %v4587 = vmax.f32 %v4467, 0.0
        %v4588 = vmax.f32 %v4470, 0.0
        %v4589 = vmax.f32 %v4475, 0.0
        %v4590 = vmax.f32 %v4478, 0.0
        %v4591 = vmax.f32 %v4483, 0.0
        %v4592 = vmax.f32 %v4486, 0.0
        %v4593 = vmax.f32 %v4491, 0.0
        %v4594 = vmax.f32 %v4494, 0.0
        %v4595 = vmax.f32 %v4499, 0.0
        %v4596 = vmax.f32 %v4502, 0.0
        %v4597 = vmax.f32 %v4507, 0.0
        %v4598 = vmax.f32 %v4510, 0.0
        %v4599 = vmax.f32 %v4515, 0.0
        %v4600 = vmax.f32 %v4518, 0.0
        %v4601 = vmax.f32 %v4523, 0.0
        %v4602 = vmax.f32 %v4526, 0.0
        %v4603 = vmax.f32 %v4531, 0.0
        %v4604 = vmax.f32 %v4534, 0.0
        %v4605 = vmax.f32 %v4539, 0.0
        %v4606 = vmax.f32 %v4542, 0.0
        %v4607 = vmax.f32 %v4547, 0.0
        %v4608 = vmax.f32 %v4550, 0.0
        %v4609 = vmax.f32 %v4555, 0.0
        %v4610 = vmax.f32 %v4558, 0.0
        %v4611 = vmax.f32 %v4563, 0.0
        %v4612 = vmax.f32 %v4566, 0.0
        %v4613 = vmax.f32 %v4571, 0.0
        %v4614 = vmax.f32 %v4574, 0.0
        %v4615 = vmax.f32 %v4579, 0.0
        %v4616 = vmax.f32 %v4582, 0.0
        %v4617 = vpack.c.bf16 %v4586, %v4585
        %v4618 = vpack.c.bf16 %v4588, %v4587
        %v4619 = vpack.c.bf16 %v4590, %v4589
        %v4620 = vpack.c.bf16 %v4592, %v4591
        %v4621 = vpack.c.bf16 %v4594, %v4593
        %v4622 = vpack.c.bf16 %v4596, %v4595
        %v4623 = vpack.c.bf16 %v4598, %v4597
        %v4624 = vpack.c.bf16 %v4600, %v4599
        %v4625 = vpack.c.bf16 %v4602, %v4601
        %v4626 = vpack.c.bf16 %v4604, %v4603
        %v4627 = vpack.c.bf16 %v4606, %v4605
        %v4628 = vpack.c.bf16 %v4608, %v4607
        %v4629 = vpack.c.bf16 %v4610, %v4609
        %v4630 = vpack.c.bf16 %v4612, %v4611
        %v4631 = vpack.c.bf16 %v4614, %v4613
        %v4632 = vpack.c.bf16 %v4616, %v4615
        %4633 = vst.msk [vmem:[#allocation2 + $0x10] sm:$0xff] %vm377, %v4617
        %4634 = vst.msk [vmem:[#allocation2 + $0x18] sm:$0xff] %vm377, %v4618
        %4635 = vst.msk [vmem:[#allocation2 + $0x20] sm:$0xff] %vm377, %v4619
        %4636 = vst.msk [vmem:[#allocation2 + $0x28] sm:$0xff] %vm377, %v4620
        %4637 = vst.msk [vmem:[#allocation2 + $0x30] sm:$0xff] %vm377, %v4621
        %4638 = vst.msk [vmem:[#allocation2 + $0x38] sm:$0xff] %vm377, %v4622
        %4639 = vst.msk [vmem:[#allocation2 + $0x40] sm:$0xff] %vm377, %v4623
        %4640 = vst.msk [vmem:[#allocation2 + $0x48] sm:$0xff] %vm377, %v4624
        %4641 = vst.msk [vmem:[#allocation2 + $0x50] sm:$0xff] %vm377, %v4625
        %4642 = vst.msk [vmem:[#allocation2 + $0x58] sm:$0xff] %vm377, %v4626
        %4643 = vst.msk [vmem:[#allocation2 + $0x60] sm:$0xff] %vm377, %v4627
        %4644 = vst.msk [vmem:[#allocation2 + $0x68] sm:$0xff] %vm377, %v4628
        %4645 = vst.msk [vmem:[#allocation2 + $0x70] sm:$0xff] %vm377, %v4629
        %4646 = vst.msk [vmem:[#allocation2 + $0x78] sm:$0xff] %vm377, %v4630
        %4647 = vst.msk [vmem:[#allocation2 + $0x80] sm:$0xff] %vm377, %v4631
        %4648 = vst.msk [vmem:[#allocation2 + $0x88] sm:$0xff] %vm377, %v4632
        %v4649 = vld [vmem:[#allocation2] sm:$0x80]
        %v4650 = vld [vmem:[#allocation2 + $0x8] sm:$0xff]
        %v4651 = vld [vmem:[#allocation2 + $0x10] sm:$0xff]
        %v4652 = vld [vmem:[#allocation2 + $0x18] sm:$0xff]
        %v4653 = vld [vmem:[#allocation2 + $0x20] sm:$0xff]
        %v4654 = vld [vmem:[#allocation2 + $0x28] sm:$0xff]
        %v4655 = vld [vmem:[#allocation2 + $0x30] sm:$0xff]
        %v4656 = vld [vmem:[#allocation2 + $0x38] sm:$0xff]
        %v4657 = vld [vmem:[#allocation2 + $0x40] sm:$0xff]
        %v4658 = vld [vmem:[#allocation2 + $0x48] sm:$0xff]
        %v4659 = vld [vmem:[#allocation2 + $0x50] sm:$0xff]
        %v4660 = vld [vmem:[#allocation2 + $0x58] sm:$0xff]
        %v4661 = vld [vmem:[#allocation2 + $0x60] sm:$0xff]
        %v4662 = vld [vmem:[#allocation2 + $0x68] sm:$0xff]
        %v4663 = vld [vmem:[#allocation2 + $0x70] sm:$0xff]
        %v4664 = vld [vmem:[#allocation2 + $0x78] sm:$0xff]
        %v4665 = vld [vmem:[#allocation2 + $0x80] sm:$0xff]
        %v4666 = vsel %vm1621, %v4649, 0
        %v4667 = vsel %vm1622, %v4650, 0
        %v4668 = vsel %vm1623, %v4651, 0
        %v4669 = vsel %vm1624, %v4652, 0
        %v4670 = vsel %vm1625, %v4653, 0
        %v4671 = vsel %vm1626, %v4654, 0
        %v4672 = vsel %vm1627, %v4655, 0
        %v4673 = vsel %vm1628, %v4656, 0
        %v4674 = vsel %vm1629, %v4657, 0
        %v4675 = vsel %vm1630, %v4658, 0
        %v4676 = vsel %vm1631, %v4659, 0
        %v4677 = vsel %vm1632, %v4660, 0
        %v4678 = vsel %vm1633, %v4661, 0
        %v4679 = vsel %vm1634, %v4662, 0
        %v4680 = vsel %vm1635, %v4663, 0
        %v4681 = vsel %vm1636, %v4664, 0
        %v4682 = vsel %vm1637, %v4665, 0
        %v4684 = vshrl.u32 %v4666, 16
        %v4686 = vrot.slane %v4684, 7
        %v4688 = vshrl.u32 %v4667, 16
        %v4690 = vrot.slane %v4688, 7
        %v4691 = vshll.u32 %v4667, 16
        %v4693 = vor.u32 %v4690, %v4691
        %v4694 = vsel %vm1655, %v4686, %v4693
        %v4696 = vshrl.u32 %v4668, 16
        %v4698 = vrot.slane %v4696, 7
        %v4699 = vshll.u32 %v4668, 16
        %v4701 = vor.u32 %v4698, %v4699
        %v4702 = vsel %vm1655, %v4690, %v4701
        %v4704 = vshrl.u32 %v4669, 16
        %v4706 = vrot.slane %v4704, 7
        %v4707 = vshll.u32 %v4669, 16
        %v4709 = vor.u32 %v4706, %v4707
        %v4710 = vsel %vm1655, %v4698, %v4709
        %v4712 = vshrl.u32 %v4670, 16
        %v4714 = vrot.slane %v4712, 7
        %v4715 = vshll.u32 %v4670, 16
        %v4717 = vor.u32 %v4714, %v4715
        %v4718 = vsel %vm1655, %v4706, %v4717
        %v4720 = vshrl.u32 %v4671, 16
        %v4722 = vrot.slane %v4720, 7
        %v4723 = vshll.u32 %v4671, 16
        %v4725 = vor.u32 %v4722, %v4723
        %v4726 = vsel %vm1655, %v4714, %v4725
        %v4728 = vshrl.u32 %v4672, 16
        %v4730 = vrot.slane %v4728, 7
        %v4731 = vshll.u32 %v4672, 16
        %v4733 = vor.u32 %v4730, %v4731
        %v4734 = vsel %vm1655, %v4722, %v4733
        %v4736 = vshrl.u32 %v4673, 16
        %v4738 = vrot.slane %v4736, 7
        %v4739 = vshll.u32 %v4673, 16
        %v4741 = vor.u32 %v4738, %v4739
        %v4742 = vsel %vm1655, %v4730, %v4741
        %v4744 = vshrl.u32 %v4674, 16
        %v4746 = vrot.slane %v4744, 7
        %v4747 = vshll.u32 %v4674, 16
        %v4749 = vor.u32 %v4746, %v4747
        %v4750 = vsel %vm1655, %v4738, %v4749
        %v4752 = vshrl.u32 %v4675, 16
        %v4754 = vrot.slane %v4752, 7
        %v4755 = vshll.u32 %v4675, 16
        %v4757 = vor.u32 %v4754, %v4755
        %v4758 = vsel %vm1655, %v4746, %v4757
        %v4760 = vshrl.u32 %v4676, 16
        %v4762 = vrot.slane %v4760, 7
        %v4763 = vshll.u32 %v4676, 16
        %v4765 = vor.u32 %v4762, %v4763
        %v4766 = vsel %vm1655, %v4754, %v4765
        %v4768 = vshrl.u32 %v4677, 16
        %v4770 = vrot.slane %v4768, 7
        %v4771 = vshll.u32 %v4677, 16
        %v4773 = vor.u32 %v4770, %v4771
        %v4774 = vsel %vm1655, %v4762, %v4773
        %v4776 = vshrl.u32 %v4678, 16
        %v4778 = vrot.slane %v4776, 7
        %v4779 = vshll.u32 %v4678, 16
        %v4781 = vor.u32 %v4778, %v4779
        %v4782 = vsel %vm1655, %v4770, %v4781
        %v4784 = vshrl.u32 %v4679, 16
        %v4786 = vrot.slane %v4784, 7
        %v4787 = vshll.u32 %v4679, 16
        %v4789 = vor.u32 %v4786, %v4787
        %v4790 = vsel %vm1655, %v4778, %v4789
        %v4792 = vshrl.u32 %v4680, 16
        %v4794 = vrot.slane %v4792, 7
        %v4795 = vshll.u32 %v4680, 16
        %v4797 = vor.u32 %v4794, %v4795
        %v4798 = vsel %vm1655, %v4786, %v4797
        %v4800 = vshrl.u32 %v4681, 16
        %v4802 = vrot.slane %v4800, 7
        %v4803 = vshll.u32 %v4681, 16
        %v4805 = vor.u32 %v4802, %v4803
        %v4806 = vsel %vm1655, %v4794, %v4805
        %v4808 = vshrl.u32 %v4682, 16
        %v4810 = vrot.slane %v4808, 7
        %v4811 = vshll.u32 %v4682, 16
        %v4813 = vor.u32 %v4810, %v4811
        %v4814 = vsel %vm1655, %v4802, %v4813
        %4831 = vst.msk [vmem:[#allocation3] sm:$0xff] %vm377, %v4694
        %4832 = vst.msk [vmem:[#allocation3 + $0x18] sm:$0xff] %vm377, %v4702
        %4833 = vst.msk [vmem:[#allocation3 + $0x30] sm:$0xff] %vm377, %v4710
        %4834 = vst.msk [vmem:[#allocation3 + $0x48] sm:$0xff] %vm377, %v4718
        %4835 = vst.msk [vmem:[#allocation3 + $0x60] sm:$0xff] %vm377, %v4726
        %4836 = vst.msk [vmem:[#allocation3 + $0x78] sm:$0xff] %vm377, %v4734
        %4837 = vst.msk [vmem:[#allocation3 + $0x90] sm:$0xff] %vm377, %v4742
        %4838 = vst.msk [vmem:[#allocation3 + $0xa8] sm:$0xff] %vm377, %v4750
        %4839 = vst.msk [vmem:[#allocation3 + $0xc0] sm:$0xff] %vm377, %v4758
        %4840 = vst.msk [vmem:[#allocation3 + $0xd8] sm:$0xff] %vm377, %v4766
        %4841 = vst.msk [vmem:[#allocation3 + $0xf0] sm:$0xff] %vm377, %v4774
        %4842 = vst.msk [vmem:[#allocation3 + $0x108] sm:$0xff] %vm377, %v4782
        %4843 = vst.msk [vmem:[#allocation3 + $0x120] sm:$0xff] %vm377, %v4790
        %4844 = vst.msk [vmem:[#allocation3 + $0x138] sm:$0xff] %vm377, %v4798
        %4845 = vst.msk [vmem:[#allocation3 + $0x150] sm:$0xff] %vm377, %v4806
        %4846 = vst.msk [vmem:[#allocation3 + $0x168] sm:$0xff] %vm377, %v4814
        %v4847 = vld [vmem:[#allocation2 + $0x8] sm:$0xff]
        %v4848 = vld [vmem:[#allocation2 + $0x10] sm:$0xff]
        %v4849 = vld [vmem:[#allocation2 + $0x18] sm:$0xff]
        %v4850 = vld [vmem:[#allocation2 + $0x20] sm:$0xff]
        %v4851 = vld [vmem:[#allocation2 + $0x28] sm:$0xff]
        %v4852 = vld [vmem:[#allocation2 + $0x30] sm:$0xff]
        %v4853 = vld [vmem:[#allocation2 + $0x38] sm:$0xff]
        %v4854 = vld [vmem:[#allocation2 + $0x40] sm:$0xff]
        %v4855 = vld [vmem:[#allocation2 + $0x48] sm:$0xff]
        %v4856 = vld [vmem:[#allocation2 + $0x50] sm:$0xff]
        %v4857 = vld [vmem:[#allocation2 + $0x58] sm:$0xff]
        %v4858 = vld [vmem:[#allocation2 + $0x60] sm:$0xff]
        %v4859 = vld [vmem:[#allocation2 + $0x68] sm:$0xff]
        %v4860 = vld [vmem:[#allocation2 + $0x70] sm:$0xff]
        %v4861 = vld [vmem:[#allocation2 + $0x78] sm:$0xff]
        %v4862 = vld [vmem:[#allocation2 + $0x80] sm:$0xff]
        %4879 = vrot.lane.b32.xlu0 %v4847, 32
        %v4880 = vpop.permute.xlu0 %4879
        %4881 = vrot.lane.b32.xlu0 %v4848, 32
        %v4882 = vpop.permute.xlu0 %4881
        %4883 = vrot.lane.b32.xlu0 %v4849, 32
        %v4884 = vpop.permute.xlu0 %4883
        %4885 = vrot.lane.b32.xlu0 %v4850, 32
        %v4886 = vpop.permute.xlu0 %4885
        %4887 = vrot.lane.b32.xlu0 %v4851, 32
        %v4888 = vpop.permute.xlu0 %4887
        %4889 = vrot.lane.b32.xlu0 %v4852, 32
        %v4890 = vpop.permute.xlu0 %4889
        %4891 = vrot.lane.b32.xlu0 %v4853, 32
        %v4892 = vpop.permute.xlu0 %4891
        %4893 = vrot.lane.b32.xlu0 %v4854, 32
        %v4894 = vpop.permute.xlu0 %4893
        %4895 = vrot.lane.b32.xlu0 %v4855, 32
        %v4896 = vpop.permute.xlu0 %4895
        %4897 = vrot.lane.b32.xlu0 %v4856, 32
        %v4898 = vpop.permute.xlu0 %4897
        %4899 = vrot.lane.b32.xlu0 %v4857, 32
        %v4900 = vpop.permute.xlu0 %4899
        %4901 = vrot.lane.b32.xlu0 %v4858, 32
        %v4902 = vpop.permute.xlu0 %4901
        %4903 = vrot.lane.b32.xlu0 %v4859, 32
        %v4904 = vpop.permute.xlu0 %4903
        %4905 = vrot.lane.b32.xlu0 %v4860, 32
        %v4906 = vpop.permute.xlu0 %4905
        %4907 = vrot.lane.b32.xlu0 %v4861, 32
        %v4908 = vpop.permute.xlu0 %4907
        %4909 = vrot.lane.b32.xlu0 %v4862, 32
        %v4910 = vpop.permute.xlu0 %4909
        %4927 = vst.msk [vmem:[#allocation3] sm:$0xff] %vm1900, %v4880
        %4928 = vst.msk [vmem:[#allocation3 + $0x18] sm:$0xff] %vm1900, %v4882
        %4929 = vst.msk [vmem:[#allocation3 + $0x30] sm:$0xff] %vm1900, %v4884
        %4930 = vst.msk [vmem:[#allocation3 + $0x48] sm:$0xff] %vm1900, %v4886
        %4931 = vst.msk [vmem:[#allocation3 + $0x60] sm:$0xff] %vm1900, %v4888
        %4932 = vst.msk [vmem:[#allocation3 + $0x78] sm:$0xff] %vm1900, %v4890
        %4933 = vst.msk [vmem:[#allocation3 + $0x90] sm:$0xff] %vm1900, %v4892
        %4934 = vst.msk [vmem:[#allocation3 + $0xa8] sm:$0xff] %vm1900, %v4894
        %4935 = vst.msk [vmem:[#allocation3 + $0xc0] sm:$0xff] %vm1900, %v4896
        %4936 = vst.msk [vmem:[#allocation3 + $0xd8] sm:$0xff] %vm1900, %v4898
        %4937 = vst.msk [vmem:[#allocation3 + $0xf0] sm:$0xff] %vm1900, %v4900
        %4938 = vst.msk [vmem:[#allocation3 + $0x108] sm:$0xff] %vm1900, %v4902
        %4939 = vst.msk [vmem:[#allocation3 + $0x120] sm:$0xff] %vm1900, %v4904
        %4940 = vst.msk [vmem:[#allocation3 + $0x138] sm:$0xff] %vm1900, %v4906
        %4941 = vst.msk [vmem:[#allocation3 + $0x150] sm:$0xff] %vm1900, %v4908
        %4942 = vst.msk [vmem:[#allocation3 + $0x168] sm:$0xff] %vm1900, %v4910
        %v4943 = vld [vmem:[#allocation2 + $0x8] sm:$0xff]
        %v4944 = vld [vmem:[#allocation2 + $0x10] sm:$0xff]
        %v4945 = vld [vmem:[#allocation2 + $0x18] sm:$0xff]
        %v4946 = vld [vmem:[#allocation2 + $0x20] sm:$0xff]
        %v4947 = vld [vmem:[#allocation2 + $0x28] sm:$0xff]
        %v4948 = vld [vmem:[#allocation2 + $0x30] sm:$0xff]
        %v4949 = vld [vmem:[#allocation2 + $0x38] sm:$0xff]
        %v4950 = vld [vmem:[#allocation2 + $0x40] sm:$0xff]
        %v4951 = vld [vmem:[#allocation2 + $0x48] sm:$0xff]
        %v4952 = vld [vmem:[#allocation2 + $0x50] sm:$0xff]
        %v4953 = vld [vmem:[#allocation2 + $0x58] sm:$0xff]
        %v4954 = vld [vmem:[#allocation2 + $0x60] sm:$0xff]
        %v4955 = vld [vmem:[#allocation2 + $0x68] sm:$0xff]
        %v4956 = vld [vmem:[#allocation2 + $0x70] sm:$0xff]
        %v4957 = vld [vmem:[#allocation2 + $0x78] sm:$0xff]
        %v4958 = vld [vmem:[#allocation2 + $0x80] sm:$0xff]
        %v4959 = vld [vmem:[#allocation2 + $0x88] sm:$0x1]
        %v4960 = vsel %vm2237, %v4943, 0
        %v4961 = vsel %vm2238, %v4944, 0
        %v4962 = vsel %vm2239, %v4945, 0
        %v4963 = vsel %vm2240, %v4946, 0
        %v4964 = vsel %vm2241, %v4947, 0
        %v4965 = vsel %vm2242, %v4948, 0
        %v4966 = vsel %vm2243, %v4949, 0
        %v4967 = vsel %vm2244, %v4950, 0
        %v4968 = vsel %vm2245, %v4951, 0
        %v4969 = vsel %vm2246, %v4952, 0
        %v4970 = vsel %vm2247, %v4953, 0
        %v4971 = vsel %vm2248, %v4954, 0
        %v4972 = vsel %vm2249, %v4955, 0
        %v4973 = vsel %vm2250, %v4956, 0
        %v4974 = vsel %vm2251, %v4957, 0
        %v4975 = vsel %vm2252, %v4958, 0
        %v4976 = vsel %vm2253, %v4959, 0
        %v4978 = vshrl.u32 %v4960, 16
        %v4980 = vshll.u32 %v4960, 16
        %v4982 = vrot.slane %v4980, 1
        %v4983 = vor.u32 %v4978, %v4982
        %v4985 = vshll.u32 %v4961, 16
        %v4987 = vrot.slane %v4985, 1
        %v4988 = vsel %vm1493, %v4983, %v4987
        %v4989 = vshrl.u32 %v4961, 16
        %v4991 = vor.u32 %v4989, %v4987
        %v4993 = vshll.u32 %v4962, 16
        %v4995 = vrot.slane %v4993, 1
        %v4996 = vsel %vm1493, %v4991, %v4995
        %v4997 = vshrl.u32 %v4962, 16
        %v4999 = vor.u32 %v4997, %v4995
        %v5001 = vshll.u32 %v4963, 16
        %v5003 = vrot.slane %v5001, 1
        %v5004 = vsel %vm1493, %v4999, %v5003
        %v5005 = vshrl.u32 %v4963, 16
        %v5007 = vor.u32 %v5005, %v5003
        %v5009 = vshll.u32 %v4964, 16
        %v5011 = vrot.slane %v5009, 1
        %v5012 = vsel %vm1493, %v5007, %v5011
        %v5013 = vshrl.u32 %v4964, 16
        %v5015 = vor.u32 %v5013, %v5011
        %v5017 = vshll.u32 %v4965, 16
        %v5019 = vrot.slane %v5017, 1
        %v5020 = vsel %vm1493, %v5015, %v5019
        %v5021 = vshrl.u32 %v4965, 16
        %v5023 = vor.u32 %v5021, %v5019
        %v5025 = vshll.u32 %v4966, 16
        %v5027 = vrot.slane %v5025, 1
        %v5028 = vsel %vm1493, %v5023, %v5027
        %v5029 = vshrl.u32 %v4966, 16
        %v5031 = vor.u32 %v5029, %v5027
        %v5033 = vshll.u32 %v4967, 16
        %v5035 = vrot.slane %v5033, 1
        %v5036 = vsel %vm1493, %v5031, %v5035
        %v5037 = vshrl.u32 %v4967, 16
        %v5039 = vor.u32 %v5037, %v5035
        %v5041 = vshll.u32 %v4968, 16
        %v5043 = vrot.slane %v5041, 1
        %v5044 = vsel %vm1493, %v5039, %v5043
        %v5045 = vshrl.u32 %v4968, 16
        %v5047 = vor.u32 %v5045, %v5043
        %v5049 = vshll.u32 %v4969, 16
        %v5051 = vrot.slane %v5049, 1
        %v5052 = vsel %vm1493, %v5047, %v5051
        %v5053 = vshrl.u32 %v4969, 16
        %v5055 = vor.u32 %v5053, %v5051
        %v5057 = vshll.u32 %v4970, 16
        %v5059 = vrot.slane %v5057, 1
        %v5060 = vsel %vm1493, %v5055, %v5059
        %v5061 = vshrl.u32 %v4970, 16
        %v5063 = vor.u32 %v5061, %v5059
        %v5065 = vshll.u32 %v4971, 16
        %v5067 = vrot.slane %v5065, 1
        %v5068 = vsel %vm1493, %v5063, %v5067
        %v5069 = vshrl.u32 %v4971, 16
        %v5071 = vor.u32 %v5069, %v5067
        %v5073 = vshll.u32 %v4972, 16
        %v5075 = vrot.slane %v5073, 1
        %v5076 = vsel %vm1493, %v5071, %v5075
        %v5077 = vshrl.u32 %v4972, 16
        %v5079 = vor.u32 %v5077, %v5075
        %v5081 = vshll.u32 %v4973, 16
        %v5083 = vrot.slane %v5081, 1
        %v5084 = vsel %vm1493, %v5079, %v5083
        %v5085 = vshrl.u32 %v4973, 16
        %v5087 = vor.u32 %v5085, %v5083
        %v5089 = vshll.u32 %v4974, 16
        %v5091 = vrot.slane %v5089, 1
        %v5092 = vsel %vm1493, %v5087, %v5091
        %v5093 = vshrl.u32 %v4974, 16
        %v5095 = vor.u32 %v5093, %v5091
        %v5097 = vshll.u32 %v4975, 16
        %v5099 = vrot.slane %v5097, 1
        %v5100 = vsel %vm1493, %v5095, %v5099
        %v5101 = vshrl.u32 %v4975, 16
        %v5103 = vor.u32 %v5101, %v5099
        %v5105 = vshll.u32 %v4976, 16
        %v5107 = vrot.slane %v5105, 1
        %v5108 = vsel %vm1493, %v5103, %v5107
        %5109 = vrot.lane.b32.xlu0 %v4988, 64
        %v5110 = vpop.permute.xlu0 %5109
        %5111 = vrot.lane.b32.xlu0 %v4996, 64
        %v5112 = vpop.permute.xlu0 %5111
        %5113 = vrot.lane.b32.xlu0 %v5004, 64
        %v5114 = vpop.permute.xlu0 %5113
        %5115 = vrot.lane.b32.xlu0 %v5012, 64
        %v5116 = vpop.permute.xlu0 %5115
        %5117 = vrot.lane.b32.xlu0 %v5020, 64
        %v5118 = vpop.permute.xlu0 %5117
        %5119 = vrot.lane.b32.xlu0 %v5028, 64
        %v5120 = vpop.permute.xlu0 %5119
        %5121 = vrot.lane.b32.xlu0 %v5036, 64
        %v5122 = vpop.permute.xlu0 %5121
        %5123 = vrot.lane.b32.xlu0 %v5044, 64
        %v5124 = vpop.permute.xlu0 %5123
        %5125 = vrot.lane.b32.xlu0 %v5052, 64
        %v5126 = vpop.permute.xlu0 %5125
        %5127 = vrot.lane.b32.xlu0 %v5060, 64
        %v5128 = vpop.permute.xlu0 %5127
        %5129 = vrot.lane.b32.xlu0 %v5068, 64
        %v5130 = vpop.permute.xlu0 %5129
        %5131 = vrot.lane.b32.xlu0 %v5076, 64
        %v5132 = vpop.permute.xlu0 %5131
        %5133 = vrot.lane.b32.xlu0 %v5084, 64
        %v5134 = vpop.permute.xlu0 %5133
        %5135 = vrot.lane.b32.xlu0 %v5092, 64
        %v5136 = vpop.permute.xlu0 %5135
        %5137 = vrot.lane.b32.xlu0 %v5100, 64
        %v5138 = vpop.permute.xlu0 %5137
        %5139 = vrot.lane.b32.xlu0 %v5108, 64
        %v5140 = vpop.permute.xlu0 %5139
        %5157 = vst.msk [vmem:[#allocation3] sm:$0xff] %vm2451, %v5110
        %5158 = vst.msk [vmem:[#allocation3 + $0x18] sm:$0xff] %vm2451, %v5112
        %5159 = vst.msk [vmem:[#allocation3 + $0x30] sm:$0xff] %vm2451, %v5114
        %5160 = vst.msk [vmem:[#allocation3 + $0x48] sm:$0xff] %vm2451, %v5116
        %5161 = vst.msk [vmem:[#allocation3 + $0x60] sm:$0xff] %vm2451, %v5118
        %5162 = vst.msk [vmem:[#allocation3 + $0x78] sm:$0xff] %vm2451, %v5120
        %5163 = vst.msk [vmem:[#allocation3 + $0x90] sm:$0xff] %vm2451, %v5122
        %5164 = vst.msk [vmem:[#allocation3 + $0xa8] sm:$0xff] %vm2451, %v5124
        %5165 = vst.msk [vmem:[#allocation3 + $0xc0] sm:$0xff] %vm2451, %v5126
        %5166 = vst.msk [vmem:[#allocation3 + $0xd8] sm:$0xff] %vm2451, %v5128
        %5167 = vst.msk [vmem:[#allocation3 + $0xf0] sm:$0xff] %vm2451, %v5130
        %5168 = vst.msk [vmem:[#allocation3 + $0x108] sm:$0xff] %vm2451, %v5132
        %5169 = vst.msk [vmem:[#allocation3 + $0x120] sm:$0xff] %vm2451, %v5134
        %5170 = vst.msk [vmem:[#allocation3 + $0x138] sm:$0xff] %vm2451, %v5136
        %5171 = vst.msk [vmem:[#allocation3 + $0x150] sm:$0xff] %vm2451, %v5138
        %5172 = vst.msk [vmem:[#allocation3 + $0x168] sm:$0xff] %vm2451, %v5140
        %v5173 = vld [vmem:[#allocation2 + $0x8] sm:$0x80]
        %v5174 = vld [vmem:[#allocation2 + $0x10] sm:$0xff]
        %v5175 = vld [vmem:[#allocation2 + $0x18] sm:$0xff]
        %v5176 = vld [vmem:[#allocation2 + $0x20] sm:$0xff]
        %v5177 = vld [vmem:[#allocation2 + $0x28] sm:$0xff]
        %v5178 = vld [vmem:[#allocation2 + $0x30] sm:$0xff]
        %v5179 = vld [vmem:[#allocation2 + $0x38] sm:$0xff]
        %v5180 = vld [vmem:[#allocation2 + $0x40] sm:$0xff]
        %v5181 = vld [vmem:[#allocation2 + $0x48] sm:$0xff]
        %v5182 = vld [vmem:[#allocation2 + $0x50] sm:$0xff]
        %v5183 = vld [vmem:[#allocation2 + $0x58] sm:$0xff]
        %v5184 = vld [vmem:[#allocation2 + $0x60] sm:$0xff]
        %v5185 = vld [vmem:[#allocation2 + $0x68] sm:$0xff]
        %v5186 = vld [vmem:[#allocation2 + $0x70] sm:$0xff]
        %v5187 = vld [vmem:[#allocation2 + $0x78] sm:$0xff]
        %v5188 = vld [vmem:[#allocation2 + $0x80] sm:$0xff]
        %v5189 = vld [vmem:[#allocation2 + $0x88] sm:$0xff]
        %v5190 = vsel %vm1621, %v5173, 0
        %v5191 = vsel %vm1622, %v5174, 0
        %v5192 = vsel %vm1623, %v5175, 0
        %v5193 = vsel %vm1624, %v5176, 0
        %v5194 = vsel %vm1625, %v5177, 0
        %v5195 = vsel %vm1626, %v5178, 0
        %v5196 = vsel %vm1627, %v5179, 0
        %v5197 = vsel %vm1628, %v5180, 0
        %v5198 = vsel %vm1629, %v5181, 0
        %v5199 = vsel %vm1630, %v5182, 0
        %v5200 = vsel %vm1631, %v5183, 0
        %v5201 = vsel %vm1632, %v5184, 0
        %v5202 = vsel %vm1633, %v5185, 0
        %v5203 = vsel %vm1634, %v5186, 0
        %v5204 = vsel %vm1635, %v5187, 0
        %v5205 = vsel %vm1636, %v5188, 0
        %v5206 = vsel %vm1637, %v5189, 0
        %v5208 = vshrl.u32 %v5190, 16
        %v5210 = vrot.slane %v5208, 7
        %v5212 = vshrl.u32 %v5191, 16
        %v5214 = vrot.slane %v5212, 7
        %v5215 = vshll.u32 %v5191, 16
        %v5217 = vor.u32 %v5214, %v5215
        %v5218 = vsel %vm1655, %v5210, %v5217
        %v5220 = vshrl.u32 %v5192, 16
        %v5222 = vrot.slane %v5220, 7
        %v5223 = vshll.u32 %v5192, 16
        %v5225 = vor.u32 %v5222, %v5223
        %v5226 = vsel %vm1655, %v5214, %v5225
        %v5228 = vshrl.u32 %v5193, 16
        %v5230 = vrot.slane %v5228, 7
        %v5231 = vshll.u32 %v5193, 16
        %v5233 = vor.u32 %v5230, %v5231
        %v5234 = vsel %vm1655, %v5222, %v5233
        %v5236 = vshrl.u32 %v5194, 16
        %v5238 = vrot.slane %v5236, 7
        %v5239 = vshll.u32 %v5194, 16
        %v5241 = vor.u32 %v5238, %v5239
        %v5242 = vsel %vm1655, %v5230, %v5241
        %v5244 = vshrl.u32 %v5195, 16
        %v5246 = vrot.slane %v5244, 7
        %v5247 = vshll.u32 %v5195, 16
        %v5249 = vor.u32 %v5246, %v5247
        %v5250 = vsel %vm1655, %v5238, %v5249
        %v5252 = vshrl.u32 %v5196, 16
        %v5254 = vrot.slane %v5252, 7
        %v5255 = vshll.u32 %v5196, 16
        %v5257 = vor.u32 %v5254, %v5255
        %v5258 = vsel %vm1655, %v5246, %v5257
        %v5260 = vshrl.u32 %v5197, 16
        %v5262 = vrot.slane %v5260, 7
        %v5263 = vshll.u32 %v5197, 16
        %v5265 = vor.u32 %v5262, %v5263
        %v5266 = vsel %vm1655, %v5254, %v5265
        %v5268 = vshrl.u32 %v5198, 16
        %v5270 = vrot.slane %v5268, 7
        %v5271 = vshll.u32 %v5198, 16
        %v5273 = vor.u32 %v5270, %v5271
        %v5274 = vsel %vm1655, %v5262, %v5273
        %v5276 = vshrl.u32 %v5199, 16
        %v5278 = vrot.slane %v5276, 7
        %v5279 = vshll.u32 %v5199, 16
        %v5281 = vor.u32 %v5278, %v5279
        %v5282 = vsel %vm1655, %v5270, %v5281
        %v5284 = vshrl.u32 %v5200, 16
        %v5286 = vrot.slane %v5284, 7
        %v5287 = vshll.u32 %v5200, 16
        %v5289 = vor.u32 %v5286, %v5287
        %v5290 = vsel %vm1655, %v5278, %v5289
        %v5292 = vshrl.u32 %v5201, 16
        %v5294 = vrot.slane %v5292, 7
        %v5295 = vshll.u32 %v5201, 16
        %v5297 = vor.u32 %v5294, %v5295
        %v5298 = vsel %vm1655, %v5286, %v5297
        %v5300 = vshrl.u32 %v5202, 16
        %v5302 = vrot.slane %v5300, 7
        %v5303 = vshll.u32 %v5202, 16
        %v5305 = vor.u32 %v5302, %v5303
        %v5306 = vsel %vm1655, %v5294, %v5305
        %v5308 = vshrl.u32 %v5203, 16
        %v5310 = vrot.slane %v5308, 7
        %v5311 = vshll.u32 %v5203, 16
        %v5313 = vor.u32 %v5310, %v5311
        %v5314 = vsel %vm1655, %v5302, %v5313
        %v5316 = vshrl.u32 %v5204, 16
        %v5318 = vrot.slane %v5316, 7
        %v5319 = vshll.u32 %v5204, 16
        %v5321 = vor.u32 %v5318, %v5319
        %v5322 = vsel %vm1655, %v5310, %v5321
        %v5324 = vshrl.u32 %v5205, 16
        %v5326 = vrot.slane %v5324, 7
        %v5327 = vshll.u32 %v5205, 16
        %v5329 = vor.u32 %v5326, %v5327
        %v5330 = vsel %vm1655, %v5318, %v5329
        %v5332 = vshrl.u32 %v5206, 16
        %v5334 = vrot.slane %v5332, 7
        %v5335 = vshll.u32 %v5206, 16
        %v5337 = vor.u32 %v5334, %v5335
        %v5338 = vsel %vm1655, %v5326, %v5337
        %5339 = vrot.lane.b32.xlu0 %v5218, 96
        %v5340 = vpop.permute.xlu0 %5339
        %5341 = vrot.lane.b32.xlu0 %v5226, 96
        %v5342 = vpop.permute.xlu0 %5341
        %5343 = vrot.lane.b32.xlu0 %v5234, 96
        %v5344 = vpop.permute.xlu0 %5343
        %5345 = vrot.lane.b32.xlu0 %v5242, 96
        %v5346 = vpop.permute.xlu0 %5345
        %5347 = vrot.lane.b32.xlu0 %v5250, 96
        %v5348 = vpop.permute.xlu0 %5347
        %5349 = vrot.lane.b32.xlu0 %v5258, 96
        %v5350 = vpop.permute.xlu0 %5349
        %5351 = vrot.lane.b32.xlu0 %v5266, 96
        %v5352 = vpop.permute.xlu0 %5351
        %5353 = vrot.lane.b32.xlu0 %v5274, 96
        %v5354 = vpop.permute.xlu0 %5353
        %5355 = vrot.lane.b32.xlu0 %v5282, 96
        %v5356 = vpop.permute.xlu0 %5355
        %5357 = vrot.lane.b32.xlu0 %v5290, 96
        %v5358 = vpop.permute.xlu0 %5357
        %5359 = vrot.lane.b32.xlu0 %v5298, 96
        %v5360 = vpop.permute.xlu0 %5359
        %5361 = vrot.lane.b32.xlu0 %v5306, 96
        %v5362 = vpop.permute.xlu0 %5361
        %5363 = vrot.lane.b32.xlu0 %v5314, 96
        %v5364 = vpop.permute.xlu0 %5363
        %5365 = vrot.lane.b32.xlu0 %v5322, 96
        %v5366 = vpop.permute.xlu0 %5365
        %5367 = vrot.lane.b32.xlu0 %v5330, 96
        %v5368 = vpop.permute.xlu0 %5367
        %5369 = vrot.lane.b32.xlu0 %v5338, 96
        %v5370 = vpop.permute.xlu0 %5369
        %5387 = vst.msk [vmem:[#allocation3] sm:$0xff] %vm2682, %v5340
        %5388 = vst.msk [vmem:[#allocation3 + $0x18] sm:$0xff] %vm2682, %v5342
        %5389 = vst.msk [vmem:[#allocation3 + $0x30] sm:$0xff] %vm2682, %v5344
        %5390 = vst.msk [vmem:[#allocation3 + $0x48] sm:$0xff] %vm2682, %v5346
        %5391 = vst.msk [vmem:[#allocation3 + $0x60] sm:$0xff] %vm2682, %v5348
        %5392 = vst.msk [vmem:[#allocation3 + $0x78] sm:$0xff] %vm2682, %v5350
        %5393 = vst.msk [vmem:[#allocation3 + $0x90] sm:$0xff] %vm2682, %v5352
        %5394 = vst.msk [vmem:[#allocation3 + $0xa8] sm:$0xff] %vm2682, %v5354
        %5395 = vst.msk [vmem:[#allocation3 + $0xc0] sm:$0xff] %vm2682, %v5356
        %5396 = vst.msk [vmem:[#allocation3 + $0xd8] sm:$0xff] %vm2682, %v5358
        %5397 = vst.msk [vmem:[#allocation3 + $0xf0] sm:$0xff] %vm2682, %v5360
        %5398 = vst.msk [vmem:[#allocation3 + $0x108] sm:$0xff] %vm2682, %v5362
        %5399 = vst.msk [vmem:[#allocation3 + $0x120] sm:$0xff] %vm2682, %v5364
        %5400 = vst.msk [vmem:[#allocation3 + $0x138] sm:$0xff] %vm2682, %v5366
        %5401 = vst.msk [vmem:[#allocation3 + $0x150] sm:$0xff] %vm2682, %v5368
        %5402 = vst.msk [vmem:[#allocation3 + $0x168] sm:$0xff] %vm2682, %v5370
        %v5403 = vld [vmem:[#allocation2 + $0x10] sm:$0xff]
        %v5404 = vld [vmem:[#allocation2 + $0x18] sm:$0xff]
        %v5405 = vld [vmem:[#allocation2 + $0x20] sm:$0xff]
        %v5406 = vld [vmem:[#allocation2 + $0x28] sm:$0xff]
        %v5407 = vld [vmem:[#allocation2 + $0x30] sm:$0xff]
        %v5408 = vld [vmem:[#allocation2 + $0x38] sm:$0xff]
        %v5409 = vld [vmem:[#allocation2 + $0x40] sm:$0xff]
        %v5410 = vld [vmem:[#allocation2 + $0x48] sm:$0xff]
        %v5411 = vld [vmem:[#allocation2 + $0x50] sm:$0xff]
        %v5412 = vld [vmem:[#allocation2 + $0x58] sm:$0xff]
        %v5413 = vld [vmem:[#allocation2 + $0x60] sm:$0xff]
        %v5414 = vld [vmem:[#allocation2 + $0x68] sm:$0xff]
        %v5415 = vld [vmem:[#allocation2 + $0x70] sm:$0xff]
        %v5416 = vld [vmem:[#allocation2 + $0x78] sm:$0xff]
        %v5417 = vld [vmem:[#allocation2 + $0x80] sm:$0xff]
        %v5418 = vld [vmem:[#allocation2 + $0x88] sm:$0xff]
        %5419 = vst.msk [vmem:[#allocation3 + $0x8] sm:$0xff] %vm377, %v5403
        %5420 = vst.msk [vmem:[#allocation3 + $0x20] sm:$0xff] %vm377, %v5404
        %5421 = vst.msk [vmem:[#allocation3 + $0x38] sm:$0xff] %vm377, %v5405
        %5422 = vst.msk [vmem:[#allocation3 + $0x50] sm:$0xff] %vm377, %v5406
        %5423 = vst.msk [vmem:[#allocation3 + $0x68] sm:$0xff] %vm377, %v5407
        %5424 = vst.msk [vmem:[#allocation3 + $0x80] sm:$0xff] %vm377, %v5408
        %5425 = vst.msk [vmem:[#allocation3 + $0x98] sm:$0xff] %vm377, %v5409
        %5426 = vst.msk [vmem:[#allocation3 + $0xb0] sm:$0xff] %vm377, %v5410
        %5427 = vst.msk [vmem:[#allocation3 + $0xc8] sm:$0xff] %vm377, %v5411
        %5428 = vst.msk [vmem:[#allocation3 + $0xe0] sm:$0xff] %vm377, %v5412
        %5429 = vst.msk [vmem:[#allocation3 + $0xf8] sm:$0xff] %vm377, %v5413
        %5430 = vst.msk [vmem:[#allocation3 + $0x110] sm:$0xff] %vm377, %v5414
        %5431 = vst.msk [vmem:[#allocation3 + $0x128] sm:$0xff] %vm377, %v5415
        %5432 = vst.msk [vmem:[#allocation3 + $0x140] sm:$0xff] %vm377, %v5416
        %5433 = vst.msk [vmem:[#allocation3 + $0x158] sm:$0xff] %vm377, %v5417
        %5434 = vst.msk [vmem:[#allocation3 + $0x170] sm:$0xff] %vm377, %v5418
        %v5435 = vld [vmem:[#allocation2 + $0x10] sm:$0xff]
        %v5436 = vld [vmem:[#allocation2 + $0x18] sm:$0xff]
        %v5437 = vld [vmem:[#allocation2 + $0x20] sm:$0xff]
        %v5438 = vld [vmem:[#allocation2 + $0x28] sm:$0xff]
        %v5439 = vld [vmem:[#allocation2 + $0x30] sm:$0xff]
        %v5440 = vld [vmem:[#allocation2 + $0x38] sm:$0xff]
        %v5441 = vld [vmem:[#allocation2 + $0x40] sm:$0xff]
        %v5442 = vld [vmem:[#allocation2 + $0x48] sm:$0xff]
        %v5443 = vld [vmem:[#allocation2 + $0x50] sm:$0xff]
        %v5444 = vld [vmem:[#allocation2 + $0x58] sm:$0xff]
        %v5445 = vld [vmem:[#allocation2 + $0x60] sm:$0xff]
        %v5446 = vld [vmem:[#allocation2 + $0x68] sm:$0xff]
        %v5447 = vld [vmem:[#allocation2 + $0x70] sm:$0xff]
        %v5448 = vld [vmem:[#allocation2 + $0x78] sm:$0xff]
        %v5449 = vld [vmem:[#allocation2 + $0x80] sm:$0xff]
        %v5450 = vld [vmem:[#allocation2 + $0x88] sm:$0xff]
        %v5451 = vld [vmem:[#allocation2 + $0x90] sm:$0x1]
        %v5452 = vsel %vm2237, %v5435, 0
        %v5453 = vsel %vm2238, %v5436, 0
        %v5454 = vsel %vm2239, %v5437, 0
        %v5455 = vsel %vm2240, %v5438, 0
        %v5456 = vsel %vm2241, %v5439, 0
        %v5457 = vsel %vm2242, %v5440, 0
        %v5458 = vsel %vm2243, %v5441, 0
        %v5459 = vsel %vm2244, %v5442, 0
        %v5460 = vsel %vm2245, %v5443, 0
        %v5461 = vsel %vm2246, %v5444, 0
        %v5462 = vsel %vm2247, %v5445, 0
        %v5463 = vsel %vm2248, %v5446, 0
        %v5464 = vsel %vm2249, %v5447, 0
        %v5465 = vsel %vm2250, %v5448, 0
        %v5466 = vsel %vm2251, %v5449, 0
        %v5467 = vsel %vm2252, %v5450, 0
        %v5468 = vsel %vm2253, %v5451, 0
        %v5470 = vshrl.u32 %v5452, 16
        %v5472 = vshll.u32 %v5452, 16
        %v5474 = vrot.slane %v5472, 1
        %v5475 = vor.u32 %v5470, %v5474
        %v5477 = vshll.u32 %v5453, 16
        %v5479 = vrot.slane %v5477, 1
        %v5480 = vsel %vm1493, %v5475, %v5479
        %v5481 = vshrl.u32 %v5453, 16
        %v5483 = vor.u32 %v5481, %v5479
        %v5485 = vshll.u32 %v5454, 16
        %v5487 = vrot.slane %v5485, 1
        %v5488 = vsel %vm1493, %v5483, %v5487
        %v5489 = vshrl.u32 %v5454, 16
        %v5491 = vor.u32 %v5489, %v5487
        %v5493 = vshll.u32 %v5455, 16
        %v5495 = vrot.slane %v5493, 1
        %v5496 = vsel %vm1493, %v5491, %v5495
        %v5497 = vshrl.u32 %v5455, 16
        %v5499 = vor.u32 %v5497, %v5495
        %v5501 = vshll.u32 %v5456, 16
        %v5503 = vrot.slane %v5501, 1
        %v5504 = vsel %vm1493, %v5499, %v5503
        %v5505 = vshrl.u32 %v5456, 16
        %v5507 = vor.u32 %v5505, %v5503
        %v5509 = vshll.u32 %v5457, 16
        %v5511 = vrot.slane %v5509, 1
        %v5512 = vsel %vm1493, %v5507, %v5511
        %v5513 = vshrl.u32 %v5457, 16
        %v5515 = vor.u32 %v5513, %v5511
        %v5517 = vshll.u32 %v5458, 16
        %v5519 = vrot.slane %v5517, 1
        %v5520 = vsel %vm1493, %v5515, %v5519
        %v5521 = vshrl.u32 %v5458, 16
        %v5523 = vor.u32 %v5521, %v5519
        %v5525 = vshll.u32 %v5459, 16
        %v5527 = vrot.slane %v5525, 1
        %v5528 = vsel %vm1493, %v5523, %v5527
        %v5529 = vshrl.u32 %v5459, 16
        %v5531 = vor.u32 %v5529, %v5527
        %v5533 = vshll.u32 %v5460, 16
        %v5535 = vrot.slane %v5533, 1
        %v5536 = vsel %vm1493, %v5531, %v5535
        %v5537 = vshrl.u32 %v5460, 16
        %v5539 = vor.u32 %v5537, %v5535
        %v5541 = vshll.u32 %v5461, 16
        %v5543 = vrot.slane %v5541, 1
        %v5544 = vsel %vm1493, %v5539, %v5543
        %v5545 = vshrl.u32 %v5461, 16
        %v5547 = vor.u32 %v5545, %v5543
        %v5549 = vshll.u32 %v5462, 16
        %v5551 = vrot.slane %v5549, 1
        %v5552 = vsel %vm1493, %v5547, %v5551
        %v5553 = vshrl.u32 %v5462, 16
        %v5555 = vor.u32 %v5553, %v5551
        %v5557 = vshll.u32 %v5463, 16
        %v5559 = vrot.slane %v5557, 1
        %v5560 = vsel %vm1493, %v5555, %v5559
        %v5561 = vshrl.u32 %v5463, 16
        %v5563 = vor.u32 %v5561, %v5559
        %v5565 = vshll.u32 %v5464, 16
        %v5567 = vrot.slane %v5565, 1
        %v5568 = vsel %vm1493, %v5563, %v5567
        %v5569 = vshrl.u32 %v5464, 16
        %v5571 = vor.u32 %v5569, %v5567
        %v5573 = vshll.u32 %v5465, 16
        %v5575 = vrot.slane %v5573, 1
        %v5576 = vsel %vm1493, %v5571, %v5575
        %v5577 = vshrl.u32 %v5465, 16
        %v5579 = vor.u32 %v5577, %v5575
        %v5581 = vshll.u32 %v5466, 16
        %v5583 = vrot.slane %v5581, 1
        %v5584 = vsel %vm1493, %v5579, %v5583
        %v5585 = vshrl.u32 %v5466, 16
        %v5587 = vor.u32 %v5585, %v5583
        %v5589 = vshll.u32 %v5467, 16
        %v5591 = vrot.slane %v5589, 1
        %v5592 = vsel %vm1493, %v5587, %v5591
        %v5593 = vshrl.u32 %v5467, 16
        %v5595 = vor.u32 %v5593, %v5591
        %v5597 = vshll.u32 %v5468, 16
        %v5599 = vrot.slane %v5597, 1
        %v5600 = vsel %vm1493, %v5595, %v5599
        %5601 = vrot.lane.b32.xlu0 %v5480, 32
        %v5602 = vpop.permute.xlu0 %5601
        %5603 = vrot.lane.b32.xlu0 %v5488, 32
        %v5604 = vpop.permute.xlu0 %5603
        %5605 = vrot.lane.b32.xlu0 %v5496, 32
        %v5606 = vpop.permute.xlu0 %5605
        %5607 = vrot.lane.b32.xlu0 %v5504, 32
        %v5608 = vpop.permute.xlu0 %5607
        %5609 = vrot.lane.b32.xlu0 %v5512, 32
        %v5610 = vpop.permute.xlu0 %5609
        %5611 = vrot.lane.b32.xlu0 %v5520, 32
        %v5612 = vpop.permute.xlu0 %5611
        %5613 = vrot.lane.b32.xlu0 %v5528, 32
        %v5614 = vpop.permute.xlu0 %5613
        %5615 = vrot.lane.b32.xlu0 %v5536, 32
        %v5616 = vpop.permute.xlu0 %5615
        %5617 = vrot.lane.b32.xlu0 %v5544, 32
        %v5618 = vpop.permute.xlu0 %5617
        %5619 = vrot.lane.b32.xlu0 %v5552, 32
        %v5620 = vpop.permute.xlu0 %5619
        %5621 = vrot.lane.b32.xlu0 %v5560, 32
        %v5622 = vpop.permute.xlu0 %5621
        %5623 = vrot.lane.b32.xlu0 %v5568, 32
        %v5624 = vpop.permute.xlu0 %5623
        %5625 = vrot.lane.b32.xlu0 %v5576, 32
        %v5626 = vpop.permute.xlu0 %5625
        %5627 = vrot.lane.b32.xlu0 %v5584, 32
        %v5628 = vpop.permute.xlu0 %5627
        %5629 = vrot.lane.b32.xlu0 %v5592, 32
        %v5630 = vpop.permute.xlu0 %5629
        %5631 = vrot.lane.b32.xlu0 %v5600, 32
        %v5632 = vpop.permute.xlu0 %5631
        %5649 = vst.msk [vmem:[#allocation3 + $0x8] sm:$0xff] %vm1900, %v5602
        %5650 = vst.msk [vmem:[#allocation3 + $0x20] sm:$0xff] %vm1900, %v5604
        %5651 = vst.msk [vmem:[#allocation3 + $0x38] sm:$0xff] %vm1900, %v5606
        %5652 = vst.msk [vmem:[#allocation3 + $0x50] sm:$0xff] %vm1900, %v5608
        %5653 = vst.msk [vmem:[#allocation3 + $0x68] sm:$0xff] %vm1900, %v5610
        %5654 = vst.msk [vmem:[#allocation3 + $0x80] sm:$0xff] %vm1900, %v5612
        %5655 = vst.msk [vmem:[#allocation3 + $0x98] sm:$0xff] %vm1900, %v5614
        %5656 = vst.msk [vmem:[#allocation3 + $0xb0] sm:$0xff] %vm1900, %v5616
        %5657 = vst.msk [vmem:[#allocation3 + $0xc8] sm:$0xff] %vm1900, %v5618
        %5658 = vst.msk [vmem:[#allocation3 + $0xe0] sm:$0xff] %vm1900, %v5620
        %5659 = vst.msk [vmem:[#allocation3 + $0xf8] sm:$0xff] %vm1900, %v5622
        %5660 = vst.msk [vmem:[#allocation3 + $0x110] sm:$0xff] %vm1900, %v5624
        %5661 = vst.msk [vmem:[#allocation3 + $0x128] sm:$0xff] %vm1900, %v5626
        %5662 = vst.msk [vmem:[#allocation3 + $0x140] sm:$0xff] %vm1900, %v5628
        %5663 = vst.msk [vmem:[#allocation3 + $0x158] sm:$0xff] %vm1900, %v5630
        %5664 = vst.msk [vmem:[#allocation3 + $0x170] sm:$0xff] %vm1900, %v5632
        %v5665 = vld [vmem:[#allocation2 + $0x10] sm:$0x80]
        %v5666 = vld [vmem:[#allocation2 + $0x18] sm:$0xff]
        %v5667 = vld [vmem:[#allocation2 + $0x20] sm:$0xff]
        %v5668 = vld [vmem:[#allocation2 + $0x28] sm:$0xff]
        %v5669 = vld [vmem:[#allocation2 + $0x30] sm:$0xff]
        %v5670 = vld [vmem:[#allocation2 + $0x38] sm:$0xff]
        %v5671 = vld [vmem:[#allocation2 + $0x40] sm:$0xff]
        %v5672 = vld [vmem:[#allocation2 + $0x48] sm:$0xff]
        %v5673 = vld [vmem:[#allocation2 + $0x50] sm:$0xff]
        %v5674 = vld [vmem:[#allocation2 + $0x58] sm:$0xff]
        %v5675 = vld [vmem:[#allocation2 + $0x60] sm:$0xff]
        %v5676 = vld [vmem:[#allocation2 + $0x68] sm:$0xff]
        %v5677 = vld [vmem:[#allocation2 + $0x70] sm:$0xff]
        %v5678 = vld [vmem:[#allocation2 + $0x78] sm:$0xff]
        %v5679 = vld [vmem:[#allocation2 + $0x80] sm:$0xff]
        %v5680 = vld [vmem:[#allocation2 + $0x88] sm:$0xff]
        %v5681 = vld [vmem:[#allocation2 + $0x90] sm:$0xff]
        %v5682 = vsel %vm1621, %v5665, 0
        %v5683 = vsel %vm1622, %v5666, 0
        %v5684 = vsel %vm1623, %v5667, 0
        %v5685 = vsel %vm1624, %v5668, 0
        %v5686 = vsel %vm1625, %v5669, 0
        %v5687 = vsel %vm1626, %v5670, 0
        %v5688 = vsel %vm1627, %v5671, 0
        %v5689 = vsel %vm1628, %v5672, 0
        %v5690 = vsel %vm1629, %v5673, 0
        %v5691 = vsel %vm1630, %v5674, 0
        %v5692 = vsel %vm1631, %v5675, 0
        %v5693 = vsel %vm1632, %v5676, 0
        %v5694 = vsel %vm1633, %v5677, 0
        %v5695 = vsel %vm1634, %v5678, 0
        %v5696 = vsel %vm1635, %v5679, 0
        %v5697 = vsel %vm1636, %v5680, 0
        %v5698 = vsel %vm1637, %v5681, 0
        %v5700 = vshrl.u32 %v5682, 16
        %v5702 = vrot.slane %v5700, 7
        %v5704 = vshrl.u32 %v5683, 16
        %v5706 = vrot.slane %v5704, 7
        %v5707 = vshll.u32 %v5683, 16
        %v5709 = vor.u32 %v5706, %v5707
        %v5710 = vsel %vm1655, %v5702, %v5709
        %v5712 = vshrl.u32 %v5684, 16
        %v5714 = vrot.slane %v5712, 7
        %v5715 = vshll.u32 %v5684, 16
        %v5717 = vor.u32 %v5714, %v5715
        %v5718 = vsel %vm1655, %v5706, %v5717
        %v5720 = vshrl.u32 %v5685, 16
        %v5722 = vrot.slane %v5720, 7
        %v5723 = vshll.u32 %v5685, 16
        %v5725 = vor.u32 %v5722, %v5723
        %v5726 = vsel %vm1655, %v5714, %v5725
        %v5728 = vshrl.u32 %v5686, 16
        %v5730 = vrot.slane %v5728, 7
        %v5731 = vshll.u32 %v5686, 16
        %v5733 = vor.u32 %v5730, %v5731
        %v5734 = vsel %vm1655, %v5722, %v5733
        %v5736 = vshrl.u32 %v5687, 16
        %v5738 = vrot.slane %v5736, 7
        %v5739 = vshll.u32 %v5687, 16
        %v5741 = vor.u32 %v5738, %v5739
        %v5742 = vsel %vm1655, %v5730, %v5741
        %v5744 = vshrl.u32 %v5688, 16
        %v5746 = vrot.slane %v5744, 7
        %v5747 = vshll.u32 %v5688, 16
        %v5749 = vor.u32 %v5746, %v5747
        %v5750 = vsel %vm1655, %v5738, %v5749
        %v5752 = vshrl.u32 %v5689, 16
        %v5754 = vrot.slane %v5752, 7
        %v5755 = vshll.u32 %v5689, 16
        %v5757 = vor.u32 %v5754, %v5755
        %v5758 = vsel %vm1655, %v5746, %v5757
        %v5760 = vshrl.u32 %v5690, 16
        %v5762 = vrot.slane %v5760, 7
        %v5763 = vshll.u32 %v5690, 16
        %v5765 = vor.u32 %v5762, %v5763
        %v5766 = vsel %vm1655, %v5754, %v5765
        %v5768 = vshrl.u32 %v5691, 16
        %v5770 = vrot.slane %v5768, 7
        %v5771 = vshll.u32 %v5691, 16
        %v5773 = vor.u32 %v5770, %v5771
        %v5774 = vsel %vm1655, %v5762, %v5773
        %v5776 = vshrl.u32 %v5692, 16
        %v5778 = vrot.slane %v5776, 7
        %v5779 = vshll.u32 %v5692, 16
        %v5781 = vor.u32 %v5778, %v5779
        %v5782 = vsel %vm1655, %v5770, %v5781
        %v5784 = vshrl.u32 %v5693, 16
        %v5786 = vrot.slane %v5784, 7
        %v5787 = vshll.u32 %v5693, 16
        %v5789 = vor.u32 %v5786, %v5787
        %v5790 = vsel %vm1655, %v5778, %v5789
        %v5792 = vshrl.u32 %v5694, 16
        %v5794 = vrot.slane %v5792, 7
        %v5795 = vshll.u32 %v5694, 16
        %v5797 = vor.u32 %v5794, %v5795
        %v5798 = vsel %vm1655, %v5786, %v5797
        %v5800 = vshrl.u32 %v5695, 16
        %v5802 = vrot.slane %v5800, 7
        %v5803 = vshll.u32 %v5695, 16
        %v5805 = vor.u32 %v5802, %v5803
        %v5806 = vsel %vm1655, %v5794, %v5805
        %v5808 = vshrl.u32 %v5696, 16
        %v5810 = vrot.slane %v5808, 7
        %v5811 = vshll.u32 %v5696, 16
        %v5813 = vor.u32 %v5810, %v5811
        %v5814 = vsel %vm1655, %v5802, %v5813
        %v5816 = vshrl.u32 %v5697, 16
        %v5818 = vrot.slane %v5816, 7
        %v5819 = vshll.u32 %v5697, 16
        %v5821 = vor.u32 %v5818, %v5819
        %v5822 = vsel %vm1655, %v5810, %v5821
        %v5824 = vshrl.u32 %v5698, 16
        %v5826 = vrot.slane %v5824, 7
        %v5827 = vshll.u32 %v5698, 16
        %v5829 = vor.u32 %v5826, %v5827
        %v5830 = vsel %vm1655, %v5818, %v5829
        %5831 = vrot.lane.b32.xlu0 %v5710, 64
        %v5832 = vpop.permute.xlu0 %5831
        %5833 = vrot.lane.b32.xlu0 %v5718, 64
        %v5834 = vpop.permute.xlu0 %5833
        %5835 = vrot.lane.b32.xlu0 %v5726, 64
        %v5836 = vpop.permute.xlu0 %5835
        %5837 = vrot.lane.b32.xlu0 %v5734, 64
        %v5838 = vpop.permute.xlu0 %5837
        %5839 = vrot.lane.b32.xlu0 %v5742, 64
        %v5840 = vpop.permute.xlu0 %5839
        %5841 = vrot.lane.b32.xlu0 %v5750, 64
        %v5842 = vpop.permute.xlu0 %5841
        %5843 = vrot.lane.b32.xlu0 %v5758, 64
        %v5844 = vpop.permute.xlu0 %5843
        %5845 = vrot.lane.b32.xlu0 %v5766, 64
        %v5846 = vpop.permute.xlu0 %5845
        %5847 = vrot.lane.b32.xlu0 %v5774, 64
        %v5848 = vpop.permute.xlu0 %5847
        %5849 = vrot.lane.b32.xlu0 %v5782, 64
        %v5850 = vpop.permute.xlu0 %5849
        %5851 = vrot.lane.b32.xlu0 %v5790, 64
        %v5852 = vpop.permute.xlu0 %5851
        %5853 = vrot.lane.b32.xlu0 %v5798, 64
        %v5854 = vpop.permute.xlu0 %5853
        %5855 = vrot.lane.b32.xlu0 %v5806, 64
        %v5856 = vpop.permute.xlu0 %5855
        %5857 = vrot.lane.b32.xlu0 %v5814, 64
        %v5858 = vpop.permute.xlu0 %5857
        %5859 = vrot.lane.b32.xlu0 %v5822, 64
        %v5860 = vpop.permute.xlu0 %5859
        %5861 = vrot.lane.b32.xlu0 %v5830, 64
        %v5862 = vpop.permute.xlu0 %5861
        %5879 = vst.msk [vmem:[#allocation3 + $0x8] sm:$0xff] %vm2451, %v5832
        %5880 = vst.msk [vmem:[#allocation3 + $0x20] sm:$0xff] %vm2451, %v5834
        %5881 = vst.msk [vmem:[#allocation3 + $0x38] sm:$0xff] %vm2451, %v5836
        %5882 = vst.msk [vmem:[#allocation3 + $0x50] sm:$0xff] %vm2451, %v5838
        %5883 = vst.msk [vmem:[#allocation3 + $0x68] sm:$0xff] %vm2451, %v5840
        %5884 = vst.msk [vmem:[#allocation3 + $0x80] sm:$0xff] %vm2451, %v5842
        %5885 = vst.msk [vmem:[#allocation3 + $0x98] sm:$0xff] %vm2451, %v5844
        %5886 = vst.msk [vmem:[#allocation3 + $0xb0] sm:$0xff] %vm2451, %v5846
        %5887 = vst.msk [vmem:[#allocation3 + $0xc8] sm:$0xff] %vm2451, %v5848
        %5888 = vst.msk [vmem:[#allocation3 + $0xe0] sm:$0xff] %vm2451, %v5850
        %5889 = vst.msk [vmem:[#allocation3 + $0xf8] sm:$0xff] %vm2451, %v5852
        %5890 = vst.msk [vmem:[#allocation3 + $0x110] sm:$0xff] %vm2451, %v5854
        %5891 = vst.msk [vmem:[#allocation3 + $0x128] sm:$0xff] %vm2451, %v5856
        %5892 = vst.msk [vmem:[#allocation3 + $0x140] sm:$0xff] %vm2451, %v5858
        %5893 = vst.msk [vmem:[#allocation3 + $0x158] sm:$0xff] %vm2451, %v5860
        %5894 = vst.msk [vmem:[#allocation3 + $0x170] sm:$0xff] %vm2451, %v5862
        %v5895 = vld [vmem:[#allocation2 + $0x18] sm:$0xff]
        %v5896 = vld [vmem:[#allocation2 + $0x20] sm:$0xff]
        %v5897 = vld [vmem:[#allocation2 + $0x28] sm:$0xff]
        %v5898 = vld [vmem:[#allocation2 + $0x30] sm:$0xff]
        %v5899 = vld [vmem:[#allocation2 + $0x38] sm:$0xff]
        %v5900 = vld [vmem:[#allocation2 + $0x40] sm:$0xff]
        %v5901 = vld [vmem:[#allocation2 + $0x48] sm:$0xff]
        %v5902 = vld [vmem:[#allocation2 + $0x50] sm:$0xff]
        %v5903 = vld [vmem:[#allocation2 + $0x58] sm:$0xff]
        %v5904 = vld [vmem:[#allocation2 + $0x60] sm:$0xff]
        %v5905 = vld [vmem:[#allocation2 + $0x68] sm:$0xff]
        %v5906 = vld [vmem:[#allocation2 + $0x70] sm:$0xff]
        %v5907 = vld [vmem:[#allocation2 + $0x78] sm:$0xff]
        %v5908 = vld [vmem:[#allocation2 + $0x80] sm:$0xff]
        %v5909 = vld [vmem:[#allocation2 + $0x88] sm:$0xff]
        %v5910 = vld [vmem:[#allocation2 + $0x90] sm:$0xff]
        %5927 = vrot.lane.b32.xlu0 %v5895, 96
        %v5928 = vpop.permute.xlu0 %5927
        %5929 = vrot.lane.b32.xlu0 %v5896, 96
        %v5930 = vpop.permute.xlu0 %5929
        %5931 = vrot.lane.b32.xlu0 %v5897, 96
        %v5932 = vpop.permute.xlu0 %5931
        %5933 = vrot.lane.b32.xlu0 %v5898, 96
        %v5934 = vpop.permute.xlu0 %5933
        %5935 = vrot.lane.b32.xlu0 %v5899, 96
        %v5936 = vpop.permute.xlu0 %5935
        %5937 = vrot.lane.b32.xlu0 %v5900, 96
        %v5938 = vpop.permute.xlu0 %5937
        %5939 = vrot.lane.b32.xlu0 %v5901, 96
        %v5940 = vpop.permute.xlu0 %5939
        %5941 = vrot.lane.b32.xlu0 %v5902, 96
        %v5942 = vpop.permute.xlu0 %5941
        %5943 = vrot.lane.b32.xlu0 %v5903, 96
        %v5944 = vpop.permute.xlu0 %5943
        %5945 = vrot.lane.b32.xlu0 %v5904, 96
        %v5946 = vpop.permute.xlu0 %5945
        %5947 = vrot.lane.b32.xlu0 %v5905, 96
        %v5948 = vpop.permute.xlu0 %5947
        %5949 = vrot.lane.b32.xlu0 %v5906, 96
        %v5950 = vpop.permute.xlu0 %5949
        %5951 = vrot.lane.b32.xlu0 %v5907, 96
        %v5952 = vpop.permute.xlu0 %5951
        %5953 = vrot.lane.b32.xlu0 %v5908, 96
        %v5954 = vpop.permute.xlu0 %5953
        %5955 = vrot.lane.b32.xlu0 %v5909, 96
        %v5956 = vpop.permute.xlu0 %5955
        %5957 = vrot.lane.b32.xlu0 %v5910, 96
        %v5958 = vpop.permute.xlu0 %5957
        %5975 = vst.msk [vmem:[#allocation3 + $0x8] sm:$0xff] %vm2682, %v5928
        %5976 = vst.msk [vmem:[#allocation3 + $0x20] sm:$0xff] %vm2682, %v5930
        %5977 = vst.msk [vmem:[#allocation3 + $0x38] sm:$0xff] %vm2682, %v5932
        %5978 = vst.msk [vmem:[#allocation3 + $0x50] sm:$0xff] %vm2682, %v5934
        %5979 = vst.msk [vmem:[#allocation3 + $0x68] sm:$0xff] %vm2682, %v5936
        %5980 = vst.msk [vmem:[#allocation3 + $0x80] sm:$0xff] %vm2682, %v5938
        %5981 = vst.msk [vmem:[#allocation3 + $0x98] sm:$0xff] %vm2682, %v5940
        %5982 = vst.msk [vmem:[#allocation3 + $0xb0] sm:$0xff] %vm2682, %v5942
        %5983 = vst.msk [vmem:[#allocation3 + $0xc8] sm:$0xff] %vm2682, %v5944
        %5984 = vst.msk [vmem:[#allocation3 + $0xe0] sm:$0xff] %vm2682, %v5946
        %5985 = vst.msk [vmem:[#allocation3 + $0xf8] sm:$0xff] %vm2682, %v5948
        %5986 = vst.msk [vmem:[#allocation3 + $0x110] sm:$0xff] %vm2682, %v5950
        %5987 = vst.msk [vmem:[#allocation3 + $0x128] sm:$0xff] %vm2682, %v5952
        %5988 = vst.msk [vmem:[#allocation3 + $0x140] sm:$0xff] %vm2682, %v5954
        %5989 = vst.msk [vmem:[#allocation3 + $0x158] sm:$0xff] %vm2682, %v5956
        %5990 = vst.msk [vmem:[#allocation3 + $0x170] sm:$0xff] %vm2682, %v5958
        %v5991 = vld [vmem:[#allocation2 + $0x18] sm:$0xff]
        %v5992 = vld [vmem:[#allocation2 + $0x20] sm:$0xff]
        %v5993 = vld [vmem:[#allocation2 + $0x28] sm:$0xff]
        %v5994 = vld [vmem:[#allocation2 + $0x30] sm:$0xff]
        %v5995 = vld [vmem:[#allocation2 + $0x38] sm:$0xff]
        %v5996 = vld [vmem:[#allocation2 + $0x40] sm:$0xff]
        %v5997 = vld [vmem:[#allocation2 + $0x48] sm:$0xff]
        %v5998 = vld [vmem:[#allocation2 + $0x50] sm:$0xff]
        %v5999 = vld [vmem:[#allocation2 + $0x58] sm:$0xff]
        %v6000 = vld [vmem:[#allocation2 + $0x60] sm:$0xff]
        %v6001 = vld [vmem:[#allocation2 + $0x68] sm:$0xff]
        %v6002 = vld [vmem:[#allocation2 + $0x70] sm:$0xff]
        %v6003 = vld [vmem:[#allocation2 + $0x78] sm:$0xff]
        %v6004 = vld [vmem:[#allocation2 + $0x80] sm:$0xff]
        %v6005 = vld [vmem:[#allocation2 + $0x88] sm:$0xff]
        %v6006 = vld [vmem:[#allocation2 + $0x90] sm:$0xff]
        %v6007 = vld [vmem:[#allocation2 + $0x98] sm:$0x1]
        %v6008 = vsel %vm2237, %v5991, 0
        %v6009 = vsel %vm2238, %v5992, 0
        %v6010 = vsel %vm2239, %v5993, 0
        %v6011 = vsel %vm2240, %v5994, 0
        %v6012 = vsel %vm2241, %v5995, 0
        %v6013 = vsel %vm2242, %v5996, 0
        %v6014 = vsel %vm2243, %v5997, 0
        %v6015 = vsel %vm2244, %v5998, 0
        %v6016 = vsel %vm2245, %v5999, 0
        %v6017 = vsel %vm2246, %v6000, 0
        %v6018 = vsel %vm2247, %v6001, 0
        %v6019 = vsel %vm2248, %v6002, 0
        %v6020 = vsel %vm2249, %v6003, 0
        %v6021 = vsel %vm2250, %v6004, 0
        %v6022 = vsel %vm2251, %v6005, 0
        %v6023 = vsel %vm2252, %v6006, 0
        %v6024 = vsel %vm2253, %v6007, 0
        %v6026 = vshrl.u32 %v6008, 16
        %v6028 = vshll.u32 %v6008, 16
        %v6030 = vrot.slane %v6028, 1
        %v6031 = vor.u32 %v6026, %v6030
        %v6033 = vshll.u32 %v6009, 16
        %v6035 = vrot.slane %v6033, 1
        %v6036 = vsel %vm1493, %v6031, %v6035
        %v6037 = vshrl.u32 %v6009, 16
        %v6039 = vor.u32 %v6037, %v6035
        %v6041 = vshll.u32 %v6010, 16
        %v6043 = vrot.slane %v6041, 1
        %v6044 = vsel %vm1493, %v6039, %v6043
        %v6045 = vshrl.u32 %v6010, 16
        %v6047 = vor.u32 %v6045, %v6043
        %v6049 = vshll.u32 %v6011, 16
        %v6051 = vrot.slane %v6049, 1
        %v6052 = vsel %vm1493, %v6047, %v6051
        %v6053 = vshrl.u32 %v6011, 16
        %v6055 = vor.u32 %v6053, %v6051
        %v6057 = vshll.u32 %v6012, 16
        %v6059 = vrot.slane %v6057, 1
        %v6060 = vsel %vm1493, %v6055, %v6059
        %v6061 = vshrl.u32 %v6012, 16
        %v6063 = vor.u32 %v6061, %v6059
        %v6065 = vshll.u32 %v6013, 16
        %v6067 = vrot.slane %v6065, 1
        %v6068 = vsel %vm1493, %v6063, %v6067
        %v6069 = vshrl.u32 %v6013, 16
        %v6071 = vor.u32 %v6069, %v6067
        %v6073 = vshll.u32 %v6014, 16
        %v6075 = vrot.slane %v6073, 1
        %v6076 = vsel %vm1493, %v6071, %v6075
        %v6077 = vshrl.u32 %v6014, 16
        %v6079 = vor.u32 %v6077, %v6075
        %v6081 = vshll.u32 %v6015, 16
        %v6083 = vrot.slane %v6081, 1
        %v6084 = vsel %vm1493, %v6079, %v6083
        %v6085 = vshrl.u32 %v6015, 16
        %v6087 = vor.u32 %v6085, %v6083
        %v6089 = vshll.u32 %v6016, 16
        %v6091 = vrot.slane %v6089, 1
        %v6092 = vsel %vm1493, %v6087, %v6091
        %v6093 = vshrl.u32 %v6016, 16
        %v6095 = vor.u32 %v6093, %v6091
        %v6097 = vshll.u32 %v6017, 16
        %v6099 = vrot.slane %v6097, 1
        %v6100 = vsel %vm1493, %v6095, %v6099
        %v6101 = vshrl.u32 %v6017, 16
        %v6103 = vor.u32 %v6101, %v6099
        %v6105 = vshll.u32 %v6018, 16
        %v6107 = vrot.slane %v6105, 1
        %v6108 = vsel %vm1493, %v6103, %v6107
        %v6109 = vshrl.u32 %v6018, 16
        %v6111 = vor.u32 %v6109, %v6107
        %v6113 = vshll.u32 %v6019, 16
        %v6115 = vrot.slane %v6113, 1
        %v6116 = vsel %vm1493, %v6111, %v6115
        %v6117 = vshrl.u32 %v6019, 16
        %v6119 = vor.u32 %v6117, %v6115
        %v6121 = vshll.u32 %v6020, 16
        %v6123 = vrot.slane %v6121, 1
        %v6124 = vsel %vm1493, %v6119, %v6123
        %v6125 = vshrl.u32 %v6020, 16
        %v6127 = vor.u32 %v6125, %v6123
        %v6129 = vshll.u32 %v6021, 16
        %v6131 = vrot.slane %v6129, 1
        %v6132 = vsel %vm1493, %v6127, %v6131
        %v6133 = vshrl.u32 %v6021, 16
        %v6135 = vor.u32 %v6133, %v6131
        %v6137 = vshll.u32 %v6022, 16
        %v6139 = vrot.slane %v6137, 1
        %v6140 = vsel %vm1493, %v6135, %v6139
        %v6141 = vshrl.u32 %v6022, 16
        %v6143 = vor.u32 %v6141, %v6139
        %v6145 = vshll.u32 %v6023, 16
        %v6147 = vrot.slane %v6145, 1
        %v6148 = vsel %vm1493, %v6143, %v6147
        %v6149 = vshrl.u32 %v6023, 16
        %v6151 = vor.u32 %v6149, %v6147
        %v6153 = vshll.u32 %v6024, 16
        %v6155 = vrot.slane %v6153, 1
        %v6156 = vsel %vm1493, %v6151, %v6155
        %6173 = vst.msk [vmem:[#allocation3 + $0x10] sm:$0xff] %vm377, %v6036
        %6174 = vst.msk [vmem:[#allocation3 + $0x28] sm:$0xff] %vm377, %v6044
        %6175 = vst.msk [vmem:[#allocation3 + $0x40] sm:$0xff] %vm377, %v6052
        %6176 = vst.msk [vmem:[#allocation3 + $0x58] sm:$0xff] %vm377, %v6060
        %6177 = vst.msk [vmem:[#allocation3 + $0x70] sm:$0xff] %vm377, %v6068
        %6178 = vst.msk [vmem:[#allocation3 + $0x88] sm:$0xff] %vm377, %v6076
        %6179 = vst.msk [vmem:[#allocation3 + $0xa0] sm:$0xff] %vm377, %v6084
        %6180 = vst.msk [vmem:[#allocation3 + $0xb8] sm:$0xff] %vm377, %v6092
        %6181 = vst.msk [vmem:[#allocation3 + $0xd0] sm:$0xff] %vm377, %v6100
        %6182 = vst.msk [vmem:[#allocation3 + $0xe8] sm:$0xff] %vm377, %v6108
        %6183 = vst.msk [vmem:[#allocation3 + $0x100] sm:$0xff] %vm377, %v6116
        %6184 = vst.msk [vmem:[#allocation3 + $0x118] sm:$0xff] %vm377, %v6124
        %6185 = vst.msk [vmem:[#allocation3 + $0x130] sm:$0xff] %vm377, %v6132
        %6186 = vst.msk [vmem:[#allocation3 + $0x148] sm:$0xff] %vm377, %v6140
        %6187 = vst.msk [vmem:[#allocation3 + $0x160] sm:$0xff] %vm377, %v6148
        %6188 = vst.msk [vmem:[#allocation3 + $0x178] sm:$0xff] %vm377, %v6156
        %v6189 = vld [vmem:[#allocation3] sm:$0xff]
        %v6190 = vld [vmem:[#allocation3 + $0x8] sm:$0xff]
        %v6191 = vld [vmem:[#allocation3 + $0x10] sm:$0xff]
        %v6192 = vld [vmem:[#allocation3 + $0x18] sm:$0xff]
        %v6193 = vld [vmem:[#allocation3 + $0x20] sm:$0xff]
        %v6194 = vld [vmem:[#allocation3 + $0x28] sm:$0xff]
        %v6195 = vld [vmem:[#allocation3 + $0x30] sm:$0xff]
        %v6196 = vld [vmem:[#allocation3 + $0x38] sm:$0xff]
        %v6197 = vld [vmem:[#allocation3 + $0x40] sm:$0xff]
        %v6198 = vld [vmem:[#allocation3 + $0x48] sm:$0xff]
        %v6199 = vld [vmem:[#allocation3 + $0x50] sm:$0xff]
        %v6200 = vld [vmem:[#allocation3 + $0x58] sm:$0xff]
        %v6201 = vld [vmem:[#allocation3 + $0x60] sm:$0xff]
        %v6202 = vld [vmem:[#allocation3 + $0x68] sm:$0xff]
        %v6203 = vld [vmem:[#allocation3 + $0x70] sm:$0xff]
        %v6204 = vld [vmem:[#allocation3 + $0x78] sm:$0xff]
        %v6205 = vld [vmem:[#allocation3 + $0x80] sm:$0xff]
        %v6206 = vld [vmem:[#allocation3 + $0x88] sm:$0xff]
        %v6207 = vld [vmem:[#allocation3 + $0x90] sm:$0xff]
        %v6208 = vld [vmem:[#allocation3 + $0x98] sm:$0xff]
        %v6209 = vld [vmem:[#allocation3 + $0xa0] sm:$0xff]
        %v6210 = vld [vmem:[#allocation3 + $0xa8] sm:$0xff]
        %v6211 = vld [vmem:[#allocation3 + $0xb0] sm:$0xff]
        %v6212 = vld [vmem:[#allocation3 + $0xb8] sm:$0xff]
        %v6213 = vld [vmem:[#allocation3 + $0xc0] sm:$0xff]
        %v6214 = vld [vmem:[#allocation3 + $0xc8] sm:$0xff]
        %v6215 = vld [vmem:[#allocation3 + $0xd0] sm:$0xff]
        %v6216 = vld [vmem:[#allocation3 + $0xd8] sm:$0xff]
        %v6217 = vld [vmem:[#allocation3 + $0xe0] sm:$0xff]
        %v6218 = vld [vmem:[#allocation3 + $0xe8] sm:$0xff]
        %v6219 = vld [vmem:[#allocation3 + $0xf0] sm:$0xff]
        %v6220 = vld [vmem:[#allocation3 + $0xf8] sm:$0xff]
        %v6221 = vld [vmem:[#allocation3 + $0x100] sm:$0xff]
        %v6222 = vld [vmem:[#allocation3 + $0x108] sm:$0xff]
        %v6223 = vld [vmem:[#allocation3 + $0x110] sm:$0xff]
        %v6224 = vld [vmem:[#allocation3 + $0x118] sm:$0xff]
        %v6225 = vld [vmem:[#allocation3 + $0x120] sm:$0xff]
        %v6226 = vld [vmem:[#allocation3 + $0x128] sm:$0xff]
        %v6227 = vld [vmem:[#allocation3 + $0x130] sm:$0xff]
        %v6228 = vld [vmem:[#allocation3 + $0x138] sm:$0xff]
        %v6229 = vld [vmem:[#allocation3 + $0x140] sm:$0xff]
        %v6230 = vld [vmem:[#allocation3 + $0x148] sm:$0xff]
        %v6231 = vld [vmem:[#allocation3 + $0x150] sm:$0xff]
        %v6232 = vld [vmem:[#allocation3 + $0x158] sm:$0xff]
        %v6233 = vld [vmem:[#allocation3 + $0x160] sm:$0xff]
        %v6234 = vld [vmem:[#allocation3 + $0x168] sm:$0xff]
        %v6235 = vld [vmem:[#allocation3 + $0x170] sm:$0xff]
        %v6236 = vld [vmem:[#allocation3 + $0x178] sm:$0xff]
        %v6237 = vld [vmem:[%s6] sm:$0xf]
        %v6238 = vld [vmem:[%s6 + $0x4] sm:$0xf]
        %v6239 = vld [vmem:[%s6 + $0x8] sm:$0xf]
        %v6240 = vld [vmem:[%s6 + $0xc] sm:$0xf]
        %v6241 = vld [vmem:[%s6 + $0x10] sm:$0xf]
        %v6242 = vld [vmem:[%s6 + $0x14] sm:$0xf]
        %v6243 = vld [vmem:[%s6 + $0x18] sm:$0xf]
        %v6244 = vld [vmem:[%s6 + $0x1c] sm:$0xf]
        %v6245 = vld [vmem:[%s6 + $0x20] sm:$0xf]
        %v6246 = vld [vmem:[%s6 + $0x24] sm:$0xf]
        %v6247 = vld [vmem:[%s6 + $0x28] sm:$0xf]
        %v6248 = vld [vmem:[%s6 + $0x2c] sm:$0xf]
        %v6249 = vld [vmem:[%s6 + $0x30] sm:$0xf]
        %v6250 = vld [vmem:[%s6 + $0x34] sm:$0xf]
        %v6251 = vld [vmem:[%s6 + $0x38] sm:$0xf]
        %v6252 = vld [vmem:[%s6 + $0x3c] sm:$0xf]
        %v6253 = vld [vmem:[%s6 + $0x40] sm:$0xf]
        %v6254 = vld [vmem:[%s6 + $0x44] sm:$0xf]
        %v6255 = vld [vmem:[%s6 + $0x48] sm:$0xf]
        %v6256 = vld [vmem:[%s6 + $0x4c] sm:$0xf]
        %v6257 = vld [vmem:[%s6 + $0x50] sm:$0xf]
        %v6258 = vld [vmem:[%s6 + $0x54] sm:$0xf]
        %v6259 = vld [vmem:[%s6 + $0x58] sm:$0xf]
        %v6260 = vld [vmem:[%s6 + $0x5c] sm:$0xf]
        %v6261 = vld [vmem:[%s6 + $0x60] sm:$0xf]
        %v6262 = vld [vmem:[%s6 + $0x64] sm:$0xf]
        %v6263 = vld [vmem:[%s6 + $0x68] sm:$0xf]
        %v6264 = vld [vmem:[%s6 + $0x6c] sm:$0xf]
        %v6265 = vld [vmem:[%s6 + $0x70] sm:$0xf]
        %v6266 = vld [vmem:[%s6 + $0x74] sm:$0xf]
        %v6267 = vld [vmem:[%s6 + $0x78] sm:$0xf]
        %v6268 = vld [vmem:[%s6 + $0x7c] sm:$0xf]
        %v6269 = vld [vmem:[%s6 + $0x80] sm:$0xf]
        %v6270 = vld [vmem:[%s6 + $0x84] sm:$0xf]
        %v6271 = vld [vmem:[%s6 + $0x88] sm:$0xf]
        %v6272 = vld [vmem:[%s6 + $0x8c] sm:$0xf]
        %v6309 = vunpack.c.l.b16 %v6237
        %v6310 = vunpack.c.l.b16 %v6238
        %v6311 = vunpack.c.l.b16 %v6239
        %v6312 = vunpack.c.l.b16 %v6240
        %v6313 = vunpack.c.l.b16 %v6241
        %v6314 = vunpack.c.l.b16 %v6242
        %v6315 = vunpack.c.l.b16 %v6243
        %v6316 = vunpack.c.l.b16 %v6244
        %v6317 = vunpack.c.l.b16 %v6245
        %v6318 = vunpack.c.l.b16 %v6246
        %v6319 = vunpack.c.l.b16 %v6247
        %v6320 = vunpack.c.l.b16 %v6248
        %v6321 = vunpack.c.l.b16 %v6249
        %v6322 = vunpack.c.l.b16 %v6250
        %v6323 = vunpack.c.l.b16 %v6251
        %v6324 = vunpack.c.l.b16 %v6252
        %v6325 = vunpack.c.l.b16 %v6253
        %v6326 = vunpack.c.l.b16 %v6254
        %v6327 = vunpack.c.l.b16 %v6255
        %v6328 = vunpack.c.l.b16 %v6256
        %v6329 = vunpack.c.l.b16 %v6257
        %v6330 = vunpack.c.l.b16 %v6258
        %v6331 = vunpack.c.l.b16 %v6259
        %v6332 = vunpack.c.l.b16 %v6260
        %v6333 = vunpack.c.l.b16 %v6261
        %v6334 = vunpack.c.l.b16 %v6262
        %v6335 = vunpack.c.l.b16 %v6263
        %v6336 = vunpack.c.l.b16 %v6264
        %v6337 = vunpack.c.l.b16 %v6265
        %v6338 = vunpack.c.l.b16 %v6266
        %v6339 = vunpack.c.l.b16 %v6267
        %v6340 = vunpack.c.l.b16 %v6268
        %v6341 = vunpack.c.l.b16 %v6269
        %v6342 = vunpack.c.l.b16 %v6270
        %v6343 = vunpack.c.l.b16 %v6271
        %v6344 = vunpack.c.l.b16 %v6272
        %v6345 = vpack.c.b16 %v6310, %v6309
        %v6346 = vpack.c.b16 %v6312, %v6311
        %v6347 = vpack.c.b16 %v6314, %v6313
        %v6348 = vpack.c.b16 %v6316, %v6315
        %v6349 = vpack.c.b16 %v6318, %v6317
        %v6350 = vpack.c.b16 %v6320, %v6319
        %v6351 = vpack.c.b16 %v6322, %v6321
        %v6352 = vpack.c.b16 %v6324, %v6323
        %v6353 = vpack.c.b16 %v6326, %v6325
        %v6354 = vpack.c.b16 %v6328, %v6327
        %v6355 = vpack.c.b16 %v6330, %v6329
        %v6356 = vpack.c.b16 %v6332, %v6331
        %v6357 = vpack.c.b16 %v6334, %v6333
        %v6358 = vpack.c.b16 %v6336, %v6335
        %v6359 = vpack.c.b16 %v6338, %v6337
        %v6360 = vpack.c.b16 %v6340, %v6339
        %v6361 = vpack.c.b16 %v6342, %v6341
        %v6362 = vpack.c.b16 %v6344, %v6343
        %v6382 = vsel %vm377, %v6191, 0
        %v6385 = vsel %vm377, %v6194, 0
        %v6388 = vsel %vm377, %v6197, 0
        %v6391 = vsel %vm377, %v6200, 0
        %v6394 = vsel %vm377, %v6203, 0
        %v6397 = vsel %vm377, %v6206, 0
        %v6400 = vsel %vm377, %v6209, 0
        %v6403 = vsel %vm377, %v6212, 0
        %v6406 = vsel %vm377, %v6215, 0
        %v6409 = vsel %vm377, %v6218, 0
        %v6412 = vsel %vm377, %v6221, 0
        %v6415 = vsel %vm377, %v6224, 0
        %v6418 = vsel %vm377, %v6227, 0
        %v6421 = vsel %vm377, %v6230, 0
        %v6424 = vsel %vm377, %v6233, 0
        %v6427 = vsel %vm377, %v6236, 0
        %6429 = vmatprep.subr.bf16.mxu0 0
        %6430 = vmatpush1.bf16.msra.mxu0 %v6345
        %6431 = vmatprep.subr.bf16.mxu0 0
        %6432 = vmatpush1.bf16.msra.mxu0 %v6346
        %6433 = vmatprep.subr.bf16.mxu0 0
        %6434 = vmatpush1.bf16.msra.mxu0 %v6347
        %6435 = vmatprep.subr.bf16.mxu0 0
        %6436 = vmatpush1.bf16.msra.mxu0 %v6348
        %6437 = vmatprep.subr.bf16.mxu0 0
        %6438 = vmatpush1.bf16.msra.mxu0 %v6349
        %6439 = vmatprep.subr.bf16.mxu0 0
        %6440 = vmatpush1.bf16.msra.mxu0 %v6350
        %6441 = vmatprep.subr.bf16.mxu0 0
        %6442 = vmatpush1.bf16.msra.mxu0 %v6351
        %6443 = vmatprep.subr.bf16.mxu0 0
        %6444 = vmatpush1.bf16.msra.mxu0 %v6352
        %6445 = vmatprep.subr.bf16.mxu0 0
        %6446 = vmatpush1.bf16.msra.mxu0 %v6353
        %6447 = vmatprep.subr.bf16.mxu0 0
        %6448 = vmatpush1.bf16.msra.mxu0 %v6354
        %6449 = vmatprep.subr.bf16.mxu0 0
        %6450 = vmatpush1.bf16.msra.mxu0 %v6355
        %6451 = vmatprep.subr.bf16.mxu0 0
        %6452 = vmatpush1.bf16.msra.mxu0 %v6356
        %6453 = vmatprep.subr.bf16.mxu0 0
        %6454 = vmatpush1.bf16.msra.mxu0 %v6357
        %6455 = vmatprep.subr.bf16.mxu0 0
        %6456 = vmatpush1.bf16.msra.mxu0 %v6358
        %6457 = vmatprep.subr.bf16.mxu0 0
        %6458 = vmatpush1.bf16.msra.mxu0 %v6359
        %6459 = vmatprep.subr.bf16.mxu0 0
        %6460 = vmatpush1.bf16.msra.mxu0 %v6360
        %6461 = vmatprep.mubr.bf16.mxu0 %v6190
        %6462 = vmatmul.mubr.bf16.gmra.mrb[0].mxu0 %v6189
        %v6463 = vpop.f32.mrb[0].mxu0
        %v6464 = vadd.f32 0.0, %v6463
        %v6465 = vpop.f32.mrb[0].mxu0
        %v6466 = vpop.f32.mrb[0].mxu0
        %v6467 = vadd.f32 0.0, %v6466
        %v6468 = vpop.f32.mrb[0].mxu0
        %6469 = vmatprep.mubr.bf16.mxu0 %v6193
        %6470 = vmatmul.mubr.bf16.gmra.mrb[0].mxu0 %v6192
        %v6471 = vpop.f32.mrb[0].mxu0
        %v6472 = vadd.f32 0.0, %v6471
        %v6473 = vpop.f32.mrb[0].mxu0
        %v6474 = vpop.f32.mrb[0].mxu0
        %v6475 = vadd.f32 0.0, %v6474
        %v6476 = vpop.f32.mrb[0].mxu0
        %6477 = vmatprep.mubr.bf16.mxu0 %v6196
        %6478 = vmatmul.mubr.bf16.gmra.mrb[0].mxu0 %v6195
        %v6479 = vpop.f32.mrb[0].mxu0
        %v6480 = vadd.f32 0.0, %v6479
        %v6481 = vpop.f32.mrb[0].mxu0
        %v6482 = vpop.f32.mrb[0].mxu0
        %v6483 = vadd.f32 0.0, %v6482
        %v6484 = vpop.f32.mrb[0].mxu0
        %6485 = vmatprep.mubr.bf16.mxu0 %v6199
        %6486 = vmatmul.mubr.bf16.gmra.mrb[0].mxu0 %v6198
        %v6487 = vpop.f32.mrb[0].mxu0
        %v6488 = vadd.f32 0.0, %v6487
        %v6489 = vpop.f32.mrb[0].mxu0
        %v6490 = vpop.f32.mrb[0].mxu0
        %v6491 = vadd.f32 0.0, %v6490
        %v6492 = vpop.f32.mrb[0].mxu0
        %6493 = vmatprep.mubr.bf16.mxu0 %v6202
        %6494 = vmatmul.mubr.bf16.gmra.mrb[0].mxu0 %v6201
        %v6495 = vpop.f32.mrb[0].mxu0
        %v6496 = vadd.f32 0.0, %v6495
        %v6497 = vpop.f32.mrb[0].mxu0
        %v6498 = vpop.f32.mrb[0].mxu0
        %v6499 = vadd.f32 0.0, %v6498
        %v6500 = vpop.f32.mrb[0].mxu0
        %6501 = vmatprep.mubr.bf16.mxu0 %v6205
        %6502 = vmatmul.mubr.bf16.gmra.mrb[0].mxu0 %v6204
        %v6503 = vpop.f32.mrb[0].mxu0
        %v6504 = vadd.f32 0.0, %v6503
        %v6505 = vpop.f32.mrb[0].mxu0
        %v6506 = vpop.f32.mrb[0].mxu0
        %v6507 = vadd.f32 0.0, %v6506
        %v6508 = vpop.f32.mrb[0].mxu0
        %6509 = vmatprep.mubr.bf16.mxu0 %v6208
        %6510 = vmatmul.mubr.bf16.gmra.mrb[0].mxu0 %v6207
        %v6511 = vpop.f32.mrb[0].mxu0
        %v6512 = vadd.f32 0.0, %v6511
        %v6513 = vpop.f32.mrb[0].mxu0
        %v6514 = vpop.f32.mrb[0].mxu0
        %v6515 = vadd.f32 0.0, %v6514
        %v6516 = vpop.f32.mrb[0].mxu0
        %6517 = vmatprep.mubr.bf16.mxu0 %v6211
        %6518 = vmatmul.mubr.bf16.gmra.mrb[0].mxu0 %v6210
        %v6519 = vpop.f32.mrb[0].mxu0
        %v6520 = vadd.f32 0.0, %v6519
        %v6521 = vpop.f32.mrb[0].mxu0
        %v6522 = vpop.f32.mrb[0].mxu0
        %v6523 = vadd.f32 0.0, %v6522
        %v6524 = vpop.f32.mrb[0].mxu0
        %6525 = vmatprep.mubr.bf16.mxu0 %v6214
        %6526 = vmatmul.mubr.bf16.gmra.mrb[0].mxu0 %v6213
        %v6527 = vpop.f32.mrb[0].mxu0
        %v6528 = vadd.f32 0.0, %v6527
        %v6529 = vpop.f32.mrb[0].mxu0
        %v6530 = vpop.f32.mrb[0].mxu0
        %v6531 = vadd.f32 0.0, %v6530
        %v6532 = vpop.f32.mrb[0].mxu0
        %6533 = vmatprep.mubr.bf16.mxu0 %v6217
        %6534 = vmatmul.mubr.bf16.gmra.mrb[0].mxu0 %v6216
        %v6535 = vpop.f32.mrb[0].mxu0
        %v6536 = vadd.f32 0.0, %v6535
        %v6537 = vpop.f32.mrb[0].mxu0
        %v6538 = vpop.f32.mrb[0].mxu0
        %v6539 = vadd.f32 0.0, %v6538
        %v6540 = vpop.f32.mrb[0].mxu0
        %6541 = vmatprep.mubr.bf16.mxu0 %v6220
        %6542 = vmatmul.mubr.bf16.gmra.mrb[0].mxu0 %v6219
        %v6543 = vpop.f32.mrb[0].mxu0
        %v6544 = vadd.f32 0.0, %v6543
        %v6545 = vpop.f32.mrb[0].mxu0
        %v6546 = vpop.f32.mrb[0].mxu0
        %v6547 = vadd.f32 0.0, %v6546
        %v6548 = vpop.f32.mrb[0].mxu0
        %6549 = vmatprep.mubr.bf16.mxu0 %v6223
        %6550 = vmatmul.mubr.bf16.gmra.mrb[0].mxu0 %v6222
        %v6551 = vpop.f32.mrb[0].mxu0
        %v6552 = vadd.f32 0.0, %v6551
        %v6553 = vpop.f32.mrb[0].mxu0
        %v6554 = vpop.f32.mrb[0].mxu0
        %v6555 = vadd.f32 0.0, %v6554
        %v6556 = vpop.f32.mrb[0].mxu0
        %6557 = vmatprep.mubr.bf16.mxu0 %v6226
        %6558 = vmatmul.mubr.bf16.gmra.mrb[0].mxu0 %v6225
        %v6559 = vpop.f32.mrb[0].mxu0
        %v6560 = vadd.f32 0.0, %v6559
        %v6561 = vpop.f32.mrb[0].mxu0
        %v6562 = vpop.f32.mrb[0].mxu0
        %v6563 = vadd.f32 0.0, %v6562
        %v6564 = vpop.f32.mrb[0].mxu0
        %6565 = vmatprep.mubr.bf16.mxu0 %v6229
        %6566 = vmatmul.mubr.bf16.gmra.mrb[0].mxu0 %v6228
        %v6567 = vpop.f32.mrb[0].mxu0
        %v6568 = vadd.f32 0.0, %v6567
        %v6569 = vpop.f32.mrb[0].mxu0
        %v6570 = vpop.f32.mrb[0].mxu0
        %v6571 = vadd.f32 0.0, %v6570
        %v6572 = vpop.f32.mrb[0].mxu0
        %6573 = vmatprep.mubr.bf16.mxu0 %v6232
        %6574 = vmatmul.mubr.bf16.gmra.mrb[0].mxu0 %v6231
        %v6575 = vpop.f32.mrb[0].mxu0
        %v6576 = vadd.f32 0.0, %v6575
        %v6577 = vpop.f32.mrb[0].mxu0
        %v6578 = vpop.f32.mrb[0].mxu0
        %v6579 = vadd.f32 0.0, %v6578
        %v6580 = vpop.f32.mrb[0].mxu0
        %6581 = vmatprep.mubr.bf16.mxu0 %v6235
        %6582 = vmatmul.mubr.bf16.gmra.mrb[0].mxu0 %v6234
        %v6583 = vpop.f32.mrb[0].mxu0
        %v6584 = vadd.f32 0.0, %v6583
        %v6585 = vpop.f32.mrb[0].mxu0
        %v6586 = vpop.f32.mrb[0].mxu0
        %v6587 = vadd.f32 0.0, %v6586
        %v6588 = vpop.f32.mrb[0].mxu0
        %6589 = vdwg.mxu0
        %6590 = vmatprep.subr.bf16.mxu0 0
        %6591 = vmatpush1.bf16.msra.mxu0 %v6361
        %6592 = vmatprep.subr.bf16.mxu0 0
        %6593 = vmatpush1.bf16.msra.mxu0 %v6362
        %6594 = vmatprep.subr.bf16.mxu0 0
        %6595 = vmatpush1.bf16.msra.mxu0 0
        %6596 = vmatprep.subr.bf16.mxu0 0
        %6597 = vmatpush1.bf16.msra.mxu0 0
        %6598 = vmatprep.subr.bf16.mxu0 0
        %6599 = vmatpush1.bf16.msra.mxu0 0
        %6600 = vmatprep.subr.bf16.mxu0 0
        %6601 = vmatpush1.bf16.msra.mxu0 0
        %6602 = vmatprep.subr.bf16.mxu0 0
        %6603 = vmatpush1.bf16.msra.mxu0 0
        %6604 = vmatprep.subr.bf16.mxu0 0
        %6605 = vmatpush1.bf16.msra.mxu0 0
        %6606 = vmatprep.subr.bf16.mxu0 0
        %6607 = vmatpush1.bf16.msra.mxu0 0
        %6608 = vmatprep.subr.bf16.mxu0 0
        %6609 = vmatpush1.bf16.msra.mxu0 0
        %6610 = vmatprep.subr.bf16.mxu0 0
        %6611 = vmatpush1.bf16.msra.mxu0 0
        %6612 = vmatprep.subr.bf16.mxu0 0
        %6613 = vmatpush1.bf16.msra.mxu0 0
        %6614 = vmatprep.subr.bf16.mxu0 0
        %6615 = vmatpush1.bf16.msra.mxu0 0
        %6616 = vmatprep.subr.bf16.mxu0 0
        %6617 = vmatpush1.bf16.msra.mxu0 0
        %6618 = vmatprep.subr.bf16.mxu0 0
        %6619 = vmatpush1.bf16.msra.mxu0 0
        %6620 = vmatprep.subr.bf16.mxu0 0
        %6621 = vmatpush1.bf16.msra.mxu0 0
        %6622 = vmatprep.mubr.bf16.mxu0 0
        %6623 = vmatmul.mubr.bf16.gmra.mrb[0].mxu0 %v6382
        %v6624 = vpop.f32.mrb[0].mxu0
        %v6625 = vadd.f32 %v6464, %v6624
        %v6626 = vpop.f32.mrb[0].mxu0
        %v6627 = vpop.f32.mrb[0].mxu0
        %v6628 = vadd.f32 %v6467, %v6627
        %v6629 = vpop.f32.mrb[0].mxu0
        %6630 = vmatprep.mubr.bf16.mxu0 0
        %6631 = vmatmul.mubr.bf16.gmra.mrb[0].mxu0 %v6385
        %v6632 = vpop.f32.mrb[0].mxu0
        %v6633 = vadd.f32 %v6472, %v6632
        %v6634 = vpop.f32.mrb[0].mxu0
        %v6635 = vpop.f32.mrb[0].mxu0
        %v6636 = vadd.f32 %v6475, %v6635
        %v6637 = vpop.f32.mrb[0].mxu0
        %6638 = vmatprep.mubr.bf16.mxu0 0
        %6639 = vmatmul.mubr.bf16.gmra.mrb[0].mxu0 %v6388
        %v6640 = vpop.f32.mrb[0].mxu0
        %v6641 = vadd.f32 %v6480, %v6640
        %v6642 = vpop.f32.mrb[0].mxu0
        %v6643 = vpop.f32.mrb[0].mxu0
        %v6644 = vadd.f32 %v6483, %v6643
        %v6645 = vpop.f32.mrb[0].mxu0
        %6646 = vmatprep.mubr.bf16.mxu0 0
        %6647 = vmatmul.mubr.bf16.gmra.mrb[0].mxu0 %v6391
        %v6648 = vpop.f32.mrb[0].mxu0
        %v6649 = vadd.f32 %v6488, %v6648
        %v6650 = vpop.f32.mrb[0].mxu0
        %v6651 = vpop.f32.mrb[0].mxu0
        %v6652 = vadd.f32 %v6491, %v6651
        %v6653 = vpop.f32.mrb[0].mxu0
        %6654 = vmatprep.mubr.bf16.mxu0 0
        %6655 = vmatmul.mubr.bf16.gmra.mrb[0].mxu0 %v6394
        %v6656 = vpop.f32.mrb[0].mxu0
        %v6657 = vadd.f32 %v6496, %v6656
        %v6658 = vpop.f32.mrb[0].mxu0
        %v6659 = vpop.f32.mrb[0].mxu0
        %v6660 = vadd.f32 %v6499, %v6659
        %v6661 = vpop.f32.mrb[0].mxu0
        %6662 = vmatprep.mubr.bf16.mxu0 0
        %6663 = vmatmul.mubr.bf16.gmra.mrb[0].mxu0 %v6397
        %v6664 = vpop.f32.mrb[0].mxu0
        %v6665 = vadd.f32 %v6504, %v6664
        %v6666 = vpop.f32.mrb[0].mxu0
        %v6667 = vpop.f32.mrb[0].mxu0
        %v6668 = vadd.f32 %v6507, %v6667
        %v6669 = vpop.f32.mrb[0].mxu0
        %6670 = vmatprep.mubr.bf16.mxu0 0
        %6671 = vmatmul.mubr.bf16.gmra.mrb[0].mxu0 %v6400
        %v6672 = vpop.f32.mrb[0].mxu0
        %v6673 = vadd.f32 %v6512, %v6672
        %v6674 = vpop.f32.mrb[0].mxu0
        %v6675 = vpop.f32.mrb[0].mxu0
        %v6676 = vadd.f32 %v6515, %v6675
        %v6677 = vpop.f32.mrb[0].mxu0
        %6678 = vmatprep.mubr.bf16.mxu0 0
        %6679 = vmatmul.mubr.bf16.gmra.mrb[0].mxu0 %v6403
        %v6680 = vpop.f32.mrb[0].mxu0
        %v6681 = vadd.f32 %v6520, %v6680
        %v6682 = vpop.f32.mrb[0].mxu0
        %v6683 = vpop.f32.mrb[0].mxu0
        %v6684 = vadd.f32 %v6523, %v6683
        %v6685 = vpop.f32.mrb[0].mxu0
        %6686 = vmatprep.mubr.bf16.mxu0 0
        %6687 = vmatmul.mubr.bf16.gmra.mrb[0].mxu0 %v6406
        %v6688 = vpop.f32.mrb[0].mxu0
        %v6689 = vadd.f32 %v6528, %v6688
        %v6690 = vpop.f32.mrb[0].mxu0
        %v6691 = vpop.f32.mrb[0].mxu0
        %v6692 = vadd.f32 %v6531, %v6691
        %v6693 = vpop.f32.mrb[0].mxu0
        %6694 = vmatprep.mubr.bf16.mxu0 0
        %6695 = vmatmul.mubr.bf16.gmra.mrb[0].mxu0 %v6409
        %v6696 = vpop.f32.mrb[0].mxu0
        %v6697 = vadd.f32 %v6536, %v6696
        %v6698 = vpop.f32.mrb[0].mxu0
        %v6699 = vpop.f32.mrb[0].mxu0
        %v6700 = vadd.f32 %v6539, %v6699
        %v6701 = vpop.f32.mrb[0].mxu0
        %6702 = vmatprep.mubr.bf16.mxu0 0
        %6703 = vmatmul.mubr.bf16.gmra.mrb[0].mxu0 %v6412
        %v6704 = vpop.f32.mrb[0].mxu0
        %v6705 = vadd.f32 %v6544, %v6704
        %v6706 = vpop.f32.mrb[0].mxu0
        %v6707 = vpop.f32.mrb[0].mxu0
        %v6708 = vadd.f32 %v6547, %v6707
        %v6709 = vpop.f32.mrb[0].mxu0
        %6710 = vmatprep.mubr.bf16.mxu0 0
        %6711 = vmatmul.mubr.bf16.gmra.mrb[0].mxu0 %v6415
        %v6712 = vpop.f32.mrb[0].mxu0
        %v6713 = vadd.f32 %v6552, %v6712
        %v6714 = vpop.f32.mrb[0].mxu0
        %v6715 = vpop.f32.mrb[0].mxu0
        %v6716 = vadd.f32 %v6555, %v6715
        %v6717 = vpop.f32.mrb[0].mxu0
        %6718 = vmatprep.mubr.bf16.mxu0 0
        %6719 = vmatmul.mubr.bf16.gmra.mrb[0].mxu0 %v6418
        %v6720 = vpop.f32.mrb[0].mxu0
        %v6721 = vadd.f32 %v6560, %v6720
        %v6722 = vpop.f32.mrb[0].mxu0
        %v6723 = vpop.f32.mrb[0].mxu0
        %v6724 = vadd.f32 %v6563, %v6723
        %v6725 = vpop.f32.mrb[0].mxu0
        %6726 = vmatprep.mubr.bf16.mxu0 0
        %6727 = vmatmul.mubr.bf16.gmra.mrb[0].mxu0 %v6421
        %v6728 = vpop.f32.mrb[0].mxu0
        %v6729 = vadd.f32 %v6568, %v6728
        %v6730 = vpop.f32.mrb[0].mxu0
        %v6731 = vpop.f32.mrb[0].mxu0
        %v6732 = vadd.f32 %v6571, %v6731
        %v6733 = vpop.f32.mrb[0].mxu0
        %6734 = vmatprep.mubr.bf16.mxu0 0
        %6735 = vmatmul.mubr.bf16.gmra.mrb[0].mxu0 %v6424
        %v6736 = vpop.f32.mrb[0].mxu0
        %v6737 = vadd.f32 %v6576, %v6736
        %v6738 = vpop.f32.mrb[0].mxu0
        %v6739 = vpop.f32.mrb[0].mxu0
        %v6740 = vadd.f32 %v6579, %v6739
        %v6741 = vpop.f32.mrb[0].mxu0
        %6742 = vmatprep.mubr.bf16.mxu0 0
        %6743 = vmatmul.mubr.bf16.gmra.mrb[0].mxu0 %v6427
        %v6744 = vpop.f32.mrb[0].mxu0
        %v6745 = vadd.f32 %v6584, %v6744
        %v6746 = vpop.f32.mrb[0].mxu0
        %v6747 = vpop.f32.mrb[0].mxu0
        %v6748 = vadd.f32 %v6587, %v6747
        %v6749 = vpop.f32.mrb[0].mxu0
        %6750 = vdwg.mxu0
        %6783 = vrot.lane.b32.xlu0 %v6625, 16
        %v6784 = vpop.permute.xlu0 %6783
        %6785 = vrot.lane.b32.xlu0 %v6628, 16
        %v6786 = vpop.permute.xlu0 %6785
        %6787 = vrot.lane.b32.xlu0 %v6633, 16
        %v6788 = vpop.permute.xlu0 %6787
        %6789 = vrot.lane.b32.xlu0 %v6636, 16
        %v6790 = vpop.permute.xlu0 %6789
        %6791 = vrot.lane.b32.xlu0 %v6641, 16
        %v6792 = vpop.permute.xlu0 %6791
        %6793 = vrot.lane.b32.xlu0 %v6644, 16
        %v6794 = vpop.permute.xlu0 %6793
        %6795 = vrot.lane.b32.xlu0 %v6649, 16
        %v6796 = vpop.permute.xlu0 %6795
        %6797 = vrot.lane.b32.xlu0 %v6652, 16
        %v6798 = vpop.permute.xlu0 %6797
        %6799 = vrot.lane.b32.xlu0 %v6657, 16
        %v6800 = vpop.permute.xlu0 %6799
        %6801 = vrot.lane.b32.xlu0 %v6660, 16
        %v6802 = vpop.permute.xlu0 %6801
        %6803 = vrot.lane.b32.xlu0 %v6665, 16
        %v6804 = vpop.permute.xlu0 %6803
        %6805 = vrot.lane.b32.xlu0 %v6668, 16
        %v6806 = vpop.permute.xlu0 %6805
        %6807 = vrot.lane.b32.xlu0 %v6673, 16
        %v6808 = vpop.permute.xlu0 %6807
        %6809 = vrot.lane.b32.xlu0 %v6676, 16
        %v6810 = vpop.permute.xlu0 %6809
        %6811 = vrot.lane.b32.xlu0 %v6681, 16
        %v6812 = vpop.permute.xlu0 %6811
        %6813 = vrot.lane.b32.xlu0 %v6684, 16
        %v6814 = vpop.permute.xlu0 %6813
        %6815 = vrot.lane.b32.xlu0 %v6689, 16
        %v6816 = vpop.permute.xlu0 %6815
        %6817 = vrot.lane.b32.xlu0 %v6692, 16
        %v6818 = vpop.permute.xlu0 %6817
        %6819 = vrot.lane.b32.xlu0 %v6697, 16
        %v6820 = vpop.permute.xlu0 %6819
        %6821 = vrot.lane.b32.xlu0 %v6700, 16
        %v6822 = vpop.permute.xlu0 %6821
        %6823 = vrot.lane.b32.xlu0 %v6705, 16
        %v6824 = vpop.permute.xlu0 %6823
        %6825 = vrot.lane.b32.xlu0 %v6708, 16
        %v6826 = vpop.permute.xlu0 %6825
        %6827 = vrot.lane.b32.xlu0 %v6713, 16
        %v6828 = vpop.permute.xlu0 %6827
        %6829 = vrot.lane.b32.xlu0 %v6716, 16
        %v6830 = vpop.permute.xlu0 %6829
        %6831 = vrot.lane.b32.xlu0 %v6721, 16
        %v6832 = vpop.permute.xlu0 %6831
        %6833 = vrot.lane.b32.xlu0 %v6724, 16
        %v6834 = vpop.permute.xlu0 %6833
        %6835 = vrot.lane.b32.xlu0 %v6729, 16
        %v6836 = vpop.permute.xlu0 %6835
        %6837 = vrot.lane.b32.xlu0 %v6732, 16
        %v6838 = vpop.permute.xlu0 %6837
        %6839 = vrot.lane.b32.xlu0 %v6737, 16
        %v6840 = vpop.permute.xlu0 %6839
        %6841 = vrot.lane.b32.xlu0 %v6740, 16
        %v6842 = vpop.permute.xlu0 %6841
        %6843 = vrot.lane.b32.xlu0 %v6745, 16
        %v6844 = vpop.permute.xlu0 %6843
        %6845 = vrot.lane.b32.xlu0 %v6748, 16
        %v6846 = vpop.permute.xlu0 %6845
        %vm6879 = vcmask 195712
        %6880 = vst.msk [vmem:[%s271] sm:$0xff] %vm6879, %v6784
        %6881 = vst.msk [vmem:[%s271 + $0x8] sm:$0xff] %vm6879, %v6786
        %6882 = vst.msk [vmem:[%s271 + $0x10] sm:$0xff] %vm6879, %v6788
        %6883 = vst.msk [vmem:[%s271 + $0x18] sm:$0xff] %vm6879, %v6790
        %6884 = vst.msk [vmem:[%s271 + $0x20] sm:$0xff] %vm6879, %v6792
        %6885 = vst.msk [vmem:[%s271 + $0x28] sm:$0xff] %vm6879, %v6794
        %6886 = vst.msk [vmem:[%s271 + $0x30] sm:$0xff] %vm6879, %v6796
        %6887 = vst.msk [vmem:[%s271 + $0x38] sm:$0xff] %vm6879, %v6798
        %6888 = vst.msk [vmem:[%s271 + $0x40] sm:$0xff] %vm6879, %v6800
        %6889 = vst.msk [vmem:[%s271 + $0x48] sm:$0xff] %vm6879, %v6802
        %6890 = vst.msk [vmem:[%s271 + $0x50] sm:$0xff] %vm6879, %v6804
        %6891 = vst.msk [vmem:[%s271 + $0x58] sm:$0xff] %vm6879, %v6806
        %6892 = vst.msk [vmem:[%s271 + $0x60] sm:$0xff] %vm6879, %v6808
        %6893 = vst.msk [vmem:[%s271 + $0x68] sm:$0xff] %vm6879, %v6810
        %6894 = vst.msk [vmem:[%s271 + $0x70] sm:$0xff] %vm6879, %v6812
        %6895 = vst.msk [vmem:[%s271 + $0x78] sm:$0xff] %vm6879, %v6814
        %6896 = vst.msk [vmem:[%s271 + $0x80] sm:$0xff] %vm6879, %v6816
        %6897 = vst.msk [vmem:[%s271 + $0x88] sm:$0xff] %vm6879, %v6818
        %6898 = vst.msk [vmem:[%s271 + $0x90] sm:$0xff] %vm6879, %v6820
        %6899 = vst.msk [vmem:[%s271 + $0x98] sm:$0xff] %vm6879, %v6822
        %6900 = vst.msk [vmem:[%s271 + $0xa0] sm:$0xff] %vm6879, %v6824
        %6901 = vst.msk [vmem:[%s271 + $0xa8] sm:$0xff] %vm6879, %v6826
        %6902 = vst.msk [vmem:[%s271 + $0xb0] sm:$0xff] %vm6879, %v6828
        %6903 = vst.msk [vmem:[%s271 + $0xb8] sm:$0xff] %vm6879, %v6830
        %6904 = vst.msk [vmem:[%s271 + $0xc0] sm:$0xff] %vm6879, %v6832
        %6905 = vst.msk [vmem:[%s271 + $0xc8] sm:$0xff] %vm6879, %v6834
        %6906 = vst.msk [vmem:[%s271 + $0xd0] sm:$0xff] %vm6879, %v6836
        %6907 = vst.msk [vmem:[%s271 + $0xd8] sm:$0xff] %vm6879, %v6838
        %6908 = vst.msk [vmem:[%s271 + $0xe0] sm:$0xff] %vm6879, %v6840
        %6909 = vst.msk [vmem:[%s271 + $0xe8] sm:$0xff] %vm6879, %v6842
        %6910 = vst.msk [vmem:[%s271 + $0xf0] sm:$0xff] %vm6879, %v6844
        %6911 = vst.msk [vmem:[%s271 + $0xf8] sm:$0xff] %vm6879, %v6846
        %s6912 = sand.u32 %s181, 1
        %s6913 = scalar_lea.sflag [#allocation5], %s6912
        %s6914 = sand.u32 %s181, 1
        %s6915 = smul.addr %s6914, 256
        %s6916 = scalar_lea.vmem [#allocation4], %s6915
        // Predicated region
        $region49: #{dense_block_forward.1} parent=47 // pred_check
          %p6917 = pneg %p191
        $region50: #{dense_block_forward.1} parent=47 // pred_check_branch
          %6919 = sbr.rel (%p6917) target = $region52
        $region51: #{dense_block_forward.1} parent=47 // pred_region
          %s6921 = ssub.s32 4096, 4096
          %6922 = vsyncadd %s6913, %s6921
          %s6923 = smul.addr %s21, 32
          %s6924 = smul.addr %s6923, 128
          %s6925 = scalar_lea.hbm %s7, %s6924
          %s6926 = sshll.u32 %s6916, 4
          %s6927 = int_to_ptr.vmem [resolvable:$true] %s6926
          %6932 = dma.vmem_to_hbm [thread:$0]  %s6927, 4096, %s6925, %s6913, 128, 128, 8
        $region52: #{dense_block_forward.1} parent=47 // pred_fallthru
          _
      $region48: #{dense_block_forward.1} parent=5 // pred_fallthru
        _
      %p6933 = scmp.le.s32.totalorder 2, %s16
      // Predicated region
      $region53: #{dense_block_forward.1} parent=5 // pred_check
        %p6934 = pneg %p6933
      $region54: #{dense_block_forward.1} parent=5 // pred_check_branch
        %6936 = sbr.rel (%p6934) target = $region56
      $region55: #{dense_block_forward.1} parent=5 // pred_region
        %s6937 = ssub.s32 %s16, 2
        // Predicated region
        $region57: #{dense_block_forward.1} parent=55 // pred_check
          %p6938 = pneg %p197
        $region58: #{dense_block_forward.1} parent=55 // pred_check_branch
          %6940 = sbr.rel (%p6938) target = $region60
        $region59: #{dense_block_forward.1} parent=55 // pred_region
          %s6941 = sand.u32 %s182, 1
          %s6942 = scalar_lea.sflag [#allocation5], %s6941
          %s6943 = sand.u32 %s182, 1
          %s6944 = smul.addr %s6943, 256
          %s6945 = scalar_lea.vmem [#allocation4], %s6944
          %6946 = dma.done %s6942, 4096
        $region60: #{dense_block_forward.1} parent=55 // pred_fallthru
          _
      $region56: #{dense_block_forward.1} parent=5 // pred_fallthru
        _
    $region6: #{dense_block_forward.1} parent=1 // loop_footer
      %s20 = sadd.s32 1, %s16
    $region7: #{dense_block_forward.1} parent=1 // loop_footer_branch
      %15 = sbr.rel target = $region3
    $region8: #{dense_block_forward.1} parent=1 // loop_exit
      _
    %6947 = vsyncpa [#allocation5], 1
    %s6948 = scalar_lea.sflag [#allocation5], 1
    %6949 = vsyncpa %s6948, 1

</llo_original>
